<compile_context>
chip_gen: v6e
topology: v6e:2x2x1
jax: 0.10.0
libtpu: 0.0.40
codegen_flags: <defaults>
</compile_context>

<pallas_src>
import functools

import numpy as np

import jax
import jax.numpy as jnp
from jax import lax
from jax.experimental import pallas as pl
from jax.experimental.pallas import tpu as pltpu  # noqa: F401  (TPU backend)

LEAKY_SLOPE = 0.01  # F.leaky_relu default negative_slope


def _leaky(z):
    return jnp.where(z >= 0, z, LEAKY_SLOPE * z)


# ---------------------------------------------------------------------------
# The single fused kernel
# ---------------------------------------------------------------------------
def _fused_kernel(
    # conv1 im2col patches, one per branch, rows ordered (pool_offset, b, io, jo)
    p1_a_ref, p1_b_ref,
    # branch-1 conv weights (matmul layout)
    w1_a_ref, b1_a_ref, w2_a_ref, b2_a_ref,
    # branch-2 conv weights
    w1_b_ref, b1_b_ref, w2_b_ref, b2_b_ref,
    # branch-1 classifier head
    wc1_a_ref, bc1_a_ref, wc2_a_ref, bc2_a_ref,
    # branch-2 classifier head
    wc1_b_ref, bc1_b_ref, wc2_b_ref, bc2_b_ref,
    # target head (fc1/fc3 concatenated inputs realized as pre-split weights)
    wt1a_ref, wt1b_ref, bt1_ref,
    wt2_ref, bt2_ref,
    wt3a_ref, wt3b_ref, wt3c_ref, bt3_ref,
    wt4_ref, bt4_ref,
    # constant 0/1 gather / scatter matrices
    r2_ref, lsel_ref, escat_ref,
    # outputs
    out_ref, o1_ref, o2_ref,
    *, batch):
    B36 = batch * 36   # rows per pool-offset block after conv1
    B4 = batch * 4     # rows per pool-offset block after conv2

    def dot(a, b):
        return jnp.dot(a, b, preferred_element_type=jnp.float32)

    def run_branch(p1, w1, b1, w2_ref_, b2, wc1, bc1, wc2, bc2):
        # conv1 (+bias); rows are (pool_offset, b, io, jo)
        h1 = dot(p1, w1) + b1                                      # [4*B*36, 16]
        # 2x2 max-pool == max of the 4 contiguous pool-offset row blocks
        m1 = jnp.maximum(jnp.maximum(h1[0:B36], h1[B36:2 * B36]),
                         jnp.maximum(h1[2 * B36:3 * B36], h1[3 * B36:4 * B36]))
        a1 = _leaky(m1)                                            # [B*36, 16] rows (b, io, jo)

        # conv2 = sum over the 9 taps of (constant row-gather) @ a1 @ (per-tap weight)
        acc = None
        for t in range(9):
            g = dot(r2_ref[t], a1)                                 # [16*B, 16]
            c = dot(g, w2_ref_[t])                                 # [16*B, 32]
            acc = c if acc is None else acc + c
        h2 = acc + b2                                              # rows (pool_offset, q, b)
        m2 = jnp.maximum(jnp.maximum(h2[0:B4], h2[B4:2 * B4]),
                         jnp.maximum(h2[2 * B4:3 * B4], h2[3 * B4:4 * B4]))
        a2 = _leaky(m2)                                            # [4*B, 32] rows (q, b)

        # NCHW flatten to a lane-dense [B, 128] via constant select/scatter matmuls:
        # v[b, 4*c + q] = a2[q*B + b, c]
        v = None
        for q in range(4):
            piece = dot(dot(lsel_ref[q], a2), escat_ref[q])        # [B, 128]
            v = piece if v is None else v + piece

        # classifier head (F.dropout identity in eval mode)
        hc = _leaky(dot(v, wc1) + bc1)                             # [B, 64]
        o = dot(hc, wc2) + bc2                                     # [B, 10]
        return v, o

    v1, o1 = run_branch(p1_a_ref[...], w1_a_ref[...], b1_a_ref[...],
                        w2_a_ref, b2_a_ref[...],
                        wc1_a_ref[...], bc1_a_ref[...],
                        wc2_a_ref[...], bc2_a_ref[...])
    v2, o2 = run_branch(p1_b_ref[...], w1_b_ref[...], b1_b_ref[...],
                        w2_b_ref, b2_b_ref[...],
                        wc1_b_ref[...], bc1_b_ref[...],
                        wc2_b_ref[...], bc2_b_ref[...])

    # target head; concat inputs realized as split-weight sums (no in-kernel concat)
    t = _leaky(dot(v1, wt1a_ref[...]) + dot(v2, wt1b_ref[...]) + bt1_ref[...])
    t = _leaky(dot(t, wt2_ref[...]) + bt2_ref[...])
    t = _leaky(dot(t, wt3a_ref[...]) + dot(o1, wt3b_ref[...])
               + dot(o2, wt3c_ref[...]) + bt3_ref[...])
    res = dot(t, wt4_ref[...]) + bt4_ref[...]

    out_ref[...] = res
    o1_ref[...] = o1
    o2_ref[...] = o2


# ---------------------------------------------------------------------------
# Wrapper-side preprocessing (input patches + constant gather matrices)
# ---------------------------------------------------------------------------
def _conv1_patches(img):
    """img: [B, 14, 14] single-channel images -> conv1 im2col patches
    [4*B*36, 9], rows ordered (pool_offset dp=(dpi,dpj), b, io, jo),
    cols ordered (di*3 + dj).  Output spatial pos is (2*io+dpi, 2*jo+dpj)."""
    B = img.shape[0]
    blocks = []
    for dpi in range(2):
        for dpj in range(2):
            taps = []
            for di in range(3):
                for dj in range(3):
                    si, sj = dpi + di, dpj + dj
                    taps.append(img[:, si:si + 11:2, sj:sj + 11:2])  # [B, 6, 6]
            blocks.append(jnp.stack(taps, axis=-1))                  # [B, 6, 6, 9]
    p = jnp.stack(blocks, axis=0)                                    # [4, B, 6, 6, 9]
    return p.reshape(4 * B * 36, 9)


def _build_constants(batch):
    """Constant 0/1 matrices:
       r2[t]    : [16B, 36B] row-gather for conv2 tap t = di*3+dj
       lsel[q]  : [B, 4B]    selects pooled2 row (q, b)
       escat[q] : [32, 128]  scatters channel c of spatial pos q -> flat 4*c+q
    """
    r2 = np.zeros((9, 16 * batch, 36 * batch), np.float32)
    for di in range(3):
        for dj in range(3):
            t = di * 3 + dj
            for dpi in range(2):
                for dpj in range(2):
                    for qi in range(2):
                        for qj in range(2):
                            i2, j2 = 2 * qi + dpi, 2 * qj + dpj
                            for b in range(batch):
                                row = ((dpi * 2 + dpj) * 4 + (qi * 2 + qj)) * batch + b
                                src = b * 36 + (i2 + di) * 6 + (j2 + dj)
                                r2[t, row, src] = 1.0
    lsel = np.zeros((4, batch, 4 * batch), np.float32)
    escat = np.zeros((4, 32, 128), np.float32)
    for q in range(4):
        for b in range(batch):
            lsel[q, b, q * batch + b] = 1.0
        for c in range(32):
            escat[q, c, 4 * c + q] = 1.0
    return jnp.asarray(r2), jnp.asarray(lsel), jnp.asarray(escat)


# ---------------------------------------------------------------------------
# Parameters (PyTorch layout) and one-time repacking for the kernel
# ---------------------------------------------------------------------------
def _init_conv(key, cout, cin, k):
    k1, k2 = jax.random.split(key)
    bound = 1.0 / np.sqrt(cin * k * k)
    return {"w": jax.random.uniform(k1, (cout, cin, k, k), jnp.float32, -bound, bound),
            "b": jax.random.uniform(k2, (cout,), jnp.float32, -bound, bound)}


def _init_linear(key, fout, fin):
    k1, k2 = jax.random.split(key)
    bound = 1.0 / np.sqrt(fin)
    return {"w": jax.random.uniform(k1, (fout, fin), jnp.float32, -bound, bound),
            "b": jax.random.uniform(k2, (fout,), jnp.float32, -bound, bound)}


def init_params(key):
    keys = jax.random.split(key, 12)
    return {
        "conv1_l": _init_conv(keys[0], 16, 1, 3),
        "conv2_l": _init_conv(keys[1], 32, 16, 3),
        "conv1_r": _init_conv(keys[2], 16, 1, 3),
        "conv2_r": _init_conv(keys[3], 32, 16, 3),
        "fc1_class_l": _init_linear(keys[4], 64, 128),
        "fc2_class_l": _init_linear(keys[5], 10, 64),
        "fc1_class_r": _init_linear(keys[6], 64, 128),
        "fc2_class_r": _init_linear(keys[7], 10, 64),
        "fc1_target": _init_linear(keys[8], 64, 256),
        "fc2_target": _init_linear(keys[9], 32, 64),
        "fc3_target": _init_linear(keys[10], 32, 32 + 2 * 10),
        "fc4_target": _init_linear(keys[11], 2, 32),
    }


def pack_params(params, weight_sharing, batch):
    """One-time (outside jit) repack of PyTorch-layout params into kernel-ready
    operands: conv weights -> matmul layout, FC weights pre-transposed to
    [in, out], concatenated FC inputs realized as pre-split weights."""
    def conv1_pack(p):
        return (p["w"].reshape(16, 9).T,                       # [9, 16]  (tap, cout)
                p["b"].reshape(1, 16))

    def conv2_pack(p):
        # [cout=32, cin=16, 3, 3] -> [9 (tap), 16 (cin), 32 (cout)]
        return (p["w"].transpose(2, 3, 1, 0).reshape(9, 16, 32),
                p["b"].reshape(1, 32))

    def lin_pack(p):
        return p["w"].T, p["b"].reshape(1, -1)

    w1_a, b1_a = conv1_pack(params["conv1_l"])
    w2_a, b2_a = conv2_pack(params["conv2_l"])
    wc1_a, bc1_a = lin_pack(params["fc1_class_l"])
    wc2_a, bc2_a = lin_pack(params["fc2_class_l"])
    if weight_sharing:
        w1_b, b1_b, w2_b, b2_b = w1_a, b1_a, w2_a, b2_a
        wc1_b, bc1_b, wc2_b, bc2_b = wc1_a, bc1_a, wc2_a, bc2_a
    else:
        w1_b, b1_b = conv1_pack(params["conv1_r"])
        w2_b, b2_b = conv2_pack(params["conv2_r"])
        wc1_b, bc1_b = lin_pack(params["fc1_class_r"])
        wc2_b, bc2_b = lin_pack(params["fc2_class_r"])

    wt1 = params["fc1_target"]["w"]                            # [64, 256]
    wt1a, wt1b = wt1[:, :128].T, wt1[:, 128:].T                # [128, 64] each
    bt1 = params["fc1_target"]["b"].reshape(1, -1)
    wt2, bt2 = lin_pack(params["fc2_target"])
    wt3 = params["fc3_target"]["w"]                            # [32, 52]
    wt3a, wt3b, wt3c = wt3[:, :32].T, wt3[:, 32:42].T, wt3[:, 42:].T
    bt3 = params["fc3_target"]["b"].reshape(1, -1)
    wt4, bt4 = lin_pack(params["fc4_target"])

    r2, lsel, escat = _build_constants(batch)

    return (w1_a, b1_a, w2_a, b2_a,
            w1_b, b1_b, w2_b, b2_b,
            wc1_a, bc1_a, wc2_a, bc2_a,
            wc1_b, bc1_b, wc2_b, bc2_b,
            wt1a, wt1b, bt1,
            wt2, bt2,
            wt3a, wt3b, wt3c, bt3,
            wt4, bt4,
            r2, lsel, escat)


# ---------------------------------------------------------------------------
# Forward pass: one pallas_call for the whole network
# ---------------------------------------------------------------------------
@jax.jit
def forward(pack, x):
    """x: [B, 2, 14, 14] NCHW.  Returns (target [B,2], class1 [B,10], class2 [B,10])."""
    B = x.shape[0]
    p1_a = _conv1_patches(x[:, 0])      # branch 1 uses channel 0
    p1_b = _conv1_patches(x[:, 1])      # branch 2 uses channel 1
    operands = (p1_a, p1_b) + tuple(pack)

    def full_spec(a):
        nd = len(a.shape)
        return pl.BlockSpec(a.shape, lambda i, _n=nd: (0,) * _n)

    out_shape = (jax.ShapeDtypeStruct((B, 2), jnp.float32),
                 jax.ShapeDtypeStruct((B, 10), jnp.float32),
                 jax.ShapeDtypeStruct((B, 10), jnp.float32))

    bytes_accessed = sum(int(np.prod(a.shape)) * 4 for a in operands) + (2 + 10 + 10) * B * 4
    cost = pl.CostEstimate(flops=1_200_000 * B, transcendentals=0,
                           bytes_accessed=int(bytes_accessed))

    out, o1, o2 = pl.pallas_call(
        functools.partial(_fused_kernel, batch=B),
        out_shape=out_shape,
        grid=(1,),
        in_specs=[full_spec(a) for a in operands],
        out_specs=[full_spec(s) for s in out_shape],
        cost_estimate=cost,
    )(*operands)
    return out, o1, o2


# ---------------------------------------------------------------------------
# Pure-JAX reference (correctness check only)
# ---------------------------------------------------------------------------
def reference_forward(params, x, weight_sharing):
    def conv(inp, p):
        out = lax.conv_general_dilated(
            inp, p["w"], (1, 1), "VALID",
            dimension_numbers=("NCHW", "OIHW", "NCHW"),
            precision=lax.Precision.HIGHEST)
        return out + p["b"].reshape(1, -1, 1, 1)

    def pool_leaky(h):
        b, c, hh, ww = h.shape
        m = jnp.max(h.reshape(b, c, hh // 2, 2, ww // 2, 2), axis=(3, 5))
        return jnp.where(m >= 0, m, LEAKY_SLOPE * m)

    def lin(v, p):
        return jnp.dot(v, p["w"].T, precision=lax.Precision.HIGHEST) + p["b"]

    B = x.shape[0]
    x1, x2 = x[:, 0:1], x[:, 1:2]

    def branch(inp, c1, c2):
        h = pool_leaky(conv(inp, c1))
        h = pool_leaky(conv(h, c2))     # Dropout2d: identity in eval mode
        return h.reshape(B, -1)

    v1 = branch(x1, params["conv1_l"], params["conv2_l"])
    if weight_sharing:
        v2 = branch(x2, params["conv1_l"], params["conv2_l"])
    else:
        v2 = branch(x2, params["conv1_r"], params["conv2_r"])

    def classifier(v, p1, p2):
        h = lin(v, p1)
        h = jnp.where(h >= 0, h, LEAKY_SLOPE * h)
        return lin(h, p2)               # dropout identity

    o1 = classifier(v1, params["fc1_class_l"], params["fc2_class_l"])
    if weight_sharing:
        o2 = classifier(v2, params["fc1_class_l"], params["fc2_class_l"])
    else:
        o2 = classifier(v2, params["fc1_class_r"], params["fc2_class_r"])

    xcat = jnp.concatenate([v1, v2], axis=1)
    t = lin(xcat, params["fc1_target"]); t = jnp.where(t >= 0, t, LEAKY_SLOPE * t)
    t = lin(t, params["fc2_target"]);    t = jnp.where(t >= 0, t, LEAKY_SLOPE * t)
    t = jnp.concatenate([t, o1, o2], axis=1)
    t = lin(t, params["fc3_target"]);    t = jnp.where(t >= 0, t, LEAKY_SLOPE * t)
    t = lin(t, params["fc4_target"])
    return t, o1, o2


if __name__ == "__main__":
    key = jax.random.PRNGKey(0)
    pkey, xkey = jax.random.split(key)
    params = init_params(pkey)

    B = 2
    x = jax.random.normal(xkey, (B, 2, 14, 14), dtype=jnp.float32)

    for ws in (False, True):
        pack = pack_params(params, weight_sharing=ws, batch=B)
        out, c1, c2 = forward(pack, x)
        jax.block_until_ready((out, c1, c2))
        assert out.shape == (B, 2) and c1.shape == (B, 10) and c2.shape == (B, 10)

        r_out, r_c1, r_c2 = reference_forward(params, x, ws)
        for got, ref in ((out, r_out), (c1, r_c1), (c2, r_c2)):
            assert jnp.allclose(got, ref, rtol=2e-2, atol=2e-2), (
                f"mismatch (weight_sharing={ws}): "
                f"max|diff|={float(jnp.max(jnp.abs(got - ref)))}")

    print("KERNEL_OK")
</pallas_src>

<mosaic_0001>
module attributes {stable_mosaic.version = 11 : i64} {
  func.func @_fused_kernel(%arg0: i32, %arg1: memref<288x9xf32, #tpu.memory_space<vmem>>, %arg2: memref<288x9xf32, #tpu.memory_space<vmem>>, %arg3: memref<9x16xf32, #tpu.memory_space<vmem>>, %arg4: memref<1x16xf32, #tpu.memory_space<vmem>>, %arg5: memref<9x16x32xf32, #tpu.memory_space<vmem>>, %arg6: memref<1x32xf32, #tpu.memory_space<vmem>>, %arg7: memref<9x16xf32, #tpu.memory_space<vmem>>, %arg8: memref<1x16xf32, #tpu.memory_space<vmem>>, %arg9: memref<9x16x32xf32, #tpu.memory_space<vmem>>, %arg10: memref<1x32xf32, #tpu.memory_space<vmem>>, %arg11: memref<128x64xf32, #tpu.memory_space<vmem>>, %arg12: memref<1x64xf32, #tpu.memory_space<vmem>>, %arg13: memref<64x10xf32, #tpu.memory_space<vmem>>, %arg14: memref<1x10xf32, #tpu.memory_space<vmem>>, %arg15: memref<128x64xf32, #tpu.memory_space<vmem>>, %arg16: memref<1x64xf32, #tpu.memory_space<vmem>>, %arg17: memref<64x10xf32, #tpu.memory_space<vmem>>, %arg18: memref<1x10xf32, #tpu.memory_space<vmem>>, %arg19: memref<128x64xf32, #tpu.memory_space<vmem>>, %arg20: memref<128x64xf32, #tpu.memory_space<vmem>>, %arg21: memref<1x64xf32, #tpu.memory_space<vmem>>, %arg22: memref<64x32xf32, #tpu.memory_space<vmem>>, %arg23: memref<1x32xf32, #tpu.memory_space<vmem>>, %arg24: memref<32x32xf32, #tpu.memory_space<vmem>>, %arg25: memref<10x32xf32, #tpu.memory_space<vmem>>, %arg26: memref<10x32xf32, #tpu.memory_space<vmem>>, %arg27: memref<1x32xf32, #tpu.memory_space<vmem>>, %arg28: memref<32x2xf32, #tpu.memory_space<vmem>>, %arg29: memref<1x2xf32, #tpu.memory_space<vmem>>, %arg30: memref<9x32x72xf32, #tpu.memory_space<vmem>>, %arg31: memref<4x2x8xf32, #tpu.memory_space<vmem>>, %arg32: memref<4x32x128xf32, #tpu.memory_space<vmem>>, %arg33: memref<2x2xf32, #tpu.memory_space<vmem>>, %arg34: memref<2x10xf32, #tpu.memory_space<vmem>>, %arg35: memref<2x10xf32, #tpu.memory_space<vmem>>) attributes {dimension_semantics = [#tpu.dimension_semantics<arbitrary>], iteration_bounds = array<i64: 1>, scalar_prefetch = 0 : i64, scratch_operands = 0 : i64, tpu.core_type = #tpu.core_type<tc>, window_params = [{pipeline_mode = #tpu.pipeline_mode<synchronous>, transform_indices = @transform_0, window_bounds = array<i64: 288, 9>}, {pipeline_mode = #tpu.pipeline_mode<synchronous>, transform_indices = @transform_1, window_bounds = array<i64: 288, 9>}, {pipeline_mode = #tpu.pipeline_mode<synchronous>, transform_indices = @transform_2, window_bounds = array<i64: 9, 16>}, {pipeline_mode = #tpu.pipeline_mode<synchronous>, transform_indices = @transform_3, window_bounds = array<i64: 1, 16>}, {pipeline_mode = #tpu.pipeline_mode<synchronous>, transform_indices = @transform_4, window_bounds = array<i64: 9, 16, 32>}, {pipeline_mode = #tpu.pipeline_mode<synchronous>, transform_indices = @transform_5, window_bounds = array<i64: 1, 32>}, {pipeline_mode = #tpu.pipeline_mode<synchronous>, transform_indices = @transform_6, window_bounds = array<i64: 9, 16>}, {pipeline_mode = #tpu.pipeline_mode<synchronous>, transform_indices = @transform_7, window_bounds = array<i64: 1, 16>}, {pipeline_mode = #tpu.pipeline_mode<synchronous>, transform_indices = @transform_8, window_bounds = array<i64: 9, 16, 32>}, {pipeline_mode = #tpu.pipeline_mode<synchronous>, transform_indices = @transform_9, window_bounds = array<i64: 1, 32>}, {pipeline_mode = #tpu.pipeline_mode<synchronous>, transform_indices = @transform_10, window_bounds = array<i64: 128, 64>}, {pipeline_mode = #tpu.pipeline_mode<synchronous>, transform_indices = @transform_11, window_bounds = array<i64: 1, 64>}, {pipeline_mode = #tpu.pipeline_mode<synchronous>, transform_indices = @transform_12, window_bounds = array<i64: 64, 10>}, {pipeline_mode = #tpu.pipeline_mode<synchronous>, transform_indices = @transform_13, window_bounds = array<i64: 1, 10>}, {pipeline_mode = #tpu.pipeline_mode<synchronous>, transform_indices = @transform_14, window_bounds = array<i64: 128, 64>}, {pipeline_mode = #tpu.pipeline_mode<synchronous>, transform_indices = @transform_15, window_bounds = array<i64: 1, 64>}, {pipeline_mode = #tpu.pipeline_mode<synchronous>, transform_indices = @transform_16, window_bounds = array<i64: 64, 10>}, {pipeline_mode = #tpu.pipeline_mode<synchronous>, transform_indices = @transform_17, window_bounds = array<i64: 1, 10>}, {pipeline_mode = #tpu.pipeline_mode<synchronous>, transform_indices = @transform_18, window_bounds = array<i64: 128, 64>}, {pipeline_mode = #tpu.pipeline_mode<synchronous>, transform_indices = @transform_19, window_bounds = array<i64: 128, 64>}, {pipeline_mode = #tpu.pipeline_mode<synchronous>, transform_indices = @transform_20, window_bounds = array<i64: 1, 64>}, {pipeline_mode = #tpu.pipeline_mode<synchronous>, transform_indices = @transform_21, window_bounds = array<i64: 64, 32>}, {pipeline_mode = #tpu.pipeline_mode<synchronous>, transform_indices = @transform_22, window_bounds = array<i64: 1, 32>}, {pipeline_mode = #tpu.pipeline_mode<synchronous>, transform_indices = @transform_23, window_bounds = array<i64: 32, 32>}, {pipeline_mode = #tpu.pipeline_mode<synchronous>, transform_indices = @transform_24, window_bounds = array<i64: 10, 32>}, {pipeline_mode = #tpu.pipeline_mode<synchronous>, transform_indices = @transform_25, window_bounds = array<i64: 10, 32>}, {pipeline_mode = #tpu.pipeline_mode<synchronous>, transform_indices = @transform_26, window_bounds = array<i64: 1, 32>}, {pipeline_mode = #tpu.pipeline_mode<synchronous>, transform_indices = @transform_27, window_bounds = array<i64: 32, 2>}, {pipeline_mode = #tpu.pipeline_mode<synchronous>, transform_indices = @transform_28, window_bounds = array<i64: 1, 2>}, {pipeline_mode = #tpu.pipeline_mode<synchronous>, transform_indices = @transform_29, window_bounds = array<i64: 9, 32, 72>}, {pipeline_mode = #tpu.pipeline_mode<synchronous>, transform_indices = @transform_30, window_bounds = array<i64: 4, 2, 8>}, {pipeline_mode = #tpu.pipeline_mode<synchronous>, transform_indices = @transform_31, window_bounds = array<i64: 4, 32, 128>}, {pipeline_mode = #tpu.pipeline_mode<synchronous>, transform_indices = @transform_32, window_bounds = array<i64: 2, 2>}, {pipeline_mode = #tpu.pipeline_mode<synchronous>, transform_indices = @transform_33, window_bounds = array<i64: 2, 10>}, {pipeline_mode = #tpu.pipeline_mode<synchronous>, transform_indices = @transform_34, window_bounds = array<i64: 2, 10>}]} {
    %c0 = arith.constant 0 : index
    %c0_0 = arith.constant 0 : index
    %0 = vector.load %arg1[%c0, %c0_0] : memref<288x9xf32, #tpu.memory_space<vmem>>, vector<288x9xf32>
    %c0_1 = arith.constant 0 : index
    %c0_2 = arith.constant 0 : index
    %1 = vector.load %arg3[%c0_1, %c0_2] : memref<9x16xf32, #tpu.memory_space<vmem>>, vector<9x16xf32>
    %c0_3 = arith.constant 0 : index
    %c0_4 = arith.constant 0 : index
    %2 = vector.load %arg4[%c0_3, %c0_4] : memref<1x16xf32, #tpu.memory_space<vmem>>, vector<1x16xf32>
    %c0_5 = arith.constant 0 : index
    %c0_6 = arith.constant 0 : index
    %3 = vector.load %arg6[%c0_5, %c0_6] : memref<1x32xf32, #tpu.memory_space<vmem>>, vector<1x32xf32>
    %c0_7 = arith.constant 0 : index
    %c0_8 = arith.constant 0 : index
    %4 = vector.load %arg11[%c0_7, %c0_8] : memref<128x64xf32, #tpu.memory_space<vmem>>, vector<128x64xf32>
    %c0_9 = arith.constant 0 : index
    %c0_10 = arith.constant 0 : index
    %5 = vector.load %arg12[%c0_9, %c0_10] : memref<1x64xf32, #tpu.memory_space<vmem>>, vector<1x64xf32>
    %c0_11 = arith.constant 0 : index
    %c0_12 = arith.constant 0 : index
    %6 = vector.load %arg13[%c0_11, %c0_12] : memref<64x10xf32, #tpu.memory_space<vmem>>, vector<64x10xf32>
    %c0_13 = arith.constant 0 : index
    %c0_14 = arith.constant 0 : index
    %7 = vector.load %arg14[%c0_13, %c0_14] : memref<1x10xf32, #tpu.memory_space<vmem>>, vector<1x10xf32>
    %cst = arith.constant dense<0.000000e+00> : vector<288x16xf32>
    %8 = tpu.matmul %0, %1, %cst {dimension_numbers = #tpu.dot_dimension_numbers<[1], [0], [0], [1], [0, 0, 1, 1], [], []>} : vector<288x9xf32>, vector<9x16xf32>, vector<288x16xf32> -> vector<288x16xf32>
    %9 = vector.broadcast %2 : vector<1x16xf32> to vector<288x16xf32>
    %10 = arith.addf %8, %9 : vector<288x16xf32>
    %11 = vector.extract_strided_slice %10 {offsets = [0, 0], sizes = [72, 16], strides = [1, 1]} : vector<288x16xf32> to vector<72x16xf32>
    %12 = vector.extract_strided_slice %10 {offsets = [72, 0], sizes = [72, 16], strides = [1, 1]} : vector<288x16xf32> to vector<72x16xf32>
    %13 = arith.maximumf %11, %12 : vector<72x16xf32>
    %14 = vector.extract_strided_slice %10 {offsets = [144, 0], sizes = [72, 16], strides = [1, 1]} : vector<288x16xf32> to vector<72x16xf32>
    %15 = vector.extract_strided_slice %10 {offsets = [216, 0], sizes = [72, 16], strides = [1, 1]} : vector<288x16xf32> to vector<72x16xf32>
    %16 = arith.maximumf %14, %15 : vector<72x16xf32>
    %17 = arith.maximumf %13, %16 : vector<72x16xf32>
    %cst_15 = arith.constant 0.000000e+00 : f32
    %18 = vector.broadcast %cst_15 : f32 to vector<72x16xf32>
    %19 = arith.cmpf oge, %17, %18 : vector<72x16xf32>
    %cst_16 = arith.constant 0.00999999977 : f32
    %20 = vector.broadcast %cst_16 : f32 to vector<72x16xf32>
    %21 = arith.mulf %20, %17 : vector<72x16xf32>
    %22 = arith.select %19, %17, %21 : vector<72x16xi1>, vector<72x16xf32>
    %c0_17 = arith.constant 0 : index
    %c0_18 = arith.constant 0 : index
    %c0_19 = arith.constant 0 : index
    %23 = vector.load %arg30[%c0_17, %c0_18, %c0_19] : memref<9x32x72xf32, #tpu.memory_space<vmem>>, vector<1x32x72xf32>
    %24 = vector.shape_cast %23 : vector<1x32x72xf32> to vector<32x72xf32>
    %cst_20 = arith.constant dense<0.000000e+00> : vector<32x16xf32>
    %25 = tpu.matmul %24, %22, %cst_20 {dimension_numbers = #tpu.dot_dimension_numbers<[1], [0], [0], [1], [0, 0, 1, 1], [], []>} : vector<32x72xf32>, vector<72x16xf32>, vector<32x16xf32> -> vector<32x16xf32>
    %c0_21 = arith.constant 0 : index
    %c0_22 = arith.constant 0 : index
    %c0_23 = arith.constant 0 : index
    %26 = vector.load %arg5[%c0_21, %c0_22, %c0_23] : memref<9x16x32xf32, #tpu.memory_space<vmem>>, vector<1x16x32xf32>
    %27 = vector.shape_cast %26 : vector<1x16x32xf32> to vector<16x32xf32>
    %cst_24 = arith.constant dense<0.000000e+00> : vector<32x32xf32>
    %28 = tpu.matmul %25, %27, %cst_24 {dimension_numbers = #tpu.dot_dimension_numbers<[1], [0], [0], [1], [0, 0, 1, 1], [], []>} : vector<32x16xf32>, vector<16x32xf32>, vector<32x32xf32> -> vector<32x32xf32>
    %c1 = arith.constant 1 : index
    %c0_25 = arith.constant 0 : index
    %c0_26 = arith.constant 0 : index
    %29 = vector.load %arg30[%c1, %c0_25, %c0_26] : memref<9x32x72xf32, #tpu.memory_space<vmem>>, vector<1x32x72xf32>
    %30 = vector.shape_cast %29 : vector<1x32x72xf32> to vector<32x72xf32>
    %cst_27 = arith.constant dense<0.000000e+00> : vector<32x16xf32>
    %31 = tpu.matmul %30, %22, %cst_27 {dimension_numbers = #tpu.dot_dimension_numbers<[1], [0], [0], [1], [0, 0, 1, 1], [], []>} : vector<32x72xf32>, vector<72x16xf32>, vector<32x16xf32> -> vector<32x16xf32>
    %c1_28 = arith.constant 1 : index
    %c0_29 = arith.constant 0 : index
    %c0_30 = arith.constant 0 : index
    %32 = vector.load %arg5[%c1_28, %c0_29, %c0_30] : memref<9x16x32xf32, #tpu.memory_space<vmem>>, vector<1x16x32xf32>
    %33 = vector.shape_cast %32 : vector<1x16x32xf32> to vector<16x32xf32>
    %cst_31 = arith.constant dense<0.000000e+00> : vector<32x32xf32>
    %34 = tpu.matmul %31, %33, %cst_31 {dimension_numbers = #tpu.dot_dimension_numbers<[1], [0], [0], [1], [0, 0, 1, 1], [], []>} : vector<32x16xf32>, vector<16x32xf32>, vector<32x32xf32> -> vector<32x32xf32>
    %35 = arith.addf %28, %34 : vector<32x32xf32>
    %c2 = arith.constant 2 : index
    %c0_32 = arith.constant 0 : index
    %c0_33 = arith.constant 0 : index
    %36 = vector.load %arg30[%c2, %c0_32, %c0_33] : memref<9x32x72xf32, #tpu.memory_space<vmem>>, vector<1x32x72xf32>
    %37 = vector.shape_cast %36 : vector<1x32x72xf32> to vector<32x72xf32>
    %cst_34 = arith.constant dense<0.000000e+00> : vector<32x16xf32>
    %38 = tpu.matmul %37, %22, %cst_34 {dimension_numbers = #tpu.dot_dimension_numbers<[1], [0], [0], [1], [0, 0, 1, 1], [], []>} : vector<32x72xf32>, vector<72x16xf32>, vector<32x16xf32> -> vector<32x16xf32>
    %c2_35 = arith.constant 2 : index
    %c0_36 = arith.constant 0 : index
    %c0_37 = arith.constant 0 : index
    %39 = vector.load %arg5[%c2_35, %c0_36, %c0_37] : memref<9x16x32xf32, #tpu.memory_space<vmem>>, vector<1x16x32xf32>
    %40 = vector.shape_cast %39 : vector<1x16x32xf32> to vector<16x32xf32>
    %cst_38 = arith.constant dense<0.000000e+00> : vector<32x32xf32>
    %41 = tpu.matmul %38, %40, %cst_38 {dimension_numbers = #tpu.dot_dimension_numbers<[1], [0], [0], [1], [0, 0, 1, 1], [], []>} : vector<32x16xf32>, vector<16x32xf32>, vector<32x32xf32> -> vector<32x32xf32>
    %42 = arith.addf %35, %41 : vector<32x32xf32>
    %c3 = arith.constant 3 : index
    %c0_39 = arith.constant 0 : index
    %c0_40 = arith.constant 0 : index
    %43 = vector.load %arg30[%c3, %c0_39, %c0_40] : memref<9x32x72xf32, #tpu.memory_space<vmem>>, vector<1x32x72xf32>
    %44 = vector.shape_cast %43 : vector<1x32x72xf32> to vector<32x72xf32>
    %cst_41 = arith.constant dense<0.000000e+00> : vector<32x16xf32>
    %45 = tpu.matmul %44, %22, %cst_41 {dimension_numbers = #tpu.dot_dimension_numbers<[1], [0], [0], [1], [0, 0, 1, 1], [], []>} : vector<32x72xf32>, vector<72x16xf32>, vector<32x16xf32> -> vector<32x16xf32>
    %c3_42 = arith.constant 3 : index
    %c0_43 = arith.constant 0 : index
    %c0_44 = arith.constant 0 : index
    %46 = vector.load %arg5[%c3_42, %c0_43, %c0_44] : memref<9x16x32xf32, #tpu.memory_space<vmem>>, vector<1x16x32xf32>
    %47 = vector.shape_cast %46 : vector<1x16x32xf32> to vector<16x32xf32>
    %cst_45 = arith.constant dense<0.000000e+00> : vector<32x32xf32>
    %48 = tpu.matmul %45, %47, %cst_45 {dimension_numbers = #tpu.dot_dimension_numbers<[1], [0], [0], [1], [0, 0, 1, 1], [], []>} : vector<32x16xf32>, vector<16x32xf32>, vector<32x32xf32> -> vector<32x32xf32>
    %49 = arith.addf %42, %48 : vector<32x32xf32>
    %c4 = arith.constant 4 : index
    %c0_46 = arith.constant 0 : index
    %c0_47 = arith.constant 0 : index
    %50 = vector.load %arg30[%c4, %c0_46, %c0_47] : memref<9x32x72xf32, #tpu.memory_space<vmem>>, vector<1x32x72xf32>
    %51 = vector.shape_cast %50 : vector<1x32x72xf32> to vector<32x72xf32>
    %cst_48 = arith.constant dense<0.000000e+00> : vector<32x16xf32>
    %52 = tpu.matmul %51, %22, %cst_48 {dimension_numbers = #tpu.dot_dimension_numbers<[1], [0], [0], [1], [0, 0, 1, 1], [], []>} : vector<32x72xf32>, vector<72x16xf32>, vector<32x16xf32> -> vector<32x16xf32>
    %c4_49 = arith.constant 4 : index
    %c0_50 = arith.constant 0 : index
    %c0_51 = arith.constant 0 : index
    %53 = vector.load %arg5[%c4_49, %c0_50, %c0_51] : memref<9x16x32xf32, #tpu.memory_space<vmem>>, vector<1x16x32xf32>
    %54 = vector.shape_cast %53 : vector<1x16x32xf32> to vector<16x32xf32>
    %cst_52 = arith.constant dense<0.000000e+00> : vector<32x32xf32>
    %55 = tpu.matmul %52, %54, %cst_52 {dimension_numbers = #tpu.dot_dimension_numbers<[1], [0], [0], [1], [0, 0, 1, 1], [], []>} : vector<32x16xf32>, vector<16x32xf32>, vector<32x32xf32> -> vector<32x32xf32>
    %56 = arith.addf %49, %55 : vector<32x32xf32>
    %c5 = arith.constant 5 : index
    %c0_53 = arith.constant 0 : index
    %c0_54 = arith.constant 0 : index
    %57 = vector.load %arg30[%c5, %c0_53, %c0_54] : memref<9x32x72xf32, #tpu.memory_space<vmem>>, vector<1x32x72xf32>
    %58 = vector.shape_cast %57 : vector<1x32x72xf32> to vector<32x72xf32>
    %cst_55 = arith.constant dense<0.000000e+00> : vector<32x16xf32>
    %59 = tpu.matmul %58, %22, %cst_55 {dimension_numbers = #tpu.dot_dimension_numbers<[1], [0], [0], [1], [0, 0, 1, 1], [], []>} : vector<32x72xf32>, vector<72x16xf32>, vector<32x16xf32> -> vector<32x16xf32>
    %c5_56 = arith.constant 5 : index
    %c0_57 = arith.constant 0 : index
    %c0_58 = arith.constant 0 : index
    %60 = vector.load %arg5[%c5_56, %c0_57, %c0_58] : memref<9x16x32xf32, #tpu.memory_space<vmem>>, vector<1x16x32xf32>
    %61 = vector.shape_cast %60 : vector<1x16x32xf32> to vector<16x32xf32>
    %cst_59 = arith.constant dense<0.000000e+00> : vector<32x32xf32>
    %62 = tpu.matmul %59, %61, %cst_59 {dimension_numbers = #tpu.dot_dimension_numbers<[1], [0], [0], [1], [0, 0, 1, 1], [], []>} : vector<32x16xf32>, vector<16x32xf32>, vector<32x32xf32> -> vector<32x32xf32>
    %63 = arith.addf %56, %62 : vector<32x32xf32>
    %c6 = arith.constant 6 : index
    %c0_60 = arith.constant 0 : index
    %c0_61 = arith.constant 0 : index
    %64 = vector.load %arg30[%c6, %c0_60, %c0_61] : memref<9x32x72xf32, #tpu.memory_space<vmem>>, vector<1x32x72xf32>
    %65 = vector.shape_cast %64 : vector<1x32x72xf32> to vector<32x72xf32>
    %cst_62 = arith.constant dense<0.000000e+00> : vector<32x16xf32>
    %66 = tpu.matmul %65, %22, %cst_62 {dimension_numbers = #tpu.dot_dimension_numbers<[1], [0], [0], [1], [0, 0, 1, 1], [], []>} : vector<32x72xf32>, vector<72x16xf32>, vector<32x16xf32> -> vector<32x16xf32>
    %c6_63 = arith.constant 6 : index
    %c0_64 = arith.constant 0 : index
    %c0_65 = arith.constant 0 : index
    %67 = vector.load %arg5[%c6_63, %c0_64, %c0_65] : memref<9x16x32xf32, #tpu.memory_space<vmem>>, vector<1x16x32xf32>
    %68 = vector.shape_cast %67 : vector<1x16x32xf32> to vector<16x32xf32>
    %cst_66 = arith.constant dense<0.000000e+00> : vector<32x32xf32>
    %69 = tpu.matmul %66, %68, %cst_66 {dimension_numbers = #tpu.dot_dimension_numbers<[1], [0], [0], [1], [0, 0, 1, 1], [], []>} : vector<32x16xf32>, vector<16x32xf32>, vector<32x32xf32> -> vector<32x32xf32>
    %70 = arith.addf %63, %69 : vector<32x32xf32>
    %c7 = arith.constant 7 : index
    %c0_67 = arith.constant 0 : index
    %c0_68 = arith.constant 0 : index
    %71 = vector.load %arg30[%c7, %c0_67, %c0_68] : memref<9x32x72xf32, #tpu.memory_space<vmem>>, vector<1x32x72xf32>
    %72 = vector.shape_cast %71 : vector<1x32x72xf32> to vector<32x72xf32>
    %cst_69 = arith.constant dense<0.000000e+00> : vector<32x16xf32>
    %73 = tpu.matmul %72, %22, %cst_69 {dimension_numbers = #tpu.dot_dimension_numbers<[1], [0], [0], [1], [0, 0, 1, 1], [], []>} : vector<32x72xf32>, vector<72x16xf32>, vector<32x16xf32> -> vector<32x16xf32>
    %c7_70 = arith.constant 7 : index
    %c0_71 = arith.constant 0 : index
    %c0_72 = arith.constant 0 : index
    %74 = vector.load %arg5[%c7_70, %c0_71, %c0_72] : memref<9x16x32xf32, #tpu.memory_space<vmem>>, vector<1x16x32xf32>
    %75 = vector.shape_cast %74 : vector<1x16x32xf32> to vector<16x32xf32>
    %cst_73 = arith.constant dense<0.000000e+00> : vector<32x32xf32>
    %76 = tpu.matmul %73, %75, %cst_73 {dimension_numbers = #tpu.dot_dimension_numbers<[1], [0], [0], [1], [0, 0, 1, 1], [], []>} : vector<32x16xf32>, vector<16x32xf32>, vector<32x32xf32> -> vector<32x32xf32>
    %77 = arith.addf %70, %76 : vector<32x32xf32>
    %c8 = arith.constant 8 : index
    %c0_74 = arith.constant 0 : index
    %c0_75 = arith.constant 0 : index
    %78 = vector.load %arg30[%c8, %c0_74, %c0_75] : memref<9x32x72xf32, #tpu.memory_space<vmem>>, vector<1x32x72xf32>
    %79 = vector.shape_cast %78 : vector<1x32x72xf32> to vector<32x72xf32>
    %cst_76 = arith.constant dense<0.000000e+00> : vector<32x16xf32>
    %80 = tpu.matmul %79, %22, %cst_76 {dimension_numbers = #tpu.dot_dimension_numbers<[1], [0], [0], [1], [0, 0, 1, 1], [], []>} : vector<32x72xf32>, vector<72x16xf32>, vector<32x16xf32> -> vector<32x16xf32>
    %c8_77 = arith.constant 8 : index
    %c0_78 = arith.constant 0 : index
    %c0_79 = arith.constant 0 : index
    %81 = vector.load %arg5[%c8_77, %c0_78, %c0_79] : memref<9x16x32xf32, #tpu.memory_space<vmem>>, vector<1x16x32xf32>
    %82 = vector.shape_cast %81 : vector<1x16x32xf32> to vector<16x32xf32>
    %cst_80 = arith.constant dense<0.000000e+00> : vector<32x32xf32>
    %83 = tpu.matmul %80, %82, %cst_80 {dimension_numbers = #tpu.dot_dimension_numbers<[1], [0], [0], [1], [0, 0, 1, 1], [], []>} : vector<32x16xf32>, vector<16x32xf32>, vector<32x32xf32> -> vector<32x32xf32>
    %84 = arith.addf %77, %83 : vector<32x32xf32>
    %85 = vector.broadcast %3 : vector<1x32xf32> to vector<32x32xf32>
    %86 = arith.addf %84, %85 : vector<32x32xf32>
    %87 = vector.extract_strided_slice %86 {offsets = [0, 0], sizes = [8, 32], strides = [1, 1]} : vector<32x32xf32> to vector<8x32xf32>
    %88 = vector.extract_strided_slice %86 {offsets = [8, 0], sizes = [8, 32], strides = [1, 1]} : vector<32x32xf32> to vector<8x32xf32>
    %89 = arith.maximumf %87, %88 : vector<8x32xf32>
    %90 = vector.extract_strided_slice %86 {offsets = [16, 0], sizes = [8, 32], strides = [1, 1]} : vector<32x32xf32> to vector<8x32xf32>
    %91 = vector.extract_strided_slice %86 {offsets = [24, 0], sizes = [8, 32], strides = [1, 1]} : vector<32x32xf32> to vector<8x32xf32>
    %92 = arith.maximumf %90, %91 : vector<8x32xf32>
    %93 = arith.maximumf %89, %92 : vector<8x32xf32>
    %cst_81 = arith.constant 0.000000e+00 : f32
    %94 = vector.broadcast %cst_81 : f32 to vector<8x32xf32>
    %95 = arith.cmpf oge, %93, %94 : vector<8x32xf32>
    %cst_82 = arith.constant 0.00999999977 : f32
    %96 = vector.broadcast %cst_82 : f32 to vector<8x32xf32>
    %97 = arith.mulf %96, %93 : vector<8x32xf32>
    %98 = arith.select %95, %93, %97 : vector<8x32xi1>, vector<8x32xf32>
    %c0_83 = arith.constant 0 : index
    %c0_84 = arith.constant 0 : index
    %c0_85 = arith.constant 0 : index
    %99 = vector.load %arg31[%c0_83, %c0_84, %c0_85] : memref<4x2x8xf32, #tpu.memory_space<vmem>>, vector<1x2x8xf32>
    %100 = vector.shape_cast %99 : vector<1x2x8xf32> to vector<2x8xf32>
    %cst_86 = arith.constant dense<0.000000e+00> : vector<2x32xf32>
    %101 = tpu.matmul %100, %98, %cst_86 {dimension_numbers = #tpu.dot_dimension_numbers<[1], [0], [0], [1], [0, 0, 1, 1], [], []>} : vector<2x8xf32>, vector<8x32xf32>, vector<2x32xf32> -> vector<2x32xf32>
    %c0_87 = arith.constant 0 : index
    %c0_88 = arith.constant 0 : index
    %c0_89 = arith.constant 0 : index
    %102 = vector.load %arg32[%c0_87, %c0_88, %c0_89] : memref<4x32x128xf32, #tpu.memory_space<vmem>>, vector<1x32x128xf32>
    %103 = vector.shape_cast %102 : vector<1x32x128xf32> to vector<32x128xf32>
    %cst_90 = arith.constant dense<0.000000e+00> : vector<2x128xf32>
    %104 = tpu.matmul %101, %103, %cst_90 {dimension_numbers = #tpu.dot_dimension_numbers<[1], [0], [0], [1], [0, 0, 1, 1], [], []>} : vector<2x32xf32>, vector<32x128xf32>, vector<2x128xf32> -> vector<2x128xf32>
    %c1_91 = arith.constant 1 : index
    %c0_92 = arith.constant 0 : index
    %c0_93 = arith.constant 0 : index
    %105 = vector.load %arg31[%c1_91, %c0_92, %c0_93] : memref<4x2x8xf32, #tpu.memory_space<vmem>>, vector<1x2x8xf32>
    %106 = vector.shape_cast %105 : vector<1x2x8xf32> to vector<2x8xf32>
    %cst_94 = arith.constant dense<0.000000e+00> : vector<2x32xf32>
    %107 = tpu.matmul %106, %98, %cst_94 {dimension_numbers = #tpu.dot_dimension_numbers<[1], [0], [0], [1], [0, 0, 1, 1], [], []>} : vector<2x8xf32>, vector<8x32xf32>, vector<2x32xf32> -> vector<2x32xf32>
    %c1_95 = arith.constant 1 : index
    %c0_96 = arith.constant 0 : index
    %c0_97 = arith.constant 0 : index
    %108 = vector.load %arg32[%c1_95, %c0_96, %c0_97] : memref<4x32x128xf32, #tpu.memory_space<vmem>>, vector<1x32x128xf32>
    %109 = vector.shape_cast %108 : vector<1x32x128xf32> to vector<32x128xf32>
    %cst_98 = arith.constant dense<0.000000e+00> : vector<2x128xf32>
    %110 = tpu.matmul %107, %109, %cst_98 {dimension_numbers = #tpu.dot_dimension_numbers<[1], [0], [0], [1], [0, 0, 1, 1], [], []>} : vector<2x32xf32>, vector<32x128xf32>, vector<2x128xf32> -> vector<2x128xf32>
    %111 = arith.addf %104, %110 : vector<2x128xf32>
    %c2_99 = arith.constant 2 : index
    %c0_100 = arith.constant 0 : index
    %c0_101 = arith.constant 0 : index
    %112 = vector.load %arg31[%c2_99, %c0_100, %c0_101] : memref<4x2x8xf32, #tpu.memory_space<vmem>>, vector<1x2x8xf32>
    %113 = vector.shape_cast %112 : vector<1x2x8xf32> to vector<2x8xf32>
    %cst_102 = arith.constant dense<0.000000e+00> : vector<2x32xf32>
    %114 = tpu.matmul %113, %98, %cst_102 {dimension_numbers = #tpu.dot_dimension_numbers<[1], [0], [0], [1], [0, 0, 1, 1], [], []>} : vector<2x8xf32>, vector<8x32xf32>, vector<2x32xf32> -> vector<2x32xf32>
    %c2_103 = arith.constant 2 : index
    %c0_104 = arith.constant 0 : index
    %c0_105 = arith.constant 0 : index
    %115 = vector.load %arg32[%c2_103, %c0_104, %c0_105] : memref<4x32x128xf32, #tpu.memory_space<vmem>>, vector<1x32x128xf32>
    %116 = vector.shape_cast %115 : vector<1x32x128xf32> to vector<32x128xf32>
    %cst_106 = arith.constant dense<0.000000e+00> : vector<2x128xf32>
    %117 = tpu.matmul %114, %116, %cst_106 {dimension_numbers = #tpu.dot_dimension_numbers<[1], [0], [0], [1], [0, 0, 1, 1], [], []>} : vector<2x32xf32>, vector<32x128xf32>, vector<2x128xf32> -> vector<2x128xf32>
    %118 = arith.addf %111, %117 : vector<2x128xf32>
    %c3_107 = arith.constant 3 : index
    %c0_108 = arith.constant 0 : index
    %c0_109 = arith.constant 0 : index
    %119 = vector.load %arg31[%c3_107, %c0_108, %c0_109] : memref<4x2x8xf32, #tpu.memory_space<vmem>>, vector<1x2x8xf32>
    %120 = vector.shape_cast %119 : vector<1x2x8xf32> to vector<2x8xf32>
    %cst_110 = arith.constant dense<0.000000e+00> : vector<2x32xf32>
    %121 = tpu.matmul %120, %98, %cst_110 {dimension_numbers = #tpu.dot_dimension_numbers<[1], [0], [0], [1], [0, 0, 1, 1], [], []>} : vector<2x8xf32>, vector<8x32xf32>, vector<2x32xf32> -> vector<2x32xf32>
    %c3_111 = arith.constant 3 : index
    %c0_112 = arith.constant 0 : index
    %c0_113 = arith.constant 0 : index
    %122 = vector.load %arg32[%c3_111, %c0_112, %c0_113] : memref<4x32x128xf32, #tpu.memory_space<vmem>>, vector<1x32x128xf32>
    %123 = vector.shape_cast %122 : vector<1x32x128xf32> to vector<32x128xf32>
    %cst_114 = arith.constant dense<0.000000e+00> : vector<2x128xf32>
    %124 = tpu.matmul %121, %123, %cst_114 {dimension_numbers = #tpu.dot_dimension_numbers<[1], [0], [0], [1], [0, 0, 1, 1], [], []>} : vector<2x32xf32>, vector<32x128xf32>, vector<2x128xf32> -> vector<2x128xf32>
    %125 = arith.addf %118, %124 : vector<2x128xf32>
    %cst_115 = arith.constant dense<0.000000e+00> : vector<2x64xf32>
    %126 = tpu.matmul %125, %4, %cst_115 {dimension_numbers = #tpu.dot_dimension_numbers<[1], [0], [0], [1], [0, 0, 1, 1], [], []>} : vector<2x128xf32>, vector<128x64xf32>, vector<2x64xf32> -> vector<2x64xf32>
    %127 = vector.broadcast %5 : vector<1x64xf32> to vector<2x64xf32>
    %128 = arith.addf %126, %127 : vector<2x64xf32>
    %cst_116 = arith.constant 0.000000e+00 : f32
    %129 = vector.broadcast %cst_116 : f32 to vector<2x64xf32>
    %130 = arith.cmpf oge, %128, %129 : vector<2x64xf32>
    %cst_117 = arith.constant 0.00999999977 : f32
    %131 = vector.broadcast %cst_117 : f32 to vector<2x64xf32>
    %132 = arith.mulf %131, %128 : vector<2x64xf32>
    %133 = arith.select %130, %128, %132 : vector<2x64xi1>, vector<2x64xf32>
    %cst_118 = arith.constant dense<0.000000e+00> : vector<2x10xf32>
    %134 = tpu.matmul %133, %6, %cst_118 {dimension_numbers = #tpu.dot_dimension_numbers<[1], [0], [0], [1], [0, 0, 1, 1], [], []>} : vector<2x64xf32>, vector<64x10xf32>, vector<2x10xf32> -> vector<2x10xf32>
    %135 = vector.broadcast %7 : vector<1x10xf32> to vector<2x10xf32>
    %136 = arith.addf %134, %135 : vector<2x10xf32>
    %c0_119 = arith.constant 0 : index
    %c0_120 = arith.constant 0 : index
    %137 = vector.load %arg2[%c0_119, %c0_120] : memref<288x9xf32, #tpu.memory_space<vmem>>, vector<288x9xf32>
    %c0_121 = arith.constant 0 : index
    %c0_122 = arith.constant 0 : index
    %138 = vector.load %arg7[%c0_121, %c0_122] : memref<9x16xf32, #tpu.memory_space<vmem>>, vector<9x16xf32>
    %c0_123 = arith.constant 0 : index
    %c0_124 = arith.constant 0 : index
    %139 = vector.load %arg8[%c0_123, %c0_124] : memref<1x16xf32, #tpu.memory_space<vmem>>, vector<1x16xf32>
    %c0_125 = arith.constant 0 : index
    %c0_126 = arith.constant 0 : index
    %140 = vector.load %arg10[%c0_125, %c0_126] : memref<1x32xf32, #tpu.memory_space<vmem>>, vector<1x32xf32>
    %c0_127 = arith.constant 0 : index
    %c0_128 = arith.constant 0 : index
    %141 = vector.load %arg15[%c0_127, %c0_128] : memref<128x64xf32, #tpu.memory_space<vmem>>, vector<128x64xf32>
    %c0_129 = arith.constant 0 : index
    %c0_130 = arith.constant 0 : index
    %142 = vector.load %arg16[%c0_129, %c0_130] : memref<1x64xf32, #tpu.memory_space<vmem>>, vector<1x64xf32>
    %c0_131 = arith.constant 0 : index
    %c0_132 = arith.constant 0 : index
    %143 = vector.load %arg17[%c0_131, %c0_132] : memref<64x10xf32, #tpu.memory_space<vmem>>, vector<64x10xf32>
    %c0_133 = arith.constant 0 : index
    %c0_134 = arith.constant 0 : index
    %144 = vector.load %arg18[%c0_133, %c0_134] : memref<1x10xf32, #tpu.memory_space<vmem>>, vector<1x10xf32>
    %cst_135 = arith.constant dense<0.000000e+00> : vector<288x16xf32>
    %145 = tpu.matmul %137, %138, %cst_135 {dimension_numbers = #tpu.dot_dimension_numbers<[1], [0], [0], [1], [0, 0, 1, 1], [], []>} : vector<288x9xf32>, vector<9x16xf32>, vector<288x16xf32> -> vector<288x16xf32>
    %146 = vector.broadcast %139 : vector<1x16xf32> to vector<288x16xf32>
    %147 = arith.addf %145, %146 : vector<288x16xf32>
    %148 = vector.extract_strided_slice %147 {offsets = [0, 0], sizes = [72, 16], strides = [1, 1]} : vector<288x16xf32> to vector<72x16xf32>
    %149 = vector.extract_strided_slice %147 {offsets = [72, 0], sizes = [72, 16], strides = [1, 1]} : vector<288x16xf32> to vector<72x16xf32>
    %150 = arith.maximumf %148, %149 : vector<72x16xf32>
    %151 = vector.extract_strided_slice %147 {offsets = [144, 0], sizes = [72, 16], strides = [1, 1]} : vector<288x16xf32> to vector<72x16xf32>
    %152 = vector.extract_strided_slice %147 {offsets = [216, 0], sizes = [72, 16], strides = [1, 1]} : vector<288x16xf32> to vector<72x16xf32>
    %153 = arith.maximumf %151, %152 : vector<72x16xf32>
    %154 = arith.maximumf %150, %153 : vector<72x16xf32>
    %cst_136 = arith.constant 0.000000e+00 : f32
    %155 = vector.broadcast %cst_136 : f32 to vector<72x16xf32>
    %156 = arith.cmpf oge, %154, %155 : vector<72x16xf32>
    %cst_137 = arith.constant 0.00999999977 : f32
    %157 = vector.broadcast %cst_137 : f32 to vector<72x16xf32>
    %158 = arith.mulf %157, %154 : vector<72x16xf32>
    %159 = arith.select %156, %154, %158 : vector<72x16xi1>, vector<72x16xf32>
    %c0_138 = arith.constant 0 : index
    %c0_139 = arith.constant 0 : index
    %c0_140 = arith.constant 0 : index
    %160 = vector.load %arg30[%c0_138, %c0_139, %c0_140] : memref<9x32x72xf32, #tpu.memory_space<vmem>>, vector<1x32x72xf32>
    %161 = vector.shape_cast %160 : vector<1x32x72xf32> to vector<32x72xf32>
    %cst_141 = arith.constant dense<0.000000e+00> : vector<32x16xf32>
    %162 = tpu.matmul %161, %159, %cst_141 {dimension_numbers = #tpu.dot_dimension_numbers<[1], [0], [0], [1], [0, 0, 1, 1], [], []>} : vector<32x72xf32>, vector<72x16xf32>, vector<32x16xf32> -> vector<32x16xf32>
    %c0_142 = arith.constant 0 : index
    %c0_143 = arith.constant 0 : index
    %c0_144 = arith.constant 0 : index
    %163 = vector.load %arg9[%c0_142, %c0_143, %c0_144] : memref<9x16x32xf32, #tpu.memory_space<vmem>>, vector<1x16x32xf32>
    %164 = vector.shape_cast %163 : vector<1x16x32xf32> to vector<16x32xf32>
    %cst_145 = arith.constant dense<0.000000e+00> : vector<32x32xf32>
    %165 = tpu.matmul %162, %164, %cst_145 {dimension_numbers = #tpu.dot_dimension_numbers<[1], [0], [0], [1], [0, 0, 1, 1], [], []>} : vector<32x16xf32>, vector<16x32xf32>, vector<32x32xf32> -> vector<32x32xf32>
    %c1_146 = arith.constant 1 : index
    %c0_147 = arith.constant 0 : index
    %c0_148 = arith.constant 0 : index
    %166 = vector.load %arg30[%c1_146, %c0_147, %c0_148] : memref<9x32x72xf32, #tpu.memory_space<vmem>>, vector<1x32x72xf32>
    %167 = vector.shape_cast %166 : vector<1x32x72xf32> to vector<32x72xf32>
    %cst_149 = arith.constant dense<0.000000e+00> : vector<32x16xf32>
    %168 = tpu.matmul %167, %159, %cst_149 {dimension_numbers = #tpu.dot_dimension_numbers<[1], [0], [0], [1], [0, 0, 1, 1], [], []>} : vector<32x72xf32>, vector<72x16xf32>, vector<32x16xf32> -> vector<32x16xf32>
    %c1_150 = arith.constant 1 : index
    %c0_151 = arith.constant 0 : index
    %c0_152 = arith.constant 0 : index
    %169 = vector.load %arg9[%c1_150, %c0_151, %c0_152] : memref<9x16x32xf32, #tpu.memory_space<vmem>>, vector<1x16x32xf32>
    %170 = vector.shape_cast %169 : vector<1x16x32xf32> to vector<16x32xf32>
    %cst_153 = arith.constant dense<0.000000e+00> : vector<32x32xf32>
    %171 = tpu.matmul %168, %170, %cst_153 {dimension_numbers = #tpu.dot_dimension_numbers<[1], [0], [0], [1], [0, 0, 1, 1], [], []>} : vector<32x16xf32>, vector<16x32xf32>, vector<32x32xf32> -> vector<32x32xf32>
    %172 = arith.addf %165, %171 : vector<32x32xf32>
    %c2_154 = arith.constant 2 : index
    %c0_155 = arith.constant 0 : index
    %c0_156 = arith.constant 0 : index
    %173 = vector.load %arg30[%c2_154, %c0_155, %c0_156] : memref<9x32x72xf32, #tpu.memory_space<vmem>>, vector<1x32x72xf32>
    %174 = vector.shape_cast %173 : vector<1x32x72xf32> to vector<32x72xf32>
    %cst_157 = arith.constant dense<0.000000e+00> : vector<32x16xf32>
    %175 = tpu.matmul %174, %159, %cst_157 {dimension_numbers = #tpu.dot_dimension_numbers<[1], [0], [0], [1], [0, 0, 1, 1], [], []>} : vector<32x72xf32>, vector<72x16xf32>, vector<32x16xf32> -> vector<32x16xf32>
    %c2_158 = arith.constant 2 : index
    %c0_159 = arith.constant 0 : index
    %c0_160 = arith.constant 0 : index
    %176 = vector.load %arg9[%c2_158, %c0_159, %c0_160] : memref<9x16x32xf32, #tpu.memory_space<vmem>>, vector<1x16x32xf32>
    %177 = vector.shape_cast %176 : vector<1x16x32xf32> to vector<16x32xf32>
    %cst_161 = arith.constant dense<0.000000e+00> : vector<32x32xf32>
    %178 = tpu.matmul %175, %177, %cst_161 {dimension_numbers = #tpu.dot_dimension_numbers<[1], [0], [0], [1], [0, 0, 1, 1], [], []>} : vector<32x16xf32>, vector<16x32xf32>, vector<32x32xf32> -> vector<32x32xf32>
    %179 = arith.addf %172, %178 : vector<32x32xf32>
    %c3_162 = arith.constant 3 : index
    %c0_163 = arith.constant 0 : index
    %c0_164 = arith.constant 0 : index
    %180 = vector.load %arg30[%c3_162, %c0_163, %c0_164] : memref<9x32x72xf32, #tpu.memory_space<vmem>>, vector<1x32x72xf32>
    %181 = vector.shape_cast %180 : vector<1x32x72xf32> to vector<32x72xf32>
    %cst_165 = arith.constant dense<0.000000e+00> : vector<32x16xf32>
    %182 = tpu.matmul %181, %159, %cst_165 {dimension_numbers = #tpu.dot_dimension_numbers<[1], [0], [0], [1], [0, 0, 1, 1], [], []>} : vector<32x72xf32>, vector<72x16xf32>, vector<32x16xf32> -> vector<32x16xf32>
    %c3_166 = arith.constant 3 : index
    %c0_167 = arith.constant 0 : index
    %c0_168 = arith.constant 0 : index
    %183 = vector.load %arg9[%c3_166, %c0_167, %c0_168] : memref<9x16x32xf32, #tpu.memory_space<vmem>>, vector<1x16x32xf32>
    %184 = vector.shape_cast %183 : vector<1x16x32xf32> to vector<16x32xf32>
    %cst_169 = arith.constant dense<0.000000e+00> : vector<32x32xf32>
    %185 = tpu.matmul %182, %184, %cst_169 {dimension_numbers = #tpu.dot_dimension_numbers<[1], [0], [0], [1], [0, 0, 1, 1], [], []>} : vector<32x16xf32>, vector<16x32xf32>, vector<32x32xf32> -> vector<32x32xf32>
    %186 = arith.addf %179, %185 : vector<32x32xf32>
    %c4_170 = arith.constant 4 : index
    %c0_171 = arith.constant 0 : index
    %c0_172 = arith.constant 0 : index
    %187 = vector.load %arg30[%c4_170, %c0_171, %c0_172] : memref<9x32x72xf32, #tpu.memory_space<vmem>>, vector<1x32x72xf32>
    %188 = vector.shape_cast %187 : vector<1x32x72xf32> to vector<32x72xf32>
    %cst_173 = arith.constant dense<0.000000e+00> : vector<32x16xf32>
    %189 = tpu.matmul %188, %159, %cst_173 {dimension_numbers = #tpu.dot_dimension_numbers<[1], [0], [0], [1], [0, 0, 1, 1], [], []>} : vector<32x72xf32>, vector<72x16xf32>, vector<32x16xf32> -> vector<32x16xf32>
    %c4_174 = arith.constant 4 : index
    %c0_175 = arith.constant 0 : index
    %c0_176 = arith.constant 0 : index
    %190 = vector.load %arg9[%c4_174, %c0_175, %c0_176] : memref<9x16x32xf32, #tpu.memory_space<vmem>>, vector<1x16x32xf32>
    %191 = vector.shape_cast %190 : vector<1x16x32xf32> to vector<16x32xf32>
    %cst_177 = arith.constant dense<0.000000e+00> : vector<32x32xf32>
    %192 = tpu.matmul %189, %191, %cst_177 {dimension_numbers = #tpu.dot_dimension_numbers<[1], [0], [0], [1], [0, 0, 1, 1], [], []>} : vector<32x16xf32>, vector<16x32xf32>, vector<32x32xf32> -> vector<32x32xf32>
    %193 = arith.addf %186, %192 : vector<32x32xf32>
    %c5_178 = arith.constant 5 : index
    %c0_179 = arith.constant 0 : index
    %c0_180 = arith.constant 0 : index
    %194 = vector.load %arg30[%c5_178, %c0_179, %c0_180] : memref<9x32x72xf32, #tpu.memory_space<vmem>>, vector<1x32x72xf32>
    %195 = vector.shape_cast %194 : vector<1x32x72xf32> to vector<32x72xf32>
    %cst_181 = arith.constant dense<0.000000e+00> : vector<32x16xf32>
    %196 = tpu.matmul %195, %159, %cst_181 {dimension_numbers = #tpu.dot_dimension_numbers<[1], [0], [0], [1], [0, 0, 1, 1], [], []>} : vector<32x72xf32>, vector<72x16xf32>, vector<32x16xf32> -> vector<32x16xf32>
    %c5_182 = arith.constant 5 : index
    %c0_183 = arith.constant 0 : index
    %c0_184 = arith.constant 0 : index
    %197 = vector.load %arg9[%c5_182, %c0_183, %c0_184] : memref<9x16x32xf32, #tpu.memory_space<vmem>>, vector<1x16x32xf32>
    %198 = vector.shape_cast %197 : vector<1x16x32xf32> to vector<16x32xf32>
    %cst_185 = arith.constant dense<0.000000e+00> : vector<32x32xf32>
    %199 = tpu.matmul %196, %198, %cst_185 {dimension_numbers = #tpu.dot_dimension_numbers<[1], [0], [0], [1], [0, 0, 1, 1], [], []>} : vector<32x16xf32>, vector<16x32xf32>, vector<32x32xf32> -> vector<32x32xf32>
    %200 = arith.addf %193, %199 : vector<32x32xf32>
    %c6_186 = arith.constant 6 : index
    %c0_187 = arith.constant 0 : index
    %c0_188 = arith.constant 0 : index
    %201 = vector.load %arg30[%c6_186, %c0_187, %c0_188] : memref<9x32x72xf32, #tpu.memory_space<vmem>>, vector<1x32x72xf32>
    %202 = vector.shape_cast %201 : vector<1x32x72xf32> to vector<32x72xf32>
    %cst_189 = arith.constant dense<0.000000e+00> : vector<32x16xf32>
    %203 = tpu.matmul %202, %159, %cst_189 {dimension_numbers = #tpu.dot_dimension_numbers<[1], [0], [0], [1], [0, 0, 1, 1], [], []>} : vector<32x72xf32>, vector<72x16xf32>, vector<32x16xf32> -> vector<32x16xf32>
    %c6_190 = arith.constant 6 : index
    %c0_191 = arith.constant 0 : index
    %c0_192 = arith.constant 0 : index
    %204 = vector.load %arg9[%c6_190, %c0_191, %c0_192] : memref<9x16x32xf32, #tpu.memory_space<vmem>>, vector<1x16x32xf32>
    %205 = vector.shape_cast %204 : vector<1x16x32xf32> to vector<16x32xf32>
    %cst_193 = arith.constant dense<0.000000e+00> : vector<32x32xf32>
    %206 = tpu.matmul %203, %205, %cst_193 {dimension_numbers = #tpu.dot_dimension_numbers<[1], [0], [0], [1], [0, 0, 1, 1], [], []>} : vector<32x16xf32>, vector<16x32xf32>, vector<32x32xf32> -> vector<32x32xf32>
    %207 = arith.addf %200, %206 : vector<32x32xf32>
    %c7_194 = arith.constant 7 : index
    %c0_195 = arith.constant 0 : index
    %c0_196 = arith.constant 0 : index
    %208 = vector.load %arg30[%c7_194, %c0_195, %c0_196] : memref<9x32x72xf32, #tpu.memory_space<vmem>>, vector<1x32x72xf32>
    %209 = vector.shape_cast %208 : vector<1x32x72xf32> to vector<32x72xf32>
    %cst_197 = arith.constant dense<0.000000e+00> : vector<32x16xf32>
    %210 = tpu.matmul %209, %159, %cst_197 {dimension_numbers = #tpu.dot_dimension_numbers<[1], [0], [0], [1], [0, 0, 1, 1], [], []>} : vector<32x72xf32>, vector<72x16xf32>, vector<32x16xf32> -> vector<32x16xf32>
    %c7_198 = arith.constant 7 : index
    %c0_199 = arith.constant 0 : index
    %c0_200 = arith.constant 0 : index
    %211 = vector.load %arg9[%c7_198, %c0_199, %c0_200] : memref<9x16x32xf32, #tpu.memory_space<vmem>>, vector<1x16x32xf32>
    %212 = vector.shape_cast %211 : vector<1x16x32xf32> to vector<16x32xf32>
    %cst_201 = arith.constant dense<0.000000e+00> : vector<32x32xf32>
    %213 = tpu.matmul %210, %212, %cst_201 {dimension_numbers = #tpu.dot_dimension_numbers<[1], [0], [0], [1], [0, 0, 1, 1], [], []>} : vector<32x16xf32>, vector<16x32xf32>, vector<32x32xf32> -> vector<32x32xf32>
    %214 = arith.addf %207, %213 : vector<32x32xf32>
    %c8_202 = arith.constant 8 : index
    %c0_203 = arith.constant 0 : index
    %c0_204 = arith.constant 0 : index
    %215 = vector.load %arg30[%c8_202, %c0_203, %c0_204] : memref<9x32x72xf32, #tpu.memory_space<vmem>>, vector<1x32x72xf32>
    %216 = vector.shape_cast %215 : vector<1x32x72xf32> to vector<32x72xf32>
    %cst_205 = arith.constant dense<0.000000e+00> : vector<32x16xf32>
    %217 = tpu.matmul %216, %159, %cst_205 {dimension_numbers = #tpu.dot_dimension_numbers<[1], [0], [0], [1], [0, 0, 1, 1], [], []>} : vector<32x72xf32>, vector<72x16xf32>, vector<32x16xf32> -> vector<32x16xf32>
    %c8_206 = arith.constant 8 : index
    %c0_207 = arith.constant 0 : index
    %c0_208 = arith.constant 0 : index
    %218 = vector.load %arg9[%c8_206, %c0_207, %c0_208] : memref<9x16x32xf32, #tpu.memory_space<vmem>>, vector<1x16x32xf32>
    %219 = vector.shape_cast %218 : vector<1x16x32xf32> to vector<16x32xf32>
    %cst_209 = arith.constant dense<0.000000e+00> : vector<32x32xf32>
    %220 = tpu.matmul %217, %219, %cst_209 {dimension_numbers = #tpu.dot_dimension_numbers<[1], [0], [0], [1], [0, 0, 1, 1], [], []>} : vector<32x16xf32>, vector<16x32xf32>, vector<32x32xf32> -> vector<32x32xf32>
    %221 = arith.addf %214, %220 : vector<32x32xf32>
    %222 = vector.broadcast %140 : vector<1x32xf32> to vector<32x32xf32>
    %223 = arith.addf %221, %222 : vector<32x32xf32>
    %224 = vector.extract_strided_slice %223 {offsets = [0, 0], sizes = [8, 32], strides = [1, 1]} : vector<32x32xf32> to vector<8x32xf32>
    %225 = vector.extract_strided_slice %223 {offsets = [8, 0], sizes = [8, 32], strides = [1, 1]} : vector<32x32xf32> to vector<8x32xf32>
    %226 = arith.maximumf %224, %225 : vector<8x32xf32>
    %227 = vector.extract_strided_slice %223 {offsets = [16, 0], sizes = [8, 32], strides = [1, 1]} : vector<32x32xf32> to vector<8x32xf32>
    %228 = vector.extract_strided_slice %223 {offsets = [24, 0], sizes = [8, 32], strides = [1, 1]} : vector<32x32xf32> to vector<8x32xf32>
    %229 = arith.maximumf %227, %228 : vector<8x32xf32>
    %230 = arith.maximumf %226, %229 : vector<8x32xf32>
    %cst_210 = arith.constant 0.000000e+00 : f32
    %231 = vector.broadcast %cst_210 : f32 to vector<8x32xf32>
    %232 = arith.cmpf oge, %230, %231 : vector<8x32xf32>
    %cst_211 = arith.constant 0.00999999977 : f32
    %233 = vector.broadcast %cst_211 : f32 to vector<8x32xf32>
    %234 = arith.mulf %233, %230 : vector<8x32xf32>
    %235 = arith.select %232, %230, %234 : vector<8x32xi1>, vector<8x32xf32>
    %c0_212 = arith.constant 0 : index
    %c0_213 = arith.constant 0 : index
    %c0_214 = arith.constant 0 : index
    %236 = vector.load %arg31[%c0_212, %c0_213, %c0_214] : memref<4x2x8xf32, #tpu.memory_space<vmem>>, vector<1x2x8xf32>
    %237 = vector.shape_cast %236 : vector<1x2x8xf32> to vector<2x8xf32>
    %cst_215 = arith.constant dense<0.000000e+00> : vector<2x32xf32>
    %238 = tpu.matmul %237, %235, %cst_215 {dimension_numbers = #tpu.dot_dimension_numbers<[1], [0], [0], [1], [0, 0, 1, 1], [], []>} : vector<2x8xf32>, vector<8x32xf32>, vector<2x32xf32> -> vector<2x32xf32>
    %c0_216 = arith.constant 0 : index
    %c0_217 = arith.constant 0 : index
    %c0_218 = arith.constant 0 : index
    %239 = vector.load %arg32[%c0_216, %c0_217, %c0_218] : memref<4x32x128xf32, #tpu.memory_space<vmem>>, vector<1x32x128xf32>
    %240 = vector.shape_cast %239 : vector<1x32x128xf32> to vector<32x128xf32>
    %cst_219 = arith.constant dense<0.000000e+00> : vector<2x128xf32>
    %241 = tpu.matmul %238, %240, %cst_219 {dimension_numbers = #tpu.dot_dimension_numbers<[1], [0], [0], [1], [0, 0, 1, 1], [], []>} : vector<2x32xf32>, vector<32x128xf32>, vector<2x128xf32> -> vector<2x128xf32>
    %c1_220 = arith.constant 1 : index
    %c0_221 = arith.constant 0 : index
    %c0_222 = arith.constant 0 : index
    %242 = vector.load %arg31[%c1_220, %c0_221, %c0_222] : memref<4x2x8xf32, #tpu.memory_space<vmem>>, vector<1x2x8xf32>
    %243 = vector.shape_cast %242 : vector<1x2x8xf32> to vector<2x8xf32>
    %cst_223 = arith.constant dense<0.000000e+00> : vector<2x32xf32>
    %244 = tpu.matmul %243, %235, %cst_223 {dimension_numbers = #tpu.dot_dimension_numbers<[1], [0], [0], [1], [0, 0, 1, 1], [], []>} : vector<2x8xf32>, vector<8x32xf32>, vector<2x32xf32> -> vector<2x32xf32>
    %c1_224 = arith.constant 1 : index
    %c0_225 = arith.constant 0 : index
    %c0_226 = arith.constant 0 : index
    %245 = vector.load %arg32[%c1_224, %c0_225, %c0_226] : memref<4x32x128xf32, #tpu.memory_space<vmem>>, vector<1x32x128xf32>
    %246 = vector.shape_cast %245 : vector<1x32x128xf32> to vector<32x128xf32>
    %cst_227 = arith.constant dense<0.000000e+00> : vector<2x128xf32>
    %247 = tpu.matmul %244, %246, %cst_227 {dimension_numbers = #tpu.dot_dimension_numbers<[1], [0], [0], [1], [0, 0, 1, 1], [], []>} : vector<2x32xf32>, vector<32x128xf32>, vector<2x128xf32> -> vector<2x128xf32>
    %248 = arith.addf %241, %247 : vector<2x128xf32>
    %c2_228 = arith.constant 2 : index
    %c0_229 = arith.constant 0 : index
    %c0_230 = arith.constant 0 : index
    %249 = vector.load %arg31[%c2_228, %c0_229, %c0_230] : memref<4x2x8xf32, #tpu.memory_space<vmem>>, vector<1x2x8xf32>
    %250 = vector.shape_cast %249 : vector<1x2x8xf32> to vector<2x8xf32>
    %cst_231 = arith.constant dense<0.000000e+00> : vector<2x32xf32>
    %251 = tpu.matmul %250, %235, %cst_231 {dimension_numbers = #tpu.dot_dimension_numbers<[1], [0], [0], [1], [0, 0, 1, 1], [], []>} : vector<2x8xf32>, vector<8x32xf32>, vector<2x32xf32> -> vector<2x32xf32>
    %c2_232 = arith.constant 2 : index
    %c0_233 = arith.constant 0 : index
    %c0_234 = arith.constant 0 : index
    %252 = vector.load %arg32[%c2_232, %c0_233, %c0_234] : memref<4x32x128xf32, #tpu.memory_space<vmem>>, vector<1x32x128xf32>
    %253 = vector.shape_cast %252 : vector<1x32x128xf32> to vector<32x128xf32>
    %cst_235 = arith.constant dense<0.000000e+00> : vector<2x128xf32>
    %254 = tpu.matmul %251, %253, %cst_235 {dimension_numbers = #tpu.dot_dimension_numbers<[1], [0], [0], [1], [0, 0, 1, 1], [], []>} : vector<2x32xf32>, vector<32x128xf32>, vector<2x128xf32> -> vector<2x128xf32>
    %255 = arith.addf %248, %254 : vector<2x128xf32>
    %c3_236 = arith.constant 3 : index
    %c0_237 = arith.constant 0 : index
    %c0_238 = arith.constant 0 : index
    %256 = vector.load %arg31[%c3_236, %c0_237, %c0_238] : memref<4x2x8xf32, #tpu.memory_space<vmem>>, vector<1x2x8xf32>
    %257 = vector.shape_cast %256 : vector<1x2x8xf32> to vector<2x8xf32>
    %cst_239 = arith.constant dense<0.000000e+00> : vector<2x32xf32>
    %258 = tpu.matmul %257, %235, %cst_239 {dimension_numbers = #tpu.dot_dimension_numbers<[1], [0], [0], [1], [0, 0, 1, 1], [], []>} : vector<2x8xf32>, vector<8x32xf32>, vector<2x32xf32> -> vector<2x32xf32>
    %c3_240 = arith.constant 3 : index
    %c0_241 = arith.constant 0 : index
    %c0_242 = arith.constant 0 : index
    %259 = vector.load %arg32[%c3_240, %c0_241, %c0_242] : memref<4x32x128xf32, #tpu.memory_space<vmem>>, vector<1x32x128xf32>
    %260 = vector.shape_cast %259 : vector<1x32x128xf32> to vector<32x128xf32>
    %cst_243 = arith.constant dense<0.000000e+00> : vector<2x128xf32>
    %261 = tpu.matmul %258, %260, %cst_243 {dimension_numbers = #tpu.dot_dimension_numbers<[1], [0], [0], [1], [0, 0, 1, 1], [], []>} : vector<2x32xf32>, vector<32x128xf32>, vector<2x128xf32> -> vector<2x128xf32>
    %262 = arith.addf %255, %261 : vector<2x128xf32>
    %cst_244 = arith.constant dense<0.000000e+00> : vector<2x64xf32>
    %263 = tpu.matmul %262, %141, %cst_244 {dimension_numbers = #tpu.dot_dimension_numbers<[1], [0], [0], [1], [0, 0, 1, 1], [], []>} : vector<2x128xf32>, vector<128x64xf32>, vector<2x64xf32> -> vector<2x64xf32>
    %264 = vector.broadcast %142 : vector<1x64xf32> to vector<2x64xf32>
    %265 = arith.addf %263, %264 : vector<2x64xf32>
    %cst_245 = arith.constant 0.000000e+00 : f32
    %266 = vector.broadcast %cst_245 : f32 to vector<2x64xf32>
    %267 = arith.cmpf oge, %265, %266 : vector<2x64xf32>
    %cst_246 = arith.constant 0.00999999977 : f32
    %268 = vector.broadcast %cst_246 : f32 to vector<2x64xf32>
    %269 = arith.mulf %268, %265 : vector<2x64xf32>
    %270 = arith.select %267, %265, %269 : vector<2x64xi1>, vector<2x64xf32>
    %cst_247 = arith.constant dense<0.000000e+00> : vector<2x10xf32>
    %271 = tpu.matmul %270, %143, %cst_247 {dimension_numbers = #tpu.dot_dimension_numbers<[1], [0], [0], [1], [0, 0, 1, 1], [], []>} : vector<2x64xf32>, vector<64x10xf32>, vector<2x10xf32> -> vector<2x10xf32>
    %272 = vector.broadcast %144 : vector<1x10xf32> to vector<2x10xf32>
    %273 = arith.addf %271, %272 : vector<2x10xf32>
    %c0_248 = arith.constant 0 : index
    %c0_249 = arith.constant 0 : index
    %274 = vector.load %arg19[%c0_248, %c0_249] : memref<128x64xf32, #tpu.memory_space<vmem>>, vector<128x64xf32>
    %cst_250 = arith.constant dense<0.000000e+00> : vector<2x64xf32>
    %275 = tpu.matmul %125, %274, %cst_250 {dimension_numbers = #tpu.dot_dimension_numbers<[1], [0], [0], [1], [0, 0, 1, 1], [], []>} : vector<2x128xf32>, vector<128x64xf32>, vector<2x64xf32> -> vector<2x64xf32>
    %c0_251 = arith.constant 0 : index
    %c0_252 = arith.constant 0 : index
    %276 = vector.load %arg20[%c0_251, %c0_252] : memref<128x64xf32, #tpu.memory_space<vmem>>, vector<128x64xf32>
    %cst_253 = arith.constant dense<0.000000e+00> : vector<2x64xf32>
    %277 = tpu.matmul %262, %276, %cst_253 {dimension_numbers = #tpu.dot_dimension_numbers<[1], [0], [0], [1], [0, 0, 1, 1], [], []>} : vector<2x128xf32>, vector<128x64xf32>, vector<2x64xf32> -> vector<2x64xf32>
    %278 = arith.addf %275, %277 : vector<2x64xf32>
    %c0_254 = arith.constant 0 : index
    %c0_255 = arith.constant 0 : index
    %279 = vector.load %arg21[%c0_254, %c0_255] : memref<1x64xf32, #tpu.memory_space<vmem>>, vector<1x64xf32>
    %280 = vector.broadcast %279 : vector<1x64xf32> to vector<2x64xf32>
    %281 = arith.addf %278, %280 : vector<2x64xf32>
    %cst_256 = arith.constant 0.000000e+00 : f32
    %282 = vector.broadcast %cst_256 : f32 to vector<2x64xf32>
    %283 = arith.cmpf oge, %281, %282 : vector<2x64xf32>
    %cst_257 = arith.constant 0.00999999977 : f32
    %284 = vector.broadcast %cst_257 : f32 to vector<2x64xf32>
    %285 = arith.mulf %284, %281 : vector<2x64xf32>
    %286 = arith.select %283, %281, %285 : vector<2x64xi1>, vector<2x64xf32>
    %c0_258 = arith.constant 0 : index
    %c0_259 = arith.constant 0 : index
    %287 = vector.load %arg22[%c0_258, %c0_259] : memref<64x32xf32, #tpu.memory_space<vmem>>, vector<64x32xf32>
    %cst_260 = arith.constant dense<0.000000e+00> : vector<2x32xf32>
    %288 = tpu.matmul %286, %287, %cst_260 {dimension_numbers = #tpu.dot_dimension_numbers<[1], [0], [0], [1], [0, 0, 1, 1], [], []>} : vector<2x64xf32>, vector<64x32xf32>, vector<2x32xf32> -> vector<2x32xf32>
    %c0_261 = arith.constant 0 : index
    %c0_262 = arith.constant 0 : index
    %289 = vector.load %arg23[%c0_261, %c0_262] : memref<1x32xf32, #tpu.memory_space<vmem>>, vector<1x32xf32>
    %290 = vector.broadcast %289 : vector<1x32xf32> to vector<2x32xf32>
    %291 = arith.addf %288, %290 : vector<2x32xf32>
    %cst_263 = arith.constant 0.000000e+00 : f32
    %292 = vector.broadcast %cst_263 : f32 to vector<2x32xf32>
    %293 = arith.cmpf oge, %291, %292 : vector<2x32xf32>
    %cst_264 = arith.constant 0.00999999977 : f32
    %294 = vector.broadcast %cst_264 : f32 to vector<2x32xf32>
    %295 = arith.mulf %294, %291 : vector<2x32xf32>
    %296 = arith.select %293, %291, %295 : vector<2x32xi1>, vector<2x32xf32>
    %c0_265 = arith.constant 0 : index
    %c0_266 = arith.constant 0 : index
    %297 = vector.load %arg24[%c0_265, %c0_266] : memref<32x32xf32, #tpu.memory_space<vmem>>, vector<32x32xf32>
    %cst_267 = arith.constant dense<0.000000e+00> : vector<2x32xf32>
    %298 = tpu.matmul %296, %297, %cst_267 {dimension_numbers = #tpu.dot_dimension_numbers<[1], [0], [0], [1], [0, 0, 1, 1], [], []>} : vector<2x32xf32>, vector<32x32xf32>, vector<2x32xf32> -> vector<2x32xf32>
    %c0_268 = arith.constant 0 : index
    %c0_269 = arith.constant 0 : index
    %299 = vector.load %arg25[%c0_268, %c0_269] : memref<10x32xf32, #tpu.memory_space<vmem>>, vector<10x32xf32>
    %cst_270 = arith.constant dense<0.000000e+00> : vector<2x32xf32>
    %300 = tpu.matmul %136, %299, %cst_270 {dimension_numbers = #tpu.dot_dimension_numbers<[1], [0], [0], [1], [0, 0, 1, 1], [], []>} : vector<2x10xf32>, vector<10x32xf32>, vector<2x32xf32> -> vector<2x32xf32>
    %301 = arith.addf %298, %300 : vector<2x32xf32>
    %c0_271 = arith.constant 0 : index
    %c0_272 = arith.constant 0 : index
    %302 = vector.load %arg26[%c0_271, %c0_272] : memref<10x32xf32, #tpu.memory_space<vmem>>, vector<10x32xf32>
    %cst_273 = arith.constant dense<0.000000e+00> : vector<2x32xf32>
    %303 = tpu.matmul %273, %302, %cst_273 {dimension_numbers = #tpu.dot_dimension_numbers<[1], [0], [0], [1], [0, 0, 1, 1], [], []>} : vector<2x10xf32>, vector<10x32xf32>, vector<2x32xf32> -> vector<2x32xf32>
    %304 = arith.addf %301, %303 : vector<2x32xf32>
    %c0_274 = arith.constant 0 : index
    %c0_275 = arith.constant 0 : index
    %305 = vector.load %arg27[%c0_274, %c0_275] : memref<1x32xf32, #tpu.memory_space<vmem>>, vector<1x32xf32>
    %306 = vector.broadcast %305 : vector<1x32xf32> to vector<2x32xf32>
    %307 = arith.addf %304, %306 : vector<2x32xf32>
    %cst_276 = arith.constant 0.000000e+00 : f32
    %308 = vector.broadcast %cst_276 : f32 to vector<2x32xf32>
    %309 = arith.cmpf oge, %307, %308 : vector<2x32xf32>
    %cst_277 = arith.constant 0.00999999977 : f32
    %310 = vector.broadcast %cst_277 : f32 to vector<2x32xf32>
    %311 = arith.mulf %310, %307 : vector<2x32xf32>
    %312 = arith.select %309, %307, %311 : vector<2x32xi1>, vector<2x32xf32>
    %c0_278 = arith.constant 0 : index
    %c0_279 = arith.constant 0 : index
    %313 = vector.load %arg28[%c0_278, %c0_279] : memref<32x2xf32, #tpu.memory_space<vmem>>, vector<32x2xf32>
    %cst_280 = arith.constant dense<0.000000e+00> : vector<2x2xf32>
    %314 = tpu.matmul %312, %313, %cst_280 {dimension_numbers = #tpu.dot_dimension_numbers<[1], [0], [0], [1], [0, 0, 1, 1], [], []>} : vector<2x32xf32>, vector<32x2xf32>, vector<2x2xf32> -> vector<2x2xf32>
    %c0_281 = arith.constant 0 : index
    %c0_282 = arith.constant 0 : index
    %315 = vector.load %arg29[%c0_281, %c0_282] : memref<1x2xf32, #tpu.memory_space<vmem>>, vector<1x2xf32>
    %316 = vector.broadcast %315 : vector<1x2xf32> to vector<2x2xf32>
    %317 = arith.addf %314, %316 : vector<2x2xf32>
    %c0_283 = arith.constant 0 : index
    %c0_284 = arith.constant 0 : index
    %318 = vector.load %arg33[%c0_283, %c0_284] : memref<2x2xf32, #tpu.memory_space<vmem>>, vector<2x2xf32>
    tpu.vector_store %arg33[%c0_283, %c0_284], %317 {strides = array<i32>} : memref<2x2xf32, #tpu.memory_space<vmem>>, vector<2x2xf32>,
    %c0_285 = arith.constant 0 : index
    %c0_286 = arith.constant 0 : index
    %319 = vector.load %arg34[%c0_285, %c0_286] : memref<2x10xf32, #tpu.memory_space<vmem>>, vector<2x10xf32>
    tpu.vector_store %arg34[%c0_285, %c0_286], %136 {strides = array<i32>} : memref<2x10xf32, #tpu.memory_space<vmem>>, vector<2x10xf32>,
    %c0_287 = arith.constant 0 : index
    %c0_288 = arith.constant 0 : index
    %320 = vector.load %arg35[%c0_287, %c0_288] : memref<2x10xf32, #tpu.memory_space<vmem>>, vector<2x10xf32>
    tpu.vector_store %arg35[%c0_287, %c0_288], %273 {strides = array<i32>} : memref<2x10xf32, #tpu.memory_space<vmem>>, vector<2x10xf32>,
    return
  }
  func.func @transform_0(%arg0: i32) -> (i32, i32) {
    %c0_i32 = arith.constant 0 : i32
    %c0_i32_0 = arith.constant 0 : i32
    %c0_i32_1 = arith.constant 0 : i32
    return %c0_i32, %c0_i32_0 : i32, i32
  }
  func.func @transform_1(%arg0: i32) -> (i32, i32) {
    %c0_i32 = arith.constant 0 : i32
    %c0_i32_0 = arith.constant 0 : i32
    %c0_i32_1 = arith.constant 0 : i32
    return %c0_i32, %c0_i32_0 : i32, i32
  }
  func.func @transform_2(%arg0: i32) -> (i32, i32) {
    %c0_i32 = arith.constant 0 : i32
    %c0_i32_0 = arith.constant 0 : i32
    %c0_i32_1 = arith.constant 0 : i32
    return %c0_i32, %c0_i32_0 : i32, i32
  }
  func.func @transform_3(%arg0: i32) -> (i32, i32) {
    %c0_i32 = arith.constant 0 : i32
    %c0_i32_0 = arith.constant 0 : i32
    %c0_i32_1 = arith.constant 0 : i32
    return %c0_i32, %c0_i32_0 : i32, i32
  }
  func.func @transform_4(%arg0: i32) -> (i32, i32, i32) {
    %c0_i32 = arith.constant 0 : i32
    %c0_i32_0 = arith.constant 0 : i32
    %c0_i32_1 = arith.constant 0 : i32
    %c0_i32_2 = arith.constant 0 : i32
    return %c0_i32, %c0_i32_0, %c0_i32_1 : i32, i32, i32
  }
  func.func @transform_5(%arg0: i32) -> (i32, i32) {
    %c0_i32 = arith.constant 0 : i32
    %c0_i32_0 = arith.constant 0 : i32
    %c0_i32_1 = arith.constant 0 : i32
    return %c0_i32, %c0_i32_0 : i32, i32
  }
  func.func @transform_6(%arg0: i32) -> (i32, i32) {
    %c0_i32 = arith.constant 0 : i32
    %c0_i32_0 = arith.constant 0 : i32
    %c0_i32_1 = arith.constant 0 : i32
    return %c0_i32, %c0_i32_0 : i32, i32
  }
  func.func @transform_7(%arg0: i32) -> (i32, i32) {
    %c0_i32 = arith.constant 0 : i32
    %c0_i32_0 = arith.constant 0 : i32
    %c0_i32_1 = arith.constant 0 : i32
    return %c0_i32, %c0_i32_0 : i32, i32
  }
  func.func @transform_8(%arg0: i32) -> (i32, i32, i32) {
    %c0_i32 = arith.constant 0 : i32
    %c0_i32_0 = arith.constant 0 : i32
    %c0_i32_1 = arith.constant 0 : i32
    %c0_i32_2 = arith.constant 0 : i32
    return %c0_i32, %c0_i32_0, %c0_i32_1 : i32, i32, i32
  }
  func.func @transform_9(%arg0: i32) -> (i32, i32) {
    %c0_i32 = arith.constant 0 : i32
    %c0_i32_0 = arith.constant 0 : i32
    %c0_i32_1 = arith.constant 0 : i32
    return %c0_i32, %c0_i32_0 : i32, i32
  }
  func.func @transform_10(%arg0: i32) -> (i32, i32) {
    %c0_i32 = arith.constant 0 : i32
    %c0_i32_0 = arith.constant 0 : i32
    %c0_i32_1 = arith.constant 0 : i32
    return %c0_i32, %c0_i32_0 : i32, i32
  }
  func.func @transform_11(%arg0: i32) -> (i32, i32) {
    %c0_i32 = arith.constant 0 : i32
    %c0_i32_0 = arith.constant 0 : i32
    %c0_i32_1 = arith.constant 0 : i32
    return %c0_i32, %c0_i32_0 : i32, i32
  }
  func.func @transform_12(%arg0: i32) -> (i32, i32) {
    %c0_i32 = arith.constant 0 : i32
    %c0_i32_0 = arith.constant 0 : i32
    %c0_i32_1 = arith.constant 0 : i32
    return %c0_i32, %c0_i32_0 : i32, i32
  }
  func.func @transform_13(%arg0: i32) -> (i32, i32) {
    %c0_i32 = arith.constant 0 : i32
    %c0_i32_0 = arith.constant 0 : i32
    %c0_i32_1 = arith.constant 0 : i32
    return %c0_i32, %c0_i32_0 : i32, i32
  }
  func.func @transform_14(%arg0: i32) -> (i32, i32) {
    %c0_i32 = arith.constant 0 : i32
    %c0_i32_0 = arith.constant 0 : i32
    %c0_i32_1 = arith.constant 0 : i32
    return %c0_i32, %c0_i32_0 : i32, i32
  }
  func.func @transform_15(%arg0: i32) -> (i32, i32) {
    %c0_i32 = arith.constant 0 : i32
    %c0_i32_0 = arith.constant 0 : i32
    %c0_i32_1 = arith.constant 0 : i32
    return %c0_i32, %c0_i32_0 : i32, i32
  }
  func.func @transform_16(%arg0: i32) -> (i32, i32) {
    %c0_i32 = arith.constant 0 : i32
    %c0_i32_0 = arith.constant 0 : i32
    %c0_i32_1 = arith.constant 0 : i32
    return %c0_i32, %c0_i32_0 : i32, i32
  }
  func.func @transform_17(%arg0: i32) -> (i32, i32) {
    %c0_i32 = arith.constant 0 : i32
    %c0_i32_0 = arith.constant 0 : i32
    %c0_i32_1 = arith.constant 0 : i32
    return %c0_i32, %c0_i32_0 : i32, i32
  }
  func.func @transform_18(%arg0: i32) -> (i32, i32) {
    %c0_i32 = arith.constant 0 : i32
    %c0_i32_0 = arith.constant 0 : i32
    %c0_i32_1 = arith.constant 0 : i32
    return %c0_i32, %c0_i32_0 : i32, i32
  }
  func.func @transform_19(%arg0: i32) -> (i32, i32) {
    %c0_i32 = arith.constant 0 : i32
    %c0_i32_0 = arith.constant 0 : i32
    %c0_i32_1 = arith.constant 0 : i32
    return %c0_i32, %c0_i32_0 : i32, i32
  }
  func.func @transform_20(%arg0: i32) -> (i32, i32) {
    %c0_i32 = arith.constant 0 : i32
    %c0_i32_0 = arith.constant 0 : i32
    %c0_i32_1 = arith.constant 0 : i32
    return %c0_i32, %c0_i32_0 : i32, i32
  }
  func.func @transform_21(%arg0: i32) -> (i32, i32) {
    %c0_i32 = arith.constant 0 : i32
    %c0_i32_0 = arith.constant 0 : i32
    %c0_i32_1 = arith.constant 0 : i32
    return %c0_i32, %c0_i32_0 : i32, i32
  }
  func.func @transform_22(%arg0: i32) -> (i32, i32) {
    %c0_i32 = arith.constant 0 : i32
    %c0_i32_0 = arith.constant 0 : i32
    %c0_i32_1 = arith.constant 0 : i32
    return %c0_i32, %c0_i32_0 : i32, i32
  }
  func.func @transform_23(%arg0: i32) -> (i32, i32) {
    %c0_i32 = arith.constant 0 : i32
    %c0_i32_0 = arith.constant 0 : i32
    %c0_i32_1 = arith.constant 0 : i32
    return %c0_i32, %c0_i32_0 : i32, i32
  }
  func.func @transform_24(%arg0: i32) -> (i32, i32) {
    %c0_i32 = arith.constant 0 : i32
    %c0_i32_0 = arith.constant 0 : i32
    %c0_i32_1 = arith.constant 0 : i32
    return %c0_i32, %c0_i32_0 : i32, i32
  }
  func.func @transform_25(%arg0: i32) -> (i32, i32) {
    %c0_i32 = arith.constant 0 : i32
    %c0_i32_0 = arith.constant 0 : i32
    %c0_i32_1 = arith.constant 0 : i32
    return %c0_i32, %c0_i32_0 : i32, i32
  }
  func.func @transform_26(%arg0: i32) -> (i32, i32) {
    %c0_i32 = arith.constant 0 : i32
    %c0_i32_0 = arith.constant 0 : i32
    %c0_i32_1 = arith.constant 0 : i32
    return %c0_i32, %c0_i32_0 : i32, i32
  }
  func.func @transform_27(%arg0: i32) -> (i32, i32) {
    %c0_i32 = arith.constant 0 : i32
    %c0_i32_0 = arith.constant 0 : i32
    %c0_i32_1 = arith.constant 0 : i32
    return %c0_i32, %c0_i32_0 : i32, i32
  }
  func.func @transform_28(%arg0: i32) -> (i32, i32) {
    %c0_i32 = arith.constant 0 : i32
    %c0_i32_0 = arith.constant 0 : i32
    %c0_i32_1 = arith.constant 0 : i32
    return %c0_i32, %c0_i32_0 : i32, i32
  }
  func.func @transform_29(%arg0: i32) -> (i32, i32, i32) {
    %c0_i32 = arith.constant 0 : i32
    %c0_i32_0 = arith.constant 0 : i32
    %c0_i32_1 = arith.constant 0 : i32
    %c0_i32_2 = arith.constant 0 : i32
    return %c0_i32, %c0_i32_0, %c0_i32_1 : i32, i32, i32
  }
  func.func @transform_30(%arg0: i32) -> (i32, i32, i32) {
    %c0_i32 = arith.constant 0 : i32
    %c0_i32_0 = arith.constant 0 : i32
    %c0_i32_1 = arith.constant 0 : i32
    %c0_i32_2 = arith.constant 0 : i32
    return %c0_i32, %c0_i32_0, %c0_i32_1 : i32, i32, i32
  }
  func.func @transform_31(%arg0: i32) -> (i32, i32, i32) {
    %c0_i32 = arith.constant 0 : i32
    %c0_i32_0 = arith.constant 0 : i32
    %c0_i32_1 = arith.constant 0 : i32
    %c0_i32_2 = arith.constant 0 : i32
    return %c0_i32, %c0_i32_0, %c0_i32_1 : i32, i32, i32
  }
  func.func @transform_32(%arg0: i32) -> (i32, i32) {
    %c0_i32 = arith.constant 0 : i32
    %c0_i32_0 = arith.constant 0 : i32
    %c0_i32_1 = arith.constant 0 : i32
    return %c0_i32, %c0_i32_0 : i32, i32
  }
  func.func @transform_33(%arg0: i32) -> (i32, i32) {
    %c0_i32 = arith.constant 0 : i32
    %c0_i32_0 = arith.constant 0 : i32
    %c0_i32_1 = arith.constant 0 : i32
    return %c0_i32, %c0_i32_0 : i32, i32
  }
  func.func @transform_34(%arg0: i32) -> (i32, i32) {
    %c0_i32 = arith.constant 0 : i32
    %c0_i32_0 = arith.constant 0 : i32
    %c0_i32_1 = arith.constant 0 : i32
    return %c0_i32, %c0_i32_0 : i32, i32
  }
}

</mosaic_0001>

<llo_original>
// kernel: forward.1
$region0: #{forward.1}
  #allocation0 [shape = 'u32[]', space=smem, size = 0x4, offset = 0x4, fixed_abs, tag = 'smem constant byte address 0x4 - core index']
  #allocation1 [shape = 'u32[144,128]{1,0:T(1,128)}', space=vmem, size = 0x12000, scoped, tag = 'internal scratch']
  %s0 = inlined_call_operand.smem [shape: u32[35], index: -1, kind: input, shape index: {}]
  %s1 = sld [smem:[%s0]]
  %s2 = scalar_lea.smem %s0, 1
  %s3 = sld [smem:[%s2]]
  %s4 = scalar_lea.smem %s0, 2
  %s5 = sld [smem:[%s4]]
  %s6 = scalar_lea.smem %s0, 3
  %s7 = sld [smem:[%s6]]
  %s8 = scalar_lea.smem %s0, 4
  %s9 = sld [smem:[%s8]]
  %s10 = scalar_lea.smem %s0, 5
  %s11 = sld [smem:[%s10]]
  %s12 = scalar_lea.smem %s0, 6
  %s13 = sld [smem:[%s12]]
  %s14 = scalar_lea.smem %s0, 7
  %s15 = sld [smem:[%s14]]
  %s16 = scalar_lea.smem %s0, 8
  %s17 = sld [smem:[%s16]]
  %s18 = scalar_lea.smem %s0, 9
  %s19 = sld [smem:[%s18]]
  %s20 = scalar_lea.smem %s0, 10
  %s21 = sld [smem:[%s20]]
  %s22 = scalar_lea.smem %s0, 11
  %s23 = sld [smem:[%s22]]
  %s24 = scalar_lea.smem %s0, 12
  %s25 = sld [smem:[%s24]]
  %s26 = scalar_lea.smem %s0, 13
  %s27 = sld [smem:[%s26]]
  %s28 = scalar_lea.smem %s0, 14
  %s29 = sld [smem:[%s28]]
  %s30 = scalar_lea.smem %s0, 15
  %s31 = sld [smem:[%s30]]
  %s32 = scalar_lea.smem %s0, 16
  %s33 = sld [smem:[%s32]]
  %s34 = scalar_lea.smem %s0, 17
  %s35 = sld [smem:[%s34]]
  %s36 = scalar_lea.smem %s0, 18
  %s37 = sld [smem:[%s36]]
  %s38 = scalar_lea.smem %s0, 19
  %s39 = sld [smem:[%s38]]
  %s40 = scalar_lea.smem %s0, 20
  %s41 = sld [smem:[%s40]]
  %s42 = scalar_lea.smem %s0, 21
  %s43 = sld [smem:[%s42]]
  %s44 = scalar_lea.smem %s0, 22
  %s45 = sld [smem:[%s44]]
  %s46 = scalar_lea.smem %s0, 23
  %s47 = sld [smem:[%s46]]
  %s48 = scalar_lea.smem %s0, 24
  %s49 = sld [smem:[%s48]]
  %s50 = scalar_lea.smem %s0, 25
  %s51 = sld [smem:[%s50]]
  %s52 = scalar_lea.smem %s0, 26
  %s53 = sld [smem:[%s52]]
  %s54 = scalar_lea.smem %s0, 27
  %s55 = sld [smem:[%s54]]
  %s56 = scalar_lea.smem %s0, 28
  %s57 = sld [smem:[%s56]]
  %s58 = scalar_lea.smem %s0, 29
  %s59 = sld [smem:[%s58]]
  %s60 = scalar_lea.smem %s0, 30
  %s61 = sld [smem:[%s60]]
  %s62 = scalar_lea.smem %s0, 31
  %s63 = sld [smem:[%s62]]
  %s64 = scalar_lea.smem %s0, 32
  %s65 = sld [smem:[%s64]]
  %s66 = scalar_lea.smem %s0, 33
  %s67 = sld [smem:[%s66]]
  %s68 = scalar_lea.smem %s0, 34
  %s69 = sld [smem:[%s68]]
  %70 = xla_tuple %s65, %s67, %s69
  %s71 = sld [smem:[#allocation0]]
  $region154: #{forward.1} parent=0
    _
  %s73 = ssub.s32 1, %s71
  %s74 = scalar_select 0, %s73, %s71
  $region1: #{forward.1} parent=0
    #allocation2 [shape = 'u8[1024]{0}', space=vmem, size = 0x400, scoped, tag = 'output window, operand 0, single buffered']
    #allocation3 [shape = 's32[1]{0}', space=sflag, size = 0x4, scoped, tag = 'scoped memory for forward.1']
    #allocation4 [shape = 'u8[1024]{0}', space=vmem, size = 0x400, scoped, tag = 'output window, operand 1, single buffered']
    #allocation5 [shape = 's32[1]{0}', space=sflag, size = 0x4, scoped, tag = 'scoped memory for forward.1']
    #allocation6 [shape = 'u8[1024]{0}', space=vmem, size = 0x400, scoped, tag = 'output window, operand 2, single buffered']
    %75 = vsyncpa [#allocation3], 0
    %76 = vsyncpa [#allocation5], 0
    // Predicated region
    $region2: #{forward.1} parent=1 // pred_check
      _
    $region3: #{forward.1} parent=1 // pred_check_branch
      %78 = sbr.rel (0) target = $region5
    $region4: #{forward.1} parent=1 // pred_region
      _
    $region5: #{forward.1} parent=1 // pred_fallthru
      _
    // Predicated region
    $region6: #{forward.1} parent=1 // pred_check
      _
    $region7: #{forward.1} parent=1 // pred_check_branch
      %80 = sbr.rel (0) target = $region9
    $region8: #{forward.1} parent=1 // pred_region
      _
    $region9: #{forward.1} parent=1 // pred_fallthru
      _
    // Predicated region
    $region10: #{forward.1} parent=1 // pred_check
      _
    $region11: #{forward.1} parent=1 // pred_check_branch
      %82 = sbr.rel (0) target = $region13
    $region12: #{forward.1} parent=1 // pred_region
      _
    $region13: #{forward.1} parent=1 // pred_fallthru
      _
    // Predicated region
    $region14: #{forward.1} parent=1 // pred_check
      _
    $region15: #{forward.1} parent=1 // pred_check_branch
      %84 = sbr.rel (0) target = $region17
    $region16: #{forward.1} parent=1 // pred_region
      _
    $region17: #{forward.1} parent=1 // pred_fallthru
      _
    // Predicated region
    $region18: #{forward.1} parent=1 // pred_check
      _
    $region19: #{forward.1} parent=1 // pred_check_branch
      %86 = sbr.rel (0) target = $region21
    $region20: #{forward.1} parent=1 // pred_region
      _
    $region21: #{forward.1} parent=1 // pred_fallthru
      _
    // Predicated region
    $region22: #{forward.1} parent=1 // pred_check
      _
    $region23: #{forward.1} parent=1 // pred_check_branch
      %88 = sbr.rel (0) target = $region25
    $region24: #{forward.1} parent=1 // pred_region
      _
    $region25: #{forward.1} parent=1 // pred_fallthru
      _
    // Predicated region
    $region26: #{forward.1} parent=1 // pred_check
      _
    $region27: #{forward.1} parent=1 // pred_check_branch
      %90 = sbr.rel (0) target = $region29
    $region28: #{forward.1} parent=1 // pred_region
      _
    $region29: #{forward.1} parent=1 // pred_fallthru
      _
    // Predicated region
    $region30: #{forward.1} parent=1 // pred_check
      _
    $region31: #{forward.1} parent=1 // pred_check_branch
      %92 = sbr.rel (0) target = $region33
    $region32: #{forward.1} parent=1 // pred_region
      _
    $region33: #{forward.1} parent=1 // pred_fallthru
      _
    // Predicated region
    $region34: #{forward.1} parent=1 // pred_check
      _
    $region35: #{forward.1} parent=1 // pred_check_branch
      %94 = sbr.rel (0) target = $region37
    $region36: #{forward.1} parent=1 // pred_region
      _
    $region37: #{forward.1} parent=1 // pred_fallthru
      _
    // Predicated region
    $region38: #{forward.1} parent=1 // pred_check
      _
    $region39: #{forward.1} parent=1 // pred_check_branch
      %96 = sbr.rel (0) target = $region41
    $region40: #{forward.1} parent=1 // pred_region
      _
    $region41: #{forward.1} parent=1 // pred_fallthru
      _
    // Predicated region
    $region42: #{forward.1} parent=1 // pred_check
      _
    $region43: #{forward.1} parent=1 // pred_check_branch
      %98 = sbr.rel (0) target = $region45
    $region44: #{forward.1} parent=1 // pred_region
      _
    $region45: #{forward.1} parent=1 // pred_fallthru
      _
    // Predicated region
    $region46: #{forward.1} parent=1 // pred_check
      _
    $region47: #{forward.1} parent=1 // pred_check_branch
      %100 = sbr.rel (0) target = $region49
    $region48: #{forward.1} parent=1 // pred_region
      _
    $region49: #{forward.1} parent=1 // pred_fallthru
      _
    // Predicated region
    $region50: #{forward.1} parent=1 // pred_check
      _
    $region51: #{forward.1} parent=1 // pred_check_branch
      %102 = sbr.rel (0) target = $region53
    $region52: #{forward.1} parent=1 // pred_region
      _
    $region53: #{forward.1} parent=1 // pred_fallthru
      _
    // Predicated region
    $region54: #{forward.1} parent=1 // pred_check
      _
    $region55: #{forward.1} parent=1 // pred_check_branch
      %104 = sbr.rel (0) target = $region57
    $region56: #{forward.1} parent=1 // pred_region
      _
    $region57: #{forward.1} parent=1 // pred_fallthru
      _
    // Predicated region
    $region58: #{forward.1} parent=1 // pred_check
      _
    $region59: #{forward.1} parent=1 // pred_check_branch
      %106 = sbr.rel (0) target = $region61
    $region60: #{forward.1} parent=1 // pred_region
      _
    $region61: #{forward.1} parent=1 // pred_fallthru
      _
    // Predicated region
    $region62: #{forward.1} parent=1 // pred_check
      _
    $region63: #{forward.1} parent=1 // pred_check_branch
      %108 = sbr.rel (0) target = $region65
    $region64: #{forward.1} parent=1 // pred_region
      _
    $region65: #{forward.1} parent=1 // pred_fallthru
      _
    // Predicated region
    $region66: #{forward.1} parent=1 // pred_check
      _
    $region67: #{forward.1} parent=1 // pred_check_branch
      %110 = sbr.rel (0) target = $region69
    $region68: #{forward.1} parent=1 // pred_region
      _
    $region69: #{forward.1} parent=1 // pred_fallthru
      _
    // Predicated region
    $region70: #{forward.1} parent=1 // pred_check
      _
    $region71: #{forward.1} parent=1 // pred_check_branch
      %112 = sbr.rel (0) target = $region73
    $region72: #{forward.1} parent=1 // pred_region
      _
    $region73: #{forward.1} parent=1 // pred_fallthru
      _
    // Predicated region
    $region74: #{forward.1} parent=1 // pred_check
      _
    $region75: #{forward.1} parent=1 // pred_check_branch
      %114 = sbr.rel (0) target = $region77
    $region76: #{forward.1} parent=1 // pred_region
      _
    $region77: #{forward.1} parent=1 // pred_fallthru
      _
    // Predicated region
    $region78: #{forward.1} parent=1 // pred_check
      _
    $region79: #{forward.1} parent=1 // pred_check_branch
      %116 = sbr.rel (0) target = $region81
    $region80: #{forward.1} parent=1 // pred_region
      _
    $region81: #{forward.1} parent=1 // pred_fallthru
      _
    // Predicated region
    $region82: #{forward.1} parent=1 // pred_check
      _
    $region83: #{forward.1} parent=1 // pred_check_branch
      %118 = sbr.rel (0) target = $region85
    $region84: #{forward.1} parent=1 // pred_region
      _
    $region85: #{forward.1} parent=1 // pred_fallthru
      _
    // Predicated region
    $region86: #{forward.1} parent=1 // pred_check
      _
    $region87: #{forward.1} parent=1 // pred_check_branch
      %120 = sbr.rel (0) target = $region89
    $region88: #{forward.1} parent=1 // pred_region
      _
    $region89: #{forward.1} parent=1 // pred_fallthru
      _
    // Predicated region
    $region90: #{forward.1} parent=1 // pred_check
      _
    $region91: #{forward.1} parent=1 // pred_check_branch
      %122 = sbr.rel (0) target = $region93
    $region92: #{forward.1} parent=1 // pred_region
      _
    $region93: #{forward.1} parent=1 // pred_fallthru
      _
    // Predicated region
    $region94: #{forward.1} parent=1 // pred_check
      _
    $region95: #{forward.1} parent=1 // pred_check_branch
      %124 = sbr.rel (0) target = $region97
    $region96: #{forward.1} parent=1 // pred_region
      _
    $region97: #{forward.1} parent=1 // pred_fallthru
      _
    // Predicated region
    $region98: #{forward.1} parent=1 // pred_check
      _
    $region99: #{forward.1} parent=1 // pred_check_branch
      %126 = sbr.rel (0) target = $region101
    $region100: #{forward.1} parent=1 // pred_region
      _
    $region101: #{forward.1} parent=1 // pred_fallthru
      _
    // Predicated region
    $region102: #{forward.1} parent=1 // pred_check
      _
    $region103: #{forward.1} parent=1 // pred_check_branch
      %128 = sbr.rel (0) target = $region105
    $region104: #{forward.1} parent=1 // pred_region
      _
    $region105: #{forward.1} parent=1 // pred_fallthru
      _
    // Predicated region
    $region106: #{forward.1} parent=1 // pred_check
      _
    $region107: #{forward.1} parent=1 // pred_check_branch
      %130 = sbr.rel (0) target = $region109
    $region108: #{forward.1} parent=1 // pred_region
      _
    $region109: #{forward.1} parent=1 // pred_fallthru
      _
    // Predicated region
    $region110: #{forward.1} parent=1 // pred_check
      _
    $region111: #{forward.1} parent=1 // pred_check_branch
      %132 = sbr.rel (0) target = $region113
    $region112: #{forward.1} parent=1 // pred_region
      _
    $region113: #{forward.1} parent=1 // pred_fallthru
      _
    // Predicated region
    $region114: #{forward.1} parent=1 // pred_check
      _
    $region115: #{forward.1} parent=1 // pred_check_branch
      %134 = sbr.rel (0) target = $region117
    $region116: #{forward.1} parent=1 // pred_region
      _
    $region117: #{forward.1} parent=1 // pred_fallthru
      _
    // Predicated region
    $region118: #{forward.1} parent=1 // pred_check
      _
    $region119: #{forward.1} parent=1 // pred_check_branch
      %136 = sbr.rel (0) target = $region121
    $region120: #{forward.1} parent=1 // pred_region
      _
    $region121: #{forward.1} parent=1 // pred_fallthru
      _
    // Predicated region
    $region122: #{forward.1} parent=1 // pred_check
      _
    $region123: #{forward.1} parent=1 // pred_check_branch
      %138 = sbr.rel (0) target = $region125
    $region124: #{forward.1} parent=1 // pred_region
      _
    $region125: #{forward.1} parent=1 // pred_fallthru
      _
    // Predicated region
    $region126: #{forward.1} parent=1 // pred_check
      _
    $region127: #{forward.1} parent=1 // pred_check_branch
      %140 = sbr.rel (0) target = $region129
    $region128: #{forward.1} parent=1 // pred_region
      _
    $region129: #{forward.1} parent=1 // pred_fallthru
      _
    %v141 = vld [vmem:[%s1] sm:$0xff]
    %v142 = vld [vmem:[%s1 + $0x8] sm:$0xff]
    %v143 = vld [vmem:[%s1 + $0x10] sm:$0xff]
    %v144 = vld [vmem:[%s1 + $0x18] sm:$0xff]
    %v145 = vld [vmem:[%s1 + $0x20] sm:$0xff]
    %v146 = vld [vmem:[%s1 + $0x28] sm:$0xff]
    %v147 = vld [vmem:[%s1 + $0x30] sm:$0xff]
    %v148 = vld [vmem:[%s1 + $0x38] sm:$0xff]
    %v149 = vld [vmem:[%s1 + $0x40] sm:$0xff]
    %v150 = vld [vmem:[%s1 + $0x48] sm:$0xff]
    %v151 = vld [vmem:[%s1 + $0x50] sm:$0xff]
    %v152 = vld [vmem:[%s1 + $0x58] sm:$0xff]
    %v153 = vld [vmem:[%s1 + $0x60] sm:$0xff]
    %v154 = vld [vmem:[%s1 + $0x68] sm:$0xff]
    %v155 = vld [vmem:[%s1 + $0x70] sm:$0xff]
    %v156 = vld [vmem:[%s1 + $0x78] sm:$0xff]
    %v157 = vld [vmem:[%s1 + $0x80] sm:$0xff]
    %v158 = vld [vmem:[%s1 + $0x88] sm:$0xff]
    %v159 = vld [vmem:[%s1 + $0x90] sm:$0xff]
    %v160 = vld [vmem:[%s1 + $0x98] sm:$0xff]
    %v161 = vld [vmem:[%s1 + $0xa0] sm:$0xff]
    %v162 = vld [vmem:[%s1 + $0xa8] sm:$0xff]
    %v163 = vld [vmem:[%s1 + $0xb0] sm:$0xff]
    %v164 = vld [vmem:[%s1 + $0xb8] sm:$0xff]
    %v165 = vld [vmem:[%s1 + $0xc0] sm:$0xff]
    %v166 = vld [vmem:[%s1 + $0xc8] sm:$0xff]
    %v167 = vld [vmem:[%s1 + $0xd0] sm:$0xff]
    %v168 = vld [vmem:[%s1 + $0xd8] sm:$0xff]
    %v169 = vld [vmem:[%s1 + $0xe0] sm:$0xff]
    %v170 = vld [vmem:[%s1 + $0xe8] sm:$0xff]
    %v171 = vld [vmem:[%s1 + $0xf0] sm:$0xff]
    %v172 = vld [vmem:[%s1 + $0xf8] sm:$0xff]
    %v173 = vld [vmem:[%s1 + $0x100] sm:$0xff]
    %v174 = vld [vmem:[%s1 + $0x108] sm:$0xff]
    %v175 = vld [vmem:[%s1 + $0x110] sm:$0xff]
    %v176 = vld [vmem:[%s1 + $0x118] sm:$0xff]
    %v177 = vld [vmem:[%s5] sm:$0xff]
    %v178 = vld [vmem:[%s5 + $0x8] sm:$0x1]
    %v179 = vld [vmem:[%s7] sm:$0x1]
    %v180 = vld [vmem:[%s11] sm:$0x1]
    %v181 = vld [vmem:[%s21] sm:$0xff]
    %v182 = vld [vmem:[%s21 + $0x8] sm:$0xff]
    %v183 = vld [vmem:[%s21 + $0x10] sm:$0xff]
    %v184 = vld [vmem:[%s21 + $0x18] sm:$0xff]
    %v185 = vld [vmem:[%s21 + $0x20] sm:$0xff]
    %v186 = vld [vmem:[%s21 + $0x28] sm:$0xff]
    %v187 = vld [vmem:[%s21 + $0x30] sm:$0xff]
    %v188 = vld [vmem:[%s21 + $0x38] sm:$0xff]
    %v189 = vld [vmem:[%s21 + $0x40] sm:$0xff]
    %v190 = vld [vmem:[%s21 + $0x48] sm:$0xff]
    %v191 = vld [vmem:[%s21 + $0x50] sm:$0xff]
    %v192 = vld [vmem:[%s21 + $0x58] sm:$0xff]
    %v193 = vld [vmem:[%s21 + $0x60] sm:$0xff]
    %v194 = vld [vmem:[%s21 + $0x68] sm:$0xff]
    %v195 = vld [vmem:[%s21 + $0x70] sm:$0xff]
    %v196 = vld [vmem:[%s21 + $0x78] sm:$0xff]
    %v197 = vld [vmem:[%s23] sm:$0x1]
    %v198 = vld [vmem:[%s25] sm:$0xff]
    %v199 = vld [vmem:[%s25 + $0x8] sm:$0xff]
    %v200 = vld [vmem:[%s25 + $0x10] sm:$0xff]
    %v201 = vld [vmem:[%s25 + $0x18] sm:$0xff]
    %v202 = vld [vmem:[%s25 + $0x20] sm:$0xff]
    %v203 = vld [vmem:[%s25 + $0x28] sm:$0xff]
    %v204 = vld [vmem:[%s25 + $0x30] sm:$0xff]
    %v205 = vld [vmem:[%s25 + $0x38] sm:$0xff]
    %v206 = vld [vmem:[%s27] sm:$0x1]
    %v208 = vlaneseq
    %v209 = vshrl.u32 %v208, 7
    %v210 = vsub.s32 0, %v209
    %v211 = vrot.slane %v179, %v210
    %vm213 = vcmask 72704
    %v215 = vsel %vm213, %v141, 0
    %v218 = vsel %vm213, %v142, 0
    %v221 = vsel %vm213, %v143, 0
    %v224 = vsel %vm213, %v144, 0
    %v227 = vsel %vm213, %v145, 0
    %v230 = vsel %vm213, %v146, 0
    %v233 = vsel %vm213, %v147, 0
    %v236 = vsel %vm213, %v148, 0
    %v239 = vsel %vm213, %v149, 0
    %v242 = vsel %vm213, %v150, 0
    %v245 = vsel %vm213, %v151, 0
    %v248 = vsel %vm213, %v152, 0
    %v251 = vsel %vm213, %v153, 0
    %v254 = vsel %vm213, %v154, 0
    %v257 = vsel %vm213, %v155, 0
    %v260 = vsel %vm213, %v156, 0
    %v263 = vsel %vm213, %v157, 0
    %v266 = vsel %vm213, %v158, 0
    %v269 = vsel %vm213, %v159, 0
    %v272 = vsel %vm213, %v160, 0
    %v275 = vsel %vm213, %v161, 0
    %v278 = vsel %vm213, %v162, 0
    %v281 = vsel %vm213, %v163, 0
    %v284 = vsel %vm213, %v164, 0
    %v287 = vsel %vm213, %v165, 0
    %v290 = vsel %vm213, %v166, 0
    %v293 = vsel %vm213, %v167, 0
    %v296 = vsel %vm213, %v168, 0
    %v299 = vsel %vm213, %v169, 0
    %v302 = vsel %vm213, %v170, 0
    %v305 = vsel %vm213, %v171, 0
    %v308 = vsel %vm213, %v172, 0
    %v311 = vsel %vm213, %v173, 0
    %v314 = vsel %vm213, %v174, 0
    %v317 = vsel %vm213, %v175, 0
    %v320 = vsel %vm213, %v176, 0
    %vm322 = vcmask 1040384
    %v324 = vsel %vm322, %v178, 0
    %326 = vmatprep.subr.mxu0 0.0
    %327 = vmatpush1.msra.mxu0 0.0
    %328 = vmatprep.subr.mxu0 0.0
    %329 = vmatpush1.msra.mxu0 0.0
    %330 = vmatprep.subr.mxu0 0.0
    %331 = vmatpush1.msra.mxu0 0.0
    %332 = vmatprep.subr.mxu0 0.0
    %333 = vmatpush1.msra.mxu0 0.0
    %334 = vmatprep.subr.mxu0 0.0
    %335 = vmatpush1.msra.mxu0 0.0
    %336 = vmatprep.subr.mxu0 0.0
    %337 = vmatpush1.msra.mxu0 0.0
    %338 = vmatprep.subr.mxu0 0.0
    %339 = vmatpush1.msra.mxu0 0.0
    %340 = vmatprep.subr.mxu0 0.0
    %341 = vmatpush1.msra.mxu0 0.0
    %342 = vmatprep.subr.mxu0 0.0
    %343 = vmatpush1.msra.mxu0 0.0
    %344 = vmatprep.subr.mxu0 0.0
    %345 = vmatpush1.msra.mxu0 0.0
    %346 = vmatprep.subr.mxu0 0.0
    %347 = vmatpush1.msra.mxu0 0.0
    %348 = vmatprep.subr.mxu0 0.0
    %349 = vmatpush1.msra.mxu0 0.0
    %350 = vmatprep.subr.mxu0 0.0
    %351 = vmatpush1.msra.mxu0 0.0
    %352 = vmatprep.subr.mxu0 0.0
    %353 = vmatpush1.msra.mxu0 0.0
    %354 = vmatprep.subr.mxu0 0.0
    %355 = vmatpush1.msra.mxu0 %v324
    %356 = vmatprep.subr.mxu0 0.0
    %357 = vmatpush1.msra.mxu0 %v177
    %358 = vmatprep.subr.mxu0 0.0
    %359 = vmatpush2.msra.mxu0 0.0
    %360 = vmatprep.subr.mxu0 0.0
    %361 = vmatpush2.msra.mxu0 0.0
    %362 = vmatprep.subr.mxu0 0.0
    %363 = vmatpush2.msra.mxu0 0.0
    %364 = vmatprep.subr.mxu0 0.0
    %365 = vmatpush2.msra.mxu0 0.0
    %366 = vmatprep.subr.mxu0 0.0
    %367 = vmatpush2.msra.mxu0 0.0
    %368 = vmatprep.subr.mxu0 0.0
    %369 = vmatpush2.msra.mxu0 0.0
    %370 = vmatprep.subr.mxu0 0.0
    %371 = vmatpush2.msra.mxu0 0.0
    %372 = vmatprep.subr.mxu0 0.0
    %373 = vmatpush2.msra.mxu0 0.0
    %374 = vmatprep.subr.mxu0 0.0
    %375 = vmatpush2.msra.mxu0 0.0
    %376 = vmatprep.subr.mxu0 0.0
    %377 = vmatpush2.msra.mxu0 0.0
    %378 = vmatprep.subr.mxu0 0.0
    %379 = vmatpush2.msra.mxu0 0.0
    %380 = vmatprep.subr.mxu0 0.0
    %381 = vmatpush2.msra.mxu0 0.0
    %382 = vmatprep.subr.mxu0 0.0
    %383 = vmatpush2.msra.mxu0 0.0
    %384 = vmatprep.subr.mxu0 0.0
    %385 = vmatpush2.msra.mxu0 0.0
    %386 = vmatprep.subr.mxu0 0.0
    %387 = vmatpush2.msra.mxu0 0.0
    %388 = vmatprep.subr.mxu0 0.0
    %389 = vmatpush2.msra.mxu0 0.0
    %390 = vmatprep.mubr.f32.mxu0 0.0
    %391 = vmatmul.mubr.f32.gmra.mxu0 %v215
    %v392 = vpop.f32.mrf.mxu0
    %v393 = vadd.f32 %v211, %v392
    %v394 = vpop.f32.mrf.mxu0
    %395 = vmatprep.mubr.f32.mxu0 0.0
    %396 = vmatmul.mubr.f32.gmra.mxu0 %v218
    %v397 = vpop.f32.mrf.mxu0
    %v398 = vadd.f32 %v211, %v397
    %v399 = vpop.f32.mrf.mxu0
    %400 = vmatprep.mubr.f32.mxu0 0.0
    %401 = vmatmul.mubr.f32.gmra.mxu0 %v221
    %v402 = vpop.f32.mrf.mxu0
    %v403 = vadd.f32 %v211, %v402
    %v404 = vpop.f32.mrf.mxu0
    %405 = vmatprep.mubr.f32.mxu0 0.0
    %406 = vmatmul.mubr.f32.gmra.mxu0 %v224
    %v407 = vpop.f32.mrf.mxu0
    %v408 = vadd.f32 %v211, %v407
    %v409 = vpop.f32.mrf.mxu0
    %410 = vmatprep.mubr.f32.mxu0 0.0
    %411 = vmatmul.mubr.f32.gmra.mxu0 %v227
    %v412 = vpop.f32.mrf.mxu0
    %v413 = vadd.f32 %v211, %v412
    %v414 = vpop.f32.mrf.mxu0
    %415 = vmatprep.mubr.f32.mxu0 0.0
    %416 = vmatmul.mubr.f32.gmra.mxu0 %v230
    %v417 = vpop.f32.mrf.mxu0
    %v418 = vadd.f32 %v211, %v417
    %v419 = vpop.f32.mrf.mxu0
    %420 = vmatprep.mubr.f32.mxu0 0.0
    %421 = vmatmul.mubr.f32.gmra.mxu0 %v233
    %v422 = vpop.f32.mrf.mxu0
    %v423 = vadd.f32 %v211, %v422
    %v424 = vpop.f32.mrf.mxu0
    %425 = vmatprep.mubr.f32.mxu0 0.0
    %426 = vmatmul.mubr.f32.gmra.mxu0 %v236
    %v427 = vpop.f32.mrf.mxu0
    %v428 = vadd.f32 %v211, %v427
    %v429 = vpop.f32.mrf.mxu0
    %430 = vmatprep.mubr.f32.mxu0 0.0
    %431 = vmatmul.mubr.f32.gmra.mxu0 %v239
    %v432 = vpop.f32.mrf.mxu0
    %v433 = vadd.f32 %v211, %v432
    %v434 = vpop.f32.mrf.mxu0
    %435 = vmatprep.mubr.f32.mxu0 0.0
    %436 = vmatmul.mubr.f32.gmra.mxu0 %v242
    %v437 = vpop.f32.mrf.mxu0
    %v438 = vadd.f32 %v211, %v437
    %v439 = vpop.f32.mrf.mxu0
    %440 = vmatprep.mubr.f32.mxu0 0.0
    %441 = vmatmul.mubr.f32.gmra.mxu0 %v245
    %v442 = vpop.f32.mrf.mxu0
    %v443 = vadd.f32 %v211, %v442
    %v444 = vpop.f32.mrf.mxu0
    %445 = vmatprep.mubr.f32.mxu0 0.0
    %446 = vmatmul.mubr.f32.gmra.mxu0 %v248
    %v447 = vpop.f32.mrf.mxu0
    %v448 = vadd.f32 %v211, %v447
    %v449 = vpop.f32.mrf.mxu0
    %450 = vmatprep.mubr.f32.mxu0 0.0
    %451 = vmatmul.mubr.f32.gmra.mxu0 %v251
    %v452 = vpop.f32.mrf.mxu0
    %v453 = vadd.f32 %v211, %v452
    %v454 = vpop.f32.mrf.mxu0
    %455 = vmatprep.mubr.f32.mxu0 0.0
    %456 = vmatmul.mubr.f32.gmra.mxu0 %v254
    %v457 = vpop.f32.mrf.mxu0
    %v458 = vadd.f32 %v211, %v457
    %v459 = vpop.f32.mrf.mxu0
    %460 = vmatprep.mubr.f32.mxu0 0.0
    %461 = vmatmul.mubr.f32.gmra.mxu0 %v257
    %v462 = vpop.f32.mrf.mxu0
    %v463 = vadd.f32 %v211, %v462
    %v464 = vpop.f32.mrf.mxu0
    %465 = vmatprep.mubr.f32.mxu0 0.0
    %466 = vmatmul.mubr.f32.gmra.mxu0 %v260
    %v467 = vpop.f32.mrf.mxu0
    %v468 = vadd.f32 %v211, %v467
    %v469 = vpop.f32.mrf.mxu0
    %470 = vmatprep.mubr.f32.mxu0 0.0
    %471 = vmatmul.mubr.f32.gmra.mxu0 %v263
    %v472 = vpop.f32.mrf.mxu0
    %v473 = vadd.f32 %v211, %v472
    %v474 = vpop.f32.mrf.mxu0
    %475 = vmatprep.mubr.f32.mxu0 0.0
    %476 = vmatmul.mubr.f32.gmra.mxu0 %v266
    %v477 = vpop.f32.mrf.mxu0
    %v478 = vadd.f32 %v211, %v477
    %v479 = vpop.f32.mrf.mxu0
    %480 = vmatprep.mubr.f32.mxu0 0.0
    %481 = vmatmul.mubr.f32.gmra.mxu0 %v269
    %v482 = vpop.f32.mrf.mxu0
    %v483 = vadd.f32 %v211, %v482
    %v484 = vpop.f32.mrf.mxu0
    %485 = vmatprep.mubr.f32.mxu0 0.0
    %486 = vmatmul.mubr.f32.gmra.mxu0 %v272
    %v487 = vpop.f32.mrf.mxu0
    %v488 = vadd.f32 %v211, %v487
    %v489 = vpop.f32.mrf.mxu0
    %490 = vmatprep.mubr.f32.mxu0 0.0
    %491 = vmatmul.mubr.f32.gmra.mxu0 %v275
    %v492 = vpop.f32.mrf.mxu0
    %v493 = vadd.f32 %v211, %v492
    %v494 = vpop.f32.mrf.mxu0
    %495 = vmatprep.mubr.f32.mxu0 0.0
    %496 = vmatmul.mubr.f32.gmra.mxu0 %v278
    %v497 = vpop.f32.mrf.mxu0
    %v498 = vadd.f32 %v211, %v497
    %v499 = vpop.f32.mrf.mxu0
    %500 = vmatprep.mubr.f32.mxu0 0.0
    %501 = vmatmul.mubr.f32.gmra.mxu0 %v281
    %v502 = vpop.f32.mrf.mxu0
    %v503 = vadd.f32 %v211, %v502
    %v504 = vpop.f32.mrf.mxu0
    %505 = vmatprep.mubr.f32.mxu0 0.0
    %506 = vmatmul.mubr.f32.gmra.mxu0 %v284
    %v507 = vpop.f32.mrf.mxu0
    %v508 = vadd.f32 %v211, %v507
    %v509 = vpop.f32.mrf.mxu0
    %510 = vmatprep.mubr.f32.mxu0 0.0
    %511 = vmatmul.mubr.f32.gmra.mxu0 %v287
    %v512 = vpop.f32.mrf.mxu0
    %v513 = vadd.f32 %v211, %v512
    %v514 = vpop.f32.mrf.mxu0
    %515 = vmatprep.mubr.f32.mxu0 0.0
    %516 = vmatmul.mubr.f32.gmra.mxu0 %v290
    %v517 = vpop.f32.mrf.mxu0
    %v518 = vadd.f32 %v211, %v517
    %v519 = vpop.f32.mrf.mxu0
    %520 = vmatprep.mubr.f32.mxu0 0.0
    %521 = vmatmul.mubr.f32.gmra.mxu0 %v293
    %v522 = vpop.f32.mrf.mxu0
    %v523 = vadd.f32 %v211, %v522
    %v524 = vpop.f32.mrf.mxu0
    %525 = vmatprep.mubr.f32.mxu0 0.0
    %526 = vmatmul.mubr.f32.gmra.mxu0 %v296
    %v527 = vpop.f32.mrf.mxu0
    %v528 = vadd.f32 %v211, %v527
    %v529 = vpop.f32.mrf.mxu0
    %530 = vmatprep.mubr.f32.mxu0 0.0
    %531 = vmatmul.mubr.f32.gmra.mxu0 %v299
    %v532 = vpop.f32.mrf.mxu0
    %v533 = vadd.f32 %v211, %v532
    %v534 = vpop.f32.mrf.mxu0
    %535 = vmatprep.mubr.f32.mxu0 0.0
    %536 = vmatmul.mubr.f32.gmra.mxu0 %v302
    %v537 = vpop.f32.mrf.mxu0
    %v538 = vadd.f32 %v211, %v537
    %v539 = vpop.f32.mrf.mxu0
    %540 = vmatprep.mubr.f32.mxu0 0.0
    %541 = vmatmul.mubr.f32.gmra.mxu0 %v305
    %v542 = vpop.f32.mrf.mxu0
    %v543 = vadd.f32 %v211, %v542
    %v544 = vpop.f32.mrf.mxu0
    %545 = vmatprep.mubr.f32.mxu0 0.0
    %546 = vmatmul.mubr.f32.gmra.mxu0 %v308
    %v547 = vpop.f32.mrf.mxu0
    %v548 = vadd.f32 %v211, %v547
    %v549 = vpop.f32.mrf.mxu0
    %550 = vmatprep.mubr.f32.mxu0 0.0
    %551 = vmatmul.mubr.f32.gmra.mxu0 %v311
    %v552 = vpop.f32.mrf.mxu0
    %v553 = vadd.f32 %v211, %v552
    %v554 = vpop.f32.mrf.mxu0
    %555 = vmatprep.mubr.f32.mxu0 0.0
    %556 = vmatmul.mubr.f32.gmra.mxu0 %v314
    %v557 = vpop.f32.mrf.mxu0
    %v558 = vadd.f32 %v211, %v557
    %v559 = vpop.f32.mrf.mxu0
    %560 = vmatprep.mubr.f32.mxu0 0.0
    %561 = vmatmul.mubr.f32.gmra.mxu0 %v317
    %v562 = vpop.f32.mrf.mxu0
    %v563 = vadd.f32 %v211, %v562
    %v564 = vpop.f32.mrf.mxu0
    %565 = vmatprep.mubr.f32.mxu0 0.0
    %566 = vmatmul.mubr.f32.gmra.mxu0 %v320
    %v567 = vpop.f32.mrf.mxu0
    %v568 = vadd.f32 %v211, %v567
    %v569 = vpop.f32.mrf.mxu0
    %570 = vdwg.mxu0
    %v571 = vmax.f32 %v393, %v438
    %v572 = vmax.f32 %v398, %v443
    %v573 = vmax.f32 %v403, %v448
    %v574 = vmax.f32 %v408, %v453
    %v575 = vmax.f32 %v413, %v458
    %v576 = vmax.f32 %v418, %v463
    %v577 = vmax.f32 %v423, %v468
    %v578 = vmax.f32 %v428, %v473
    %v579 = vmax.f32 %v433, %v478
    %v580 = vmax.f32 %v483, %v528
    %v581 = vmax.f32 %v488, %v533
    %v582 = vmax.f32 %v493, %v538
    %v583 = vmax.f32 %v498, %v543
    %v584 = vmax.f32 %v503, %v548
    %v585 = vmax.f32 %v508, %v553
    %v586 = vmax.f32 %v513, %v558
    %v587 = vmax.f32 %v518, %v563
    %v588 = vmax.f32 %v523, %v568
    %v589 = vmax.f32 %v571, %v580
    %v590 = vmax.f32 %v572, %v581
    %v591 = vmax.f32 %v573, %v582
    %v592 = vmax.f32 %v574, %v583
    %v593 = vmax.f32 %v575, %v584
    %v594 = vmax.f32 %v576, %v585
    %v595 = vmax.f32 %v577, %v586
    %v596 = vmax.f32 %v578, %v587
    %v597 = vmax.f32 %v579, %v588
    %vm598 = vcmp.ge.f32.partialorder %v589, 0.0
    %vm599 = vcmp.ge.f32.partialorder %v590, 0.0
    %vm600 = vcmp.ge.f32.partialorder %v591, 0.0
    %vm601 = vcmp.ge.f32.partialorder %v592, 0.0
    %vm602 = vcmp.ge.f32.partialorder %v593, 0.0
    %vm603 = vcmp.ge.f32.partialorder %v594, 0.0
    %vm604 = vcmp.ge.f32.partialorder %v595, 0.0
    %vm605 = vcmp.ge.f32.partialorder %v596, 0.0
    %vm606 = vcmp.ge.f32.partialorder %v597, 0.0
    %v607 = vmul.f32 %v589, 0.01
    %v608 = vmul.f32 %v590, 0.01
    %v609 = vmul.f32 %v591, 0.01
    %v610 = vmul.f32 %v592, 0.01
    %v611 = vmul.f32 %v593, 0.01
    %v612 = vmul.f32 %v594, 0.01
    %v613 = vmul.f32 %v595, 0.01
    %v614 = vmul.f32 %v596, 0.01
    %v615 = vmul.f32 %v597, 0.01
    %v616 = vsel %vm598, %v589, %v607
    %v617 = vsel %vm599, %v590, %v608
    %v618 = vsel %vm600, %v591, %v609
    %v619 = vsel %vm601, %v592, %v610
    %v620 = vsel %vm602, %v593, %v611
    %v621 = vsel %vm603, %v594, %v612
    %v622 = vsel %vm604, %v595, %v613
    %v623 = vsel %vm605, %v596, %v614
    %v624 = vsel %vm606, %v597, %v615
    %v625 = vld [vmem:[%s59] sm:$0xff]
    %v626 = vld [vmem:[%s59 + $0x8] sm:$0xff]
    %v627 = vld [vmem:[%s59 + $0x10] sm:$0xff]
    %v628 = vld [vmem:[%s59 + $0x18] sm:$0xff]
    %vm629 = vcmask 588800
    %v631 = vsel %vm629, %v625, 0
    %v634 = vsel %vm629, %v626, 0
    %v637 = vsel %vm629, %v627, 0
    %v640 = vsel %vm629, %v628, 0
    %642 = vmatprep.subr.mxu0 0.0
    %643 = vmatpush1.msra.mxu0 0.0
    %644 = vmatprep.subr.mxu0 0.0
    %645 = vmatpush1.msra.mxu0 0.0
    %646 = vmatprep.subr.mxu0 0.0
    %647 = vmatpush1.msra.mxu0 0.0
    %648 = vmatprep.subr.mxu0 0.0
    %649 = vmatpush1.msra.mxu0 0.0
    %650 = vmatprep.subr.mxu0 0.0
    %651 = vmatpush1.msra.mxu0 0.0
    %652 = vmatprep.subr.mxu0 0.0
    %653 = vmatpush1.msra.mxu0 0.0
    %654 = vmatprep.subr.mxu0 0.0
    %655 = vmatpush1.msra.mxu0 0.0
    %656 = vmatprep.subr.mxu0 0.0
    %657 = vmatpush1.msra.mxu0 %v624
    %658 = vmatprep.subr.mxu0 0.0
    %659 = vmatpush1.msra.mxu0 %v623
    %660 = vmatprep.subr.mxu0 0.0
    %661 = vmatpush1.msra.mxu0 %v622
    %662 = vmatprep.subr.mxu0 0.0
    %663 = vmatpush1.msra.mxu0 %v621
    %664 = vmatprep.subr.mxu0 0.0
    %665 = vmatpush1.msra.mxu0 %v620
    %666 = vmatprep.subr.mxu0 0.0
    %667 = vmatpush1.msra.mxu0 %v619
    %668 = vmatprep.subr.mxu0 0.0
    %669 = vmatpush1.msra.mxu0 %v618
    %670 = vmatprep.subr.mxu0 0.0
    %671 = vmatpush1.msra.mxu0 %v617
    %672 = vmatprep.subr.mxu0 0.0
    %673 = vmatpush1.msra.mxu0 %v616
    %674 = vmatprep.subr.mxu0 0.0
    %675 = vmatpush2.msra.mxu0 0.0
    %676 = vmatprep.subr.mxu0 0.0
    %677 = vmatpush2.msra.mxu0 0.0
    %678 = vmatprep.subr.mxu0 0.0
    %679 = vmatpush2.msra.mxu0 0.0
    %680 = vmatprep.subr.mxu0 0.0
    %681 = vmatpush2.msra.mxu0 0.0
    %682 = vmatprep.subr.mxu0 0.0
    %683 = vmatpush2.msra.mxu0 0.0
    %684 = vmatprep.subr.mxu0 0.0
    %685 = vmatpush2.msra.mxu0 0.0
    %686 = vmatprep.subr.mxu0 0.0
    %687 = vmatpush2.msra.mxu0 0.0
    %688 = vmatprep.subr.mxu0 0.0
    %689 = vmatpush2.msra.mxu0 0.0
    %690 = vmatprep.subr.mxu0 0.0
    %691 = vmatpush2.msra.mxu0 0.0
    %692 = vmatprep.subr.mxu0 0.0
    %693 = vmatpush2.msra.mxu0 0.0
    %694 = vmatprep.subr.mxu0 0.0
    %695 = vmatpush2.msra.mxu0 0.0
    %696 = vmatprep.subr.mxu0 0.0
    %697 = vmatpush2.msra.mxu0 0.0
    %698 = vmatprep.subr.mxu0 0.0
    %699 = vmatpush2.msra.mxu0 0.0
    %700 = vmatprep.subr.mxu0 0.0
    %701 = vmatpush2.msra.mxu0 0.0
    %702 = vmatprep.subr.mxu0 0.0
    %703 = vmatpush2.msra.mxu0 0.0
    %704 = vmatprep.subr.mxu0 0.0
    %705 = vmatpush2.msra.mxu0 0.0
    %706 = vmatprep.mubr.f32.mxu0 0.0
    %707 = vmatmul.mubr.f32.gmra.mxu0 %v631
    %v708 = vpop.f32.mrf.mxu0
    %v709 = vadd.f32 0.0, %v708
    %v710 = vpop.f32.mrf.mxu0
    %711 = vmatprep.mubr.f32.mxu0 0.0
    %712 = vmatmul.mubr.f32.gmra.mxu0 %v634
    %v713 = vpop.f32.mrf.mxu0
    %v714 = vadd.f32 0.0, %v713
    %v715 = vpop.f32.mrf.mxu0
    %716 = vmatprep.mubr.f32.mxu0 0.0
    %717 = vmatmul.mubr.f32.gmra.mxu0 %v637
    %v718 = vpop.f32.mrf.mxu0
    %v719 = vadd.f32 0.0, %v718
    %v720 = vpop.f32.mrf.mxu0
    %721 = vmatprep.mubr.f32.mxu0 0.0
    %722 = vmatmul.mubr.f32.gmra.mxu0 %v640
    %v723 = vpop.f32.mrf.mxu0
    %v724 = vadd.f32 0.0, %v723
    %v725 = vpop.f32.mrf.mxu0
    %726 = vdwg.mxu0
    %v727 = vld [vmem:[%s9] sm:$0xff]
    %v728 = vld [vmem:[%s9 + $0x8] sm:$0xff]
    %s729 = scalar_lea.vmem %s59, 32
    %v730 = vld [vmem:[%s729] sm:$0xff]
    %v731 = vld [vmem:[%s729 + $0x8] sm:$0xff]
    %v732 = vld [vmem:[%s729 + $0x10] sm:$0xff]
    %v733 = vld [vmem:[%s729 + $0x18] sm:$0xff]
    %v735 = vsel %vm629, %v730, 0
    %v738 = vsel %vm629, %v731, 0
    %v741 = vsel %vm629, %v732, 0
    %v744 = vsel %vm629, %v733, 0
    %746 = vmatprep.subr.mxu0 0.0
    %747 = vmatpush1.msra.mxu0 0.0
    %748 = vmatprep.subr.mxu0 0.0
    %749 = vmatpush1.msra.mxu0 0.0
    %750 = vmatprep.subr.mxu0 0.0
    %751 = vmatpush1.msra.mxu0 0.0
    %752 = vmatprep.subr.mxu0 0.0
    %753 = vmatpush1.msra.mxu0 0.0
    %754 = vmatprep.subr.mxu0 0.0
    %755 = vmatpush1.msra.mxu0 0.0
    %756 = vmatprep.subr.mxu0 0.0
    %757 = vmatpush1.msra.mxu0 0.0
    %758 = vmatprep.subr.mxu0 0.0
    %759 = vmatpush1.msra.mxu0 0.0
    %760 = vmatprep.subr.mxu0 0.0
    %761 = vmatpush1.msra.mxu0 %v624
    %762 = vmatprep.subr.mxu0 0.0
    %763 = vmatpush1.msra.mxu0 %v623
    %764 = vmatprep.subr.mxu0 0.0
    %765 = vmatpush1.msra.mxu0 %v622
    %766 = vmatprep.subr.mxu0 0.0
    %767 = vmatpush1.msra.mxu0 %v621
    %768 = vmatprep.subr.mxu0 0.0
    %769 = vmatpush1.msra.mxu0 %v620
    %770 = vmatprep.subr.mxu0 0.0
    %771 = vmatpush1.msra.mxu0 %v619
    %772 = vmatprep.subr.mxu0 0.0
    %773 = vmatpush1.msra.mxu0 %v618
    %774 = vmatprep.subr.mxu0 0.0
    %775 = vmatpush1.msra.mxu0 %v617
    %776 = vmatprep.subr.mxu0 0.0
    %777 = vmatpush1.msra.mxu0 %v616
    %778 = vmatprep.subr.mxu0 0.0
    %779 = vmatpush2.msra.mxu0 0.0
    %780 = vmatprep.subr.mxu0 0.0
    %781 = vmatpush2.msra.mxu0 0.0
    %782 = vmatprep.subr.mxu0 0.0
    %783 = vmatpush2.msra.mxu0 0.0
    %784 = vmatprep.subr.mxu0 0.0
    %785 = vmatpush2.msra.mxu0 0.0
    %786 = vmatprep.subr.mxu0 0.0
    %787 = vmatpush2.msra.mxu0 0.0
    %788 = vmatprep.subr.mxu0 0.0
    %789 = vmatpush2.msra.mxu0 0.0
    %790 = vmatprep.subr.mxu0 0.0
    %791 = vmatpush2.msra.mxu0 0.0
    %792 = vmatprep.subr.mxu0 0.0
    %793 = vmatpush2.msra.mxu0 0.0
    %794 = vmatprep.subr.mxu0 0.0
    %795 = vmatpush2.msra.mxu0 0.0
    %796 = vmatprep.subr.mxu0 0.0
    %797 = vmatpush2.msra.mxu0 0.0
    %798 = vmatprep.subr.mxu0 0.0
    %799 = vmatpush2.msra.mxu0 0.0
    %800 = vmatprep.subr.mxu0 0.0
    %801 = vmatpush2.msra.mxu0 0.0
    %802 = vmatprep.subr.mxu0 0.0
    %803 = vmatpush2.msra.mxu0 0.0
    %804 = vmatprep.subr.mxu0 0.0
    %805 = vmatpush2.msra.mxu0 0.0
    %806 = vmatprep.subr.mxu0 0.0
    %807 = vmatpush2.msra.mxu0 0.0
    %808 = vmatprep.subr.mxu0 0.0
    %809 = vmatpush2.msra.mxu0 0.0
    %810 = vmatprep.mubr.f32.mxu0 0.0
    %811 = vmatmul.mubr.f32.gmra.mxu0 %v735
    %v812 = vpop.f32.mrf.mxu0
    %v813 = vadd.f32 0.0, %v812
    %v814 = vpop.f32.mrf.mxu0
    %815 = vmatprep.mubr.f32.mxu0 0.0
    %816 = vmatmul.mubr.f32.gmra.mxu0 %v738
    %v817 = vpop.f32.mrf.mxu0
    %v818 = vadd.f32 0.0, %v817
    %v819 = vpop.f32.mrf.mxu0
    %820 = vmatprep.mubr.f32.mxu0 0.0
    %821 = vmatmul.mubr.f32.gmra.mxu0 %v741
    %v822 = vpop.f32.mrf.mxu0
    %v823 = vadd.f32 0.0, %v822
    %v824 = vpop.f32.mrf.mxu0
    %825 = vmatprep.mubr.f32.mxu0 0.0
    %826 = vmatmul.mubr.f32.gmra.mxu0 %v744
    %v827 = vpop.f32.mrf.mxu0
    %v828 = vadd.f32 0.0, %v827
    %v829 = vpop.f32.mrf.mxu0
    %830 = vdwg.mxu0
    %s831 = scalar_lea.vmem %s9, 16
    %v832 = vld [vmem:[%s831] sm:$0xff]
    %v833 = vld [vmem:[%s831 + $0x8] sm:$0xff]
    %vm834 = vcmask 130048
    %v836 = vsel %vm834, %v813, 0
    %v839 = vsel %vm834, %v818, 0
    %v842 = vsel %vm834, %v823, 0
    %v845 = vsel %vm834, %v828, 0
    %847 = vmatprep.subr.mxu0 0.0
    %848 = vmatpush1.msra.mxu0 0.0
    %849 = vmatprep.subr.mxu0 0.0
    %850 = vmatpush1.msra.mxu0 0.0
    %851 = vmatprep.subr.mxu0 0.0
    %852 = vmatpush1.msra.mxu0 0.0
    %853 = vmatprep.subr.mxu0 0.0
    %854 = vmatpush1.msra.mxu0 0.0
    %855 = vmatprep.subr.mxu0 0.0
    %856 = vmatpush1.msra.mxu0 0.0
    %857 = vmatprep.subr.mxu0 0.0
    %858 = vmatpush1.msra.mxu0 0.0
    %859 = vmatprep.subr.mxu0 0.0
    %860 = vmatpush1.msra.mxu0 0.0
    %861 = vmatprep.subr.mxu0 0.0
    %862 = vmatpush1.msra.mxu0 0.0
    %863 = vmatprep.subr.mxu0 0.0
    %864 = vmatpush1.msra.mxu0 0.0
    %865 = vmatprep.subr.mxu0 0.0
    %866 = vmatpush1.msra.mxu0 0.0
    %867 = vmatprep.subr.mxu0 0.0
    %868 = vmatpush1.msra.mxu0 0.0
    %869 = vmatprep.subr.mxu0 0.0
    %870 = vmatpush1.msra.mxu0 0.0
    %871 = vmatprep.subr.mxu0 0.0
    %872 = vmatpush1.msra.mxu0 0.0
    %873 = vmatprep.subr.mxu0 0.0
    %874 = vmatpush1.msra.mxu0 0.0
    %875 = vmatprep.subr.mxu0 0.0
    %876 = vmatpush1.msra.mxu0 %v833
    %877 = vmatprep.subr.mxu0 0.0
    %878 = vmatpush1.msra.mxu0 %v832
    %879 = vmatprep.subr.mxu0 0.0
    %880 = vmatpush2.msra.mxu0 0.0
    %881 = vmatprep.subr.mxu0 0.0
    %882 = vmatpush2.msra.mxu0 0.0
    %883 = vmatprep.subr.mxu0 0.0
    %884 = vmatpush2.msra.mxu0 0.0
    %885 = vmatprep.subr.mxu0 0.0
    %886 = vmatpush2.msra.mxu0 0.0
    %887 = vmatprep.subr.mxu0 0.0
    %888 = vmatpush2.msra.mxu0 0.0
    %889 = vmatprep.subr.mxu0 0.0
    %890 = vmatpush2.msra.mxu0 0.0
    %891 = vmatprep.subr.mxu0 0.0
    %892 = vmatpush2.msra.mxu0 0.0
    %893 = vmatprep.subr.mxu0 0.0
    %894 = vmatpush2.msra.mxu0 0.0
    %895 = vmatprep.subr.mxu0 0.0
    %896 = vmatpush2.msra.mxu0 0.0
    %897 = vmatprep.subr.mxu0 0.0
    %898 = vmatpush2.msra.mxu0 0.0
    %899 = vmatprep.subr.mxu0 0.0
    %900 = vmatpush2.msra.mxu0 0.0
    %901 = vmatprep.subr.mxu0 0.0
    %902 = vmatpush2.msra.mxu0 0.0
    %903 = vmatprep.subr.mxu0 0.0
    %904 = vmatpush2.msra.mxu0 0.0
    %905 = vmatprep.subr.mxu0 0.0
    %906 = vmatpush2.msra.mxu0 0.0
    %907 = vmatprep.subr.mxu0 0.0
    %908 = vmatpush2.msra.mxu0 0.0
    %909 = vmatprep.subr.mxu0 0.0
    %910 = vmatpush2.msra.mxu0 0.0
    %911 = vmatprep.mubr.f32.mxu0 0.0
    %912 = vmatmul.mubr.f32.gmra.mxu0 %v836
    %v913 = vpop.f32.mrf.mxu0
    %v914 = vadd.f32 0.0, %v913
    %v915 = vpop.f32.mrf.mxu0
    %916 = vmatprep.mubr.f32.mxu0 0.0
    %917 = vmatmul.mubr.f32.gmra.mxu0 %v839
    %v918 = vpop.f32.mrf.mxu0
    %v919 = vadd.f32 0.0, %v918
    %v920 = vpop.f32.mrf.mxu0
    %921 = vmatprep.mubr.f32.mxu0 0.0
    %922 = vmatmul.mubr.f32.gmra.mxu0 %v842
    %v923 = vpop.f32.mrf.mxu0
    %v924 = vadd.f32 0.0, %v923
    %v925 = vpop.f32.mrf.mxu0
    %926 = vmatprep.mubr.f32.mxu0 0.0
    %927 = vmatmul.mubr.f32.gmra.mxu0 %v845
    %v928 = vpop.f32.mrf.mxu0
    %v929 = vadd.f32 0.0, %v928
    %v930 = vpop.f32.mrf.mxu0
    %931 = vdwg.mxu0
    %v933 = vsel %vm834, %v709, 0
    %v936 = vsel %vm834, %v714, 0
    %v939 = vsel %vm834, %v719, 0
    %v942 = vsel %vm834, %v724, 0
    %944 = vmatprep.subr.mxu0 0.0
    %945 = vmatpush1.msra.mxu0 0.0
    %946 = vmatprep.subr.mxu0 0.0
    %947 = vmatpush1.msra.mxu0 0.0
    %948 = vmatprep.subr.mxu0 0.0
    %949 = vmatpush1.msra.mxu0 0.0
    %950 = vmatprep.subr.mxu0 0.0
    %951 = vmatpush1.msra.mxu0 0.0
    %952 = vmatprep.subr.mxu0 0.0
    %953 = vmatpush1.msra.mxu0 0.0
    %954 = vmatprep.subr.mxu0 0.0
    %955 = vmatpush1.msra.mxu0 0.0
    %956 = vmatprep.subr.mxu0 0.0
    %957 = vmatpush1.msra.mxu0 0.0
    %958 = vmatprep.subr.mxu0 0.0
    %959 = vmatpush1.msra.mxu0 0.0
    %960 = vmatprep.subr.mxu0 0.0
    %961 = vmatpush1.msra.mxu0 0.0
    %962 = vmatprep.subr.mxu0 0.0
    %963 = vmatpush1.msra.mxu0 0.0
    %964 = vmatprep.subr.mxu0 0.0
    %965 = vmatpush1.msra.mxu0 0.0
    %966 = vmatprep.subr.mxu0 0.0
    %967 = vmatpush1.msra.mxu0 0.0
    %968 = vmatprep.subr.mxu0 0.0
    %969 = vmatpush1.msra.mxu0 0.0
    %970 = vmatprep.subr.mxu0 0.0
    %971 = vmatpush1.msra.mxu0 0.0
    %972 = vmatprep.subr.mxu0 0.0
    %973 = vmatpush1.msra.mxu0 %v728
    %974 = vmatprep.subr.mxu0 0.0
    %975 = vmatpush1.msra.mxu0 %v727
    %976 = vmatprep.subr.mxu0 0.0
    %977 = vmatpush2.msra.mxu0 0.0
    %978 = vmatprep.subr.mxu0 0.0
    %979 = vmatpush2.msra.mxu0 0.0
    %980 = vmatprep.subr.mxu0 0.0
    %981 = vmatpush2.msra.mxu0 0.0
    %982 = vmatprep.subr.mxu0 0.0
    %983 = vmatpush2.msra.mxu0 0.0
    %984 = vmatprep.subr.mxu0 0.0
    %985 = vmatpush2.msra.mxu0 0.0
    %986 = vmatprep.subr.mxu0 0.0
    %987 = vmatpush2.msra.mxu0 0.0
    %988 = vmatprep.subr.mxu0 0.0
    %989 = vmatpush2.msra.mxu0 0.0
    %990 = vmatprep.subr.mxu0 0.0
    %991 = vmatpush2.msra.mxu0 0.0
    %992 = vmatprep.subr.mxu0 0.0
    %993 = vmatpush2.msra.mxu0 0.0
    %994 = vmatprep.subr.mxu0 0.0
    %995 = vmatpush2.msra.mxu0 0.0
    %996 = vmatprep.subr.mxu0 0.0
    %997 = vmatpush2.msra.mxu0 0.0
    %998 = vmatprep.subr.mxu0 0.0
    %999 = vmatpush2.msra.mxu0 0.0
    %1000 = vmatprep.subr.mxu0 0.0
    %1001 = vmatpush2.msra.mxu0 0.0
    %1002 = vmatprep.subr.mxu0 0.0
    %1003 = vmatpush2.msra.mxu0 0.0
    %1004 = vmatprep.subr.mxu0 0.0
    %1005 = vmatpush2.msra.mxu0 0.0
    %1006 = vmatprep.subr.mxu0 0.0
    %1007 = vmatpush2.msra.mxu0 0.0
    %1008 = vmatprep.mubr.f32.mxu0 0.0
    %1009 = vmatmul.mubr.f32.gmra.mxu0 %v933
    %v1010 = vpop.f32.mrf.mxu0
    %v1011 = vadd.f32 %v914, %v1010
    %v1012 = vpop.f32.mrf.mxu0
    %1013 = vmatprep.mubr.f32.mxu0 0.0
    %1014 = vmatmul.mubr.f32.gmra.mxu0 %v936
    %v1015 = vpop.f32.mrf.mxu0
    %v1016 = vadd.f32 %v919, %v1015
    %v1017 = vpop.f32.mrf.mxu0
    %1018 = vmatprep.mubr.f32.mxu0 0.0
    %1019 = vmatmul.mubr.f32.gmra.mxu0 %v939
    %v1020 = vpop.f32.mrf.mxu0
    %v1021 = vadd.f32 %v924, %v1020
    %v1022 = vpop.f32.mrf.mxu0
    %1023 = vmatprep.mubr.f32.mxu0 0.0
    %1024 = vmatmul.mubr.f32.gmra.mxu0 %v942
    %v1025 = vpop.f32.mrf.mxu0
    %v1026 = vadd.f32 %v929, %v1025
    %v1027 = vpop.f32.mrf.mxu0
    %1028 = vdwg.mxu0
    %s1029 = scalar_lea.vmem %s59, 64
    %v1030 = vld [vmem:[%s1029] sm:$0xff]
    %v1031 = vld [vmem:[%s1029 + $0x8] sm:$0xff]
    %v1032 = vld [vmem:[%s1029 + $0x10] sm:$0xff]
    %v1033 = vld [vmem:[%s1029 + $0x18] sm:$0xff]
    %v1035 = vsel %vm629, %v1030, 0
    %v1038 = vsel %vm629, %v1031, 0
    %v1041 = vsel %vm629, %v1032, 0
    %v1044 = vsel %vm629, %v1033, 0
    %1046 = vmatprep.subr.mxu0 0.0
    %1047 = vmatpush1.msra.mxu0 0.0
    %1048 = vmatprep.subr.mxu0 0.0
    %1049 = vmatpush1.msra.mxu0 0.0
    %1050 = vmatprep.subr.mxu0 0.0
    %1051 = vmatpush1.msra.mxu0 0.0
    %1052 = vmatprep.subr.mxu0 0.0
    %1053 = vmatpush1.msra.mxu0 0.0
    %1054 = vmatprep.subr.mxu0 0.0
    %1055 = vmatpush1.msra.mxu0 0.0
    %1056 = vmatprep.subr.mxu0 0.0
    %1057 = vmatpush1.msra.mxu0 0.0
    %1058 = vmatprep.subr.mxu0 0.0
    %1059 = vmatpush1.msra.mxu0 0.0
    %1060 = vmatprep.subr.mxu0 0.0
    %1061 = vmatpush1.msra.mxu0 %v624
    %1062 = vmatprep.subr.mxu0 0.0
    %1063 = vmatpush1.msra.mxu0 %v623
    %1064 = vmatprep.subr.mxu0 0.0
    %1065 = vmatpush1.msra.mxu0 %v622
    %1066 = vmatprep.subr.mxu0 0.0
    %1067 = vmatpush1.msra.mxu0 %v621
    %1068 = vmatprep.subr.mxu0 0.0
    %1069 = vmatpush1.msra.mxu0 %v620
    %1070 = vmatprep.subr.mxu0 0.0
    %1071 = vmatpush1.msra.mxu0 %v619
    %1072 = vmatprep.subr.mxu0 0.0
    %1073 = vmatpush1.msra.mxu0 %v618
    %1074 = vmatprep.subr.mxu0 0.0
    %1075 = vmatpush1.msra.mxu0 %v617
    %1076 = vmatprep.subr.mxu0 0.0
    %1077 = vmatpush1.msra.mxu0 %v616
    %1078 = vmatprep.subr.mxu0 0.0
    %1079 = vmatpush2.msra.mxu0 0.0
    %1080 = vmatprep.subr.mxu0 0.0
    %1081 = vmatpush2.msra.mxu0 0.0
    %1082 = vmatprep.subr.mxu0 0.0
    %1083 = vmatpush2.msra.mxu0 0.0
    %1084 = vmatprep.subr.mxu0 0.0
    %1085 = vmatpush2.msra.mxu0 0.0
    %1086 = vmatprep.subr.mxu0 0.0
    %1087 = vmatpush2.msra.mxu0 0.0
    %1088 = vmatprep.subr.mxu0 0.0
    %1089 = vmatpush2.msra.mxu0 0.0
    %1090 = vmatprep.subr.mxu0 0.0
    %1091 = vmatpush2.msra.mxu0 0.0
    %1092 = vmatprep.subr.mxu0 0.0
    %1093 = vmatpush2.msra.mxu0 0.0
    %1094 = vmatprep.subr.mxu0 0.0
    %1095 = vmatpush2.msra.mxu0 0.0
    %1096 = vmatprep.subr.mxu0 0.0
    %1097 = vmatpush2.msra.mxu0 0.0
    %1098 = vmatprep.subr.mxu0 0.0
    %1099 = vmatpush2.msra.mxu0 0.0
    %1100 = vmatprep.subr.mxu0 0.0
    %1101 = vmatpush2.msra.mxu0 0.0
    %1102 = vmatprep.subr.mxu0 0.0
    %1103 = vmatpush2.msra.mxu0 0.0
    %1104 = vmatprep.subr.mxu0 0.0
    %1105 = vmatpush2.msra.mxu0 0.0
    %1106 = vmatprep.subr.mxu0 0.0
    %1107 = vmatpush2.msra.mxu0 0.0
    %1108 = vmatprep.subr.mxu0 0.0
    %1109 = vmatpush2.msra.mxu0 0.0
    %1110 = vmatprep.mubr.f32.mxu0 0.0
    %1111 = vmatmul.mubr.f32.gmra.mxu0 %v1035
    %v1112 = vpop.f32.mrf.mxu0
    %v1113 = vadd.f32 0.0, %v1112
    %v1114 = vpop.f32.mrf.mxu0
    %1115 = vmatprep.mubr.f32.mxu0 0.0
    %1116 = vmatmul.mubr.f32.gmra.mxu0 %v1038
    %v1117 = vpop.f32.mrf.mxu0
    %v1118 = vadd.f32 0.0, %v1117
    %v1119 = vpop.f32.mrf.mxu0
    %1120 = vmatprep.mubr.f32.mxu0 0.0
    %1121 = vmatmul.mubr.f32.gmra.mxu0 %v1041
    %v1122 = vpop.f32.mrf.mxu0
    %v1123 = vadd.f32 0.0, %v1122
    %v1124 = vpop.f32.mrf.mxu0
    %1125 = vmatprep.mubr.f32.mxu0 0.0
    %1126 = vmatmul.mubr.f32.gmra.mxu0 %v1044
    %v1127 = vpop.f32.mrf.mxu0
    %v1128 = vadd.f32 0.0, %v1127
    %v1129 = vpop.f32.mrf.mxu0
    %1130 = vdwg.mxu0
    %s1131 = scalar_lea.vmem %s9, 32
    %v1132 = vld [vmem:[%s1131] sm:$0xff]
    %v1133 = vld [vmem:[%s1131 + $0x8] sm:$0xff]
    %v1135 = vsel %vm834, %v1113, 0
    %v1138 = vsel %vm834, %v1118, 0
    %v1141 = vsel %vm834, %v1123, 0
    %v1144 = vsel %vm834, %v1128, 0
    %1146 = vmatprep.subr.mxu0 0.0
    %1147 = vmatpush1.msra.mxu0 0.0
    %1148 = vmatprep.subr.mxu0 0.0
    %1149 = vmatpush1.msra.mxu0 0.0
    %1150 = vmatprep.subr.mxu0 0.0
    %1151 = vmatpush1.msra.mxu0 0.0
    %1152 = vmatprep.subr.mxu0 0.0
    %1153 = vmatpush1.msra.mxu0 0.0
    %1154 = vmatprep.subr.mxu0 0.0
    %1155 = vmatpush1.msra.mxu0 0.0
    %1156 = vmatprep.subr.mxu0 0.0
    %1157 = vmatpush1.msra.mxu0 0.0
    %1158 = vmatprep.subr.mxu0 0.0
    %1159 = vmatpush1.msra.mxu0 0.0
    %1160 = vmatprep.subr.mxu0 0.0
    %1161 = vmatpush1.msra.mxu0 0.0
    %1162 = vmatprep.subr.mxu0 0.0
    %1163 = vmatpush1.msra.mxu0 0.0
    %1164 = vmatprep.subr.mxu0 0.0
    %1165 = vmatpush1.msra.mxu0 0.0
    %1166 = vmatprep.subr.mxu0 0.0
    %1167 = vmatpush1.msra.mxu0 0.0
    %1168 = vmatprep.subr.mxu0 0.0
    %1169 = vmatpush1.msra.mxu0 0.0
    %1170 = vmatprep.subr.mxu0 0.0
    %1171 = vmatpush1.msra.mxu0 0.0
    %1172 = vmatprep.subr.mxu0 0.0
    %1173 = vmatpush1.msra.mxu0 0.0
    %1174 = vmatprep.subr.mxu0 0.0
    %1175 = vmatpush1.msra.mxu0 %v1133
    %1176 = vmatprep.subr.mxu0 0.0
    %1177 = vmatpush1.msra.mxu0 %v1132
    %1178 = vmatprep.subr.mxu0 0.0
    %1179 = vmatpush2.msra.mxu0 0.0
    %1180 = vmatprep.subr.mxu0 0.0
    %1181 = vmatpush2.msra.mxu0 0.0
    %1182 = vmatprep.subr.mxu0 0.0
    %1183 = vmatpush2.msra.mxu0 0.0
    %1184 = vmatprep.subr.mxu0 0.0
    %1185 = vmatpush2.msra.mxu0 0.0
    %1186 = vmatprep.subr.mxu0 0.0
    %1187 = vmatpush2.msra.mxu0 0.0
    %1188 = vmatprep.subr.mxu0 0.0
    %1189 = vmatpush2.msra.mxu0 0.0
    %1190 = vmatprep.subr.mxu0 0.0
    %1191 = vmatpush2.msra.mxu0 0.0
    %1192 = vmatprep.subr.mxu0 0.0
    %1193 = vmatpush2.msra.mxu0 0.0
    %1194 = vmatprep.subr.mxu0 0.0
    %1195 = vmatpush2.msra.mxu0 0.0
    %1196 = vmatprep.subr.mxu0 0.0
    %1197 = vmatpush2.msra.mxu0 0.0
    %1198 = vmatprep.subr.mxu0 0.0
    %1199 = vmatpush2.msra.mxu0 0.0
    %1200 = vmatprep.subr.mxu0 0.0
    %1201 = vmatpush2.msra.mxu0 0.0
    %1202 = vmatprep.subr.mxu0 0.0
    %1203 = vmatpush2.msra.mxu0 0.0
    %1204 = vmatprep.subr.mxu0 0.0
    %1205 = vmatpush2.msra.mxu0 0.0
    %1206 = vmatprep.subr.mxu0 0.0
    %1207 = vmatpush2.msra.mxu0 0.0
    %1208 = vmatprep.subr.mxu0 0.0
    %1209 = vmatpush2.msra.mxu0 0.0
    %1210 = vmatprep.mubr.f32.mxu0 0.0
    %1211 = vmatmul.mubr.f32.gmra.mxu0 %v1135
    %v1212 = vpop.f32.mrf.mxu0
    %v1213 = vadd.f32 0.0, %v1212
    %v1214 = vpop.f32.mrf.mxu0
    %1215 = vmatprep.mubr.f32.mxu0 0.0
    %1216 = vmatmul.mubr.f32.gmra.mxu0 %v1138
    %v1217 = vpop.f32.mrf.mxu0
    %v1218 = vadd.f32 0.0, %v1217
    %v1219 = vpop.f32.mrf.mxu0
    %1220 = vmatprep.mubr.f32.mxu0 0.0
    %1221 = vmatmul.mubr.f32.gmra.mxu0 %v1141
    %v1222 = vpop.f32.mrf.mxu0
    %v1223 = vadd.f32 0.0, %v1222
    %v1224 = vpop.f32.mrf.mxu0
    %1225 = vmatprep.mubr.f32.mxu0 0.0
    %1226 = vmatmul.mubr.f32.gmra.mxu0 %v1144
    %v1227 = vpop.f32.mrf.mxu0
    %v1228 = vadd.f32 0.0, %v1227
    %v1229 = vpop.f32.mrf.mxu0
    %1230 = vdwg.mxu0
    %v1231 = vadd.f32 %v1011, %v1213
    %v1232 = vadd.f32 %v1016, %v1218
    %v1233 = vadd.f32 %v1021, %v1223
    %v1234 = vadd.f32 %v1026, %v1228
    %s1235 = scalar_lea.vmem %s59, 96
    %v1236 = vld [vmem:[%s1235] sm:$0xff]
    %v1237 = vld [vmem:[%s1235 + $0x8] sm:$0xff]
    %v1238 = vld [vmem:[%s1235 + $0x10] sm:$0xff]
    %v1239 = vld [vmem:[%s1235 + $0x18] sm:$0xff]
    %v1241 = vsel %vm629, %v1236, 0
    %v1244 = vsel %vm629, %v1237, 0
    %v1247 = vsel %vm629, %v1238, 0
    %v1250 = vsel %vm629, %v1239, 0
    %1252 = vmatprep.subr.mxu0 0.0
    %1253 = vmatpush1.msra.mxu0 0.0
    %1254 = vmatprep.subr.mxu0 0.0
    %1255 = vmatpush1.msra.mxu0 0.0
    %1256 = vmatprep.subr.mxu0 0.0
    %1257 = vmatpush1.msra.mxu0 0.0
    %1258 = vmatprep.subr.mxu0 0.0
    %1259 = vmatpush1.msra.mxu0 0.0
    %1260 = vmatprep.subr.mxu0 0.0
    %1261 = vmatpush1.msra.mxu0 0.0
    %1262 = vmatprep.subr.mxu0 0.0
    %1263 = vmatpush1.msra.mxu0 0.0
    %1264 = vmatprep.subr.mxu0 0.0
    %1265 = vmatpush1.msra.mxu0 0.0
    %1266 = vmatprep.subr.mxu0 0.0
    %1267 = vmatpush1.msra.mxu0 %v624
    %1268 = vmatprep.subr.mxu0 0.0
    %1269 = vmatpush1.msra.mxu0 %v623
    %1270 = vmatprep.subr.mxu0 0.0
    %1271 = vmatpush1.msra.mxu0 %v622
    %1272 = vmatprep.subr.mxu0 0.0
    %1273 = vmatpush1.msra.mxu0 %v621
    %1274 = vmatprep.subr.mxu0 0.0
    %1275 = vmatpush1.msra.mxu0 %v620
    %1276 = vmatprep.subr.mxu0 0.0
    %1277 = vmatpush1.msra.mxu0 %v619
    %1278 = vmatprep.subr.mxu0 0.0
    %1279 = vmatpush1.msra.mxu0 %v618
    %1280 = vmatprep.subr.mxu0 0.0
    %1281 = vmatpush1.msra.mxu0 %v617
    %1282 = vmatprep.subr.mxu0 0.0
    %1283 = vmatpush1.msra.mxu0 %v616
    %1284 = vmatprep.subr.mxu0 0.0
    %1285 = vmatpush2.msra.mxu0 0.0
    %1286 = vmatprep.subr.mxu0 0.0
    %1287 = vmatpush2.msra.mxu0 0.0
    %1288 = vmatprep.subr.mxu0 0.0
    %1289 = vmatpush2.msra.mxu0 0.0
    %1290 = vmatprep.subr.mxu0 0.0
    %1291 = vmatpush2.msra.mxu0 0.0
    %1292 = vmatprep.subr.mxu0 0.0
    %1293 = vmatpush2.msra.mxu0 0.0
    %1294 = vmatprep.subr.mxu0 0.0
    %1295 = vmatpush2.msra.mxu0 0.0
    %1296 = vmatprep.subr.mxu0 0.0
    %1297 = vmatpush2.msra.mxu0 0.0
    %1298 = vmatprep.subr.mxu0 0.0
    %1299 = vmatpush2.msra.mxu0 0.0
    %1300 = vmatprep.subr.mxu0 0.0
    %1301 = vmatpush2.msra.mxu0 0.0
    %1302 = vmatprep.subr.mxu0 0.0
    %1303 = vmatpush2.msra.mxu0 0.0
    %1304 = vmatprep.subr.mxu0 0.0
    %1305 = vmatpush2.msra.mxu0 0.0
    %1306 = vmatprep.subr.mxu0 0.0
    %1307 = vmatpush2.msra.mxu0 0.0
    %1308 = vmatprep.subr.mxu0 0.0
    %1309 = vmatpush2.msra.mxu0 0.0
    %1310 = vmatprep.subr.mxu0 0.0
    %1311 = vmatpush2.msra.mxu0 0.0
    %1312 = vmatprep.subr.mxu0 0.0
    %1313 = vmatpush2.msra.mxu0 0.0
    %1314 = vmatprep.subr.mxu0 0.0
    %1315 = vmatpush2.msra.mxu0 0.0
    %1316 = vmatprep.mubr.f32.mxu0 0.0
    %1317 = vmatmul.mubr.f32.gmra.mxu0 %v1241
    %v1318 = vpop.f32.mrf.mxu0
    %v1319 = vadd.f32 0.0, %v1318
    %v1320 = vpop.f32.mrf.mxu0
    %1321 = vmatprep.mubr.f32.mxu0 0.0
    %1322 = vmatmul.mubr.f32.gmra.mxu0 %v1244
    %v1323 = vpop.f32.mrf.mxu0
    %v1324 = vadd.f32 0.0, %v1323
    %v1325 = vpop.f32.mrf.mxu0
    %1326 = vmatprep.mubr.f32.mxu0 0.0
    %1327 = vmatmul.mubr.f32.gmra.mxu0 %v1247
    %v1328 = vpop.f32.mrf.mxu0
    %v1329 = vadd.f32 0.0, %v1328
    %v1330 = vpop.f32.mrf.mxu0
    %1331 = vmatprep.mubr.f32.mxu0 0.0
    %1332 = vmatmul.mubr.f32.gmra.mxu0 %v1250
    %v1333 = vpop.f32.mrf.mxu0
    %v1334 = vadd.f32 0.0, %v1333
    %v1335 = vpop.f32.mrf.mxu0
    %1336 = vdwg.mxu0
    %s1337 = scalar_lea.vmem %s9, 48
    %v1338 = vld [vmem:[%s1337] sm:$0xff]
    %v1339 = vld [vmem:[%s1337 + $0x8] sm:$0xff]
    %v1341 = vsel %vm834, %v1319, 0
    %v1344 = vsel %vm834, %v1324, 0
    %v1347 = vsel %vm834, %v1329, 0
    %v1350 = vsel %vm834, %v1334, 0
    %1352 = vmatprep.subr.mxu0 0.0
    %1353 = vmatpush1.msra.mxu0 0.0
    %1354 = vmatprep.subr.mxu0 0.0
    %1355 = vmatpush1.msra.mxu0 0.0
    %1356 = vmatprep.subr.mxu0 0.0
    %1357 = vmatpush1.msra.mxu0 0.0
    %1358 = vmatprep.subr.mxu0 0.0
    %1359 = vmatpush1.msra.mxu0 0.0
    %1360 = vmatprep.subr.mxu0 0.0
    %1361 = vmatpush1.msra.mxu0 0.0
    %1362 = vmatprep.subr.mxu0 0.0
    %1363 = vmatpush1.msra.mxu0 0.0
    %1364 = vmatprep.subr.mxu0 0.0
    %1365 = vmatpush1.msra.mxu0 0.0
    %1366 = vmatprep.subr.mxu0 0.0
    %1367 = vmatpush1.msra.mxu0 0.0
    %1368 = vmatprep.subr.mxu0 0.0
    %1369 = vmatpush1.msra.mxu0 0.0
    %1370 = vmatprep.subr.mxu0 0.0
    %1371 = vmatpush1.msra.mxu0 0.0
    %1372 = vmatprep.subr.mxu0 0.0
    %1373 = vmatpush1.msra.mxu0 0.0
    %1374 = vmatprep.subr.mxu0 0.0
    %1375 = vmatpush1.msra.mxu0 0.0
    %1376 = vmatprep.subr.mxu0 0.0
    %1377 = vmatpush1.msra.mxu0 0.0
    %1378 = vmatprep.subr.mxu0 0.0
    %1379 = vmatpush1.msra.mxu0 0.0
    %1380 = vmatprep.subr.mxu0 0.0
    %1381 = vmatpush1.msra.mxu0 %v1339
    %1382 = vmatprep.subr.mxu0 0.0
    %1383 = vmatpush1.msra.mxu0 %v1338
    %1384 = vmatprep.subr.mxu0 0.0
    %1385 = vmatpush2.msra.mxu0 0.0
    %1386 = vmatprep.subr.mxu0 0.0
    %1387 = vmatpush2.msra.mxu0 0.0
    %1388 = vmatprep.subr.mxu0 0.0
    %1389 = vmatpush2.msra.mxu0 0.0
    %1390 = vmatprep.subr.mxu0 0.0
    %1391 = vmatpush2.msra.mxu0 0.0
    %1392 = vmatprep.subr.mxu0 0.0
    %1393 = vmatpush2.msra.mxu0 0.0
    %1394 = vmatprep.subr.mxu0 0.0
    %1395 = vmatpush2.msra.mxu0 0.0
    %1396 = vmatprep.subr.mxu0 0.0
    %1397 = vmatpush2.msra.mxu0 0.0
    %1398 = vmatprep.subr.mxu0 0.0
    %1399 = vmatpush2.msra.mxu0 0.0
    %1400 = vmatprep.subr.mxu0 0.0
    %1401 = vmatpush2.msra.mxu0 0.0
    %1402 = vmatprep.subr.mxu0 0.0
    %1403 = vmatpush2.msra.mxu0 0.0
    %1404 = vmatprep.subr.mxu0 0.0
    %1405 = vmatpush2.msra.mxu0 0.0
    %1406 = vmatprep.subr.mxu0 0.0
    %1407 = vmatpush2.msra.mxu0 0.0
    %1408 = vmatprep.subr.mxu0 0.0
    %1409 = vmatpush2.msra.mxu0 0.0
    %1410 = vmatprep.subr.mxu0 0.0
    %1411 = vmatpush2.msra.mxu0 0.0
    %1412 = vmatprep.subr.mxu0 0.0
    %1413 = vmatpush2.msra.mxu0 0.0
    %1414 = vmatprep.subr.mxu0 0.0
    %1415 = vmatpush2.msra.mxu0 0.0
    %1416 = vmatprep.mubr.f32.mxu0 0.0
    %1417 = vmatmul.mubr.f32.gmra.mxu0 %v1341
    %v1418 = vpop.f32.mrf.mxu0
    %v1419 = vadd.f32 0.0, %v1418
    %v1420 = vpop.f32.mrf.mxu0
    %1421 = vmatprep.mubr.f32.mxu0 0.0
    %1422 = vmatmul.mubr.f32.gmra.mxu0 %v1344
    %v1423 = vpop.f32.mrf.mxu0
    %v1424 = vadd.f32 0.0, %v1423
    %v1425 = vpop.f32.mrf.mxu0
    %1426 = vmatprep.mubr.f32.mxu0 0.0
    %1427 = vmatmul.mubr.f32.gmra.mxu0 %v1347
    %v1428 = vpop.f32.mrf.mxu0
    %v1429 = vadd.f32 0.0, %v1428
    %v1430 = vpop.f32.mrf.mxu0
    %1431 = vmatprep.mubr.f32.mxu0 0.0
    %1432 = vmatmul.mubr.f32.gmra.mxu0 %v1350
    %v1433 = vpop.f32.mrf.mxu0
    %v1434 = vadd.f32 0.0, %v1433
    %v1435 = vpop.f32.mrf.mxu0
    %1436 = vdwg.mxu0
    %v1437 = vadd.f32 %v1231, %v1419
    %v1438 = vadd.f32 %v1232, %v1424
    %v1439 = vadd.f32 %v1233, %v1429
    %v1440 = vadd.f32 %v1234, %v1434
    %s1441 = scalar_lea.vmem %s59, 128
    %v1442 = vld [vmem:[%s1441] sm:$0xff]
    %v1443 = vld [vmem:[%s1441 + $0x8] sm:$0xff]
    %v1444 = vld [vmem:[%s1441 + $0x10] sm:$0xff]
    %v1445 = vld [vmem:[%s1441 + $0x18] sm:$0xff]
    %v1447 = vsel %vm629, %v1442, 0
    %v1450 = vsel %vm629, %v1443, 0
    %v1453 = vsel %vm629, %v1444, 0
    %v1456 = vsel %vm629, %v1445, 0
    %1458 = vmatprep.subr.mxu0 0.0
    %1459 = vmatpush1.msra.mxu0 0.0
    %1460 = vmatprep.subr.mxu0 0.0
    %1461 = vmatpush1.msra.mxu0 0.0
    %1462 = vmatprep.subr.mxu0 0.0
    %1463 = vmatpush1.msra.mxu0 0.0
    %1464 = vmatprep.subr.mxu0 0.0
    %1465 = vmatpush1.msra.mxu0 0.0
    %1466 = vmatprep.subr.mxu0 0.0
    %1467 = vmatpush1.msra.mxu0 0.0
    %1468 = vmatprep.subr.mxu0 0.0
    %1469 = vmatpush1.msra.mxu0 0.0
    %1470 = vmatprep.subr.mxu0 0.0
    %1471 = vmatpush1.msra.mxu0 0.0
    %1472 = vmatprep.subr.mxu0 0.0
    %1473 = vmatpush1.msra.mxu0 %v624
    %1474 = vmatprep.subr.mxu0 0.0
    %1475 = vmatpush1.msra.mxu0 %v623
    %1476 = vmatprep.subr.mxu0 0.0
    %1477 = vmatpush1.msra.mxu0 %v622
    %1478 = vmatprep.subr.mxu0 0.0
    %1479 = vmatpush1.msra.mxu0 %v621
    %1480 = vmatprep.subr.mxu0 0.0
    %1481 = vmatpush1.msra.mxu0 %v620
    %1482 = vmatprep.subr.mxu0 0.0
    %1483 = vmatpush1.msra.mxu0 %v619
    %1484 = vmatprep.subr.mxu0 0.0
    %1485 = vmatpush1.msra.mxu0 %v618
    %1486 = vmatprep.subr.mxu0 0.0
    %1487 = vmatpush1.msra.mxu0 %v617
    %1488 = vmatprep.subr.mxu0 0.0
    %1489 = vmatpush1.msra.mxu0 %v616
    %1490 = vmatprep.subr.mxu0 0.0
    %1491 = vmatpush2.msra.mxu0 0.0
    %1492 = vmatprep.subr.mxu0 0.0
    %1493 = vmatpush2.msra.mxu0 0.0
    %1494 = vmatprep.subr.mxu0 0.0
    %1495 = vmatpush2.msra.mxu0 0.0
    %1496 = vmatprep.subr.mxu0 0.0
    %1497 = vmatpush2.msra.mxu0 0.0
    %1498 = vmatprep.subr.mxu0 0.0
    %1499 = vmatpush2.msra.mxu0 0.0
    %1500 = vmatprep.subr.mxu0 0.0
    %1501 = vmatpush2.msra.mxu0 0.0
    %1502 = vmatprep.subr.mxu0 0.0
    %1503 = vmatpush2.msra.mxu0 0.0
    %1504 = vmatprep.subr.mxu0 0.0
    %1505 = vmatpush2.msra.mxu0 0.0
    %1506 = vmatprep.subr.mxu0 0.0
    %1507 = vmatpush2.msra.mxu0 0.0
    %1508 = vmatprep.subr.mxu0 0.0
    %1509 = vmatpush2.msra.mxu0 0.0
    %1510 = vmatprep.subr.mxu0 0.0
    %1511 = vmatpush2.msra.mxu0 0.0
    %1512 = vmatprep.subr.mxu0 0.0
    %1513 = vmatpush2.msra.mxu0 0.0
    %1514 = vmatprep.subr.mxu0 0.0
    %1515 = vmatpush2.msra.mxu0 0.0
    %1516 = vmatprep.subr.mxu0 0.0
    %1517 = vmatpush2.msra.mxu0 0.0
    %1518 = vmatprep.subr.mxu0 0.0
    %1519 = vmatpush2.msra.mxu0 0.0
    %1520 = vmatprep.subr.mxu0 0.0
    %1521 = vmatpush2.msra.mxu0 0.0
    %1522 = vmatprep.mubr.f32.mxu0 0.0
    %1523 = vmatmul.mubr.f32.gmra.mxu0 %v1447
    %v1524 = vpop.f32.mrf.mxu0
    %v1525 = vadd.f32 0.0, %v1524
    %v1526 = vpop.f32.mrf.mxu0
    %1527 = vmatprep.mubr.f32.mxu0 0.0
    %1528 = vmatmul.mubr.f32.gmra.mxu0 %v1450
    %v1529 = vpop.f32.mrf.mxu0
    %v1530 = vadd.f32 0.0, %v1529
    %v1531 = vpop.f32.mrf.mxu0
    %1532 = vmatprep.mubr.f32.mxu0 0.0
    %1533 = vmatmul.mubr.f32.gmra.mxu0 %v1453
    %v1534 = vpop.f32.mrf.mxu0
    %v1535 = vadd.f32 0.0, %v1534
    %v1536 = vpop.f32.mrf.mxu0
    %1537 = vmatprep.mubr.f32.mxu0 0.0
    %1538 = vmatmul.mubr.f32.gmra.mxu0 %v1456
    %v1539 = vpop.f32.mrf.mxu0
    %v1540 = vadd.f32 0.0, %v1539
    %v1541 = vpop.f32.mrf.mxu0
    %1542 = vdwg.mxu0
    %s1543 = scalar_lea.vmem %s9, 64
    %v1544 = vld [vmem:[%s1543] sm:$0xff]
    %v1545 = vld [vmem:[%s1543 + $0x8] sm:$0xff]
    %v1547 = vsel %vm834, %v1525, 0
    %v1550 = vsel %vm834, %v1530, 0
    %v1553 = vsel %vm834, %v1535, 0
    %v1556 = vsel %vm834, %v1540, 0
    %1558 = vmatprep.subr.mxu0 0.0
    %1559 = vmatpush1.msra.mxu0 0.0
    %1560 = vmatprep.subr.mxu0 0.0
    %1561 = vmatpush1.msra.mxu0 0.0
    %1562 = vmatprep.subr.mxu0 0.0
    %1563 = vmatpush1.msra.mxu0 0.0
    %1564 = vmatprep.subr.mxu0 0.0
    %1565 = vmatpush1.msra.mxu0 0.0
    %1566 = vmatprep.subr.mxu0 0.0
    %1567 = vmatpush1.msra.mxu0 0.0
    %1568 = vmatprep.subr.mxu0 0.0
    %1569 = vmatpush1.msra.mxu0 0.0
    %1570 = vmatprep.subr.mxu0 0.0
    %1571 = vmatpush1.msra.mxu0 0.0
    %1572 = vmatprep.subr.mxu0 0.0
    %1573 = vmatpush1.msra.mxu0 0.0
    %1574 = vmatprep.subr.mxu0 0.0
    %1575 = vmatpush1.msra.mxu0 0.0
    %1576 = vmatprep.subr.mxu0 0.0
    %1577 = vmatpush1.msra.mxu0 0.0
    %1578 = vmatprep.subr.mxu0 0.0
    %1579 = vmatpush1.msra.mxu0 0.0
    %1580 = vmatprep.subr.mxu0 0.0
    %1581 = vmatpush1.msra.mxu0 0.0
    %1582 = vmatprep.subr.mxu0 0.0
    %1583 = vmatpush1.msra.mxu0 0.0
    %1584 = vmatprep.subr.mxu0 0.0
    %1585 = vmatpush1.msra.mxu0 0.0
    %1586 = vmatprep.subr.mxu0 0.0
    %1587 = vmatpush1.msra.mxu0 %v1545
    %1588 = vmatprep.subr.mxu0 0.0
    %1589 = vmatpush1.msra.mxu0 %v1544
    %1590 = vmatprep.subr.mxu0 0.0
    %1591 = vmatpush2.msra.mxu0 0.0
    %1592 = vmatprep.subr.mxu0 0.0
    %1593 = vmatpush2.msra.mxu0 0.0
    %1594 = vmatprep.subr.mxu0 0.0
    %1595 = vmatpush2.msra.mxu0 0.0
    %1596 = vmatprep.subr.mxu0 0.0
    %1597 = vmatpush2.msra.mxu0 0.0
    %1598 = vmatprep.subr.mxu0 0.0
    %1599 = vmatpush2.msra.mxu0 0.0
    %1600 = vmatprep.subr.mxu0 0.0
    %1601 = vmatpush2.msra.mxu0 0.0
    %1602 = vmatprep.subr.mxu0 0.0
    %1603 = vmatpush2.msra.mxu0 0.0
    %1604 = vmatprep.subr.mxu0 0.0
    %1605 = vmatpush2.msra.mxu0 0.0
    %1606 = vmatprep.subr.mxu0 0.0
    %1607 = vmatpush2.msra.mxu0 0.0
    %1608 = vmatprep.subr.mxu0 0.0
    %1609 = vmatpush2.msra.mxu0 0.0
    %1610 = vmatprep.subr.mxu0 0.0
    %1611 = vmatpush2.msra.mxu0 0.0
    %1612 = vmatprep.subr.mxu0 0.0
    %1613 = vmatpush2.msra.mxu0 0.0
    %1614 = vmatprep.subr.mxu0 0.0
    %1615 = vmatpush2.msra.mxu0 0.0
    %1616 = vmatprep.subr.mxu0 0.0
    %1617 = vmatpush2.msra.mxu0 0.0
    %1618 = vmatprep.subr.mxu0 0.0
    %1619 = vmatpush2.msra.mxu0 0.0
    %1620 = vmatprep.subr.mxu0 0.0
    %1621 = vmatpush2.msra.mxu0 0.0
    %1622 = vmatprep.mubr.f32.mxu0 0.0
    %1623 = vmatmul.mubr.f32.gmra.mxu0 %v1547
    %v1624 = vpop.f32.mrf.mxu0
    %v1625 = vadd.f32 0.0, %v1624
    %v1626 = vpop.f32.mrf.mxu0
    %1627 = vmatprep.mubr.f32.mxu0 0.0
    %1628 = vmatmul.mubr.f32.gmra.mxu0 %v1550
    %v1629 = vpop.f32.mrf.mxu0
    %v1630 = vadd.f32 0.0, %v1629
    %v1631 = vpop.f32.mrf.mxu0
    %1632 = vmatprep.mubr.f32.mxu0 0.0
    %1633 = vmatmul.mubr.f32.gmra.mxu0 %v1553
    %v1634 = vpop.f32.mrf.mxu0
    %v1635 = vadd.f32 0.0, %v1634
    %v1636 = vpop.f32.mrf.mxu0
    %1637 = vmatprep.mubr.f32.mxu0 0.0
    %1638 = vmatmul.mubr.f32.gmra.mxu0 %v1556
    %v1639 = vpop.f32.mrf.mxu0
    %v1640 = vadd.f32 0.0, %v1639
    %v1641 = vpop.f32.mrf.mxu0
    %1642 = vdwg.mxu0
    %v1643 = vadd.f32 %v1437, %v1625
    %v1644 = vadd.f32 %v1438, %v1630
    %v1645 = vadd.f32 %v1439, %v1635
    %v1646 = vadd.f32 %v1440, %v1640
    %s1647 = scalar_lea.vmem %s59, 160
    %v1648 = vld [vmem:[%s1647] sm:$0xff]
    %v1649 = vld [vmem:[%s1647 + $0x8] sm:$0xff]
    %v1650 = vld [vmem:[%s1647 + $0x10] sm:$0xff]
    %v1651 = vld [vmem:[%s1647 + $0x18] sm:$0xff]
    %v1653 = vsel %vm629, %v1648, 0
    %v1656 = vsel %vm629, %v1649, 0
    %v1659 = vsel %vm629, %v1650, 0
    %v1662 = vsel %vm629, %v1651, 0
    %1664 = vmatprep.subr.mxu0 0.0
    %1665 = vmatpush1.msra.mxu0 0.0
    %1666 = vmatprep.subr.mxu0 0.0
    %1667 = vmatpush1.msra.mxu0 0.0
    %1668 = vmatprep.subr.mxu0 0.0
    %1669 = vmatpush1.msra.mxu0 0.0
    %1670 = vmatprep.subr.mxu0 0.0
    %1671 = vmatpush1.msra.mxu0 0.0
    %1672 = vmatprep.subr.mxu0 0.0
    %1673 = vmatpush1.msra.mxu0 0.0
    %1674 = vmatprep.subr.mxu0 0.0
    %1675 = vmatpush1.msra.mxu0 0.0
    %1676 = vmatprep.subr.mxu0 0.0
    %1677 = vmatpush1.msra.mxu0 0.0
    %1678 = vmatprep.subr.mxu0 0.0
    %1679 = vmatpush1.msra.mxu0 %v624
    %1680 = vmatprep.subr.mxu0 0.0
    %1681 = vmatpush1.msra.mxu0 %v623
    %1682 = vmatprep.subr.mxu0 0.0
    %1683 = vmatpush1.msra.mxu0 %v622
    %1684 = vmatprep.subr.mxu0 0.0
    %1685 = vmatpush1.msra.mxu0 %v621
    %1686 = vmatprep.subr.mxu0 0.0
    %1687 = vmatpush1.msra.mxu0 %v620
    %1688 = vmatprep.subr.mxu0 0.0
    %1689 = vmatpush1.msra.mxu0 %v619
    %1690 = vmatprep.subr.mxu0 0.0
    %1691 = vmatpush1.msra.mxu0 %v618
    %1692 = vmatprep.subr.mxu0 0.0
    %1693 = vmatpush1.msra.mxu0 %v617
    %1694 = vmatprep.subr.mxu0 0.0
    %1695 = vmatpush1.msra.mxu0 %v616
    %1696 = vmatprep.subr.mxu0 0.0
    %1697 = vmatpush2.msra.mxu0 0.0
    %1698 = vmatprep.subr.mxu0 0.0
    %1699 = vmatpush2.msra.mxu0 0.0
    %1700 = vmatprep.subr.mxu0 0.0
    %1701 = vmatpush2.msra.mxu0 0.0
    %1702 = vmatprep.subr.mxu0 0.0
    %1703 = vmatpush2.msra.mxu0 0.0
    %1704 = vmatprep.subr.mxu0 0.0
    %1705 = vmatpush2.msra.mxu0 0.0
    %1706 = vmatprep.subr.mxu0 0.0
    %1707 = vmatpush2.msra.mxu0 0.0
    %1708 = vmatprep.subr.mxu0 0.0
    %1709 = vmatpush2.msra.mxu0 0.0
    %1710 = vmatprep.subr.mxu0 0.0
    %1711 = vmatpush2.msra.mxu0 0.0
    %1712 = vmatprep.subr.mxu0 0.0
    %1713 = vmatpush2.msra.mxu0 0.0
    %1714 = vmatprep.subr.mxu0 0.0
    %1715 = vmatpush2.msra.mxu0 0.0
    %1716 = vmatprep.subr.mxu0 0.0
    %1717 = vmatpush2.msra.mxu0 0.0
    %1718 = vmatprep.subr.mxu0 0.0
    %1719 = vmatpush2.msra.mxu0 0.0
    %1720 = vmatprep.subr.mxu0 0.0
    %1721 = vmatpush2.msra.mxu0 0.0
    %1722 = vmatprep.subr.mxu0 0.0
    %1723 = vmatpush2.msra.mxu0 0.0
    %1724 = vmatprep.subr.mxu0 0.0
    %1725 = vmatpush2.msra.mxu0 0.0
    %1726 = vmatprep.subr.mxu0 0.0
    %1727 = vmatpush2.msra.mxu0 0.0
    %1728 = vmatprep.mubr.f32.mxu0 0.0
    %1729 = vmatmul.mubr.f32.gmra.mxu0 %v1653
    %v1730 = vpop.f32.mrf.mxu0
    %v1731 = vadd.f32 0.0, %v1730
    %v1732 = vpop.f32.mrf.mxu0
    %1733 = vmatprep.mubr.f32.mxu0 0.0
    %1734 = vmatmul.mubr.f32.gmra.mxu0 %v1656
    %v1735 = vpop.f32.mrf.mxu0
    %v1736 = vadd.f32 0.0, %v1735
    %v1737 = vpop.f32.mrf.mxu0
    %1738 = vmatprep.mubr.f32.mxu0 0.0
    %1739 = vmatmul.mubr.f32.gmra.mxu0 %v1659
    %v1740 = vpop.f32.mrf.mxu0
    %v1741 = vadd.f32 0.0, %v1740
    %v1742 = vpop.f32.mrf.mxu0
    %1743 = vmatprep.mubr.f32.mxu0 0.0
    %1744 = vmatmul.mubr.f32.gmra.mxu0 %v1662
    %v1745 = vpop.f32.mrf.mxu0
    %v1746 = vadd.f32 0.0, %v1745
    %v1747 = vpop.f32.mrf.mxu0
    %1748 = vdwg.mxu0
    %s1749 = scalar_lea.vmem %s9, 80
    %v1750 = vld [vmem:[%s1749] sm:$0xff]
    %v1751 = vld [vmem:[%s1749 + $0x8] sm:$0xff]
    %v1753 = vsel %vm834, %v1731, 0
    %v1756 = vsel %vm834, %v1736, 0
    %v1759 = vsel %vm834, %v1741, 0
    %v1762 = vsel %vm834, %v1746, 0
    %1764 = vmatprep.subr.mxu0 0.0
    %1765 = vmatpush1.msra.mxu0 0.0
    %1766 = vmatprep.subr.mxu0 0.0
    %1767 = vmatpush1.msra.mxu0 0.0
    %1768 = vmatprep.subr.mxu0 0.0
    %1769 = vmatpush1.msra.mxu0 0.0
    %1770 = vmatprep.subr.mxu0 0.0
    %1771 = vmatpush1.msra.mxu0 0.0
    %1772 = vmatprep.subr.mxu0 0.0
    %1773 = vmatpush1.msra.mxu0 0.0
    %1774 = vmatprep.subr.mxu0 0.0
    %1775 = vmatpush1.msra.mxu0 0.0
    %1776 = vmatprep.subr.mxu0 0.0
    %1777 = vmatpush1.msra.mxu0 0.0
    %1778 = vmatprep.subr.mxu0 0.0
    %1779 = vmatpush1.msra.mxu0 0.0
    %1780 = vmatprep.subr.mxu0 0.0
    %1781 = vmatpush1.msra.mxu0 0.0
    %1782 = vmatprep.subr.mxu0 0.0
    %1783 = vmatpush1.msra.mxu0 0.0
    %1784 = vmatprep.subr.mxu0 0.0
    %1785 = vmatpush1.msra.mxu0 0.0
    %1786 = vmatprep.subr.mxu0 0.0
    %1787 = vmatpush1.msra.mxu0 0.0
    %1788 = vmatprep.subr.mxu0 0.0
    %1789 = vmatpush1.msra.mxu0 0.0
    %1790 = vmatprep.subr.mxu0 0.0
    %1791 = vmatpush1.msra.mxu0 0.0
    %1792 = vmatprep.subr.mxu0 0.0
    %1793 = vmatpush1.msra.mxu0 %v1751
    %1794 = vmatprep.subr.mxu0 0.0
    %1795 = vmatpush1.msra.mxu0 %v1750
    %1796 = vmatprep.subr.mxu0 0.0
    %1797 = vmatpush2.msra.mxu0 0.0
    %1798 = vmatprep.subr.mxu0 0.0
    %1799 = vmatpush2.msra.mxu0 0.0
    %1800 = vmatprep.subr.mxu0 0.0
    %1801 = vmatpush2.msra.mxu0 0.0
    %1802 = vmatprep.subr.mxu0 0.0
    %1803 = vmatpush2.msra.mxu0 0.0
    %1804 = vmatprep.subr.mxu0 0.0
    %1805 = vmatpush2.msra.mxu0 0.0
    %1806 = vmatprep.subr.mxu0 0.0
    %1807 = vmatpush2.msra.mxu0 0.0
    %1808 = vmatprep.subr.mxu0 0.0
    %1809 = vmatpush2.msra.mxu0 0.0
    %1810 = vmatprep.subr.mxu0 0.0
    %1811 = vmatpush2.msra.mxu0 0.0
    %1812 = vmatprep.subr.mxu0 0.0
    %1813 = vmatpush2.msra.mxu0 0.0
    %1814 = vmatprep.subr.mxu0 0.0
    %1815 = vmatpush2.msra.mxu0 0.0
    %1816 = vmatprep.subr.mxu0 0.0
    %1817 = vmatpush2.msra.mxu0 0.0
    %1818 = vmatprep.subr.mxu0 0.0
    %1819 = vmatpush2.msra.mxu0 0.0
    %1820 = vmatprep.subr.mxu0 0.0
    %1821 = vmatpush2.msra.mxu0 0.0
    %1822 = vmatprep.subr.mxu0 0.0
    %1823 = vmatpush2.msra.mxu0 0.0
    %1824 = vmatprep.subr.mxu0 0.0
    %1825 = vmatpush2.msra.mxu0 0.0
    %1826 = vmatprep.subr.mxu0 0.0
    %1827 = vmatpush2.msra.mxu0 0.0
    %1828 = vmatprep.mubr.f32.mxu0 0.0
    %1829 = vmatmul.mubr.f32.gmra.mxu0 %v1753
    %v1830 = vpop.f32.mrf.mxu0
    %v1831 = vadd.f32 0.0, %v1830
    %v1832 = vpop.f32.mrf.mxu0
    %1833 = vmatprep.mubr.f32.mxu0 0.0
    %1834 = vmatmul.mubr.f32.gmra.mxu0 %v1756
    %v1835 = vpop.f32.mrf.mxu0
    %v1836 = vadd.f32 0.0, %v1835
    %v1837 = vpop.f32.mrf.mxu0
    %1838 = vmatprep.mubr.f32.mxu0 0.0
    %1839 = vmatmul.mubr.f32.gmra.mxu0 %v1759
    %v1840 = vpop.f32.mrf.mxu0
    %v1841 = vadd.f32 0.0, %v1840
    %v1842 = vpop.f32.mrf.mxu0
    %1843 = vmatprep.mubr.f32.mxu0 0.0
    %1844 = vmatmul.mubr.f32.gmra.mxu0 %v1762
    %v1845 = vpop.f32.mrf.mxu0
    %v1846 = vadd.f32 0.0, %v1845
    %v1847 = vpop.f32.mrf.mxu0
    %1848 = vdwg.mxu0
    %v1849 = vadd.f32 %v1643, %v1831
    %v1850 = vadd.f32 %v1644, %v1836
    %v1851 = vadd.f32 %v1645, %v1841
    %v1852 = vadd.f32 %v1646, %v1846
    %s1853 = scalar_lea.vmem %s59, 192
    %v1854 = vld [vmem:[%s1853] sm:$0xff]
    %v1855 = vld [vmem:[%s1853 + $0x8] sm:$0xff]
    %v1856 = vld [vmem:[%s1853 + $0x10] sm:$0xff]
    %v1857 = vld [vmem:[%s1853 + $0x18] sm:$0xff]
    %v1859 = vsel %vm629, %v1854, 0
    %v1862 = vsel %vm629, %v1855, 0
    %v1865 = vsel %vm629, %v1856, 0
    %v1868 = vsel %vm629, %v1857, 0
    %1870 = vmatprep.subr.mxu0 0.0
    %1871 = vmatpush1.msra.mxu0 0.0
    %1872 = vmatprep.subr.mxu0 0.0
    %1873 = vmatpush1.msra.mxu0 0.0
    %1874 = vmatprep.subr.mxu0 0.0
    %1875 = vmatpush1.msra.mxu0 0.0
    %1876 = vmatprep.subr.mxu0 0.0
    %1877 = vmatpush1.msra.mxu0 0.0
    %1878 = vmatprep.subr.mxu0 0.0
    %1879 = vmatpush1.msra.mxu0 0.0
    %1880 = vmatprep.subr.mxu0 0.0
    %1881 = vmatpush1.msra.mxu0 0.0
    %1882 = vmatprep.subr.mxu0 0.0
    %1883 = vmatpush1.msra.mxu0 0.0
    %1884 = vmatprep.subr.mxu0 0.0
    %1885 = vmatpush1.msra.mxu0 %v624
    %1886 = vmatprep.subr.mxu0 0.0
    %1887 = vmatpush1.msra.mxu0 %v623
    %1888 = vmatprep.subr.mxu0 0.0
    %1889 = vmatpush1.msra.mxu0 %v622
    %1890 = vmatprep.subr.mxu0 0.0
    %1891 = vmatpush1.msra.mxu0 %v621
    %1892 = vmatprep.subr.mxu0 0.0
    %1893 = vmatpush1.msra.mxu0 %v620
    %1894 = vmatprep.subr.mxu0 0.0
    %1895 = vmatpush1.msra.mxu0 %v619
    %1896 = vmatprep.subr.mxu0 0.0
    %1897 = vmatpush1.msra.mxu0 %v618
    %1898 = vmatprep.subr.mxu0 0.0
    %1899 = vmatpush1.msra.mxu0 %v617
    %1900 = vmatprep.subr.mxu0 0.0
    %1901 = vmatpush1.msra.mxu0 %v616
    %1902 = vmatprep.subr.mxu0 0.0
    %1903 = vmatpush2.msra.mxu0 0.0
    %1904 = vmatprep.subr.mxu0 0.0
    %1905 = vmatpush2.msra.mxu0 0.0
    %1906 = vmatprep.subr.mxu0 0.0
    %1907 = vmatpush2.msra.mxu0 0.0
    %1908 = vmatprep.subr.mxu0 0.0
    %1909 = vmatpush2.msra.mxu0 0.0
    %1910 = vmatprep.subr.mxu0 0.0
    %1911 = vmatpush2.msra.mxu0 0.0
    %1912 = vmatprep.subr.mxu0 0.0
    %1913 = vmatpush2.msra.mxu0 0.0
    %1914 = vmatprep.subr.mxu0 0.0
    %1915 = vmatpush2.msra.mxu0 0.0
    %1916 = vmatprep.subr.mxu0 0.0
    %1917 = vmatpush2.msra.mxu0 0.0
    %1918 = vmatprep.subr.mxu0 0.0
    %1919 = vmatpush2.msra.mxu0 0.0
    %1920 = vmatprep.subr.mxu0 0.0
    %1921 = vmatpush2.msra.mxu0 0.0
    %1922 = vmatprep.subr.mxu0 0.0
    %1923 = vmatpush2.msra.mxu0 0.0
    %1924 = vmatprep.subr.mxu0 0.0
    %1925 = vmatpush2.msra.mxu0 0.0
    %1926 = vmatprep.subr.mxu0 0.0
    %1927 = vmatpush2.msra.mxu0 0.0
    %1928 = vmatprep.subr.mxu0 0.0
    %1929 = vmatpush2.msra.mxu0 0.0
    %1930 = vmatprep.subr.mxu0 0.0
    %1931 = vmatpush2.msra.mxu0 0.0
    %1932 = vmatprep.subr.mxu0 0.0
    %1933 = vmatpush2.msra.mxu0 0.0
    %1934 = vmatprep.mubr.f32.mxu0 0.0
    %1935 = vmatmul.mubr.f32.gmra.mxu0 %v1859
    %v1936 = vpop.f32.mrf.mxu0
    %v1937 = vadd.f32 0.0, %v1936
    %v1938 = vpop.f32.mrf.mxu0
    %1939 = vmatprep.mubr.f32.mxu0 0.0
    %1940 = vmatmul.mubr.f32.gmra.mxu0 %v1862
    %v1941 = vpop.f32.mrf.mxu0
    %v1942 = vadd.f32 0.0, %v1941
    %v1943 = vpop.f32.mrf.mxu0
    %1944 = vmatprep.mubr.f32.mxu0 0.0
    %1945 = vmatmul.mubr.f32.gmra.mxu0 %v1865
    %v1946 = vpop.f32.mrf.mxu0
    %v1947 = vadd.f32 0.0, %v1946
    %v1948 = vpop.f32.mrf.mxu0
    %1949 = vmatprep.mubr.f32.mxu0 0.0
    %1950 = vmatmul.mubr.f32.gmra.mxu0 %v1868
    %v1951 = vpop.f32.mrf.mxu0
    %v1952 = vadd.f32 0.0, %v1951
    %v1953 = vpop.f32.mrf.mxu0
    %1954 = vdwg.mxu0
    %s1955 = scalar_lea.vmem %s9, 96
    %v1956 = vld [vmem:[%s1955] sm:$0xff]
    %v1957 = vld [vmem:[%s1955 + $0x8] sm:$0xff]
    %v1959 = vsel %vm834, %v1937, 0
    %v1962 = vsel %vm834, %v1942, 0
    %v1965 = vsel %vm834, %v1947, 0
    %v1968 = vsel %vm834, %v1952, 0
    %1970 = vmatprep.subr.mxu0 0.0
    %1971 = vmatpush1.msra.mxu0 0.0
    %1972 = vmatprep.subr.mxu0 0.0
    %1973 = vmatpush1.msra.mxu0 0.0
    %1974 = vmatprep.subr.mxu0 0.0
    %1975 = vmatpush1.msra.mxu0 0.0
    %1976 = vmatprep.subr.mxu0 0.0
    %1977 = vmatpush1.msra.mxu0 0.0
    %1978 = vmatprep.subr.mxu0 0.0
    %1979 = vmatpush1.msra.mxu0 0.0
    %1980 = vmatprep.subr.mxu0 0.0
    %1981 = vmatpush1.msra.mxu0 0.0
    %1982 = vmatprep.subr.mxu0 0.0
    %1983 = vmatpush1.msra.mxu0 0.0
    %1984 = vmatprep.subr.mxu0 0.0
    %1985 = vmatpush1.msra.mxu0 0.0
    %1986 = vmatprep.subr.mxu0 0.0
    %1987 = vmatpush1.msra.mxu0 0.0
    %1988 = vmatprep.subr.mxu0 0.0
    %1989 = vmatpush1.msra.mxu0 0.0
    %1990 = vmatprep.subr.mxu0 0.0
    %1991 = vmatpush1.msra.mxu0 0.0
    %1992 = vmatprep.subr.mxu0 0.0
    %1993 = vmatpush1.msra.mxu0 0.0
    %1994 = vmatprep.subr.mxu0 0.0
    %1995 = vmatpush1.msra.mxu0 0.0
    %1996 = vmatprep.subr.mxu0 0.0
    %1997 = vmatpush1.msra.mxu0 0.0
    %1998 = vmatprep.subr.mxu0 0.0
    %1999 = vmatpush1.msra.mxu0 %v1957
    %2000 = vmatprep.subr.mxu0 0.0
    %2001 = vmatpush1.msra.mxu0 %v1956
    %2002 = vmatprep.subr.mxu0 0.0
    %2003 = vmatpush2.msra.mxu0 0.0
    %2004 = vmatprep.subr.mxu0 0.0
    %2005 = vmatpush2.msra.mxu0 0.0
    %2006 = vmatprep.subr.mxu0 0.0
    %2007 = vmatpush2.msra.mxu0 0.0
    %2008 = vmatprep.subr.mxu0 0.0
    %2009 = vmatpush2.msra.mxu0 0.0
    %2010 = vmatprep.subr.mxu0 0.0
    %2011 = vmatpush2.msra.mxu0 0.0
    %2012 = vmatprep.subr.mxu0 0.0
    %2013 = vmatpush2.msra.mxu0 0.0
    %2014 = vmatprep.subr.mxu0 0.0
    %2015 = vmatpush2.msra.mxu0 0.0
    %2016 = vmatprep.subr.mxu0 0.0
    %2017 = vmatpush2.msra.mxu0 0.0
    %2018 = vmatprep.subr.mxu0 0.0
    %2019 = vmatpush2.msra.mxu0 0.0
    %2020 = vmatprep.subr.mxu0 0.0
    %2021 = vmatpush2.msra.mxu0 0.0
    %2022 = vmatprep.subr.mxu0 0.0
    %2023 = vmatpush2.msra.mxu0 0.0
    %2024 = vmatprep.subr.mxu0 0.0
    %2025 = vmatpush2.msra.mxu0 0.0
    %2026 = vmatprep.subr.mxu0 0.0
    %2027 = vmatpush2.msra.mxu0 0.0
    %2028 = vmatprep.subr.mxu0 0.0
    %2029 = vmatpush2.msra.mxu0 0.0
    %2030 = vmatprep.subr.mxu0 0.0
    %2031 = vmatpush2.msra.mxu0 0.0
    %2032 = vmatprep.subr.mxu0 0.0
    %2033 = vmatpush2.msra.mxu0 0.0
    %2034 = vmatprep.mubr.f32.mxu0 0.0
    %2035 = vmatmul.mubr.f32.gmra.mxu0 %v1959
    %v2036 = vpop.f32.mrf.mxu0
    %v2037 = vadd.f32 0.0, %v2036
    %v2038 = vpop.f32.mrf.mxu0
    %2039 = vmatprep.mubr.f32.mxu0 0.0
    %2040 = vmatmul.mubr.f32.gmra.mxu0 %v1962
    %v2041 = vpop.f32.mrf.mxu0
    %v2042 = vadd.f32 0.0, %v2041
    %v2043 = vpop.f32.mrf.mxu0
    %2044 = vmatprep.mubr.f32.mxu0 0.0
    %2045 = vmatmul.mubr.f32.gmra.mxu0 %v1965
    %v2046 = vpop.f32.mrf.mxu0
    %v2047 = vadd.f32 0.0, %v2046
    %v2048 = vpop.f32.mrf.mxu0
    %2049 = vmatprep.mubr.f32.mxu0 0.0
    %2050 = vmatmul.mubr.f32.gmra.mxu0 %v1968
    %v2051 = vpop.f32.mrf.mxu0
    %v2052 = vadd.f32 0.0, %v2051
    %v2053 = vpop.f32.mrf.mxu0
    %2054 = vdwg.mxu0
    %v2055 = vadd.f32 %v1849, %v2037
    %v2056 = vadd.f32 %v1850, %v2042
    %v2057 = vadd.f32 %v1851, %v2047
    %v2058 = vadd.f32 %v1852, %v2052
    %s2059 = scalar_lea.vmem %s59, 224
    %v2060 = vld [vmem:[%s2059] sm:$0xff]
    %v2061 = vld [vmem:[%s2059 + $0x8] sm:$0xff]
    %v2062 = vld [vmem:[%s2059 + $0x10] sm:$0xff]
    %v2063 = vld [vmem:[%s2059 + $0x18] sm:$0xff]
    %v2065 = vsel %vm629, %v2060, 0
    %v2068 = vsel %vm629, %v2061, 0
    %v2071 = vsel %vm629, %v2062, 0
    %v2074 = vsel %vm629, %v2063, 0
    %2076 = vmatprep.subr.mxu0 0.0
    %2077 = vmatpush1.msra.mxu0 0.0
    %2078 = vmatprep.subr.mxu0 0.0
    %2079 = vmatpush1.msra.mxu0 0.0
    %2080 = vmatprep.subr.mxu0 0.0
    %2081 = vmatpush1.msra.mxu0 0.0
    %2082 = vmatprep.subr.mxu0 0.0
    %2083 = vmatpush1.msra.mxu0 0.0
    %2084 = vmatprep.subr.mxu0 0.0
    %2085 = vmatpush1.msra.mxu0 0.0
    %2086 = vmatprep.subr.mxu0 0.0
    %2087 = vmatpush1.msra.mxu0 0.0
    %2088 = vmatprep.subr.mxu0 0.0
    %2089 = vmatpush1.msra.mxu0 0.0
    %2090 = vmatprep.subr.mxu0 0.0
    %2091 = vmatpush1.msra.mxu0 %v624
    %2092 = vmatprep.subr.mxu0 0.0
    %2093 = vmatpush1.msra.mxu0 %v623
    %2094 = vmatprep.subr.mxu0 0.0
    %2095 = vmatpush1.msra.mxu0 %v622
    %2096 = vmatprep.subr.mxu0 0.0
    %2097 = vmatpush1.msra.mxu0 %v621
    %2098 = vmatprep.subr.mxu0 0.0
    %2099 = vmatpush1.msra.mxu0 %v620
    %2100 = vmatprep.subr.mxu0 0.0
    %2101 = vmatpush1.msra.mxu0 %v619
    %2102 = vmatprep.subr.mxu0 0.0
    %2103 = vmatpush1.msra.mxu0 %v618
    %2104 = vmatprep.subr.mxu0 0.0
    %2105 = vmatpush1.msra.mxu0 %v617
    %2106 = vmatprep.subr.mxu0 0.0
    %2107 = vmatpush1.msra.mxu0 %v616
    %2108 = vmatprep.subr.mxu0 0.0
    %2109 = vmatpush2.msra.mxu0 0.0
    %2110 = vmatprep.subr.mxu0 0.0
    %2111 = vmatpush2.msra.mxu0 0.0
    %2112 = vmatprep.subr.mxu0 0.0
    %2113 = vmatpush2.msra.mxu0 0.0
    %2114 = vmatprep.subr.mxu0 0.0
    %2115 = vmatpush2.msra.mxu0 0.0
    %2116 = vmatprep.subr.mxu0 0.0
    %2117 = vmatpush2.msra.mxu0 0.0
    %2118 = vmatprep.subr.mxu0 0.0
    %2119 = vmatpush2.msra.mxu0 0.0
    %2120 = vmatprep.subr.mxu0 0.0
    %2121 = vmatpush2.msra.mxu0 0.0
    %2122 = vmatprep.subr.mxu0 0.0
    %2123 = vmatpush2.msra.mxu0 0.0
    %2124 = vmatprep.subr.mxu0 0.0
    %2125 = vmatpush2.msra.mxu0 0.0
    %2126 = vmatprep.subr.mxu0 0.0
    %2127 = vmatpush2.msra.mxu0 0.0
    %2128 = vmatprep.subr.mxu0 0.0
    %2129 = vmatpush2.msra.mxu0 0.0
    %2130 = vmatprep.subr.mxu0 0.0
    %2131 = vmatpush2.msra.mxu0 0.0
    %2132 = vmatprep.subr.mxu0 0.0
    %2133 = vmatpush2.msra.mxu0 0.0
    %2134 = vmatprep.subr.mxu0 0.0
    %2135 = vmatpush2.msra.mxu0 0.0
    %2136 = vmatprep.subr.mxu0 0.0
    %2137 = vmatpush2.msra.mxu0 0.0
    %2138 = vmatprep.subr.mxu0 0.0
    %2139 = vmatpush2.msra.mxu0 0.0
    %2140 = vmatprep.mubr.f32.mxu0 0.0
    %2141 = vmatmul.mubr.f32.gmra.mxu0 %v2065
    %v2142 = vpop.f32.mrf.mxu0
    %v2143 = vadd.f32 0.0, %v2142
    %v2144 = vpop.f32.mrf.mxu0
    %2145 = vmatprep.mubr.f32.mxu0 0.0
    %2146 = vmatmul.mubr.f32.gmra.mxu0 %v2068
    %v2147 = vpop.f32.mrf.mxu0
    %v2148 = vadd.f32 0.0, %v2147
    %v2149 = vpop.f32.mrf.mxu0
    %2150 = vmatprep.mubr.f32.mxu0 0.0
    %2151 = vmatmul.mubr.f32.gmra.mxu0 %v2071
    %v2152 = vpop.f32.mrf.mxu0
    %v2153 = vadd.f32 0.0, %v2152
    %v2154 = vpop.f32.mrf.mxu0
    %2155 = vmatprep.mubr.f32.mxu0 0.0
    %2156 = vmatmul.mubr.f32.gmra.mxu0 %v2074
    %v2157 = vpop.f32.mrf.mxu0
    %v2158 = vadd.f32 0.0, %v2157
    %v2159 = vpop.f32.mrf.mxu0
    %2160 = vdwg.mxu0
    %s2161 = scalar_lea.vmem %s9, 112
    %v2162 = vld [vmem:[%s2161] sm:$0xff]
    %v2163 = vld [vmem:[%s2161 + $0x8] sm:$0xff]
    %v2165 = vsel %vm834, %v2143, 0
    %v2168 = vsel %vm834, %v2148, 0
    %v2171 = vsel %vm834, %v2153, 0
    %v2174 = vsel %vm834, %v2158, 0
    %2176 = vmatprep.subr.mxu0 0.0
    %2177 = vmatpush1.msra.mxu0 0.0
    %2178 = vmatprep.subr.mxu0 0.0
    %2179 = vmatpush1.msra.mxu0 0.0
    %2180 = vmatprep.subr.mxu0 0.0
    %2181 = vmatpush1.msra.mxu0 0.0
    %2182 = vmatprep.subr.mxu0 0.0
    %2183 = vmatpush1.msra.mxu0 0.0
    %2184 = vmatprep.subr.mxu0 0.0
    %2185 = vmatpush1.msra.mxu0 0.0
    %2186 = vmatprep.subr.mxu0 0.0
    %2187 = vmatpush1.msra.mxu0 0.0
    %2188 = vmatprep.subr.mxu0 0.0
    %2189 = vmatpush1.msra.mxu0 0.0
    %2190 = vmatprep.subr.mxu0 0.0
    %2191 = vmatpush1.msra.mxu0 0.0
    %2192 = vmatprep.subr.mxu0 0.0
    %2193 = vmatpush1.msra.mxu0 0.0
    %2194 = vmatprep.subr.mxu0 0.0
    %2195 = vmatpush1.msra.mxu0 0.0
    %2196 = vmatprep.subr.mxu0 0.0
    %2197 = vmatpush1.msra.mxu0 0.0
    %2198 = vmatprep.subr.mxu0 0.0
    %2199 = vmatpush1.msra.mxu0 0.0
    %2200 = vmatprep.subr.mxu0 0.0
    %2201 = vmatpush1.msra.mxu0 0.0
    %2202 = vmatprep.subr.mxu0 0.0
    %2203 = vmatpush1.msra.mxu0 0.0
    %2204 = vmatprep.subr.mxu0 0.0
    %2205 = vmatpush1.msra.mxu0 %v2163
    %2206 = vmatprep.subr.mxu0 0.0
    %2207 = vmatpush1.msra.mxu0 %v2162
    %2208 = vmatprep.subr.mxu0 0.0
    %2209 = vmatpush2.msra.mxu0 0.0
    %2210 = vmatprep.subr.mxu0 0.0
    %2211 = vmatpush2.msra.mxu0 0.0
    %2212 = vmatprep.subr.mxu0 0.0
    %2213 = vmatpush2.msra.mxu0 0.0
    %2214 = vmatprep.subr.mxu0 0.0
    %2215 = vmatpush2.msra.mxu0 0.0
    %2216 = vmatprep.subr.mxu0 0.0
    %2217 = vmatpush2.msra.mxu0 0.0
    %2218 = vmatprep.subr.mxu0 0.0
    %2219 = vmatpush2.msra.mxu0 0.0
    %2220 = vmatprep.subr.mxu0 0.0
    %2221 = vmatpush2.msra.mxu0 0.0
    %2222 = vmatprep.subr.mxu0 0.0
    %2223 = vmatpush2.msra.mxu0 0.0
    %2224 = vmatprep.subr.mxu0 0.0
    %2225 = vmatpush2.msra.mxu0 0.0
    %2226 = vmatprep.subr.mxu0 0.0
    %2227 = vmatpush2.msra.mxu0 0.0
    %2228 = vmatprep.subr.mxu0 0.0
    %2229 = vmatpush2.msra.mxu0 0.0
    %2230 = vmatprep.subr.mxu0 0.0
    %2231 = vmatpush2.msra.mxu0 0.0
    %2232 = vmatprep.subr.mxu0 0.0
    %2233 = vmatpush2.msra.mxu0 0.0
    %2234 = vmatprep.subr.mxu0 0.0
    %2235 = vmatpush2.msra.mxu0 0.0
    %2236 = vmatprep.subr.mxu0 0.0
    %2237 = vmatpush2.msra.mxu0 0.0
    %2238 = vmatprep.subr.mxu0 0.0
    %2239 = vmatpush2.msra.mxu0 0.0
    %2240 = vmatprep.mubr.f32.mxu0 0.0
    %2241 = vmatmul.mubr.f32.gmra.mxu0 %v2165
    %v2242 = vpop.f32.mrf.mxu0
    %v2243 = vadd.f32 0.0, %v2242
    %v2244 = vpop.f32.mrf.mxu0
    %2245 = vmatprep.mubr.f32.mxu0 0.0
    %2246 = vmatmul.mubr.f32.gmra.mxu0 %v2168
    %v2247 = vpop.f32.mrf.mxu0
    %v2248 = vadd.f32 0.0, %v2247
    %v2249 = vpop.f32.mrf.mxu0
    %2250 = vmatprep.mubr.f32.mxu0 0.0
    %2251 = vmatmul.mubr.f32.gmra.mxu0 %v2171
    %v2252 = vpop.f32.mrf.mxu0
    %v2253 = vadd.f32 0.0, %v2252
    %v2254 = vpop.f32.mrf.mxu0
    %2255 = vmatprep.mubr.f32.mxu0 0.0
    %2256 = vmatmul.mubr.f32.gmra.mxu0 %v2174
    %v2257 = vpop.f32.mrf.mxu0
    %v2258 = vadd.f32 0.0, %v2257
    %v2259 = vpop.f32.mrf.mxu0
    %2260 = vdwg.mxu0
    %v2261 = vadd.f32 %v2055, %v2243
    %v2262 = vadd.f32 %v2056, %v2248
    %v2263 = vadd.f32 %v2057, %v2253
    %v2264 = vadd.f32 %v2058, %v2258
    %s2265 = scalar_lea.vmem %s59, 256
    %v2266 = vld [vmem:[%s2265] sm:$0xff]
    %v2267 = vld [vmem:[%s2265 + $0x8] sm:$0xff]
    %v2268 = vld [vmem:[%s2265 + $0x10] sm:$0xff]
    %v2269 = vld [vmem:[%s2265 + $0x18] sm:$0xff]
    %v2271 = vsel %vm629, %v2266, 0
    %v2274 = vsel %vm629, %v2267, 0
    %v2277 = vsel %vm629, %v2268, 0
    %v2280 = vsel %vm629, %v2269, 0
    %2282 = vmatprep.subr.mxu0 0.0
    %2283 = vmatpush1.msra.mxu0 0.0
    %2284 = vmatprep.subr.mxu0 0.0
    %2285 = vmatpush1.msra.mxu0 0.0
    %2286 = vmatprep.subr.mxu0 0.0
    %2287 = vmatpush1.msra.mxu0 0.0
    %2288 = vmatprep.subr.mxu0 0.0
    %2289 = vmatpush1.msra.mxu0 0.0
    %2290 = vmatprep.subr.mxu0 0.0
    %2291 = vmatpush1.msra.mxu0 0.0
    %2292 = vmatprep.subr.mxu0 0.0
    %2293 = vmatpush1.msra.mxu0 0.0
    %2294 = vmatprep.subr.mxu0 0.0
    %2295 = vmatpush1.msra.mxu0 0.0
    %2296 = vmatprep.subr.mxu0 0.0
    %2297 = vmatpush1.msra.mxu0 %v624
    %2298 = vmatprep.subr.mxu0 0.0
    %2299 = vmatpush1.msra.mxu0 %v623
    %2300 = vmatprep.subr.mxu0 0.0
    %2301 = vmatpush1.msra.mxu0 %v622
    %2302 = vmatprep.subr.mxu0 0.0
    %2303 = vmatpush1.msra.mxu0 %v621
    %2304 = vmatprep.subr.mxu0 0.0
    %2305 = vmatpush1.msra.mxu0 %v620
    %2306 = vmatprep.subr.mxu0 0.0
    %2307 = vmatpush1.msra.mxu0 %v619
    %2308 = vmatprep.subr.mxu0 0.0
    %2309 = vmatpush1.msra.mxu0 %v618
    %2310 = vmatprep.subr.mxu0 0.0
    %2311 = vmatpush1.msra.mxu0 %v617
    %2312 = vmatprep.subr.mxu0 0.0
    %2313 = vmatpush1.msra.mxu0 %v616
    %2314 = vmatprep.subr.mxu0 0.0
    %2315 = vmatpush2.msra.mxu0 0.0
    %2316 = vmatprep.subr.mxu0 0.0
    %2317 = vmatpush2.msra.mxu0 0.0
    %2318 = vmatprep.subr.mxu0 0.0
    %2319 = vmatpush2.msra.mxu0 0.0
    %2320 = vmatprep.subr.mxu0 0.0
    %2321 = vmatpush2.msra.mxu0 0.0
    %2322 = vmatprep.subr.mxu0 0.0
    %2323 = vmatpush2.msra.mxu0 0.0
    %2324 = vmatprep.subr.mxu0 0.0
    %2325 = vmatpush2.msra.mxu0 0.0
    %2326 = vmatprep.subr.mxu0 0.0
    %2327 = vmatpush2.msra.mxu0 0.0
    %2328 = vmatprep.subr.mxu0 0.0
    %2329 = vmatpush2.msra.mxu0 0.0
    %2330 = vmatprep.subr.mxu0 0.0
    %2331 = vmatpush2.msra.mxu0 0.0
    %2332 = vmatprep.subr.mxu0 0.0
    %2333 = vmatpush2.msra.mxu0 0.0
    %2334 = vmatprep.subr.mxu0 0.0
    %2335 = vmatpush2.msra.mxu0 0.0
    %2336 = vmatprep.subr.mxu0 0.0
    %2337 = vmatpush2.msra.mxu0 0.0
    %2338 = vmatprep.subr.mxu0 0.0
    %2339 = vmatpush2.msra.mxu0 0.0
    %2340 = vmatprep.subr.mxu0 0.0
    %2341 = vmatpush2.msra.mxu0 0.0
    %2342 = vmatprep.subr.mxu0 0.0
    %2343 = vmatpush2.msra.mxu0 0.0
    %2344 = vmatprep.subr.mxu0 0.0
    %2345 = vmatpush2.msra.mxu0 0.0
    %2346 = vmatprep.mubr.f32.mxu0 0.0
    %2347 = vmatmul.mubr.f32.gmra.mxu0 %v2271
    %v2348 = vpop.f32.mrf.mxu0
    %v2349 = vadd.f32 0.0, %v2348
    %v2350 = vpop.f32.mrf.mxu0
    %2351 = vmatprep.mubr.f32.mxu0 0.0
    %2352 = vmatmul.mubr.f32.gmra.mxu0 %v2274
    %v2353 = vpop.f32.mrf.mxu0
    %v2354 = vadd.f32 0.0, %v2353
    %v2355 = vpop.f32.mrf.mxu0
    %2356 = vmatprep.mubr.f32.mxu0 0.0
    %2357 = vmatmul.mubr.f32.gmra.mxu0 %v2277
    %v2358 = vpop.f32.mrf.mxu0
    %v2359 = vadd.f32 0.0, %v2358
    %v2360 = vpop.f32.mrf.mxu0
    %2361 = vmatprep.mubr.f32.mxu0 0.0
    %2362 = vmatmul.mubr.f32.gmra.mxu0 %v2280
    %v2363 = vpop.f32.mrf.mxu0
    %v2364 = vadd.f32 0.0, %v2363
    %v2365 = vpop.f32.mrf.mxu0
    %2366 = vdwg.mxu0
    %s2367 = scalar_lea.vmem %s9, 128
    %v2368 = vld [vmem:[%s2367] sm:$0xff]
    %v2369 = vld [vmem:[%s2367 + $0x8] sm:$0xff]
    %v2371 = vsel %vm834, %v2349, 0
    %v2374 = vsel %vm834, %v2354, 0
    %v2377 = vsel %vm834, %v2359, 0
    %v2380 = vsel %vm834, %v2364, 0
    %2382 = vmatprep.subr.mxu0 0.0
    %2383 = vmatpush1.msra.mxu0 0.0
    %2384 = vmatprep.subr.mxu0 0.0
    %2385 = vmatpush1.msra.mxu0 0.0
    %2386 = vmatprep.subr.mxu0 0.0
    %2387 = vmatpush1.msra.mxu0 0.0
    %2388 = vmatprep.subr.mxu0 0.0
    %2389 = vmatpush1.msra.mxu0 0.0
    %2390 = vmatprep.subr.mxu0 0.0
    %2391 = vmatpush1.msra.mxu0 0.0
    %2392 = vmatprep.subr.mxu0 0.0
    %2393 = vmatpush1.msra.mxu0 0.0
    %2394 = vmatprep.subr.mxu0 0.0
    %2395 = vmatpush1.msra.mxu0 0.0
    %2396 = vmatprep.subr.mxu0 0.0
    %2397 = vmatpush1.msra.mxu0 0.0
    %2398 = vmatprep.subr.mxu0 0.0
    %2399 = vmatpush1.msra.mxu0 0.0
    %2400 = vmatprep.subr.mxu0 0.0
    %2401 = vmatpush1.msra.mxu0 0.0
    %2402 = vmatprep.subr.mxu0 0.0
    %2403 = vmatpush1.msra.mxu0 0.0
    %2404 = vmatprep.subr.mxu0 0.0
    %2405 = vmatpush1.msra.mxu0 0.0
    %2406 = vmatprep.subr.mxu0 0.0
    %2407 = vmatpush1.msra.mxu0 0.0
    %2408 = vmatprep.subr.mxu0 0.0
    %2409 = vmatpush1.msra.mxu0 0.0
    %2410 = vmatprep.subr.mxu0 0.0
    %2411 = vmatpush1.msra.mxu0 %v2369
    %2412 = vmatprep.subr.mxu0 0.0
    %2413 = vmatpush1.msra.mxu0 %v2368
    %2414 = vmatprep.subr.mxu0 0.0
    %2415 = vmatpush2.msra.mxu0 0.0
    %2416 = vmatprep.subr.mxu0 0.0
    %2417 = vmatpush2.msra.mxu0 0.0
    %2418 = vmatprep.subr.mxu0 0.0
    %2419 = vmatpush2.msra.mxu0 0.0
    %2420 = vmatprep.subr.mxu0 0.0
    %2421 = vmatpush2.msra.mxu0 0.0
    %2422 = vmatprep.subr.mxu0 0.0
    %2423 = vmatpush2.msra.mxu0 0.0
    %2424 = vmatprep.subr.mxu0 0.0
    %2425 = vmatpush2.msra.mxu0 0.0
    %2426 = vmatprep.subr.mxu0 0.0
    %2427 = vmatpush2.msra.mxu0 0.0
    %2428 = vmatprep.subr.mxu0 0.0
    %2429 = vmatpush2.msra.mxu0 0.0
    %2430 = vmatprep.subr.mxu0 0.0
    %2431 = vmatpush2.msra.mxu0 0.0
    %2432 = vmatprep.subr.mxu0 0.0
    %2433 = vmatpush2.msra.mxu0 0.0
    %2434 = vmatprep.subr.mxu0 0.0
    %2435 = vmatpush2.msra.mxu0 0.0
    %2436 = vmatprep.subr.mxu0 0.0
    %2437 = vmatpush2.msra.mxu0 0.0
    %2438 = vmatprep.subr.mxu0 0.0
    %2439 = vmatpush2.msra.mxu0 0.0
    %2440 = vmatprep.subr.mxu0 0.0
    %2441 = vmatpush2.msra.mxu0 0.0
    %2442 = vmatprep.subr.mxu0 0.0
    %2443 = vmatpush2.msra.mxu0 0.0
    %2444 = vmatprep.subr.mxu0 0.0
    %2445 = vmatpush2.msra.mxu0 0.0
    %2446 = vmatprep.mubr.f32.mxu0 0.0
    %2447 = vmatmul.mubr.f32.gmra.mxu0 %v2371
    %v2448 = vpop.f32.mrf.mxu0
    %v2449 = vadd.f32 0.0, %v2448
    %v2450 = vpop.f32.mrf.mxu0
    %2451 = vmatprep.mubr.f32.mxu0 0.0
    %2452 = vmatmul.mubr.f32.gmra.mxu0 %v2374
    %v2453 = vpop.f32.mrf.mxu0
    %v2454 = vadd.f32 0.0, %v2453
    %v2455 = vpop.f32.mrf.mxu0
    %2456 = vmatprep.mubr.f32.mxu0 0.0
    %2457 = vmatmul.mubr.f32.gmra.mxu0 %v2377
    %v2458 = vpop.f32.mrf.mxu0
    %v2459 = vadd.f32 0.0, %v2458
    %v2460 = vpop.f32.mrf.mxu0
    %2461 = vmatprep.mubr.f32.mxu0 0.0
    %2462 = vmatmul.mubr.f32.gmra.mxu0 %v2380
    %v2463 = vpop.f32.mrf.mxu0
    %v2464 = vadd.f32 0.0, %v2463
    %v2465 = vpop.f32.mrf.mxu0
    %2466 = vdwg.mxu0
    %v2467 = vadd.f32 %v2261, %v2449
    %v2468 = vadd.f32 %v2262, %v2454
    %v2469 = vadd.f32 %v2263, %v2459
    %v2470 = vadd.f32 %v2264, %v2464
    %v2472 = vlaneseq
    %v2473 = vshrl.u32 %v2472, 7
    %v2474 = vsub.s32 0, %v2473
    %v2475 = vrot.slane %v180, %v2474
    %v2477 = vadd.f32 %v2467, %v2475
    %v2478 = vadd.f32 %v2468, %v2475
    %v2479 = vadd.f32 %v2469, %v2475
    %v2480 = vadd.f32 %v2470, %v2475
    %v2481 = vmax.f32 %v2477, %v2478
    %v2482 = vmax.f32 %v2479, %v2480
    %v2483 = vmax.f32 %v2481, %v2482
    %vm2484 = vcmp.ge.f32.partialorder %v2483, 0.0
    %v2485 = vmul.f32 %v2483, 0.01
    %v2486 = vsel %vm2484, %v2483, %v2485
    %v2487 = vld [vmem:[%s61] sm:$0x3]
    %vm2488 = vcmask 64512
    %v2490 = vsel %vm2488, %v2487, 0
    %2492 = vmatprep.subr.mxu0 0.0
    %2493 = vmatpush1.msra.mxu0 0.0
    %2494 = vmatprep.subr.mxu0 0.0
    %2495 = vmatpush1.msra.mxu0 0.0
    %2496 = vmatprep.subr.mxu0 0.0
    %2497 = vmatpush1.msra.mxu0 0.0
    %2498 = vmatprep.subr.mxu0 0.0
    %2499 = vmatpush1.msra.mxu0 0.0
    %2500 = vmatprep.subr.mxu0 0.0
    %2501 = vmatpush1.msra.mxu0 0.0
    %2502 = vmatprep.subr.mxu0 0.0
    %2503 = vmatpush1.msra.mxu0 0.0
    %2504 = vmatprep.subr.mxu0 0.0
    %2505 = vmatpush1.msra.mxu0 0.0
    %2506 = vmatprep.subr.mxu0 0.0
    %2507 = vmatpush1.msra.mxu0 0.0
    %2508 = vmatprep.subr.mxu0 0.0
    %2509 = vmatpush1.msra.mxu0 0.0
    %2510 = vmatprep.subr.mxu0 0.0
    %2511 = vmatpush1.msra.mxu0 0.0
    %2512 = vmatprep.subr.mxu0 0.0
    %2513 = vmatpush1.msra.mxu0 0.0
    %2514 = vmatprep.subr.mxu0 0.0
    %2515 = vmatpush1.msra.mxu0 0.0
    %2516 = vmatprep.subr.mxu0 0.0
    %2517 = vmatpush1.msra.mxu0 0.0
    %2518 = vmatprep.subr.mxu0 0.0
    %2519 = vmatpush1.msra.mxu0 0.0
    %2520 = vmatprep.subr.mxu0 0.0
    %2521 = vmatpush1.msra.mxu0 0.0
    %2522 = vmatprep.subr.mxu0 0.0
    %2523 = vmatpush1.msra.mxu0 %v2486
    %2524 = vmatprep.subr.mxu0 0.0
    %2525 = vmatpush2.msra.mxu0 0.0
    %2526 = vmatprep.subr.mxu0 0.0
    %2527 = vmatpush2.msra.mxu0 0.0
    %2528 = vmatprep.subr.mxu0 0.0
    %2529 = vmatpush2.msra.mxu0 0.0
    %2530 = vmatprep.subr.mxu0 0.0
    %2531 = vmatpush2.msra.mxu0 0.0
    %2532 = vmatprep.subr.mxu0 0.0
    %2533 = vmatpush2.msra.mxu0 0.0
    %2534 = vmatprep.subr.mxu0 0.0
    %2535 = vmatpush2.msra.mxu0 0.0
    %2536 = vmatprep.subr.mxu0 0.0
    %2537 = vmatpush2.msra.mxu0 0.0
    %2538 = vmatprep.subr.mxu0 0.0
    %2539 = vmatpush2.msra.mxu0 0.0
    %2540 = vmatprep.subr.mxu0 0.0
    %2541 = vmatpush2.msra.mxu0 0.0
    %2542 = vmatprep.subr.mxu0 0.0
    %2543 = vmatpush2.msra.mxu0 0.0
    %2544 = vmatprep.subr.mxu0 0.0
    %2545 = vmatpush2.msra.mxu0 0.0
    %2546 = vmatprep.subr.mxu0 0.0
    %2547 = vmatpush2.msra.mxu0 0.0
    %2548 = vmatprep.subr.mxu0 0.0
    %2549 = vmatpush2.msra.mxu0 0.0
    %2550 = vmatprep.subr.mxu0 0.0
    %2551 = vmatpush2.msra.mxu0 0.0
    %2552 = vmatprep.subr.mxu0 0.0
    %2553 = vmatpush2.msra.mxu0 0.0
    %2554 = vmatprep.subr.mxu0 0.0
    %2555 = vmatpush2.msra.mxu0 0.0
    %2556 = vmatprep.mubr.f32.mxu0 0.0
    %2557 = vmatmul.mubr.f32.gmra.mxu0 %v2490
    %v2558 = vpop.f32.mrf.mxu0
    %v2559 = vadd.f32 0.0, %v2558
    %v2560 = vpop.f32.mrf.mxu0
    %2561 = vdwg.mxu0
    %v2562 = vld [vmem:[%s63] sm:$0xff]
    %v2563 = vld [vmem:[%s63 + $0x8] sm:$0xff]
    %v2564 = vld [vmem:[%s63 + $0x10] sm:$0xff]
    %v2565 = vld [vmem:[%s63 + $0x18] sm:$0xff]
    %s2566 = scalar_lea.vmem %s61, 2
    %v2567 = vld [vmem:[%s2566] sm:$0x3]
    %v2569 = vsel %vm2488, %v2567, 0
    %2571 = vmatprep.subr.mxu0 0.0
    %2572 = vmatpush1.msra.mxu0 0.0
    %2573 = vmatprep.subr.mxu0 0.0
    %2574 = vmatpush1.msra.mxu0 0.0
    %2575 = vmatprep.subr.mxu0 0.0
    %2576 = vmatpush1.msra.mxu0 0.0
    %2577 = vmatprep.subr.mxu0 0.0
    %2578 = vmatpush1.msra.mxu0 0.0
    %2579 = vmatprep.subr.mxu0 0.0
    %2580 = vmatpush1.msra.mxu0 0.0
    %2581 = vmatprep.subr.mxu0 0.0
    %2582 = vmatpush1.msra.mxu0 0.0
    %2583 = vmatprep.subr.mxu0 0.0
    %2584 = vmatpush1.msra.mxu0 0.0
    %2585 = vmatprep.subr.mxu0 0.0
    %2586 = vmatpush1.msra.mxu0 0.0
    %2587 = vmatprep.subr.mxu0 0.0
    %2588 = vmatpush1.msra.mxu0 0.0
    %2589 = vmatprep.subr.mxu0 0.0
    %2590 = vmatpush1.msra.mxu0 0.0
    %2591 = vmatprep.subr.mxu0 0.0
    %2592 = vmatpush1.msra.mxu0 0.0
    %2593 = vmatprep.subr.mxu0 0.0
    %2594 = vmatpush1.msra.mxu0 0.0
    %2595 = vmatprep.subr.mxu0 0.0
    %2596 = vmatpush1.msra.mxu0 0.0
    %2597 = vmatprep.subr.mxu0 0.0
    %2598 = vmatpush1.msra.mxu0 0.0
    %2599 = vmatprep.subr.mxu0 0.0
    %2600 = vmatpush1.msra.mxu0 0.0
    %2601 = vmatprep.subr.mxu0 0.0
    %2602 = vmatpush1.msra.mxu0 %v2486
    %2603 = vmatprep.subr.mxu0 0.0
    %2604 = vmatpush2.msra.mxu0 0.0
    %2605 = vmatprep.subr.mxu0 0.0
    %2606 = vmatpush2.msra.mxu0 0.0
    %2607 = vmatprep.subr.mxu0 0.0
    %2608 = vmatpush2.msra.mxu0 0.0
    %2609 = vmatprep.subr.mxu0 0.0
    %2610 = vmatpush2.msra.mxu0 0.0
    %2611 = vmatprep.subr.mxu0 0.0
    %2612 = vmatpush2.msra.mxu0 0.0
    %2613 = vmatprep.subr.mxu0 0.0
    %2614 = vmatpush2.msra.mxu0 0.0
    %2615 = vmatprep.subr.mxu0 0.0
    %2616 = vmatpush2.msra.mxu0 0.0
    %2617 = vmatprep.subr.mxu0 0.0
    %2618 = vmatpush2.msra.mxu0 0.0
    %2619 = vmatprep.subr.mxu0 0.0
    %2620 = vmatpush2.msra.mxu0 0.0
    %2621 = vmatprep.subr.mxu0 0.0
    %2622 = vmatpush2.msra.mxu0 0.0
    %2623 = vmatprep.subr.mxu0 0.0
    %2624 = vmatpush2.msra.mxu0 0.0
    %2625 = vmatprep.subr.mxu0 0.0
    %2626 = vmatpush2.msra.mxu0 0.0
    %2627 = vmatprep.subr.mxu0 0.0
    %2628 = vmatpush2.msra.mxu0 0.0
    %2629 = vmatprep.subr.mxu0 0.0
    %2630 = vmatpush2.msra.mxu0 0.0
    %2631 = vmatprep.subr.mxu0 0.0
    %2632 = vmatpush2.msra.mxu0 0.0
    %2633 = vmatprep.subr.mxu0 0.0
    %2634 = vmatpush2.msra.mxu0 0.0
    %2635 = vmatprep.mubr.f32.mxu0 0.0
    %2636 = vmatmul.mubr.f32.gmra.mxu0 %v2569
    %v2637 = vpop.f32.mrf.mxu0
    %v2638 = vadd.f32 0.0, %v2637
    %v2639 = vpop.f32.mrf.mxu0
    %2640 = vdwg.mxu0
    %s2641 = scalar_lea.vmem %s63, 32
    %v2642 = vld [vmem:[%s2641] sm:$0xff]
    %v2643 = vld [vmem:[%s2641 + $0x8] sm:$0xff]
    %v2644 = vld [vmem:[%s2641 + $0x10] sm:$0xff]
    %v2645 = vld [vmem:[%s2641 + $0x18] sm:$0xff]
    %vm2646 = vcmask 261120
    %v2648 = vsel %vm2646, %v2638, 0
    %2650 = vmatprep.subr.mxu0 0.0
    %2651 = vmatpush1.msra.mxu0 0.0
    %2652 = vmatprep.subr.mxu0 0.0
    %2653 = vmatpush1.msra.mxu0 0.0
    %2654 = vmatprep.subr.mxu0 0.0
    %2655 = vmatpush1.msra.mxu0 0.0
    %2656 = vmatprep.subr.mxu0 0.0
    %2657 = vmatpush1.msra.mxu0 0.0
    %2658 = vmatprep.subr.mxu0 0.0
    %2659 = vmatpush1.msra.mxu0 0.0
    %2660 = vmatprep.subr.mxu0 0.0
    %2661 = vmatpush1.msra.mxu0 0.0
    %2662 = vmatprep.subr.mxu0 0.0
    %2663 = vmatpush1.msra.mxu0 0.0
    %2664 = vmatprep.subr.mxu0 0.0
    %2665 = vmatpush1.msra.mxu0 0.0
    %2666 = vmatprep.subr.mxu0 0.0
    %2667 = vmatpush1.msra.mxu0 0.0
    %2668 = vmatprep.subr.mxu0 0.0
    %2669 = vmatpush1.msra.mxu0 0.0
    %2670 = vmatprep.subr.mxu0 0.0
    %2671 = vmatpush1.msra.mxu0 0.0
    %2672 = vmatprep.subr.mxu0 0.0
    %2673 = vmatpush1.msra.mxu0 0.0
    %2674 = vmatprep.subr.mxu0 0.0
    %2675 = vmatpush1.msra.mxu0 %v2645
    %2676 = vmatprep.subr.mxu0 0.0
    %2677 = vmatpush1.msra.mxu0 %v2644
    %2678 = vmatprep.subr.mxu0 0.0
    %2679 = vmatpush1.msra.mxu0 %v2643
    %2680 = vmatprep.subr.mxu0 0.0
    %2681 = vmatpush1.msra.mxu0 %v2642
    %2682 = vmatprep.subr.mxu0 0.0
    %2683 = vmatpush2.msra.mxu0 0.0
    %2684 = vmatprep.subr.mxu0 0.0
    %2685 = vmatpush2.msra.mxu0 0.0
    %2686 = vmatprep.subr.mxu0 0.0
    %2687 = vmatpush2.msra.mxu0 0.0
    %2688 = vmatprep.subr.mxu0 0.0
    %2689 = vmatpush2.msra.mxu0 0.0
    %2690 = vmatprep.subr.mxu0 0.0
    %2691 = vmatpush2.msra.mxu0 0.0
    %2692 = vmatprep.subr.mxu0 0.0
    %2693 = vmatpush2.msra.mxu0 0.0
    %2694 = vmatprep.subr.mxu0 0.0
    %2695 = vmatpush2.msra.mxu0 0.0
    %2696 = vmatprep.subr.mxu0 0.0
    %2697 = vmatpush2.msra.mxu0 0.0
    %2698 = vmatprep.subr.mxu0 0.0
    %2699 = vmatpush2.msra.mxu0 0.0
    %2700 = vmatprep.subr.mxu0 0.0
    %2701 = vmatpush2.msra.mxu0 0.0
    %2702 = vmatprep.subr.mxu0 0.0
    %2703 = vmatpush2.msra.mxu0 0.0
    %2704 = vmatprep.subr.mxu0 0.0
    %2705 = vmatpush2.msra.mxu0 0.0
    %2706 = vmatprep.subr.mxu0 0.0
    %2707 = vmatpush2.msra.mxu0 0.0
    %2708 = vmatprep.subr.mxu0 0.0
    %2709 = vmatpush2.msra.mxu0 0.0
    %2710 = vmatprep.subr.mxu0 0.0
    %2711 = vmatpush2.msra.mxu0 0.0
    %2712 = vmatprep.subr.mxu0 0.0
    %2713 = vmatpush2.msra.mxu0 0.0
    %2714 = vmatprep.mubr.f32.mxu0 0.0
    %2715 = vmatmul.mubr.f32.gmra.mxu0 %v2648
    %v2716 = vpop.f32.mrf.mxu0
    %v2717 = vadd.f32 0.0, %v2716
    %v2718 = vpop.f32.mrf.mxu0
    %2719 = vdwg.mxu0
    %v2721 = vsel %vm2646, %v2559, 0
    %2723 = vmatprep.subr.mxu0 0.0
    %2724 = vmatpush1.msra.mxu0 0.0
    %2725 = vmatprep.subr.mxu0 0.0
    %2726 = vmatpush1.msra.mxu0 0.0
    %2727 = vmatprep.subr.mxu0 0.0
    %2728 = vmatpush1.msra.mxu0 0.0
    %2729 = vmatprep.subr.mxu0 0.0
    %2730 = vmatpush1.msra.mxu0 0.0
    %2731 = vmatprep.subr.mxu0 0.0
    %2732 = vmatpush1.msra.mxu0 0.0
    %2733 = vmatprep.subr.mxu0 0.0
    %2734 = vmatpush1.msra.mxu0 0.0
    %2735 = vmatprep.subr.mxu0 0.0
    %2736 = vmatpush1.msra.mxu0 0.0
    %2737 = vmatprep.subr.mxu0 0.0
    %2738 = vmatpush1.msra.mxu0 0.0
    %2739 = vmatprep.subr.mxu0 0.0
    %2740 = vmatpush1.msra.mxu0 0.0
    %2741 = vmatprep.subr.mxu0 0.0
    %2742 = vmatpush1.msra.mxu0 0.0
    %2743 = vmatprep.subr.mxu0 0.0
    %2744 = vmatpush1.msra.mxu0 0.0
    %2745 = vmatprep.subr.mxu0 0.0
    %2746 = vmatpush1.msra.mxu0 0.0
    %2747 = vmatprep.subr.mxu0 0.0
    %2748 = vmatpush1.msra.mxu0 %v2565
    %2749 = vmatprep.subr.mxu0 0.0
    %2750 = vmatpush1.msra.mxu0 %v2564
    %2751 = vmatprep.subr.mxu0 0.0
    %2752 = vmatpush1.msra.mxu0 %v2563
    %2753 = vmatprep.subr.mxu0 0.0
    %2754 = vmatpush1.msra.mxu0 %v2562
    %2755 = vmatprep.subr.mxu0 0.0
    %2756 = vmatpush2.msra.mxu0 0.0
    %2757 = vmatprep.subr.mxu0 0.0
    %2758 = vmatpush2.msra.mxu0 0.0
    %2759 = vmatprep.subr.mxu0 0.0
    %2760 = vmatpush2.msra.mxu0 0.0
    %2761 = vmatprep.subr.mxu0 0.0
    %2762 = vmatpush2.msra.mxu0 0.0
    %2763 = vmatprep.subr.mxu0 0.0
    %2764 = vmatpush2.msra.mxu0 0.0
    %2765 = vmatprep.subr.mxu0 0.0
    %2766 = vmatpush2.msra.mxu0 0.0
    %2767 = vmatprep.subr.mxu0 0.0
    %2768 = vmatpush2.msra.mxu0 0.0
    %2769 = vmatprep.subr.mxu0 0.0
    %2770 = vmatpush2.msra.mxu0 0.0
    %2771 = vmatprep.subr.mxu0 0.0
    %2772 = vmatpush2.msra.mxu0 0.0
    %2773 = vmatprep.subr.mxu0 0.0
    %2774 = vmatpush2.msra.mxu0 0.0
    %2775 = vmatprep.subr.mxu0 0.0
    %2776 = vmatpush2.msra.mxu0 0.0
    %2777 = vmatprep.subr.mxu0 0.0
    %2778 = vmatpush2.msra.mxu0 0.0
    %2779 = vmatprep.subr.mxu0 0.0
    %2780 = vmatpush2.msra.mxu0 0.0
    %2781 = vmatprep.subr.mxu0 0.0
    %2782 = vmatpush2.msra.mxu0 0.0
    %2783 = vmatprep.subr.mxu0 0.0
    %2784 = vmatpush2.msra.mxu0 0.0
    %2785 = vmatprep.subr.mxu0 0.0
    %2786 = vmatpush2.msra.mxu0 0.0
    %2787 = vmatprep.mubr.f32.mxu0 0.0
    %2788 = vmatmul.mubr.f32.gmra.mxu0 %v2721
    %v2789 = vpop.f32.mrf.mxu0
    %v2790 = vadd.f32 %v2717, %v2789
    %v2791 = vpop.f32.mrf.mxu0
    %2792 = vdwg.mxu0
    %s2793 = scalar_lea.vmem %s61, 4
    %v2794 = vld [vmem:[%s2793] sm:$0x3]
    %v2796 = vsel %vm2488, %v2794, 0
    %2798 = vmatprep.subr.mxu0 0.0
    %2799 = vmatpush1.msra.mxu0 0.0
    %2800 = vmatprep.subr.mxu0 0.0
    %2801 = vmatpush1.msra.mxu0 0.0
    %2802 = vmatprep.subr.mxu0 0.0
    %2803 = vmatpush1.msra.mxu0 0.0
    %2804 = vmatprep.subr.mxu0 0.0
    %2805 = vmatpush1.msra.mxu0 0.0
    %2806 = vmatprep.subr.mxu0 0.0
    %2807 = vmatpush1.msra.mxu0 0.0
    %2808 = vmatprep.subr.mxu0 0.0
    %2809 = vmatpush1.msra.mxu0 0.0
    %2810 = vmatprep.subr.mxu0 0.0
    %2811 = vmatpush1.msra.mxu0 0.0
    %2812 = vmatprep.subr.mxu0 0.0
    %2813 = vmatpush1.msra.mxu0 0.0
    %2814 = vmatprep.subr.mxu0 0.0
    %2815 = vmatpush1.msra.mxu0 0.0
    %2816 = vmatprep.subr.mxu0 0.0
    %2817 = vmatpush1.msra.mxu0 0.0
    %2818 = vmatprep.subr.mxu0 0.0
    %2819 = vmatpush1.msra.mxu0 0.0
    %2820 = vmatprep.subr.mxu0 0.0
    %2821 = vmatpush1.msra.mxu0 0.0
    %2822 = vmatprep.subr.mxu0 0.0
    %2823 = vmatpush1.msra.mxu0 0.0
    %2824 = vmatprep.subr.mxu0 0.0
    %2825 = vmatpush1.msra.mxu0 0.0
    %2826 = vmatprep.subr.mxu0 0.0
    %2827 = vmatpush1.msra.mxu0 0.0
    %2828 = vmatprep.subr.mxu0 0.0
    %2829 = vmatpush1.msra.mxu0 %v2486
    %2830 = vmatprep.subr.mxu0 0.0
    %2831 = vmatpush2.msra.mxu0 0.0
    %2832 = vmatprep.subr.mxu0 0.0
    %2833 = vmatpush2.msra.mxu0 0.0
    %2834 = vmatprep.subr.mxu0 0.0
    %2835 = vmatpush2.msra.mxu0 0.0
    %2836 = vmatprep.subr.mxu0 0.0
    %2837 = vmatpush2.msra.mxu0 0.0
    %2838 = vmatprep.subr.mxu0 0.0
    %2839 = vmatpush2.msra.mxu0 0.0
    %2840 = vmatprep.subr.mxu0 0.0
    %2841 = vmatpush2.msra.mxu0 0.0
    %2842 = vmatprep.subr.mxu0 0.0
    %2843 = vmatpush2.msra.mxu0 0.0
    %2844 = vmatprep.subr.mxu0 0.0
    %2845 = vmatpush2.msra.mxu0 0.0
    %2846 = vmatprep.subr.mxu0 0.0
    %2847 = vmatpush2.msra.mxu0 0.0
    %2848 = vmatprep.subr.mxu0 0.0
    %2849 = vmatpush2.msra.mxu0 0.0
    %2850 = vmatprep.subr.mxu0 0.0
    %2851 = vmatpush2.msra.mxu0 0.0
    %2852 = vmatprep.subr.mxu0 0.0
    %2853 = vmatpush2.msra.mxu0 0.0
    %2854 = vmatprep.subr.mxu0 0.0
    %2855 = vmatpush2.msra.mxu0 0.0
    %2856 = vmatprep.subr.mxu0 0.0
    %2857 = vmatpush2.msra.mxu0 0.0
    %2858 = vmatprep.subr.mxu0 0.0
    %2859 = vmatpush2.msra.mxu0 0.0
    %2860 = vmatprep.subr.mxu0 0.0
    %2861 = vmatpush2.msra.mxu0 0.0
    %2862 = vmatprep.mubr.f32.mxu0 0.0
    %2863 = vmatmul.mubr.f32.gmra.mxu0 %v2796
    %v2864 = vpop.f32.mrf.mxu0
    %v2865 = vadd.f32 0.0, %v2864
    %v2866 = vpop.f32.mrf.mxu0
    %2867 = vdwg.mxu0
    %s2868 = scalar_lea.vmem %s63, 64
    %v2869 = vld [vmem:[%s2868] sm:$0xff]
    %v2870 = vld [vmem:[%s2868 + $0x8] sm:$0xff]
    %v2871 = vld [vmem:[%s2868 + $0x10] sm:$0xff]
    %v2872 = vld [vmem:[%s2868 + $0x18] sm:$0xff]
    %v2874 = vsel %vm2646, %v2865, 0
    %2876 = vmatprep.subr.mxu0 0.0
    %2877 = vmatpush1.msra.mxu0 0.0
    %2878 = vmatprep.subr.mxu0 0.0
    %2879 = vmatpush1.msra.mxu0 0.0
    %2880 = vmatprep.subr.mxu0 0.0
    %2881 = vmatpush1.msra.mxu0 0.0
    %2882 = vmatprep.subr.mxu0 0.0
    %2883 = vmatpush1.msra.mxu0 0.0
    %2884 = vmatprep.subr.mxu0 0.0
    %2885 = vmatpush1.msra.mxu0 0.0
    %2886 = vmatprep.subr.mxu0 0.0
    %2887 = vmatpush1.msra.mxu0 0.0
    %2888 = vmatprep.subr.mxu0 0.0
    %2889 = vmatpush1.msra.mxu0 0.0
    %2890 = vmatprep.subr.mxu0 0.0
    %2891 = vmatpush1.msra.mxu0 0.0
    %2892 = vmatprep.subr.mxu0 0.0
    %2893 = vmatpush1.msra.mxu0 0.0
    %2894 = vmatprep.subr.mxu0 0.0
    %2895 = vmatpush1.msra.mxu0 0.0
    %2896 = vmatprep.subr.mxu0 0.0
    %2897 = vmatpush1.msra.mxu0 0.0
    %2898 = vmatprep.subr.mxu0 0.0
    %2899 = vmatpush1.msra.mxu0 0.0
    %2900 = vmatprep.subr.mxu0 0.0
    %2901 = vmatpush1.msra.mxu0 %v2872
    %2902 = vmatprep.subr.mxu0 0.0
    %2903 = vmatpush1.msra.mxu0 %v2871
    %2904 = vmatprep.subr.mxu0 0.0
    %2905 = vmatpush1.msra.mxu0 %v2870
    %2906 = vmatprep.subr.mxu0 0.0
    %2907 = vmatpush1.msra.mxu0 %v2869
    %2908 = vmatprep.subr.mxu0 0.0
    %2909 = vmatpush2.msra.mxu0 0.0
    %2910 = vmatprep.subr.mxu0 0.0
    %2911 = vmatpush2.msra.mxu0 0.0
    %2912 = vmatprep.subr.mxu0 0.0
    %2913 = vmatpush2.msra.mxu0 0.0
    %2914 = vmatprep.subr.mxu0 0.0
    %2915 = vmatpush2.msra.mxu0 0.0
    %2916 = vmatprep.subr.mxu0 0.0
    %2917 = vmatpush2.msra.mxu0 0.0
    %2918 = vmatprep.subr.mxu0 0.0
    %2919 = vmatpush2.msra.mxu0 0.0
    %2920 = vmatprep.subr.mxu0 0.0
    %2921 = vmatpush2.msra.mxu0 0.0
    %2922 = vmatprep.subr.mxu0 0.0
    %2923 = vmatpush2.msra.mxu0 0.0
    %2924 = vmatprep.subr.mxu0 0.0
    %2925 = vmatpush2.msra.mxu0 0.0
    %2926 = vmatprep.subr.mxu0 0.0
    %2927 = vmatpush2.msra.mxu0 0.0
    %2928 = vmatprep.subr.mxu0 0.0
    %2929 = vmatpush2.msra.mxu0 0.0
    %2930 = vmatprep.subr.mxu0 0.0
    %2931 = vmatpush2.msra.mxu0 0.0
    %2932 = vmatprep.subr.mxu0 0.0
    %2933 = vmatpush2.msra.mxu0 0.0
    %2934 = vmatprep.subr.mxu0 0.0
    %2935 = vmatpush2.msra.mxu0 0.0
    %2936 = vmatprep.subr.mxu0 0.0
    %2937 = vmatpush2.msra.mxu0 0.0
    %2938 = vmatprep.subr.mxu0 0.0
    %2939 = vmatpush2.msra.mxu0 0.0
    %2940 = vmatprep.mubr.f32.mxu0 0.0
    %2941 = vmatmul.mubr.f32.gmra.mxu0 %v2874
    %v2942 = vpop.f32.mrf.mxu0
    %v2943 = vadd.f32 0.0, %v2942
    %v2944 = vpop.f32.mrf.mxu0
    %2945 = vdwg.mxu0
    %v2946 = vadd.f32 %v2790, %v2943
    %s2947 = scalar_lea.vmem %s61, 6
    %v2948 = vld [vmem:[%s2947] sm:$0x3]
    %v2950 = vsel %vm2488, %v2948, 0
    %2952 = vmatprep.subr.mxu0 0.0
    %2953 = vmatpush1.msra.mxu0 0.0
    %2954 = vmatprep.subr.mxu0 0.0
    %2955 = vmatpush1.msra.mxu0 0.0
    %2956 = vmatprep.subr.mxu0 0.0
    %2957 = vmatpush1.msra.mxu0 0.0
    %2958 = vmatprep.subr.mxu0 0.0
    %2959 = vmatpush1.msra.mxu0 0.0
    %2960 = vmatprep.subr.mxu0 0.0
    %2961 = vmatpush1.msra.mxu0 0.0
    %2962 = vmatprep.subr.mxu0 0.0
    %2963 = vmatpush1.msra.mxu0 0.0
    %2964 = vmatprep.subr.mxu0 0.0
    %2965 = vmatpush1.msra.mxu0 0.0
    %2966 = vmatprep.subr.mxu0 0.0
    %2967 = vmatpush1.msra.mxu0 0.0
    %2968 = vmatprep.subr.mxu0 0.0
    %2969 = vmatpush1.msra.mxu0 0.0
    %2970 = vmatprep.subr.mxu0 0.0
    %2971 = vmatpush1.msra.mxu0 0.0
    %2972 = vmatprep.subr.mxu0 0.0
    %2973 = vmatpush1.msra.mxu0 0.0
    %2974 = vmatprep.subr.mxu0 0.0
    %2975 = vmatpush1.msra.mxu0 0.0
    %2976 = vmatprep.subr.mxu0 0.0
    %2977 = vmatpush1.msra.mxu0 0.0
    %2978 = vmatprep.subr.mxu0 0.0
    %2979 = vmatpush1.msra.mxu0 0.0
    %2980 = vmatprep.subr.mxu0 0.0
    %2981 = vmatpush1.msra.mxu0 0.0
    %2982 = vmatprep.subr.mxu0 0.0
    %2983 = vmatpush1.msra.mxu0 %v2486
    %2984 = vmatprep.subr.mxu0 0.0
    %2985 = vmatpush2.msra.mxu0 0.0
    %2986 = vmatprep.subr.mxu0 0.0
    %2987 = vmatpush2.msra.mxu0 0.0
    %2988 = vmatprep.subr.mxu0 0.0
    %2989 = vmatpush2.msra.mxu0 0.0
    %2990 = vmatprep.subr.mxu0 0.0
    %2991 = vmatpush2.msra.mxu0 0.0
    %2992 = vmatprep.subr.mxu0 0.0
    %2993 = vmatpush2.msra.mxu0 0.0
    %2994 = vmatprep.subr.mxu0 0.0
    %2995 = vmatpush2.msra.mxu0 0.0
    %2996 = vmatprep.subr.mxu0 0.0
    %2997 = vmatpush2.msra.mxu0 0.0
    %2998 = vmatprep.subr.mxu0 0.0
    %2999 = vmatpush2.msra.mxu0 0.0
    %3000 = vmatprep.subr.mxu0 0.0
    %3001 = vmatpush2.msra.mxu0 0.0
    %3002 = vmatprep.subr.mxu0 0.0
    %3003 = vmatpush2.msra.mxu0 0.0
    %3004 = vmatprep.subr.mxu0 0.0
    %3005 = vmatpush2.msra.mxu0 0.0
    %3006 = vmatprep.subr.mxu0 0.0
    %3007 = vmatpush2.msra.mxu0 0.0
    %3008 = vmatprep.subr.mxu0 0.0
    %3009 = vmatpush2.msra.mxu0 0.0
    %3010 = vmatprep.subr.mxu0 0.0
    %3011 = vmatpush2.msra.mxu0 0.0
    %3012 = vmatprep.subr.mxu0 0.0
    %3013 = vmatpush2.msra.mxu0 0.0
    %3014 = vmatprep.subr.mxu0 0.0
    %3015 = vmatpush2.msra.mxu0 0.0
    %3016 = vmatprep.mubr.f32.mxu0 0.0
    %3017 = vmatmul.mubr.f32.gmra.mxu0 %v2950
    %v3018 = vpop.f32.mrf.mxu0
    %v3019 = vadd.f32 0.0, %v3018
    %v3020 = vpop.f32.mrf.mxu0
    %3021 = vdwg.mxu0
    %s3022 = scalar_lea.vmem %s63, 96
    %v3023 = vld [vmem:[%s3022] sm:$0xff]
    %v3024 = vld [vmem:[%s3022 + $0x8] sm:$0xff]
    %v3025 = vld [vmem:[%s3022 + $0x10] sm:$0xff]
    %v3026 = vld [vmem:[%s3022 + $0x18] sm:$0xff]
    %v3028 = vsel %vm2646, %v3019, 0
    %3030 = vmatprep.subr.mxu0 0.0
    %3031 = vmatpush1.msra.mxu0 0.0
    %3032 = vmatprep.subr.mxu0 0.0
    %3033 = vmatpush1.msra.mxu0 0.0
    %3034 = vmatprep.subr.mxu0 0.0
    %3035 = vmatpush1.msra.mxu0 0.0
    %3036 = vmatprep.subr.mxu0 0.0
    %3037 = vmatpush1.msra.mxu0 0.0
    %3038 = vmatprep.subr.mxu0 0.0
    %3039 = vmatpush1.msra.mxu0 0.0
    %3040 = vmatprep.subr.mxu0 0.0
    %3041 = vmatpush1.msra.mxu0 0.0
    %3042 = vmatprep.subr.mxu0 0.0
    %3043 = vmatpush1.msra.mxu0 0.0
    %3044 = vmatprep.subr.mxu0 0.0
    %3045 = vmatpush1.msra.mxu0 0.0
    %3046 = vmatprep.subr.mxu0 0.0
    %3047 = vmatpush1.msra.mxu0 0.0
    %3048 = vmatprep.subr.mxu0 0.0
    %3049 = vmatpush1.msra.mxu0 0.0
    %3050 = vmatprep.subr.mxu0 0.0
    %3051 = vmatpush1.msra.mxu0 0.0
    %3052 = vmatprep.subr.mxu0 0.0
    %3053 = vmatpush1.msra.mxu0 0.0
    %3054 = vmatprep.subr.mxu0 0.0
    %3055 = vmatpush1.msra.mxu0 %v3026
    %3056 = vmatprep.subr.mxu0 0.0
    %3057 = vmatpush1.msra.mxu0 %v3025
    %3058 = vmatprep.subr.mxu0 0.0
    %3059 = vmatpush1.msra.mxu0 %v3024
    %3060 = vmatprep.subr.mxu0 0.0
    %3061 = vmatpush1.msra.mxu0 %v3023
    %3062 = vmatprep.subr.mxu0 0.0
    %3063 = vmatpush2.msra.mxu0 0.0
    %3064 = vmatprep.subr.mxu0 0.0
    %3065 = vmatpush2.msra.mxu0 0.0
    %3066 = vmatprep.subr.mxu0 0.0
    %3067 = vmatpush2.msra.mxu0 0.0
    %3068 = vmatprep.subr.mxu0 0.0
    %3069 = vmatpush2.msra.mxu0 0.0
    %3070 = vmatprep.subr.mxu0 0.0
    %3071 = vmatpush2.msra.mxu0 0.0
    %3072 = vmatprep.subr.mxu0 0.0
    %3073 = vmatpush2.msra.mxu0 0.0
    %3074 = vmatprep.subr.mxu0 0.0
    %3075 = vmatpush2.msra.mxu0 0.0
    %3076 = vmatprep.subr.mxu0 0.0
    %3077 = vmatpush2.msra.mxu0 0.0
    %3078 = vmatprep.subr.mxu0 0.0
    %3079 = vmatpush2.msra.mxu0 0.0
    %3080 = vmatprep.subr.mxu0 0.0
    %3081 = vmatpush2.msra.mxu0 0.0
    %3082 = vmatprep.subr.mxu0 0.0
    %3083 = vmatpush2.msra.mxu0 0.0
    %3084 = vmatprep.subr.mxu0 0.0
    %3085 = vmatpush2.msra.mxu0 0.0
    %3086 = vmatprep.subr.mxu0 0.0
    %3087 = vmatpush2.msra.mxu0 0.0
    %3088 = vmatprep.subr.mxu0 0.0
    %3089 = vmatpush2.msra.mxu0 0.0
    %3090 = vmatprep.subr.mxu0 0.0
    %3091 = vmatpush2.msra.mxu0 0.0
    %3092 = vmatprep.subr.mxu0 0.0
    %3093 = vmatpush2.msra.mxu0 0.0
    %3094 = vmatprep.mubr.f32.mxu0 0.0
    %3095 = vmatmul.mubr.f32.gmra.mxu0 %v3028
    %v3096 = vpop.f32.mrf.mxu0
    %v3097 = vadd.f32 0.0, %v3096
    %v3098 = vpop.f32.mrf.mxu0
    %3099 = vdwg.mxu0
    %v3100 = vadd.f32 %v2946, %v3097
    %v3102 = vlaneseq
    %v3103 = vshrl.u32 %v3102, 7
    %v3104 = vsub.s32 0, %v3103
    %v3105 = vrot.slane %v197, %v3104
    %3107 = vmatprep.subr.mxu0 0.0
    %3108 = vmatpush1.msra.mxu0 %v196
    %3109 = vmatprep.subr.mxu0 0.0
    %3110 = vmatpush1.msra.mxu0 %v195
    %3111 = vmatprep.subr.mxu0 0.0
    %3112 = vmatpush1.msra.mxu0 %v194
    %3113 = vmatprep.subr.mxu0 0.0
    %3114 = vmatpush1.msra.mxu0 %v193
    %3115 = vmatprep.subr.mxu0 0.0
    %3116 = vmatpush1.msra.mxu0 %v192
    %3117 = vmatprep.subr.mxu0 0.0
    %3118 = vmatpush1.msra.mxu0 %v191
    %3119 = vmatprep.subr.mxu0 0.0
    %3120 = vmatpush1.msra.mxu0 %v190
    %3121 = vmatprep.subr.mxu0 0.0
    %3122 = vmatpush1.msra.mxu0 %v189
    %3123 = vmatprep.subr.mxu0 0.0
    %3124 = vmatpush1.msra.mxu0 %v188
    %3125 = vmatprep.subr.mxu0 0.0
    %3126 = vmatpush1.msra.mxu0 %v187
    %3127 = vmatprep.subr.mxu0 0.0
    %3128 = vmatpush1.msra.mxu0 %v186
    %3129 = vmatprep.subr.mxu0 0.0
    %3130 = vmatpush1.msra.mxu0 %v185
    %3131 = vmatprep.subr.mxu0 0.0
    %3132 = vmatpush1.msra.mxu0 %v184
    %3133 = vmatprep.subr.mxu0 0.0
    %3134 = vmatpush1.msra.mxu0 %v183
    %3135 = vmatprep.subr.mxu0 0.0
    %3136 = vmatpush1.msra.mxu0 %v182
    %3137 = vmatprep.subr.mxu0 0.0
    %3138 = vmatpush1.msra.mxu0 %v181
    %3139 = vmatprep.subr.mxu0 0.0
    %3140 = vmatpush2.msra.mxu0 0.0
    %3141 = vmatprep.subr.mxu0 0.0
    %3142 = vmatpush2.msra.mxu0 0.0
    %3143 = vmatprep.subr.mxu0 0.0
    %3144 = vmatpush2.msra.mxu0 0.0
    %3145 = vmatprep.subr.mxu0 0.0
    %3146 = vmatpush2.msra.mxu0 0.0
    %3147 = vmatprep.subr.mxu0 0.0
    %3148 = vmatpush2.msra.mxu0 0.0
    %3149 = vmatprep.subr.mxu0 0.0
    %3150 = vmatpush2.msra.mxu0 0.0
    %3151 = vmatprep.subr.mxu0 0.0
    %3152 = vmatpush2.msra.mxu0 0.0
    %3153 = vmatprep.subr.mxu0 0.0
    %3154 = vmatpush2.msra.mxu0 0.0
    %3155 = vmatprep.subr.mxu0 0.0
    %3156 = vmatpush2.msra.mxu0 0.0
    %3157 = vmatprep.subr.mxu0 0.0
    %3158 = vmatpush2.msra.mxu0 0.0
    %3159 = vmatprep.subr.mxu0 0.0
    %3160 = vmatpush2.msra.mxu0 0.0
    %3161 = vmatprep.subr.mxu0 0.0
    %3162 = vmatpush2.msra.mxu0 0.0
    %3163 = vmatprep.subr.mxu0 0.0
    %3164 = vmatpush2.msra.mxu0 0.0
    %3165 = vmatprep.subr.mxu0 0.0
    %3166 = vmatpush2.msra.mxu0 0.0
    %3167 = vmatprep.subr.mxu0 0.0
    %3168 = vmatpush2.msra.mxu0 0.0
    %3169 = vmatprep.subr.mxu0 0.0
    %3170 = vmatpush2.msra.mxu0 0.0
    %3171 = vmatprep.mubr.f32.mxu0 0.0
    %3172 = vmatmul.mubr.f32.gmra.mxu0 %v3100
    %v3173 = vpop.f32.mrf.mxu0
    %v3174 = vadd.f32 %v3105, %v3173
    %v3175 = vpop.f32.mrf.mxu0
    %3176 = vdwg.mxu0
    %vm3177 = vcmp.ge.f32.partialorder %v3174, 0.0
    %v3178 = vmul.f32 %v3174, 0.01
    %v3179 = vsel %vm3177, %v3174, %v3178
    %v3181 = vlaneseq
    %v3182 = vshrl.u32 %v3181, 7
    %v3183 = vsub.s32 0, %v3182
    %v3184 = vrot.slane %v206, %v3183
    %vm3186 = vcmask 523264
    %v3188 = vsel %vm3186, %v3179, 0
    %3190 = vmatprep.subr.mxu0 0.0
    %3191 = vmatpush1.msra.mxu0 0.0
    %3192 = vmatprep.subr.mxu0 0.0
    %3193 = vmatpush1.msra.mxu0 0.0
    %3194 = vmatprep.subr.mxu0 0.0
    %3195 = vmatpush1.msra.mxu0 0.0
    %3196 = vmatprep.subr.mxu0 0.0
    %3197 = vmatpush1.msra.mxu0 0.0
    %3198 = vmatprep.subr.mxu0 0.0
    %3199 = vmatpush1.msra.mxu0 0.0
    %3200 = vmatprep.subr.mxu0 0.0
    %3201 = vmatpush1.msra.mxu0 0.0
    %3202 = vmatprep.subr.mxu0 0.0
    %3203 = vmatpush1.msra.mxu0 0.0
    %3204 = vmatprep.subr.mxu0 0.0
    %3205 = vmatpush1.msra.mxu0 0.0
    %3206 = vmatprep.subr.mxu0 0.0
    %3207 = vmatpush1.msra.mxu0 %v205
    %3208 = vmatprep.subr.mxu0 0.0
    %3209 = vmatpush1.msra.mxu0 %v204
    %3210 = vmatprep.subr.mxu0 0.0
    %3211 = vmatpush1.msra.mxu0 %v203
    %3212 = vmatprep.subr.mxu0 0.0
    %3213 = vmatpush1.msra.mxu0 %v202
    %3214 = vmatprep.subr.mxu0 0.0
    %3215 = vmatpush1.msra.mxu0 %v201
    %3216 = vmatprep.subr.mxu0 0.0
    %3217 = vmatpush1.msra.mxu0 %v200
    %3218 = vmatprep.subr.mxu0 0.0
    %3219 = vmatpush1.msra.mxu0 %v199
    %3220 = vmatprep.subr.mxu0 0.0
    %3221 = vmatpush1.msra.mxu0 %v198
    %3222 = vmatprep.subr.mxu0 0.0
    %3223 = vmatpush2.msra.mxu0 0.0
    %3224 = vmatprep.subr.mxu0 0.0
    %3225 = vmatpush2.msra.mxu0 0.0
    %3226 = vmatprep.subr.mxu0 0.0
    %3227 = vmatpush2.msra.mxu0 0.0
    %3228 = vmatprep.subr.mxu0 0.0
    %3229 = vmatpush2.msra.mxu0 0.0
    %3230 = vmatprep.subr.mxu0 0.0
    %3231 = vmatpush2.msra.mxu0 0.0
    %3232 = vmatprep.subr.mxu0 0.0
    %3233 = vmatpush2.msra.mxu0 0.0
    %3234 = vmatprep.subr.mxu0 0.0
    %3235 = vmatpush2.msra.mxu0 0.0
    %3236 = vmatprep.subr.mxu0 0.0
    %3237 = vmatpush2.msra.mxu0 0.0
    %3238 = vmatprep.subr.mxu0 0.0
    %3239 = vmatpush2.msra.mxu0 0.0
    %3240 = vmatprep.subr.mxu0 0.0
    %3241 = vmatpush2.msra.mxu0 0.0
    %3242 = vmatprep.subr.mxu0 0.0
    %3243 = vmatpush2.msra.mxu0 0.0
    %3244 = vmatprep.subr.mxu0 0.0
    %3245 = vmatpush2.msra.mxu0 0.0
    %3246 = vmatprep.subr.mxu0 0.0
    %3247 = vmatpush2.msra.mxu0 0.0
    %3248 = vmatprep.subr.mxu0 0.0
    %3249 = vmatpush2.msra.mxu0 0.0
    %3250 = vmatprep.subr.mxu0 0.0
    %3251 = vmatpush2.msra.mxu0 0.0
    %3252 = vmatprep.subr.mxu0 0.0
    %3253 = vmatpush2.msra.mxu0 0.0
    %3254 = vmatprep.mubr.f32.mxu0 0.0
    %3255 = vmatmul.mubr.f32.gmra.mxu0 %v3188
    %v3256 = vpop.f32.mrf.mxu0
    %v3257 = vadd.f32 %v3184, %v3256
    %v3258 = vpop.f32.mrf.mxu0
    %3259 = vdwg.mxu0
    %v3260 = vld [vmem:[%s3] sm:$0xff]
    %v3261 = vld [vmem:[%s3 + $0x8] sm:$0xff]
    %v3262 = vld [vmem:[%s3 + $0x10] sm:$0xff]
    %v3263 = vld [vmem:[%s3 + $0x18] sm:$0xff]
    %v3264 = vld [vmem:[%s3 + $0x20] sm:$0xff]
    %v3265 = vld [vmem:[%s3 + $0x28] sm:$0xff]
    %v3266 = vld [vmem:[%s3 + $0x30] sm:$0xff]
    %v3267 = vld [vmem:[%s3 + $0x38] sm:$0xff]
    %v3268 = vld [vmem:[%s3 + $0x40] sm:$0xff]
    %v3269 = vld [vmem:[%s3 + $0x48] sm:$0xff]
    %v3270 = vld [vmem:[%s3 + $0x50] sm:$0xff]
    %v3271 = vld [vmem:[%s3 + $0x58] sm:$0xff]
    %v3272 = vld [vmem:[%s3 + $0x60] sm:$0xff]
    %v3273 = vld [vmem:[%s3 + $0x68] sm:$0xff]
    %v3274 = vld [vmem:[%s3 + $0x70] sm:$0xff]
    %v3275 = vld [vmem:[%s3 + $0x78] sm:$0xff]
    %v3276 = vld [vmem:[%s3 + $0x80] sm:$0xff]
    %v3277 = vld [vmem:[%s3 + $0x88] sm:$0xff]
    %v3278 = vld [vmem:[%s3 + $0x90] sm:$0xff]
    %v3279 = vld [vmem:[%s3 + $0x98] sm:$0xff]
    %v3280 = vld [vmem:[%s3 + $0xa0] sm:$0xff]
    %v3281 = vld [vmem:[%s3 + $0xa8] sm:$0xff]
    %v3282 = vld [vmem:[%s3 + $0xb0] sm:$0xff]
    %v3283 = vld [vmem:[%s3 + $0xb8] sm:$0xff]
    %v3284 = vld [vmem:[%s3 + $0xc0] sm:$0xff]
    %v3285 = vld [vmem:[%s3 + $0xc8] sm:$0xff]
    %v3286 = vld [vmem:[%s3 + $0xd0] sm:$0xff]
    %v3287 = vld [vmem:[%s3 + $0xd8] sm:$0xff]
    %v3288 = vld [vmem:[%s3 + $0xe0] sm:$0xff]
    %v3289 = vld [vmem:[%s3 + $0xe8] sm:$0xff]
    %v3290 = vld [vmem:[%s3 + $0xf0] sm:$0xff]
    %v3291 = vld [vmem:[%s3 + $0xf8] sm:$0xff]
    %v3292 = vld [vmem:[%s3 + $0x100] sm:$0xff]
    %v3293 = vld [vmem:[%s3 + $0x108] sm:$0xff]
    %v3294 = vld [vmem:[%s3 + $0x110] sm:$0xff]
    %v3295 = vld [vmem:[%s3 + $0x118] sm:$0xff]
    %v3296 = vld [vmem:[%s13] sm:$0xff]
    %v3297 = vld [vmem:[%s13 + $0x8] sm:$0x1]
    %v3298 = vld [vmem:[%s15] sm:$0x1]
    %v3299 = vld [vmem:[%s19] sm:$0x1]
    %v3300 = vld [vmem:[%s29] sm:$0xff]
    %v3301 = vld [vmem:[%s29 + $0x8] sm:$0xff]
    %v3302 = vld [vmem:[%s29 + $0x10] sm:$0xff]
    %v3303 = vld [vmem:[%s29 + $0x18] sm:$0xff]
    %v3304 = vld [vmem:[%s29 + $0x20] sm:$0xff]
    %v3305 = vld [vmem:[%s29 + $0x28] sm:$0xff]
    %v3306 = vld [vmem:[%s29 + $0x30] sm:$0xff]
    %v3307 = vld [vmem:[%s29 + $0x38] sm:$0xff]
    %v3308 = vld [vmem:[%s29 + $0x40] sm:$0xff]
    %v3309 = vld [vmem:[%s29 + $0x48] sm:$0xff]
    %v3310 = vld [vmem:[%s29 + $0x50] sm:$0xff]
    %v3311 = vld [vmem:[%s29 + $0x58] sm:$0xff]
    %v3312 = vld [vmem:[%s29 + $0x60] sm:$0xff]
    %v3313 = vld [vmem:[%s29 + $0x68] sm:$0xff]
    %v3314 = vld [vmem:[%s29 + $0x70] sm:$0xff]
    %v3315 = vld [vmem:[%s29 + $0x78] sm:$0xff]
    %v3316 = vld [vmem:[%s31] sm:$0x1]
    %v3317 = vld [vmem:[%s33] sm:$0xff]
    %v3318 = vld [vmem:[%s33 + $0x8] sm:$0xff]
    %v3319 = vld [vmem:[%s33 + $0x10] sm:$0xff]
    %v3320 = vld [vmem:[%s33 + $0x18] sm:$0xff]
    %v3321 = vld [vmem:[%s33 + $0x20] sm:$0xff]
    %v3322 = vld [vmem:[%s33 + $0x28] sm:$0xff]
    %v3323 = vld [vmem:[%s33 + $0x30] sm:$0xff]
    %v3324 = vld [vmem:[%s33 + $0x38] sm:$0xff]
    %v3325 = vld [vmem:[%s35] sm:$0x1]
    %v3327 = vlaneseq
    %v3328 = vshrl.u32 %v3327, 7
    %v3329 = vsub.s32 0, %v3328
    %v3330 = vrot.slane %v3298, %v3329
    %v3333 = vsel %vm213, %v3260, 0
    %v3336 = vsel %vm213, %v3261, 0
    %v3339 = vsel %vm213, %v3262, 0
    %v3342 = vsel %vm213, %v3263, 0
    %v3345 = vsel %vm213, %v3264, 0
    %v3348 = vsel %vm213, %v3265, 0
    %v3351 = vsel %vm213, %v3266, 0
    %v3354 = vsel %vm213, %v3267, 0
    %v3357 = vsel %vm213, %v3268, 0
    %v3360 = vsel %vm213, %v3269, 0
    %v3363 = vsel %vm213, %v3270, 0
    %v3366 = vsel %vm213, %v3271, 0
    %v3369 = vsel %vm213, %v3272, 0
    %v3372 = vsel %vm213, %v3273, 0
    %v3375 = vsel %vm213, %v3274, 0
    %v3378 = vsel %vm213, %v3275, 0
    %v3381 = vsel %vm213, %v3276, 0
    %v3384 = vsel %vm213, %v3277, 0
    %v3387 = vsel %vm213, %v3278, 0
    %v3390 = vsel %vm213, %v3279, 0
    %v3393 = vsel %vm213, %v3280, 0
    %v3396 = vsel %vm213, %v3281, 0
    %v3399 = vsel %vm213, %v3282, 0
    %v3402 = vsel %vm213, %v3283, 0
    %v3405 = vsel %vm213, %v3284, 0
    %v3408 = vsel %vm213, %v3285, 0
    %v3411 = vsel %vm213, %v3286, 0
    %v3414 = vsel %vm213, %v3287, 0
    %v3417 = vsel %vm213, %v3288, 0
    %v3420 = vsel %vm213, %v3289, 0
    %v3423 = vsel %vm213, %v3290, 0
    %v3426 = vsel %vm213, %v3291, 0
    %v3429 = vsel %vm213, %v3292, 0
    %v3432 = vsel %vm213, %v3293, 0
    %v3435 = vsel %vm213, %v3294, 0
    %v3438 = vsel %vm213, %v3295, 0
    %v3441 = vsel %vm322, %v3297, 0
    %3443 = vmatprep.subr.mxu0 0.0
    %3444 = vmatpush1.msra.mxu0 0.0
    %3445 = vmatprep.subr.mxu0 0.0
    %3446 = vmatpush1.msra.mxu0 0.0
    %3447 = vmatprep.subr.mxu0 0.0
    %3448 = vmatpush1.msra.mxu0 0.0
    %3449 = vmatprep.subr.mxu0 0.0
    %3450 = vmatpush1.msra.mxu0 0.0
    %3451 = vmatprep.subr.mxu0 0.0
    %3452 = vmatpush1.msra.mxu0 0.0
    %3453 = vmatprep.subr.mxu0 0.0
    %3454 = vmatpush1.msra.mxu0 0.0
    %3455 = vmatprep.subr.mxu0 0.0
    %3456 = vmatpush1.msra.mxu0 0.0
    %3457 = vmatprep.subr.mxu0 0.0
    %3458 = vmatpush1.msra.mxu0 0.0
    %3459 = vmatprep.subr.mxu0 0.0
    %3460 = vmatpush1.msra.mxu0 0.0
    %3461 = vmatprep.subr.mxu0 0.0
    %3462 = vmatpush1.msra.mxu0 0.0
    %3463 = vmatprep.subr.mxu0 0.0
    %3464 = vmatpush1.msra.mxu0 0.0
    %3465 = vmatprep.subr.mxu0 0.0
    %3466 = vmatpush1.msra.mxu0 0.0
    %3467 = vmatprep.subr.mxu0 0.0
    %3468 = vmatpush1.msra.mxu0 0.0
    %3469 = vmatprep.subr.mxu0 0.0
    %3470 = vmatpush1.msra.mxu0 0.0
    %3471 = vmatprep.subr.mxu0 0.0
    %3472 = vmatpush1.msra.mxu0 %v3441
    %3473 = vmatprep.subr.mxu0 0.0
    %3474 = vmatpush1.msra.mxu0 %v3296
    %3475 = vmatprep.subr.mxu0 0.0
    %3476 = vmatpush2.msra.mxu0 0.0
    %3477 = vmatprep.subr.mxu0 0.0
    %3478 = vmatpush2.msra.mxu0 0.0
    %3479 = vmatprep.subr.mxu0 0.0
    %3480 = vmatpush2.msra.mxu0 0.0
    %3481 = vmatprep.subr.mxu0 0.0
    %3482 = vmatpush2.msra.mxu0 0.0
    %3483 = vmatprep.subr.mxu0 0.0
    %3484 = vmatpush2.msra.mxu0 0.0
    %3485 = vmatprep.subr.mxu0 0.0
    %3486 = vmatpush2.msra.mxu0 0.0
    %3487 = vmatprep.subr.mxu0 0.0
    %3488 = vmatpush2.msra.mxu0 0.0
    %3489 = vmatprep.subr.mxu0 0.0
    %3490 = vmatpush2.msra.mxu0 0.0
    %3491 = vmatprep.subr.mxu0 0.0
    %3492 = vmatpush2.msra.mxu0 0.0
    %3493 = vmatprep.subr.mxu0 0.0
    %3494 = vmatpush2.msra.mxu0 0.0
    %3495 = vmatprep.subr.mxu0 0.0
    %3496 = vmatpush2.msra.mxu0 0.0
    %3497 = vmatprep.subr.mxu0 0.0
    %3498 = vmatpush2.msra.mxu0 0.0
    %3499 = vmatprep.subr.mxu0 0.0
    %3500 = vmatpush2.msra.mxu0 0.0
    %3501 = vmatprep.subr.mxu0 0.0
    %3502 = vmatpush2.msra.mxu0 0.0
    %3503 = vmatprep.subr.mxu0 0.0
    %3504 = vmatpush2.msra.mxu0 0.0
    %3505 = vmatprep.subr.mxu0 0.0
    %3506 = vmatpush2.msra.mxu0 0.0
    %3507 = vmatprep.mubr.f32.mxu0 0.0
    %3508 = vmatmul.mubr.f32.gmra.mxu0 %v3333
    %v3509 = vpop.f32.mrf.mxu0
    %v3510 = vadd.f32 %v3330, %v3509
    %v3511 = vpop.f32.mrf.mxu0
    %3512 = vmatprep.mubr.f32.mxu0 0.0
    %3513 = vmatmul.mubr.f32.gmra.mxu0 %v3336
    %v3514 = vpop.f32.mrf.mxu0
    %v3515 = vadd.f32 %v3330, %v3514
    %v3516 = vpop.f32.mrf.mxu0
    %3517 = vmatprep.mubr.f32.mxu0 0.0
    %3518 = vmatmul.mubr.f32.gmra.mxu0 %v3339
    %v3519 = vpop.f32.mrf.mxu0
    %v3520 = vadd.f32 %v3330, %v3519
    %v3521 = vpop.f32.mrf.mxu0
    %3522 = vmatprep.mubr.f32.mxu0 0.0
    %3523 = vmatmul.mubr.f32.gmra.mxu0 %v3342
    %v3524 = vpop.f32.mrf.mxu0
    %v3525 = vadd.f32 %v3330, %v3524
    %v3526 = vpop.f32.mrf.mxu0
    %3527 = vmatprep.mubr.f32.mxu0 0.0
    %3528 = vmatmul.mubr.f32.gmra.mxu0 %v3345
    %v3529 = vpop.f32.mrf.mxu0
    %v3530 = vadd.f32 %v3330, %v3529
    %v3531 = vpop.f32.mrf.mxu0
    %3532 = vmatprep.mubr.f32.mxu0 0.0
    %3533 = vmatmul.mubr.f32.gmra.mxu0 %v3348
    %v3534 = vpop.f32.mrf.mxu0
    %v3535 = vadd.f32 %v3330, %v3534
    %v3536 = vpop.f32.mrf.mxu0
    %3537 = vmatprep.mubr.f32.mxu0 0.0
    %3538 = vmatmul.mubr.f32.gmra.mxu0 %v3351
    %v3539 = vpop.f32.mrf.mxu0
    %v3540 = vadd.f32 %v3330, %v3539
    %v3541 = vpop.f32.mrf.mxu0
    %3542 = vmatprep.mubr.f32.mxu0 0.0
    %3543 = vmatmul.mubr.f32.gmra.mxu0 %v3354
    %v3544 = vpop.f32.mrf.mxu0
    %v3545 = vadd.f32 %v3330, %v3544
    %v3546 = vpop.f32.mrf.mxu0
    %3547 = vmatprep.mubr.f32.mxu0 0.0
    %3548 = vmatmul.mubr.f32.gmra.mxu0 %v3357
    %v3549 = vpop.f32.mrf.mxu0
    %v3550 = vadd.f32 %v3330, %v3549
    %v3551 = vpop.f32.mrf.mxu0
    %3552 = vmatprep.mubr.f32.mxu0 0.0
    %3553 = vmatmul.mubr.f32.gmra.mxu0 %v3360
    %v3554 = vpop.f32.mrf.mxu0
    %v3555 = vadd.f32 %v3330, %v3554
    %v3556 = vpop.f32.mrf.mxu0
    %3557 = vmatprep.mubr.f32.mxu0 0.0
    %3558 = vmatmul.mubr.f32.gmra.mxu0 %v3363
    %v3559 = vpop.f32.mrf.mxu0
    %v3560 = vadd.f32 %v3330, %v3559
    %v3561 = vpop.f32.mrf.mxu0
    %3562 = vmatprep.mubr.f32.mxu0 0.0
    %3563 = vmatmul.mubr.f32.gmra.mxu0 %v3366
    %v3564 = vpop.f32.mrf.mxu0
    %v3565 = vadd.f32 %v3330, %v3564
    %v3566 = vpop.f32.mrf.mxu0
    %3567 = vmatprep.mubr.f32.mxu0 0.0
    %3568 = vmatmul.mubr.f32.gmra.mxu0 %v3369
    %v3569 = vpop.f32.mrf.mxu0
    %v3570 = vadd.f32 %v3330, %v3569
    %v3571 = vpop.f32.mrf.mxu0
    %3572 = vmatprep.mubr.f32.mxu0 0.0
    %3573 = vmatmul.mubr.f32.gmra.mxu0 %v3372
    %v3574 = vpop.f32.mrf.mxu0
    %v3575 = vadd.f32 %v3330, %v3574
    %v3576 = vpop.f32.mrf.mxu0
    %3577 = vmatprep.mubr.f32.mxu0 0.0
    %3578 = vmatmul.mubr.f32.gmra.mxu0 %v3375
    %v3579 = vpop.f32.mrf.mxu0
    %v3580 = vadd.f32 %v3330, %v3579
    %v3581 = vpop.f32.mrf.mxu0
    %3582 = vmatprep.mubr.f32.mxu0 0.0
    %3583 = vmatmul.mubr.f32.gmra.mxu0 %v3378
    %v3584 = vpop.f32.mrf.mxu0
    %v3585 = vadd.f32 %v3330, %v3584
    %v3586 = vpop.f32.mrf.mxu0
    %3587 = vmatprep.mubr.f32.mxu0 0.0
    %3588 = vmatmul.mubr.f32.gmra.mxu0 %v3381
    %v3589 = vpop.f32.mrf.mxu0
    %v3590 = vadd.f32 %v3330, %v3589
    %v3591 = vpop.f32.mrf.mxu0
    %3592 = vmatprep.mubr.f32.mxu0 0.0
    %3593 = vmatmul.mubr.f32.gmra.mxu0 %v3384
    %v3594 = vpop.f32.mrf.mxu0
    %v3595 = vadd.f32 %v3330, %v3594
    %v3596 = vpop.f32.mrf.mxu0
    %3597 = vmatprep.mubr.f32.mxu0 0.0
    %3598 = vmatmul.mubr.f32.gmra.mxu0 %v3387
    %v3599 = vpop.f32.mrf.mxu0
    %v3600 = vadd.f32 %v3330, %v3599
    %v3601 = vpop.f32.mrf.mxu0
    %3602 = vmatprep.mubr.f32.mxu0 0.0
    %3603 = vmatmul.mubr.f32.gmra.mxu0 %v3390
    %v3604 = vpop.f32.mrf.mxu0
    %v3605 = vadd.f32 %v3330, %v3604
    %v3606 = vpop.f32.mrf.mxu0
    %3607 = vmatprep.mubr.f32.mxu0 0.0
    %3608 = vmatmul.mubr.f32.gmra.mxu0 %v3393
    %v3609 = vpop.f32.mrf.mxu0
    %v3610 = vadd.f32 %v3330, %v3609
    %v3611 = vpop.f32.mrf.mxu0
    %3612 = vmatprep.mubr.f32.mxu0 0.0
    %3613 = vmatmul.mubr.f32.gmra.mxu0 %v3396
    %v3614 = vpop.f32.mrf.mxu0
    %v3615 = vadd.f32 %v3330, %v3614
    %v3616 = vpop.f32.mrf.mxu0
    %3617 = vmatprep.mubr.f32.mxu0 0.0
    %3618 = vmatmul.mubr.f32.gmra.mxu0 %v3399
    %v3619 = vpop.f32.mrf.mxu0
    %v3620 = vadd.f32 %v3330, %v3619
    %v3621 = vpop.f32.mrf.mxu0
    %3622 = vmatprep.mubr.f32.mxu0 0.0
    %3623 = vmatmul.mubr.f32.gmra.mxu0 %v3402
    %v3624 = vpop.f32.mrf.mxu0
    %v3625 = vadd.f32 %v3330, %v3624
    %v3626 = vpop.f32.mrf.mxu0
    %3627 = vmatprep.mubr.f32.mxu0 0.0
    %3628 = vmatmul.mubr.f32.gmra.mxu0 %v3405
    %v3629 = vpop.f32.mrf.mxu0
    %v3630 = vadd.f32 %v3330, %v3629
    %v3631 = vpop.f32.mrf.mxu0
    %3632 = vmatprep.mubr.f32.mxu0 0.0
    %3633 = vmatmul.mubr.f32.gmra.mxu0 %v3408
    %v3634 = vpop.f32.mrf.mxu0
    %v3635 = vadd.f32 %v3330, %v3634
    %v3636 = vpop.f32.mrf.mxu0
    %3637 = vmatprep.mubr.f32.mxu0 0.0
    %3638 = vmatmul.mubr.f32.gmra.mxu0 %v3411
    %v3639 = vpop.f32.mrf.mxu0
    %v3640 = vadd.f32 %v3330, %v3639
    %v3641 = vpop.f32.mrf.mxu0
    %3642 = vmatprep.mubr.f32.mxu0 0.0
    %3643 = vmatmul.mubr.f32.gmra.mxu0 %v3414
    %v3644 = vpop.f32.mrf.mxu0
    %v3645 = vadd.f32 %v3330, %v3644
    %v3646 = vpop.f32.mrf.mxu0
    %3647 = vmatprep.mubr.f32.mxu0 0.0
    %3648 = vmatmul.mubr.f32.gmra.mxu0 %v3417
    %v3649 = vpop.f32.mrf.mxu0
    %v3650 = vadd.f32 %v3330, %v3649
    %v3651 = vpop.f32.mrf.mxu0
    %3652 = vmatprep.mubr.f32.mxu0 0.0
    %3653 = vmatmul.mubr.f32.gmra.mxu0 %v3420
    %v3654 = vpop.f32.mrf.mxu0
    %v3655 = vadd.f32 %v3330, %v3654
    %v3656 = vpop.f32.mrf.mxu0
    %3657 = vmatprep.mubr.f32.mxu0 0.0
    %3658 = vmatmul.mubr.f32.gmra.mxu0 %v3423
    %v3659 = vpop.f32.mrf.mxu0
    %v3660 = vadd.f32 %v3330, %v3659
    %v3661 = vpop.f32.mrf.mxu0
    %3662 = vmatprep.mubr.f32.mxu0 0.0
    %3663 = vmatmul.mubr.f32.gmra.mxu0 %v3426
    %v3664 = vpop.f32.mrf.mxu0
    %v3665 = vadd.f32 %v3330, %v3664
    %v3666 = vpop.f32.mrf.mxu0
    %3667 = vmatprep.mubr.f32.mxu0 0.0
    %3668 = vmatmul.mubr.f32.gmra.mxu0 %v3429
    %v3669 = vpop.f32.mrf.mxu0
    %v3670 = vadd.f32 %v3330, %v3669
    %v3671 = vpop.f32.mrf.mxu0
    %3672 = vmatprep.mubr.f32.mxu0 0.0
    %3673 = vmatmul.mubr.f32.gmra.mxu0 %v3432
    %v3674 = vpop.f32.mrf.mxu0
    %v3675 = vadd.f32 %v3330, %v3674
    %v3676 = vpop.f32.mrf.mxu0
    %3677 = vmatprep.mubr.f32.mxu0 0.0
    %3678 = vmatmul.mubr.f32.gmra.mxu0 %v3435
    %v3679 = vpop.f32.mrf.mxu0
    %v3680 = vadd.f32 %v3330, %v3679
    %v3681 = vpop.f32.mrf.mxu0
    %3682 = vmatprep.mubr.f32.mxu0 0.0
    %3683 = vmatmul.mubr.f32.gmra.mxu0 %v3438
    %v3684 = vpop.f32.mrf.mxu0
    %v3685 = vadd.f32 %v3330, %v3684
    %v3686 = vpop.f32.mrf.mxu0
    %3687 = vdwg.mxu0
    %v3688 = vmax.f32 %v3510, %v3555
    %v3689 = vmax.f32 %v3515, %v3560
    %v3690 = vmax.f32 %v3520, %v3565
    %v3691 = vmax.f32 %v3525, %v3570
    %v3692 = vmax.f32 %v3530, %v3575
    %v3693 = vmax.f32 %v3535, %v3580
    %v3694 = vmax.f32 %v3540, %v3585
    %v3695 = vmax.f32 %v3545, %v3590
    %v3696 = vmax.f32 %v3550, %v3595
    %v3697 = vmax.f32 %v3600, %v3645
    %v3698 = vmax.f32 %v3605, %v3650
    %v3699 = vmax.f32 %v3610, %v3655
    %v3700 = vmax.f32 %v3615, %v3660
    %v3701 = vmax.f32 %v3620, %v3665
    %v3702 = vmax.f32 %v3625, %v3670
    %v3703 = vmax.f32 %v3630, %v3675
    %v3704 = vmax.f32 %v3635, %v3680
    %v3705 = vmax.f32 %v3640, %v3685
    %v3706 = vmax.f32 %v3688, %v3697
    %v3707 = vmax.f32 %v3689, %v3698
    %v3708 = vmax.f32 %v3690, %v3699
    %v3709 = vmax.f32 %v3691, %v3700
    %v3710 = vmax.f32 %v3692, %v3701
    %v3711 = vmax.f32 %v3693, %v3702
    %v3712 = vmax.f32 %v3694, %v3703
    %v3713 = vmax.f32 %v3695, %v3704
    %v3714 = vmax.f32 %v3696, %v3705
    %vm3715 = vcmp.ge.f32.partialorder %v3706, 0.0
    %vm3716 = vcmp.ge.f32.partialorder %v3707, 0.0
    %vm3717 = vcmp.ge.f32.partialorder %v3708, 0.0
    %vm3718 = vcmp.ge.f32.partialorder %v3709, 0.0
    %vm3719 = vcmp.ge.f32.partialorder %v3710, 0.0
    %vm3720 = vcmp.ge.f32.partialorder %v3711, 0.0
    %vm3721 = vcmp.ge.f32.partialorder %v3712, 0.0
    %vm3722 = vcmp.ge.f32.partialorder %v3713, 0.0
    %vm3723 = vcmp.ge.f32.partialorder %v3714, 0.0
    %v3724 = vmul.f32 %v3706, 0.01
    %v3725 = vmul.f32 %v3707, 0.01
    %v3726 = vmul.f32 %v3708, 0.01
    %v3727 = vmul.f32 %v3709, 0.01
    %v3728 = vmul.f32 %v3710, 0.01
    %v3729 = vmul.f32 %v3711, 0.01
    %v3730 = vmul.f32 %v3712, 0.01
    %v3731 = vmul.f32 %v3713, 0.01
    %v3732 = vmul.f32 %v3714, 0.01
    %v3733 = vsel %vm3715, %v3706, %v3724
    %v3734 = vsel %vm3716, %v3707, %v3725
    %v3735 = vsel %vm3717, %v3708, %v3726
    %v3736 = vsel %vm3718, %v3709, %v3727
    %v3737 = vsel %vm3719, %v3710, %v3728
    %v3738 = vsel %vm3720, %v3711, %v3729
    %v3739 = vsel %vm3721, %v3712, %v3730
    %v3740 = vsel %vm3722, %v3713, %v3731
    %v3741 = vsel %vm3723, %v3714, %v3732
    %3742 = vmatprep.subr.mxu0 0.0
    %3743 = vmatpush1.msra.mxu0 0.0
    %3744 = vmatprep.subr.mxu0 0.0
    %3745 = vmatpush1.msra.mxu0 0.0
    %3746 = vmatprep.subr.mxu0 0.0
    %3747 = vmatpush1.msra.mxu0 0.0
    %3748 = vmatprep.subr.mxu0 0.0
    %3749 = vmatpush1.msra.mxu0 0.0
    %3750 = vmatprep.subr.mxu0 0.0
    %3751 = vmatpush1.msra.mxu0 0.0
    %3752 = vmatprep.subr.mxu0 0.0
    %3753 = vmatpush1.msra.mxu0 0.0
    %3754 = vmatprep.subr.mxu0 0.0
    %3755 = vmatpush1.msra.mxu0 0.0
    %3756 = vmatprep.subr.mxu0 0.0
    %3757 = vmatpush1.msra.mxu0 %v3741
    %3758 = vmatprep.subr.mxu0 0.0
    %3759 = vmatpush1.msra.mxu0 %v3740
    %3760 = vmatprep.subr.mxu0 0.0
    %3761 = vmatpush1.msra.mxu0 %v3739
    %3762 = vmatprep.subr.mxu0 0.0
    %3763 = vmatpush1.msra.mxu0 %v3738
    %3764 = vmatprep.subr.mxu0 0.0
    %3765 = vmatpush1.msra.mxu0 %v3737
    %3766 = vmatprep.subr.mxu0 0.0
    %3767 = vmatpush1.msra.mxu0 %v3736
    %3768 = vmatprep.subr.mxu0 0.0
    %3769 = vmatpush1.msra.mxu0 %v3735
    %3770 = vmatprep.subr.mxu0 0.0
    %3771 = vmatpush1.msra.mxu0 %v3734
    %3772 = vmatprep.subr.mxu0 0.0
    %3773 = vmatpush1.msra.mxu0 %v3733
    %3774 = vmatprep.subr.mxu0 0.0
    %3775 = vmatpush2.msra.mxu0 0.0
    %3776 = vmatprep.subr.mxu0 0.0
    %3777 = vmatpush2.msra.mxu0 0.0
    %3778 = vmatprep.subr.mxu0 0.0
    %3779 = vmatpush2.msra.mxu0 0.0
    %3780 = vmatprep.subr.mxu0 0.0
    %3781 = vmatpush2.msra.mxu0 0.0
    %3782 = vmatprep.subr.mxu0 0.0
    %3783 = vmatpush2.msra.mxu0 0.0
    %3784 = vmatprep.subr.mxu0 0.0
    %3785 = vmatpush2.msra.mxu0 0.0
    %3786 = vmatprep.subr.mxu0 0.0
    %3787 = vmatpush2.msra.mxu0 0.0
    %3788 = vmatprep.subr.mxu0 0.0
    %3789 = vmatpush2.msra.mxu0 0.0
    %3790 = vmatprep.subr.mxu0 0.0
    %3791 = vmatpush2.msra.mxu0 0.0
    %3792 = vmatprep.subr.mxu0 0.0
    %3793 = vmatpush2.msra.mxu0 0.0
    %3794 = vmatprep.subr.mxu0 0.0
    %3795 = vmatpush2.msra.mxu0 0.0
    %3796 = vmatprep.subr.mxu0 0.0
    %3797 = vmatpush2.msra.mxu0 0.0
    %3798 = vmatprep.subr.mxu0 0.0
    %3799 = vmatpush2.msra.mxu0 0.0
    %3800 = vmatprep.subr.mxu0 0.0
    %3801 = vmatpush2.msra.mxu0 0.0
    %3802 = vmatprep.subr.mxu0 0.0
    %3803 = vmatpush2.msra.mxu0 0.0
    %3804 = vmatprep.subr.mxu0 0.0
    %3805 = vmatpush2.msra.mxu0 0.0
    %3806 = vmatprep.mubr.f32.mxu0 0.0
    %3807 = vmatmul.mubr.f32.gmra.mxu0 %v631
    %v3808 = vpop.f32.mrf.mxu0
    %v3809 = vadd.f32 0.0, %v3808
    %v3810 = vpop.f32.mrf.mxu0
    %3811 = vmatprep.mubr.f32.mxu0 0.0
    %3812 = vmatmul.mubr.f32.gmra.mxu0 %v634
    %v3813 = vpop.f32.mrf.mxu0
    %v3814 = vadd.f32 0.0, %v3813
    %v3815 = vpop.f32.mrf.mxu0
    %3816 = vmatprep.mubr.f32.mxu0 0.0
    %3817 = vmatmul.mubr.f32.gmra.mxu0 %v637
    %v3818 = vpop.f32.mrf.mxu0
    %v3819 = vadd.f32 0.0, %v3818
    %v3820 = vpop.f32.mrf.mxu0
    %3821 = vmatprep.mubr.f32.mxu0 0.0
    %3822 = vmatmul.mubr.f32.gmra.mxu0 %v640
    %v3823 = vpop.f32.mrf.mxu0
    %v3824 = vadd.f32 0.0, %v3823
    %v3825 = vpop.f32.mrf.mxu0
    %3826 = vdwg.mxu0
    %v3827 = vld [vmem:[%s17] sm:$0xff]
    %v3828 = vld [vmem:[%s17 + $0x8] sm:$0xff]
    %3829 = vmatprep.subr.mxu0 0.0
    %3830 = vmatpush1.msra.mxu0 0.0
    %3831 = vmatprep.subr.mxu0 0.0
    %3832 = vmatpush1.msra.mxu0 0.0
    %3833 = vmatprep.subr.mxu0 0.0
    %3834 = vmatpush1.msra.mxu0 0.0
    %3835 = vmatprep.subr.mxu0 0.0
    %3836 = vmatpush1.msra.mxu0 0.0
    %3837 = vmatprep.subr.mxu0 0.0
    %3838 = vmatpush1.msra.mxu0 0.0
    %3839 = vmatprep.subr.mxu0 0.0
    %3840 = vmatpush1.msra.mxu0 0.0
    %3841 = vmatprep.subr.mxu0 0.0
    %3842 = vmatpush1.msra.mxu0 0.0
    %3843 = vmatprep.subr.mxu0 0.0
    %3844 = vmatpush1.msra.mxu0 %v3741
    %3845 = vmatprep.subr.mxu0 0.0
    %3846 = vmatpush1.msra.mxu0 %v3740
    %3847 = vmatprep.subr.mxu0 0.0
    %3848 = vmatpush1.msra.mxu0 %v3739
    %3849 = vmatprep.subr.mxu0 0.0
    %3850 = vmatpush1.msra.mxu0 %v3738
    %3851 = vmatprep.subr.mxu0 0.0
    %3852 = vmatpush1.msra.mxu0 %v3737
    %3853 = vmatprep.subr.mxu0 0.0
    %3854 = vmatpush1.msra.mxu0 %v3736
    %3855 = vmatprep.subr.mxu0 0.0
    %3856 = vmatpush1.msra.mxu0 %v3735
    %3857 = vmatprep.subr.mxu0 0.0
    %3858 = vmatpush1.msra.mxu0 %v3734
    %3859 = vmatprep.subr.mxu0 0.0
    %3860 = vmatpush1.msra.mxu0 %v3733
    %3861 = vmatprep.subr.mxu0 0.0
    %3862 = vmatpush2.msra.mxu0 0.0
    %3863 = vmatprep.subr.mxu0 0.0
    %3864 = vmatpush2.msra.mxu0 0.0
    %3865 = vmatprep.subr.mxu0 0.0
    %3866 = vmatpush2.msra.mxu0 0.0
    %3867 = vmatprep.subr.mxu0 0.0
    %3868 = vmatpush2.msra.mxu0 0.0
    %3869 = vmatprep.subr.mxu0 0.0
    %3870 = vmatpush2.msra.mxu0 0.0
    %3871 = vmatprep.subr.mxu0 0.0
    %3872 = vmatpush2.msra.mxu0 0.0
    %3873 = vmatprep.subr.mxu0 0.0
    %3874 = vmatpush2.msra.mxu0 0.0
    %3875 = vmatprep.subr.mxu0 0.0
    %3876 = vmatpush2.msra.mxu0 0.0
    %3877 = vmatprep.subr.mxu0 0.0
    %3878 = vmatpush2.msra.mxu0 0.0
    %3879 = vmatprep.subr.mxu0 0.0
    %3880 = vmatpush2.msra.mxu0 0.0
    %3881 = vmatprep.subr.mxu0 0.0
    %3882 = vmatpush2.msra.mxu0 0.0
    %3883 = vmatprep.subr.mxu0 0.0
    %3884 = vmatpush2.msra.mxu0 0.0
    %3885 = vmatprep.subr.mxu0 0.0
    %3886 = vmatpush2.msra.mxu0 0.0
    %3887 = vmatprep.subr.mxu0 0.0
    %3888 = vmatpush2.msra.mxu0 0.0
    %3889 = vmatprep.subr.mxu0 0.0
    %3890 = vmatpush2.msra.mxu0 0.0
    %3891 = vmatprep.subr.mxu0 0.0
    %3892 = vmatpush2.msra.mxu0 0.0
    %3893 = vmatprep.mubr.f32.mxu0 0.0
    %3894 = vmatmul.mubr.f32.gmra.mxu0 %v735
    %v3895 = vpop.f32.mrf.mxu0
    %v3896 = vadd.f32 0.0, %v3895
    %v3897 = vpop.f32.mrf.mxu0
    %3898 = vmatprep.mubr.f32.mxu0 0.0
    %3899 = vmatmul.mubr.f32.gmra.mxu0 %v738
    %v3900 = vpop.f32.mrf.mxu0
    %v3901 = vadd.f32 0.0, %v3900
    %v3902 = vpop.f32.mrf.mxu0
    %3903 = vmatprep.mubr.f32.mxu0 0.0
    %3904 = vmatmul.mubr.f32.gmra.mxu0 %v741
    %v3905 = vpop.f32.mrf.mxu0
    %v3906 = vadd.f32 0.0, %v3905
    %v3907 = vpop.f32.mrf.mxu0
    %3908 = vmatprep.mubr.f32.mxu0 0.0
    %3909 = vmatmul.mubr.f32.gmra.mxu0 %v744
    %v3910 = vpop.f32.mrf.mxu0
    %v3911 = vadd.f32 0.0, %v3910
    %v3912 = vpop.f32.mrf.mxu0
    %3913 = vdwg.mxu0
    %s3914 = scalar_lea.vmem %s17, 16
    %v3915 = vld [vmem:[%s3914] sm:$0xff]
    %v3916 = vld [vmem:[%s3914 + $0x8] sm:$0xff]
    %v3918 = vsel %vm834, %v3896, 0
    %v3921 = vsel %vm834, %v3901, 0
    %v3924 = vsel %vm834, %v3906, 0
    %v3927 = vsel %vm834, %v3911, 0
    %3929 = vmatprep.subr.mxu0 0.0
    %3930 = vmatpush1.msra.mxu0 0.0
    %3931 = vmatprep.subr.mxu0 0.0
    %3932 = vmatpush1.msra.mxu0 0.0
    %3933 = vmatprep.subr.mxu0 0.0
    %3934 = vmatpush1.msra.mxu0 0.0
    %3935 = vmatprep.subr.mxu0 0.0
    %3936 = vmatpush1.msra.mxu0 0.0
    %3937 = vmatprep.subr.mxu0 0.0
    %3938 = vmatpush1.msra.mxu0 0.0
    %3939 = vmatprep.subr.mxu0 0.0
    %3940 = vmatpush1.msra.mxu0 0.0
    %3941 = vmatprep.subr.mxu0 0.0
    %3942 = vmatpush1.msra.mxu0 0.0
    %3943 = vmatprep.subr.mxu0 0.0
    %3944 = vmatpush1.msra.mxu0 0.0
    %3945 = vmatprep.subr.mxu0 0.0
    %3946 = vmatpush1.msra.mxu0 0.0
    %3947 = vmatprep.subr.mxu0 0.0
    %3948 = vmatpush1.msra.mxu0 0.0
    %3949 = vmatprep.subr.mxu0 0.0
    %3950 = vmatpush1.msra.mxu0 0.0
    %3951 = vmatprep.subr.mxu0 0.0
    %3952 = vmatpush1.msra.mxu0 0.0
    %3953 = vmatprep.subr.mxu0 0.0
    %3954 = vmatpush1.msra.mxu0 0.0
    %3955 = vmatprep.subr.mxu0 0.0
    %3956 = vmatpush1.msra.mxu0 0.0
    %3957 = vmatprep.subr.mxu0 0.0
    %3958 = vmatpush1.msra.mxu0 %v3916
    %3959 = vmatprep.subr.mxu0 0.0
    %3960 = vmatpush1.msra.mxu0 %v3915
    %3961 = vmatprep.subr.mxu0 0.0
    %3962 = vmatpush2.msra.mxu0 0.0
    %3963 = vmatprep.subr.mxu0 0.0
    %3964 = vmatpush2.msra.mxu0 0.0
    %3965 = vmatprep.subr.mxu0 0.0
    %3966 = vmatpush2.msra.mxu0 0.0
    %3967 = vmatprep.subr.mxu0 0.0
    %3968 = vmatpush2.msra.mxu0 0.0
    %3969 = vmatprep.subr.mxu0 0.0
    %3970 = vmatpush2.msra.mxu0 0.0
    %3971 = vmatprep.subr.mxu0 0.0
    %3972 = vmatpush2.msra.mxu0 0.0
    %3973 = vmatprep.subr.mxu0 0.0
    %3974 = vmatpush2.msra.mxu0 0.0
    %3975 = vmatprep.subr.mxu0 0.0
    %3976 = vmatpush2.msra.mxu0 0.0
    %3977 = vmatprep.subr.mxu0 0.0
    %3978 = vmatpush2.msra.mxu0 0.0
    %3979 = vmatprep.subr.mxu0 0.0
    %3980 = vmatpush2.msra.mxu0 0.0
    %3981 = vmatprep.subr.mxu0 0.0
    %3982 = vmatpush2.msra.mxu0 0.0
    %3983 = vmatprep.subr.mxu0 0.0
    %3984 = vmatpush2.msra.mxu0 0.0
    %3985 = vmatprep.subr.mxu0 0.0
    %3986 = vmatpush2.msra.mxu0 0.0
    %3987 = vmatprep.subr.mxu0 0.0
    %3988 = vmatpush2.msra.mxu0 0.0
    %3989 = vmatprep.subr.mxu0 0.0
    %3990 = vmatpush2.msra.mxu0 0.0
    %3991 = vmatprep.subr.mxu0 0.0
    %3992 = vmatpush2.msra.mxu0 0.0
    %3993 = vmatprep.mubr.f32.mxu0 0.0
    %3994 = vmatmul.mubr.f32.gmra.mxu0 %v3918
    %v3995 = vpop.f32.mrf.mxu0
    %v3996 = vadd.f32 0.0, %v3995
    %v3997 = vpop.f32.mrf.mxu0
    %3998 = vmatprep.mubr.f32.mxu0 0.0
    %3999 = vmatmul.mubr.f32.gmra.mxu0 %v3921
    %v4000 = vpop.f32.mrf.mxu0
    %v4001 = vadd.f32 0.0, %v4000
    %v4002 = vpop.f32.mrf.mxu0
    %4003 = vmatprep.mubr.f32.mxu0 0.0
    %4004 = vmatmul.mubr.f32.gmra.mxu0 %v3924
    %v4005 = vpop.f32.mrf.mxu0
    %v4006 = vadd.f32 0.0, %v4005
    %v4007 = vpop.f32.mrf.mxu0
    %4008 = vmatprep.mubr.f32.mxu0 0.0
    %4009 = vmatmul.mubr.f32.gmra.mxu0 %v3927
    %v4010 = vpop.f32.mrf.mxu0
    %v4011 = vadd.f32 0.0, %v4010
    %v4012 = vpop.f32.mrf.mxu0
    %4013 = vdwg.mxu0
    %v4015 = vsel %vm834, %v3809, 0
    %v4018 = vsel %vm834, %v3814, 0
    %v4021 = vsel %vm834, %v3819, 0
    %v4024 = vsel %vm834, %v3824, 0
    %4026 = vmatprep.subr.mxu0 0.0
    %4027 = vmatpush1.msra.mxu0 0.0
    %4028 = vmatprep.subr.mxu0 0.0
    %4029 = vmatpush1.msra.mxu0 0.0
    %4030 = vmatprep.subr.mxu0 0.0
    %4031 = vmatpush1.msra.mxu0 0.0
    %4032 = vmatprep.subr.mxu0 0.0
    %4033 = vmatpush1.msra.mxu0 0.0
    %4034 = vmatprep.subr.mxu0 0.0
    %4035 = vmatpush1.msra.mxu0 0.0
    %4036 = vmatprep.subr.mxu0 0.0
    %4037 = vmatpush1.msra.mxu0 0.0
    %4038 = vmatprep.subr.mxu0 0.0
    %4039 = vmatpush1.msra.mxu0 0.0
    %4040 = vmatprep.subr.mxu0 0.0
    %4041 = vmatpush1.msra.mxu0 0.0
    %4042 = vmatprep.subr.mxu0 0.0
    %4043 = vmatpush1.msra.mxu0 0.0
    %4044 = vmatprep.subr.mxu0 0.0
    %4045 = vmatpush1.msra.mxu0 0.0
    %4046 = vmatprep.subr.mxu0 0.0
    %4047 = vmatpush1.msra.mxu0 0.0
    %4048 = vmatprep.subr.mxu0 0.0
    %4049 = vmatpush1.msra.mxu0 0.0
    %4050 = vmatprep.subr.mxu0 0.0
    %4051 = vmatpush1.msra.mxu0 0.0
    %4052 = vmatprep.subr.mxu0 0.0
    %4053 = vmatpush1.msra.mxu0 0.0
    %4054 = vmatprep.subr.mxu0 0.0
    %4055 = vmatpush1.msra.mxu0 %v3828
    %4056 = vmatprep.subr.mxu0 0.0
    %4057 = vmatpush1.msra.mxu0 %v3827
    %4058 = vmatprep.subr.mxu0 0.0
    %4059 = vmatpush2.msra.mxu0 0.0
    %4060 = vmatprep.subr.mxu0 0.0
    %4061 = vmatpush2.msra.mxu0 0.0
    %4062 = vmatprep.subr.mxu0 0.0
    %4063 = vmatpush2.msra.mxu0 0.0
    %4064 = vmatprep.subr.mxu0 0.0
    %4065 = vmatpush2.msra.mxu0 0.0
    %4066 = vmatprep.subr.mxu0 0.0
    %4067 = vmatpush2.msra.mxu0 0.0
    %4068 = vmatprep.subr.mxu0 0.0
    %4069 = vmatpush2.msra.mxu0 0.0
    %4070 = vmatprep.subr.mxu0 0.0
    %4071 = vmatpush2.msra.mxu0 0.0
    %4072 = vmatprep.subr.mxu0 0.0
    %4073 = vmatpush2.msra.mxu0 0.0
    %4074 = vmatprep.subr.mxu0 0.0
    %4075 = vmatpush2.msra.mxu0 0.0
    %4076 = vmatprep.subr.mxu0 0.0
    %4077 = vmatpush2.msra.mxu0 0.0
    %4078 = vmatprep.subr.mxu0 0.0
    %4079 = vmatpush2.msra.mxu0 0.0
    %4080 = vmatprep.subr.mxu0 0.0
    %4081 = vmatpush2.msra.mxu0 0.0
    %4082 = vmatprep.subr.mxu0 0.0
    %4083 = vmatpush2.msra.mxu0 0.0
    %4084 = vmatprep.subr.mxu0 0.0
    %4085 = vmatpush2.msra.mxu0 0.0
    %4086 = vmatprep.subr.mxu0 0.0
    %4087 = vmatpush2.msra.mxu0 0.0
    %4088 = vmatprep.subr.mxu0 0.0
    %4089 = vmatpush2.msra.mxu0 0.0
    %4090 = vmatprep.mubr.f32.mxu0 0.0
    %4091 = vmatmul.mubr.f32.gmra.mxu0 %v4015
    %v4092 = vpop.f32.mrf.mxu0
    %v4093 = vadd.f32 %v3996, %v4092
    %v4094 = vpop.f32.mrf.mxu0
    %4095 = vmatprep.mubr.f32.mxu0 0.0
    %4096 = vmatmul.mubr.f32.gmra.mxu0 %v4018
    %v4097 = vpop.f32.mrf.mxu0
    %v4098 = vadd.f32 %v4001, %v4097
    %v4099 = vpop.f32.mrf.mxu0
    %4100 = vmatprep.mubr.f32.mxu0 0.0
    %4101 = vmatmul.mubr.f32.gmra.mxu0 %v4021
    %v4102 = vpop.f32.mrf.mxu0
    %v4103 = vadd.f32 %v4006, %v4102
    %v4104 = vpop.f32.mrf.mxu0
    %4105 = vmatprep.mubr.f32.mxu0 0.0
    %4106 = vmatmul.mubr.f32.gmra.mxu0 %v4024
    %v4107 = vpop.f32.mrf.mxu0
    %v4108 = vadd.f32 %v4011, %v4107
    %v4109 = vpop.f32.mrf.mxu0
    %4110 = vdwg.mxu0
    %4111 = vmatprep.subr.mxu0 0.0
    %4112 = vmatpush1.msra.mxu0 0.0
    %4113 = vmatprep.subr.mxu0 0.0
    %4114 = vmatpush1.msra.mxu0 0.0
    %4115 = vmatprep.subr.mxu0 0.0
    %4116 = vmatpush1.msra.mxu0 0.0
    %4117 = vmatprep.subr.mxu0 0.0
    %4118 = vmatpush1.msra.mxu0 0.0
    %4119 = vmatprep.subr.mxu0 0.0
    %4120 = vmatpush1.msra.mxu0 0.0
    %4121 = vmatprep.subr.mxu0 0.0
    %4122 = vmatpush1.msra.mxu0 0.0
    %4123 = vmatprep.subr.mxu0 0.0
    %4124 = vmatpush1.msra.mxu0 0.0
    %4125 = vmatprep.subr.mxu0 0.0
    %4126 = vmatpush1.msra.mxu0 %v3741
    %4127 = vmatprep.subr.mxu0 0.0
    %4128 = vmatpush1.msra.mxu0 %v3740
    %4129 = vmatprep.subr.mxu0 0.0
    %4130 = vmatpush1.msra.mxu0 %v3739
    %4131 = vmatprep.subr.mxu0 0.0
    %4132 = vmatpush1.msra.mxu0 %v3738
    %4133 = vmatprep.subr.mxu0 0.0
    %4134 = vmatpush1.msra.mxu0 %v3737
    %4135 = vmatprep.subr.mxu0 0.0
    %4136 = vmatpush1.msra.mxu0 %v3736
    %4137 = vmatprep.subr.mxu0 0.0
    %4138 = vmatpush1.msra.mxu0 %v3735
    %4139 = vmatprep.subr.mxu0 0.0
    %4140 = vmatpush1.msra.mxu0 %v3734
    %4141 = vmatprep.subr.mxu0 0.0
    %4142 = vmatpush1.msra.mxu0 %v3733
    %4143 = vmatprep.subr.mxu0 0.0
    %4144 = vmatpush2.msra.mxu0 0.0
    %4145 = vmatprep.subr.mxu0 0.0
    %4146 = vmatpush2.msra.mxu0 0.0
    %4147 = vmatprep.subr.mxu0 0.0
    %4148 = vmatpush2.msra.mxu0 0.0
    %4149 = vmatprep.subr.mxu0 0.0
    %4150 = vmatpush2.msra.mxu0 0.0
    %4151 = vmatprep.subr.mxu0 0.0
    %4152 = vmatpush2.msra.mxu0 0.0
    %4153 = vmatprep.subr.mxu0 0.0
    %4154 = vmatpush2.msra.mxu0 0.0
    %4155 = vmatprep.subr.mxu0 0.0
    %4156 = vmatpush2.msra.mxu0 0.0
    %4157 = vmatprep.subr.mxu0 0.0
    %4158 = vmatpush2.msra.mxu0 0.0
    %4159 = vmatprep.subr.mxu0 0.0
    %4160 = vmatpush2.msra.mxu0 0.0
    %4161 = vmatprep.subr.mxu0 0.0
    %4162 = vmatpush2.msra.mxu0 0.0
    %4163 = vmatprep.subr.mxu0 0.0
    %4164 = vmatpush2.msra.mxu0 0.0
    %4165 = vmatprep.subr.mxu0 0.0
    %4166 = vmatpush2.msra.mxu0 0.0
    %4167 = vmatprep.subr.mxu0 0.0
    %4168 = vmatpush2.msra.mxu0 0.0
    %4169 = vmatprep.subr.mxu0 0.0
    %4170 = vmatpush2.msra.mxu0 0.0
    %4171 = vmatprep.subr.mxu0 0.0
    %4172 = vmatpush2.msra.mxu0 0.0
    %4173 = vmatprep.subr.mxu0 0.0
    %4174 = vmatpush2.msra.mxu0 0.0
    %4175 = vmatprep.mubr.f32.mxu0 0.0
    %4176 = vmatmul.mubr.f32.gmra.mxu0 %v1035
    %v4177 = vpop.f32.mrf.mxu0
    %v4178 = vadd.f32 0.0, %v4177
    %v4179 = vpop.f32.mrf.mxu0
    %4180 = vmatprep.mubr.f32.mxu0 0.0
    %4181 = vmatmul.mubr.f32.gmra.mxu0 %v1038
    %v4182 = vpop.f32.mrf.mxu0
    %v4183 = vadd.f32 0.0, %v4182
    %v4184 = vpop.f32.mrf.mxu0
    %4185 = vmatprep.mubr.f32.mxu0 0.0
    %4186 = vmatmul.mubr.f32.gmra.mxu0 %v1041
    %v4187 = vpop.f32.mrf.mxu0
    %v4188 = vadd.f32 0.0, %v4187
    %v4189 = vpop.f32.mrf.mxu0
    %4190 = vmatprep.mubr.f32.mxu0 0.0
    %4191 = vmatmul.mubr.f32.gmra.mxu0 %v1044
    %v4192 = vpop.f32.mrf.mxu0
    %v4193 = vadd.f32 0.0, %v4192
    %v4194 = vpop.f32.mrf.mxu0
    %4195 = vdwg.mxu0
    %s4196 = scalar_lea.vmem %s17, 32
    %v4197 = vld [vmem:[%s4196] sm:$0xff]
    %v4198 = vld [vmem:[%s4196 + $0x8] sm:$0xff]
    %v4200 = vsel %vm834, %v4178, 0
    %v4203 = vsel %vm834, %v4183, 0
    %v4206 = vsel %vm834, %v4188, 0
    %v4209 = vsel %vm834, %v4193, 0
    %4211 = vmatprep.subr.mxu0 0.0
    %4212 = vmatpush1.msra.mxu0 0.0
    %4213 = vmatprep.subr.mxu0 0.0
    %4214 = vmatpush1.msra.mxu0 0.0
    %4215 = vmatprep.subr.mxu0 0.0
    %4216 = vmatpush1.msra.mxu0 0.0
    %4217 = vmatprep.subr.mxu0 0.0
    %4218 = vmatpush1.msra.mxu0 0.0
    %4219 = vmatprep.subr.mxu0 0.0
    %4220 = vmatpush1.msra.mxu0 0.0
    %4221 = vmatprep.subr.mxu0 0.0
    %4222 = vmatpush1.msra.mxu0 0.0
    %4223 = vmatprep.subr.mxu0 0.0
    %4224 = vmatpush1.msra.mxu0 0.0
    %4225 = vmatprep.subr.mxu0 0.0
    %4226 = vmatpush1.msra.mxu0 0.0
    %4227 = vmatprep.subr.mxu0 0.0
    %4228 = vmatpush1.msra.mxu0 0.0
    %4229 = vmatprep.subr.mxu0 0.0
    %4230 = vmatpush1.msra.mxu0 0.0
    %4231 = vmatprep.subr.mxu0 0.0
    %4232 = vmatpush1.msra.mxu0 0.0
    %4233 = vmatprep.subr.mxu0 0.0
    %4234 = vmatpush1.msra.mxu0 0.0
    %4235 = vmatprep.subr.mxu0 0.0
    %4236 = vmatpush1.msra.mxu0 0.0
    %4237 = vmatprep.subr.mxu0 0.0
    %4238 = vmatpush1.msra.mxu0 0.0
    %4239 = vmatprep.subr.mxu0 0.0
    %4240 = vmatpush1.msra.mxu0 %v4198
    %4241 = vmatprep.subr.mxu0 0.0
    %4242 = vmatpush1.msra.mxu0 %v4197
    %4243 = vmatprep.subr.mxu0 0.0
    %4244 = vmatpush2.msra.mxu0 0.0
    %4245 = vmatprep.subr.mxu0 0.0
    %4246 = vmatpush2.msra.mxu0 0.0
    %4247 = vmatprep.subr.mxu0 0.0
    %4248 = vmatpush2.msra.mxu0 0.0
    %4249 = vmatprep.subr.mxu0 0.0
    %4250 = vmatpush2.msra.mxu0 0.0
    %4251 = vmatprep.subr.mxu0 0.0
    %4252 = vmatpush2.msra.mxu0 0.0
    %4253 = vmatprep.subr.mxu0 0.0
    %4254 = vmatpush2.msra.mxu0 0.0
    %4255 = vmatprep.subr.mxu0 0.0
    %4256 = vmatpush2.msra.mxu0 0.0
    %4257 = vmatprep.subr.mxu0 0.0
    %4258 = vmatpush2.msra.mxu0 0.0
    %4259 = vmatprep.subr.mxu0 0.0
    %4260 = vmatpush2.msra.mxu0 0.0
    %4261 = vmatprep.subr.mxu0 0.0
    %4262 = vmatpush2.msra.mxu0 0.0
    %4263 = vmatprep.subr.mxu0 0.0
    %4264 = vmatpush2.msra.mxu0 0.0
    %4265 = vmatprep.subr.mxu0 0.0
    %4266 = vmatpush2.msra.mxu0 0.0
    %4267 = vmatprep.subr.mxu0 0.0
    %4268 = vmatpush2.msra.mxu0 0.0
    %4269 = vmatprep.subr.mxu0 0.0
    %4270 = vmatpush2.msra.mxu0 0.0
    %4271 = vmatprep.subr.mxu0 0.0
    %4272 = vmatpush2.msra.mxu0 0.0
    %4273 = vmatprep.subr.mxu0 0.0
    %4274 = vmatpush2.msra.mxu0 0.0
    %4275 = vmatprep.mubr.f32.mxu0 0.0
    %4276 = vmatmul.mubr.f32.gmra.mxu0 %v4200
    %v4277 = vpop.f32.mrf.mxu0
    %v4278 = vadd.f32 0.0, %v4277
    %v4279 = vpop.f32.mrf.mxu0
    %4280 = vmatprep.mubr.f32.mxu0 0.0
    %4281 = vmatmul.mubr.f32.gmra.mxu0 %v4203
    %v4282 = vpop.f32.mrf.mxu0
    %v4283 = vadd.f32 0.0, %v4282
    %v4284 = vpop.f32.mrf.mxu0
    %4285 = vmatprep.mubr.f32.mxu0 0.0
    %4286 = vmatmul.mubr.f32.gmra.mxu0 %v4206
    %v4287 = vpop.f32.mrf.mxu0
    %v4288 = vadd.f32 0.0, %v4287
    %v4289 = vpop.f32.mrf.mxu0
    %4290 = vmatprep.mubr.f32.mxu0 0.0
    %4291 = vmatmul.mubr.f32.gmra.mxu0 %v4209
    %v4292 = vpop.f32.mrf.mxu0
    %v4293 = vadd.f32 0.0, %v4292
    %v4294 = vpop.f32.mrf.mxu0
    %4295 = vdwg.mxu0
    %v4296 = vadd.f32 %v4093, %v4278
    %v4297 = vadd.f32 %v4098, %v4283
    %v4298 = vadd.f32 %v4103, %v4288
    %v4299 = vadd.f32 %v4108, %v4293
    %4300 = vmatprep.subr.mxu0 0.0
    %4301 = vmatpush1.msra.mxu0 0.0
    %4302 = vmatprep.subr.mxu0 0.0
    %4303 = vmatpush1.msra.mxu0 0.0
    %4304 = vmatprep.subr.mxu0 0.0
    %4305 = vmatpush1.msra.mxu0 0.0
    %4306 = vmatprep.subr.mxu0 0.0
    %4307 = vmatpush1.msra.mxu0 0.0
    %4308 = vmatprep.subr.mxu0 0.0
    %4309 = vmatpush1.msra.mxu0 0.0
    %4310 = vmatprep.subr.mxu0 0.0
    %4311 = vmatpush1.msra.mxu0 0.0
    %4312 = vmatprep.subr.mxu0 0.0
    %4313 = vmatpush1.msra.mxu0 0.0
    %4314 = vmatprep.subr.mxu0 0.0
    %4315 = vmatpush1.msra.mxu0 %v3741
    %4316 = vmatprep.subr.mxu0 0.0
    %4317 = vmatpush1.msra.mxu0 %v3740
    %4318 = vmatprep.subr.mxu0 0.0
    %4319 = vmatpush1.msra.mxu0 %v3739
    %4320 = vmatprep.subr.mxu0 0.0
    %4321 = vmatpush1.msra.mxu0 %v3738
    %4322 = vmatprep.subr.mxu0 0.0
    %4323 = vmatpush1.msra.mxu0 %v3737
    %4324 = vmatprep.subr.mxu0 0.0
    %4325 = vmatpush1.msra.mxu0 %v3736
    %4326 = vmatprep.subr.mxu0 0.0
    %4327 = vmatpush1.msra.mxu0 %v3735
    %4328 = vmatprep.subr.mxu0 0.0
    %4329 = vmatpush1.msra.mxu0 %v3734
    %4330 = vmatprep.subr.mxu0 0.0
    %4331 = vmatpush1.msra.mxu0 %v3733
    %4332 = vmatprep.subr.mxu0 0.0
    %4333 = vmatpush2.msra.mxu0 0.0
    %4334 = vmatprep.subr.mxu0 0.0
    %4335 = vmatpush2.msra.mxu0 0.0
    %4336 = vmatprep.subr.mxu0 0.0
    %4337 = vmatpush2.msra.mxu0 0.0
    %4338 = vmatprep.subr.mxu0 0.0
    %4339 = vmatpush2.msra.mxu0 0.0
    %4340 = vmatprep.subr.mxu0 0.0
    %4341 = vmatpush2.msra.mxu0 0.0
    %4342 = vmatprep.subr.mxu0 0.0
    %4343 = vmatpush2.msra.mxu0 0.0
    %4344 = vmatprep.subr.mxu0 0.0
    %4345 = vmatpush2.msra.mxu0 0.0
    %4346 = vmatprep.subr.mxu0 0.0
    %4347 = vmatpush2.msra.mxu0 0.0
    %4348 = vmatprep.subr.mxu0 0.0
    %4349 = vmatpush2.msra.mxu0 0.0
    %4350 = vmatprep.subr.mxu0 0.0
    %4351 = vmatpush2.msra.mxu0 0.0
    %4352 = vmatprep.subr.mxu0 0.0
    %4353 = vmatpush2.msra.mxu0 0.0
    %4354 = vmatprep.subr.mxu0 0.0
    %4355 = vmatpush2.msra.mxu0 0.0
    %4356 = vmatprep.subr.mxu0 0.0
    %4357 = vmatpush2.msra.mxu0 0.0
    %4358 = vmatprep.subr.mxu0 0.0
    %4359 = vmatpush2.msra.mxu0 0.0
    %4360 = vmatprep.subr.mxu0 0.0
    %4361 = vmatpush2.msra.mxu0 0.0
    %4362 = vmatprep.subr.mxu0 0.0
    %4363 = vmatpush2.msra.mxu0 0.0
    %4364 = vmatprep.mubr.f32.mxu0 0.0
    %4365 = vmatmul.mubr.f32.gmra.mxu0 %v1241
    %v4366 = vpop.f32.mrf.mxu0
    %v4367 = vadd.f32 0.0, %v4366
    %v4368 = vpop.f32.mrf.mxu0
    %4369 = vmatprep.mubr.f32.mxu0 0.0
    %4370 = vmatmul.mubr.f32.gmra.mxu0 %v1244
    %v4371 = vpop.f32.mrf.mxu0
    %v4372 = vadd.f32 0.0, %v4371
    %v4373 = vpop.f32.mrf.mxu0
    %4374 = vmatprep.mubr.f32.mxu0 0.0
    %4375 = vmatmul.mubr.f32.gmra.mxu0 %v1247
    %v4376 = vpop.f32.mrf.mxu0
    %v4377 = vadd.f32 0.0, %v4376
    %v4378 = vpop.f32.mrf.mxu0
    %4379 = vmatprep.mubr.f32.mxu0 0.0
    %4380 = vmatmul.mubr.f32.gmra.mxu0 %v1250
    %v4381 = vpop.f32.mrf.mxu0
    %v4382 = vadd.f32 0.0, %v4381
    %v4383 = vpop.f32.mrf.mxu0
    %4384 = vdwg.mxu0
    %s4385 = scalar_lea.vmem %s17, 48
    %v4386 = vld [vmem:[%s4385] sm:$0xff]
    %v4387 = vld [vmem:[%s4385 + $0x8] sm:$0xff]
    %v4389 = vsel %vm834, %v4367, 0
    %v4392 = vsel %vm834, %v4372, 0
    %v4395 = vsel %vm834, %v4377, 0
    %v4398 = vsel %vm834, %v4382, 0
    %4400 = vmatprep.subr.mxu0 0.0
    %4401 = vmatpush1.msra.mxu0 0.0
    %4402 = vmatprep.subr.mxu0 0.0
    %4403 = vmatpush1.msra.mxu0 0.0
    %4404 = vmatprep.subr.mxu0 0.0
    %4405 = vmatpush1.msra.mxu0 0.0
    %4406 = vmatprep.subr.mxu0 0.0
    %4407 = vmatpush1.msra.mxu0 0.0
    %4408 = vmatprep.subr.mxu0 0.0
    %4409 = vmatpush1.msra.mxu0 0.0
    %4410 = vmatprep.subr.mxu0 0.0
    %4411 = vmatpush1.msra.mxu0 0.0
    %4412 = vmatprep.subr.mxu0 0.0
    %4413 = vmatpush1.msra.mxu0 0.0
    %4414 = vmatprep.subr.mxu0 0.0
    %4415 = vmatpush1.msra.mxu0 0.0
    %4416 = vmatprep.subr.mxu0 0.0
    %4417 = vmatpush1.msra.mxu0 0.0
    %4418 = vmatprep.subr.mxu0 0.0
    %4419 = vmatpush1.msra.mxu0 0.0
    %4420 = vmatprep.subr.mxu0 0.0
    %4421 = vmatpush1.msra.mxu0 0.0
    %4422 = vmatprep.subr.mxu0 0.0
    %4423 = vmatpush1.msra.mxu0 0.0
    %4424 = vmatprep.subr.mxu0 0.0
    %4425 = vmatpush1.msra.mxu0 0.0
    %4426 = vmatprep.subr.mxu0 0.0
    %4427 = vmatpush1.msra.mxu0 0.0
    %4428 = vmatprep.subr.mxu0 0.0
    %4429 = vmatpush1.msra.mxu0 %v4387
    %4430 = vmatprep.subr.mxu0 0.0
    %4431 = vmatpush1.msra.mxu0 %v4386
    %4432 = vmatprep.subr.mxu0 0.0
    %4433 = vmatpush2.msra.mxu0 0.0
    %4434 = vmatprep.subr.mxu0 0.0
    %4435 = vmatpush2.msra.mxu0 0.0
    %4436 = vmatprep.subr.mxu0 0.0
    %4437 = vmatpush2.msra.mxu0 0.0
    %4438 = vmatprep.subr.mxu0 0.0
    %4439 = vmatpush2.msra.mxu0 0.0
    %4440 = vmatprep.subr.mxu0 0.0
    %4441 = vmatpush2.msra.mxu0 0.0
    %4442 = vmatprep.subr.mxu0 0.0
    %4443 = vmatpush2.msra.mxu0 0.0
    %4444 = vmatprep.subr.mxu0 0.0
    %4445 = vmatpush2.msra.mxu0 0.0
    %4446 = vmatprep.subr.mxu0 0.0
    %4447 = vmatpush2.msra.mxu0 0.0
    %4448 = vmatprep.subr.mxu0 0.0
    %4449 = vmatpush2.msra.mxu0 0.0
    %4450 = vmatprep.subr.mxu0 0.0
    %4451 = vmatpush2.msra.mxu0 0.0
    %4452 = vmatprep.subr.mxu0 0.0
    %4453 = vmatpush2.msra.mxu0 0.0
    %4454 = vmatprep.subr.mxu0 0.0
    %4455 = vmatpush2.msra.mxu0 0.0
    %4456 = vmatprep.subr.mxu0 0.0
    %4457 = vmatpush2.msra.mxu0 0.0
    %4458 = vmatprep.subr.mxu0 0.0
    %4459 = vmatpush2.msra.mxu0 0.0
    %4460 = vmatprep.subr.mxu0 0.0
    %4461 = vmatpush2.msra.mxu0 0.0
    %4462 = vmatprep.subr.mxu0 0.0
    %4463 = vmatpush2.msra.mxu0 0.0
    %4464 = vmatprep.mubr.f32.mxu0 0.0
    %4465 = vmatmul.mubr.f32.gmra.mxu0 %v4389
    %v4466 = vpop.f32.mrf.mxu0
    %v4467 = vadd.f32 0.0, %v4466
    %v4468 = vpop.f32.mrf.mxu0
    %4469 = vmatprep.mubr.f32.mxu0 0.0
    %4470 = vmatmul.mubr.f32.gmra.mxu0 %v4392
    %v4471 = vpop.f32.mrf.mxu0
    %v4472 = vadd.f32 0.0, %v4471
    %v4473 = vpop.f32.mrf.mxu0
    %4474 = vmatprep.mubr.f32.mxu0 0.0
    %4475 = vmatmul.mubr.f32.gmra.mxu0 %v4395
    %v4476 = vpop.f32.mrf.mxu0
    %v4477 = vadd.f32 0.0, %v4476
    %v4478 = vpop.f32.mrf.mxu0
    %4479 = vmatprep.mubr.f32.mxu0 0.0
    %4480 = vmatmul.mubr.f32.gmra.mxu0 %v4398
    %v4481 = vpop.f32.mrf.mxu0
    %v4482 = vadd.f32 0.0, %v4481
    %v4483 = vpop.f32.mrf.mxu0
    %4484 = vdwg.mxu0
    %v4485 = vadd.f32 %v4296, %v4467
    %v4486 = vadd.f32 %v4297, %v4472
    %v4487 = vadd.f32 %v4298, %v4477
    %v4488 = vadd.f32 %v4299, %v4482
    %4489 = vmatprep.subr.mxu0 0.0
    %4490 = vmatpush1.msra.mxu0 0.0
    %4491 = vmatprep.subr.mxu0 0.0
    %4492 = vmatpush1.msra.mxu0 0.0
    %4493 = vmatprep.subr.mxu0 0.0
    %4494 = vmatpush1.msra.mxu0 0.0
    %4495 = vmatprep.subr.mxu0 0.0
    %4496 = vmatpush1.msra.mxu0 0.0
    %4497 = vmatprep.subr.mxu0 0.0
    %4498 = vmatpush1.msra.mxu0 0.0
    %4499 = vmatprep.subr.mxu0 0.0
    %4500 = vmatpush1.msra.mxu0 0.0
    %4501 = vmatprep.subr.mxu0 0.0
    %4502 = vmatpush1.msra.mxu0 0.0
    %4503 = vmatprep.subr.mxu0 0.0
    %4504 = vmatpush1.msra.mxu0 %v3741
    %4505 = vmatprep.subr.mxu0 0.0
    %4506 = vmatpush1.msra.mxu0 %v3740
    %4507 = vmatprep.subr.mxu0 0.0
    %4508 = vmatpush1.msra.mxu0 %v3739
    %4509 = vmatprep.subr.mxu0 0.0
    %4510 = vmatpush1.msra.mxu0 %v3738
    %4511 = vmatprep.subr.mxu0 0.0
    %4512 = vmatpush1.msra.mxu0 %v3737
    %4513 = vmatprep.subr.mxu0 0.0
    %4514 = vmatpush1.msra.mxu0 %v3736
    %4515 = vmatprep.subr.mxu0 0.0
    %4516 = vmatpush1.msra.mxu0 %v3735
    %4517 = vmatprep.subr.mxu0 0.0
    %4518 = vmatpush1.msra.mxu0 %v3734
    %4519 = vmatprep.subr.mxu0 0.0
    %4520 = vmatpush1.msra.mxu0 %v3733
    %4521 = vmatprep.subr.mxu0 0.0
    %4522 = vmatpush2.msra.mxu0 0.0
    %4523 = vmatprep.subr.mxu0 0.0
    %4524 = vmatpush2.msra.mxu0 0.0
    %4525 = vmatprep.subr.mxu0 0.0
    %4526 = vmatpush2.msra.mxu0 0.0
    %4527 = vmatprep.subr.mxu0 0.0
    %4528 = vmatpush2.msra.mxu0 0.0
    %4529 = vmatprep.subr.mxu0 0.0
    %4530 = vmatpush2.msra.mxu0 0.0
    %4531 = vmatprep.subr.mxu0 0.0
    %4532 = vmatpush2.msra.mxu0 0.0
    %4533 = vmatprep.subr.mxu0 0.0
    %4534 = vmatpush2.msra.mxu0 0.0
    %4535 = vmatprep.subr.mxu0 0.0
    %4536 = vmatpush2.msra.mxu0 0.0
    %4537 = vmatprep.subr.mxu0 0.0
    %4538 = vmatpush2.msra.mxu0 0.0
    %4539 = vmatprep.subr.mxu0 0.0
    %4540 = vmatpush2.msra.mxu0 0.0
    %4541 = vmatprep.subr.mxu0 0.0
    %4542 = vmatpush2.msra.mxu0 0.0
    %4543 = vmatprep.subr.mxu0 0.0
    %4544 = vmatpush2.msra.mxu0 0.0
    %4545 = vmatprep.subr.mxu0 0.0
    %4546 = vmatpush2.msra.mxu0 0.0
    %4547 = vmatprep.subr.mxu0 0.0
    %4548 = vmatpush2.msra.mxu0 0.0
    %4549 = vmatprep.subr.mxu0 0.0
    %4550 = vmatpush2.msra.mxu0 0.0
    %4551 = vmatprep.subr.mxu0 0.0
    %4552 = vmatpush2.msra.mxu0 0.0
    %4553 = vmatprep.mubr.f32.mxu0 0.0
    %4554 = vmatmul.mubr.f32.gmra.mxu0 %v1447
    %v4555 = vpop.f32.mrf.mxu0
    %v4556 = vadd.f32 0.0, %v4555
    %v4557 = vpop.f32.mrf.mxu0
    %4558 = vmatprep.mubr.f32.mxu0 0.0
    %4559 = vmatmul.mubr.f32.gmra.mxu0 %v1450
    %v4560 = vpop.f32.mrf.mxu0
    %v4561 = vadd.f32 0.0, %v4560
    %v4562 = vpop.f32.mrf.mxu0
    %4563 = vmatprep.mubr.f32.mxu0 0.0
    %4564 = vmatmul.mubr.f32.gmra.mxu0 %v1453
    %v4565 = vpop.f32.mrf.mxu0
    %v4566 = vadd.f32 0.0, %v4565
    %v4567 = vpop.f32.mrf.mxu0
    %4568 = vmatprep.mubr.f32.mxu0 0.0
    %4569 = vmatmul.mubr.f32.gmra.mxu0 %v1456
    %v4570 = vpop.f32.mrf.mxu0
    %v4571 = vadd.f32 0.0, %v4570
    %v4572 = vpop.f32.mrf.mxu0
    %4573 = vdwg.mxu0
    %s4574 = scalar_lea.vmem %s17, 64
    %v4575 = vld [vmem:[%s4574] sm:$0xff]
    %v4576 = vld [vmem:[%s4574 + $0x8] sm:$0xff]
    %v4578 = vsel %vm834, %v4556, 0
    %v4581 = vsel %vm834, %v4561, 0
    %v4584 = vsel %vm834, %v4566, 0
    %v4587 = vsel %vm834, %v4571, 0
    %4589 = vmatprep.subr.mxu0 0.0
    %4590 = vmatpush1.msra.mxu0 0.0
    %4591 = vmatprep.subr.mxu0 0.0
    %4592 = vmatpush1.msra.mxu0 0.0
    %4593 = vmatprep.subr.mxu0 0.0
    %4594 = vmatpush1.msra.mxu0 0.0
    %4595 = vmatprep.subr.mxu0 0.0
    %4596 = vmatpush1.msra.mxu0 0.0
    %4597 = vmatprep.subr.mxu0 0.0
    %4598 = vmatpush1.msra.mxu0 0.0
    %4599 = vmatprep.subr.mxu0 0.0
    %4600 = vmatpush1.msra.mxu0 0.0
    %4601 = vmatprep.subr.mxu0 0.0
    %4602 = vmatpush1.msra.mxu0 0.0
    %4603 = vmatprep.subr.mxu0 0.0
    %4604 = vmatpush1.msra.mxu0 0.0
    %4605 = vmatprep.subr.mxu0 0.0
    %4606 = vmatpush1.msra.mxu0 0.0
    %4607 = vmatprep.subr.mxu0 0.0
    %4608 = vmatpush1.msra.mxu0 0.0
    %4609 = vmatprep.subr.mxu0 0.0
    %4610 = vmatpush1.msra.mxu0 0.0
    %4611 = vmatprep.subr.mxu0 0.0
    %4612 = vmatpush1.msra.mxu0 0.0
    %4613 = vmatprep.subr.mxu0 0.0
    %4614 = vmatpush1.msra.mxu0 0.0
    %4615 = vmatprep.subr.mxu0 0.0
    %4616 = vmatpush1.msra.mxu0 0.0
    %4617 = vmatprep.subr.mxu0 0.0
    %4618 = vmatpush1.msra.mxu0 %v4576
    %4619 = vmatprep.subr.mxu0 0.0
    %4620 = vmatpush1.msra.mxu0 %v4575
    %4621 = vmatprep.subr.mxu0 0.0
    %4622 = vmatpush2.msra.mxu0 0.0
    %4623 = vmatprep.subr.mxu0 0.0
    %4624 = vmatpush2.msra.mxu0 0.0
    %4625 = vmatprep.subr.mxu0 0.0
    %4626 = vmatpush2.msra.mxu0 0.0
    %4627 = vmatprep.subr.mxu0 0.0
    %4628 = vmatpush2.msra.mxu0 0.0
    %4629 = vmatprep.subr.mxu0 0.0
    %4630 = vmatpush2.msra.mxu0 0.0
    %4631 = vmatprep.subr.mxu0 0.0
    %4632 = vmatpush2.msra.mxu0 0.0
    %4633 = vmatprep.subr.mxu0 0.0
    %4634 = vmatpush2.msra.mxu0 0.0
    %4635 = vmatprep.subr.mxu0 0.0
    %4636 = vmatpush2.msra.mxu0 0.0
    %4637 = vmatprep.subr.mxu0 0.0
    %4638 = vmatpush2.msra.mxu0 0.0
    %4639 = vmatprep.subr.mxu0 0.0
    %4640 = vmatpush2.msra.mxu0 0.0
    %4641 = vmatprep.subr.mxu0 0.0
    %4642 = vmatpush2.msra.mxu0 0.0
    %4643 = vmatprep.subr.mxu0 0.0
    %4644 = vmatpush2.msra.mxu0 0.0
    %4645 = vmatprep.subr.mxu0 0.0
    %4646 = vmatpush2.msra.mxu0 0.0
    %4647 = vmatprep.subr.mxu0 0.0
    %4648 = vmatpush2.msra.mxu0 0.0
    %4649 = vmatprep.subr.mxu0 0.0
    %4650 = vmatpush2.msra.mxu0 0.0
    %4651 = vmatprep.subr.mxu0 0.0
    %4652 = vmatpush2.msra.mxu0 0.0
    %4653 = vmatprep.mubr.f32.mxu0 0.0
    %4654 = vmatmul.mubr.f32.gmra.mxu0 %v4578
    %v4655 = vpop.f32.mrf.mxu0
    %v4656 = vadd.f32 0.0, %v4655
    %v4657 = vpop.f32.mrf.mxu0
    %4658 = vmatprep.mubr.f32.mxu0 0.0
    %4659 = vmatmul.mubr.f32.gmra.mxu0 %v4581
    %v4660 = vpop.f32.mrf.mxu0
    %v4661 = vadd.f32 0.0, %v4660
    %v4662 = vpop.f32.mrf.mxu0
    %4663 = vmatprep.mubr.f32.mxu0 0.0
    %4664 = vmatmul.mubr.f32.gmra.mxu0 %v4584
    %v4665 = vpop.f32.mrf.mxu0
    %v4666 = vadd.f32 0.0, %v4665
    %v4667 = vpop.f32.mrf.mxu0
    %4668 = vmatprep.mubr.f32.mxu0 0.0
    %4669 = vmatmul.mubr.f32.gmra.mxu0 %v4587
    %v4670 = vpop.f32.mrf.mxu0
    %v4671 = vadd.f32 0.0, %v4670
    %v4672 = vpop.f32.mrf.mxu0
    %4673 = vdwg.mxu0
    %v4674 = vadd.f32 %v4485, %v4656
    %v4675 = vadd.f32 %v4486, %v4661
    %v4676 = vadd.f32 %v4487, %v4666
    %v4677 = vadd.f32 %v4488, %v4671
    %4678 = vmatprep.subr.mxu0 0.0
    %4679 = vmatpush1.msra.mxu0 0.0
    %4680 = vmatprep.subr.mxu0 0.0
    %4681 = vmatpush1.msra.mxu0 0.0
    %4682 = vmatprep.subr.mxu0 0.0
    %4683 = vmatpush1.msra.mxu0 0.0
    %4684 = vmatprep.subr.mxu0 0.0
    %4685 = vmatpush1.msra.mxu0 0.0
    %4686 = vmatprep.subr.mxu0 0.0
    %4687 = vmatpush1.msra.mxu0 0.0
    %4688 = vmatprep.subr.mxu0 0.0
    %4689 = vmatpush1.msra.mxu0 0.0
    %4690 = vmatprep.subr.mxu0 0.0
    %4691 = vmatpush1.msra.mxu0 0.0
    %4692 = vmatprep.subr.mxu0 0.0
    %4693 = vmatpush1.msra.mxu0 %v3741
    %4694 = vmatprep.subr.mxu0 0.0
    %4695 = vmatpush1.msra.mxu0 %v3740
    %4696 = vmatprep.subr.mxu0 0.0
    %4697 = vmatpush1.msra.mxu0 %v3739
    %4698 = vmatprep.subr.mxu0 0.0
    %4699 = vmatpush1.msra.mxu0 %v3738
    %4700 = vmatprep.subr.mxu0 0.0
    %4701 = vmatpush1.msra.mxu0 %v3737
    %4702 = vmatprep.subr.mxu0 0.0
    %4703 = vmatpush1.msra.mxu0 %v3736
    %4704 = vmatprep.subr.mxu0 0.0
    %4705 = vmatpush1.msra.mxu0 %v3735
    %4706 = vmatprep.subr.mxu0 0.0
    %4707 = vmatpush1.msra.mxu0 %v3734
    %4708 = vmatprep.subr.mxu0 0.0
    %4709 = vmatpush1.msra.mxu0 %v3733
    %4710 = vmatprep.subr.mxu0 0.0
    %4711 = vmatpush2.msra.mxu0 0.0
    %4712 = vmatprep.subr.mxu0 0.0
    %4713 = vmatpush2.msra.mxu0 0.0
    %4714 = vmatprep.subr.mxu0 0.0
    %4715 = vmatpush2.msra.mxu0 0.0
    %4716 = vmatprep.subr.mxu0 0.0
    %4717 = vmatpush2.msra.mxu0 0.0
    %4718 = vmatprep.subr.mxu0 0.0
    %4719 = vmatpush2.msra.mxu0 0.0
    %4720 = vmatprep.subr.mxu0 0.0
    %4721 = vmatpush2.msra.mxu0 0.0
    %4722 = vmatprep.subr.mxu0 0.0
    %4723 = vmatpush2.msra.mxu0 0.0
    %4724 = vmatprep.subr.mxu0 0.0
    %4725 = vmatpush2.msra.mxu0 0.0
    %4726 = vmatprep.subr.mxu0 0.0
    %4727 = vmatpush2.msra.mxu0 0.0
    %4728 = vmatprep.subr.mxu0 0.0
    %4729 = vmatpush2.msra.mxu0 0.0
    %4730 = vmatprep.subr.mxu0 0.0
    %4731 = vmatpush2.msra.mxu0 0.0
    %4732 = vmatprep.subr.mxu0 0.0
    %4733 = vmatpush2.msra.mxu0 0.0
    %4734 = vmatprep.subr.mxu0 0.0
    %4735 = vmatpush2.msra.mxu0 0.0
    %4736 = vmatprep.subr.mxu0 0.0
    %4737 = vmatpush2.msra.mxu0 0.0
    %4738 = vmatprep.subr.mxu0 0.0
    %4739 = vmatpush2.msra.mxu0 0.0
    %4740 = vmatprep.subr.mxu0 0.0
    %4741 = vmatpush2.msra.mxu0 0.0
    %4742 = vmatprep.mubr.f32.mxu0 0.0
    %4743 = vmatmul.mubr.f32.gmra.mxu0 %v1653
    %v4744 = vpop.f32.mrf.mxu0
    %v4745 = vadd.f32 0.0, %v4744
    %v4746 = vpop.f32.mrf.mxu0
    %4747 = vmatprep.mubr.f32.mxu0 0.0
    %4748 = vmatmul.mubr.f32.gmra.mxu0 %v1656
    %v4749 = vpop.f32.mrf.mxu0
    %v4750 = vadd.f32 0.0, %v4749
    %v4751 = vpop.f32.mrf.mxu0
    %4752 = vmatprep.mubr.f32.mxu0 0.0
    %4753 = vmatmul.mubr.f32.gmra.mxu0 %v1659
    %v4754 = vpop.f32.mrf.mxu0
    %v4755 = vadd.f32 0.0, %v4754
    %v4756 = vpop.f32.mrf.mxu0
    %4757 = vmatprep.mubr.f32.mxu0 0.0
    %4758 = vmatmul.mubr.f32.gmra.mxu0 %v1662
    %v4759 = vpop.f32.mrf.mxu0
    %v4760 = vadd.f32 0.0, %v4759
    %v4761 = vpop.f32.mrf.mxu0
    %4762 = vdwg.mxu0
    %s4763 = scalar_lea.vmem %s17, 80
    %v4764 = vld [vmem:[%s4763] sm:$0xff]
    %v4765 = vld [vmem:[%s4763 + $0x8] sm:$0xff]
    %v4767 = vsel %vm834, %v4745, 0
    %v4770 = vsel %vm834, %v4750, 0
    %v4773 = vsel %vm834, %v4755, 0
    %v4776 = vsel %vm834, %v4760, 0
    %4778 = vmatprep.subr.mxu0 0.0
    %4779 = vmatpush1.msra.mxu0 0.0
    %4780 = vmatprep.subr.mxu0 0.0
    %4781 = vmatpush1.msra.mxu0 0.0
    %4782 = vmatprep.subr.mxu0 0.0
    %4783 = vmatpush1.msra.mxu0 0.0
    %4784 = vmatprep.subr.mxu0 0.0
    %4785 = vmatpush1.msra.mxu0 0.0
    %4786 = vmatprep.subr.mxu0 0.0
    %4787 = vmatpush1.msra.mxu0 0.0
    %4788 = vmatprep.subr.mxu0 0.0
    %4789 = vmatpush1.msra.mxu0 0.0
    %4790 = vmatprep.subr.mxu0 0.0
    %4791 = vmatpush1.msra.mxu0 0.0
    %4792 = vmatprep.subr.mxu0 0.0
    %4793 = vmatpush1.msra.mxu0 0.0
    %4794 = vmatprep.subr.mxu0 0.0
    %4795 = vmatpush1.msra.mxu0 0.0
    %4796 = vmatprep.subr.mxu0 0.0
    %4797 = vmatpush1.msra.mxu0 0.0
    %4798 = vmatprep.subr.mxu0 0.0
    %4799 = vmatpush1.msra.mxu0 0.0
    %4800 = vmatprep.subr.mxu0 0.0
    %4801 = vmatpush1.msra.mxu0 0.0
    %4802 = vmatprep.subr.mxu0 0.0
    %4803 = vmatpush1.msra.mxu0 0.0
    %4804 = vmatprep.subr.mxu0 0.0
    %4805 = vmatpush1.msra.mxu0 0.0
    %4806 = vmatprep.subr.mxu0 0.0
    %4807 = vmatpush1.msra.mxu0 %v4765
    %4808 = vmatprep.subr.mxu0 0.0
    %4809 = vmatpush1.msra.mxu0 %v4764
    %4810 = vmatprep.subr.mxu0 0.0
    %4811 = vmatpush2.msra.mxu0 0.0
    %4812 = vmatprep.subr.mxu0 0.0
    %4813 = vmatpush2.msra.mxu0 0.0
    %4814 = vmatprep.subr.mxu0 0.0
    %4815 = vmatpush2.msra.mxu0 0.0
    %4816 = vmatprep.subr.mxu0 0.0
    %4817 = vmatpush2.msra.mxu0 0.0
    %4818 = vmatprep.subr.mxu0 0.0
    %4819 = vmatpush2.msra.mxu0 0.0
    %4820 = vmatprep.subr.mxu0 0.0
    %4821 = vmatpush2.msra.mxu0 0.0
    %4822 = vmatprep.subr.mxu0 0.0
    %4823 = vmatpush2.msra.mxu0 0.0
    %4824 = vmatprep.subr.mxu0 0.0
    %4825 = vmatpush2.msra.mxu0 0.0
    %4826 = vmatprep.subr.mxu0 0.0
    %4827 = vmatpush2.msra.mxu0 0.0
    %4828 = vmatprep.subr.mxu0 0.0
    %4829 = vmatpush2.msra.mxu0 0.0
    %4830 = vmatprep.subr.mxu0 0.0
    %4831 = vmatpush2.msra.mxu0 0.0
    %4832 = vmatprep.subr.mxu0 0.0
    %4833 = vmatpush2.msra.mxu0 0.0
    %4834 = vmatprep.subr.mxu0 0.0
    %4835 = vmatpush2.msra.mxu0 0.0
    %4836 = vmatprep.subr.mxu0 0.0
    %4837 = vmatpush2.msra.mxu0 0.0
    %4838 = vmatprep.subr.mxu0 0.0
    %4839 = vmatpush2.msra.mxu0 0.0
    %4840 = vmatprep.subr.mxu0 0.0
    %4841 = vmatpush2.msra.mxu0 0.0
    %4842 = vmatprep.mubr.f32.mxu0 0.0
    %4843 = vmatmul.mubr.f32.gmra.mxu0 %v4767
    %v4844 = vpop.f32.mrf.mxu0
    %v4845 = vadd.f32 0.0, %v4844
    %v4846 = vpop.f32.mrf.mxu0
    %4847 = vmatprep.mubr.f32.mxu0 0.0
    %4848 = vmatmul.mubr.f32.gmra.mxu0 %v4770
    %v4849 = vpop.f32.mrf.mxu0
    %v4850 = vadd.f32 0.0, %v4849
    %v4851 = vpop.f32.mrf.mxu0
    %4852 = vmatprep.mubr.f32.mxu0 0.0
    %4853 = vmatmul.mubr.f32.gmra.mxu0 %v4773
    %v4854 = vpop.f32.mrf.mxu0
    %v4855 = vadd.f32 0.0, %v4854
    %v4856 = vpop.f32.mrf.mxu0
    %4857 = vmatprep.mubr.f32.mxu0 0.0
    %4858 = vmatmul.mubr.f32.gmra.mxu0 %v4776
    %v4859 = vpop.f32.mrf.mxu0
    %v4860 = vadd.f32 0.0, %v4859
    %v4861 = vpop.f32.mrf.mxu0
    %4862 = vdwg.mxu0
    %v4863 = vadd.f32 %v4674, %v4845
    %v4864 = vadd.f32 %v4675, %v4850
    %v4865 = vadd.f32 %v4676, %v4855
    %v4866 = vadd.f32 %v4677, %v4860
    %4867 = vmatprep.subr.mxu0 0.0
    %4868 = vmatpush1.msra.mxu0 0.0
    %4869 = vmatprep.subr.mxu0 0.0
    %4870 = vmatpush1.msra.mxu0 0.0
    %4871 = vmatprep.subr.mxu0 0.0
    %4872 = vmatpush1.msra.mxu0 0.0
    %4873 = vmatprep.subr.mxu0 0.0
    %4874 = vmatpush1.msra.mxu0 0.0
    %4875 = vmatprep.subr.mxu0 0.0
    %4876 = vmatpush1.msra.mxu0 0.0
    %4877 = vmatprep.subr.mxu0 0.0
    %4878 = vmatpush1.msra.mxu0 0.0
    %4879 = vmatprep.subr.mxu0 0.0
    %4880 = vmatpush1.msra.mxu0 0.0
    %4881 = vmatprep.subr.mxu0 0.0
    %4882 = vmatpush1.msra.mxu0 %v3741
    %4883 = vmatprep.subr.mxu0 0.0
    %4884 = vmatpush1.msra.mxu0 %v3740
    %4885 = vmatprep.subr.mxu0 0.0
    %4886 = vmatpush1.msra.mxu0 %v3739
    %4887 = vmatprep.subr.mxu0 0.0
    %4888 = vmatpush1.msra.mxu0 %v3738
    %4889 = vmatprep.subr.mxu0 0.0
    %4890 = vmatpush1.msra.mxu0 %v3737
    %4891 = vmatprep.subr.mxu0 0.0
    %4892 = vmatpush1.msra.mxu0 %v3736
    %4893 = vmatprep.subr.mxu0 0.0
    %4894 = vmatpush1.msra.mxu0 %v3735
    %4895 = vmatprep.subr.mxu0 0.0
    %4896 = vmatpush1.msra.mxu0 %v3734
    %4897 = vmatprep.subr.mxu0 0.0
    %4898 = vmatpush1.msra.mxu0 %v3733
    %4899 = vmatprep.subr.mxu0 0.0
    %4900 = vmatpush2.msra.mxu0 0.0
    %4901 = vmatprep.subr.mxu0 0.0
    %4902 = vmatpush2.msra.mxu0 0.0
    %4903 = vmatprep.subr.mxu0 0.0
    %4904 = vmatpush2.msra.mxu0 0.0
    %4905 = vmatprep.subr.mxu0 0.0
    %4906 = vmatpush2.msra.mxu0 0.0
    %4907 = vmatprep.subr.mxu0 0.0
    %4908 = vmatpush2.msra.mxu0 0.0
    %4909 = vmatprep.subr.mxu0 0.0
    %4910 = vmatpush2.msra.mxu0 0.0
    %4911 = vmatprep.subr.mxu0 0.0
    %4912 = vmatpush2.msra.mxu0 0.0
    %4913 = vmatprep.subr.mxu0 0.0
    %4914 = vmatpush2.msra.mxu0 0.0
    %4915 = vmatprep.subr.mxu0 0.0
    %4916 = vmatpush2.msra.mxu0 0.0
    %4917 = vmatprep.subr.mxu0 0.0
    %4918 = vmatpush2.msra.mxu0 0.0
    %4919 = vmatprep.subr.mxu0 0.0
    %4920 = vmatpush2.msra.mxu0 0.0
    %4921 = vmatprep.subr.mxu0 0.0
    %4922 = vmatpush2.msra.mxu0 0.0
    %4923 = vmatprep.subr.mxu0 0.0
    %4924 = vmatpush2.msra.mxu0 0.0
    %4925 = vmatprep.subr.mxu0 0.0
    %4926 = vmatpush2.msra.mxu0 0.0
    %4927 = vmatprep.subr.mxu0 0.0
    %4928 = vmatpush2.msra.mxu0 0.0
    %4929 = vmatprep.subr.mxu0 0.0
    %4930 = vmatpush2.msra.mxu0 0.0
    %4931 = vmatprep.mubr.f32.mxu0 0.0
    %4932 = vmatmul.mubr.f32.gmra.mxu0 %v1859
    %v4933 = vpop.f32.mrf.mxu0
    %v4934 = vadd.f32 0.0, %v4933
    %v4935 = vpop.f32.mrf.mxu0
    %4936 = vmatprep.mubr.f32.mxu0 0.0
    %4937 = vmatmul.mubr.f32.gmra.mxu0 %v1862
    %v4938 = vpop.f32.mrf.mxu0
    %v4939 = vadd.f32 0.0, %v4938
    %v4940 = vpop.f32.mrf.mxu0
    %4941 = vmatprep.mubr.f32.mxu0 0.0
    %4942 = vmatmul.mubr.f32.gmra.mxu0 %v1865
    %v4943 = vpop.f32.mrf.mxu0
    %v4944 = vadd.f32 0.0, %v4943
    %v4945 = vpop.f32.mrf.mxu0
    %4946 = vmatprep.mubr.f32.mxu0 0.0
    %4947 = vmatmul.mubr.f32.gmra.mxu0 %v1868
    %v4948 = vpop.f32.mrf.mxu0
    %v4949 = vadd.f32 0.0, %v4948
    %v4950 = vpop.f32.mrf.mxu0
    %4951 = vdwg.mxu0
    %s4952 = scalar_lea.vmem %s17, 96
    %v4953 = vld [vmem:[%s4952] sm:$0xff]
    %v4954 = vld [vmem:[%s4952 + $0x8] sm:$0xff]
    %v4956 = vsel %vm834, %v4934, 0
    %v4959 = vsel %vm834, %v4939, 0
    %v4962 = vsel %vm834, %v4944, 0
    %v4965 = vsel %vm834, %v4949, 0
    %4967 = vmatprep.subr.mxu0 0.0
    %4968 = vmatpush1.msra.mxu0 0.0
    %4969 = vmatprep.subr.mxu0 0.0
    %4970 = vmatpush1.msra.mxu0 0.0
    %4971 = vmatprep.subr.mxu0 0.0
    %4972 = vmatpush1.msra.mxu0 0.0
    %4973 = vmatprep.subr.mxu0 0.0
    %4974 = vmatpush1.msra.mxu0 0.0
    %4975 = vmatprep.subr.mxu0 0.0
    %4976 = vmatpush1.msra.mxu0 0.0
    %4977 = vmatprep.subr.mxu0 0.0
    %4978 = vmatpush1.msra.mxu0 0.0
    %4979 = vmatprep.subr.mxu0 0.0
    %4980 = vmatpush1.msra.mxu0 0.0
    %4981 = vmatprep.subr.mxu0 0.0
    %4982 = vmatpush1.msra.mxu0 0.0
    %4983 = vmatprep.subr.mxu0 0.0
    %4984 = vmatpush1.msra.mxu0 0.0
    %4985 = vmatprep.subr.mxu0 0.0
    %4986 = vmatpush1.msra.mxu0 0.0
    %4987 = vmatprep.subr.mxu0 0.0
    %4988 = vmatpush1.msra.mxu0 0.0
    %4989 = vmatprep.subr.mxu0 0.0
    %4990 = vmatpush1.msra.mxu0 0.0
    %4991 = vmatprep.subr.mxu0 0.0
    %4992 = vmatpush1.msra.mxu0 0.0
    %4993 = vmatprep.subr.mxu0 0.0
    %4994 = vmatpush1.msra.mxu0 0.0
    %4995 = vmatprep.subr.mxu0 0.0
    %4996 = vmatpush1.msra.mxu0 %v4954
    %4997 = vmatprep.subr.mxu0 0.0
    %4998 = vmatpush1.msra.mxu0 %v4953
    %4999 = vmatprep.subr.mxu0 0.0
    %5000 = vmatpush2.msra.mxu0 0.0
    %5001 = vmatprep.subr.mxu0 0.0
    %5002 = vmatpush2.msra.mxu0 0.0
    %5003 = vmatprep.subr.mxu0 0.0
    %5004 = vmatpush2.msra.mxu0 0.0
    %5005 = vmatprep.subr.mxu0 0.0
    %5006 = vmatpush2.msra.mxu0 0.0
    %5007 = vmatprep.subr.mxu0 0.0
    %5008 = vmatpush2.msra.mxu0 0.0
    %5009 = vmatprep.subr.mxu0 0.0
    %5010 = vmatpush2.msra.mxu0 0.0
    %5011 = vmatprep.subr.mxu0 0.0
    %5012 = vmatpush2.msra.mxu0 0.0
    %5013 = vmatprep.subr.mxu0 0.0
    %5014 = vmatpush2.msra.mxu0 0.0
    %5015 = vmatprep.subr.mxu0 0.0
    %5016 = vmatpush2.msra.mxu0 0.0
    %5017 = vmatprep.subr.mxu0 0.0
    %5018 = vmatpush2.msra.mxu0 0.0
    %5019 = vmatprep.subr.mxu0 0.0
    %5020 = vmatpush2.msra.mxu0 0.0
    %5021 = vmatprep.subr.mxu0 0.0
    %5022 = vmatpush2.msra.mxu0 0.0
    %5023 = vmatprep.subr.mxu0 0.0
    %5024 = vmatpush2.msra.mxu0 0.0
    %5025 = vmatprep.subr.mxu0 0.0
    %5026 = vmatpush2.msra.mxu0 0.0
    %5027 = vmatprep.subr.mxu0 0.0
    %5028 = vmatpush2.msra.mxu0 0.0
    %5029 = vmatprep.subr.mxu0 0.0
    %5030 = vmatpush2.msra.mxu0 0.0
    %5031 = vmatprep.mubr.f32.mxu0 0.0
    %5032 = vmatmul.mubr.f32.gmra.mxu0 %v4956
    %v5033 = vpop.f32.mrf.mxu0
    %v5034 = vadd.f32 0.0, %v5033
    %v5035 = vpop.f32.mrf.mxu0
    %5036 = vmatprep.mubr.f32.mxu0 0.0
    %5037 = vmatmul.mubr.f32.gmra.mxu0 %v4959
    %v5038 = vpop.f32.mrf.mxu0
    %v5039 = vadd.f32 0.0, %v5038
    %v5040 = vpop.f32.mrf.mxu0
    %5041 = vmatprep.mubr.f32.mxu0 0.0
    %5042 = vmatmul.mubr.f32.gmra.mxu0 %v4962
    %v5043 = vpop.f32.mrf.mxu0
    %v5044 = vadd.f32 0.0, %v5043
    %v5045 = vpop.f32.mrf.mxu0
    %5046 = vmatprep.mubr.f32.mxu0 0.0
    %5047 = vmatmul.mubr.f32.gmra.mxu0 %v4965
    %v5048 = vpop.f32.mrf.mxu0
    %v5049 = vadd.f32 0.0, %v5048
    %v5050 = vpop.f32.mrf.mxu0
    %5051 = vdwg.mxu0
    %v5052 = vadd.f32 %v4863, %v5034
    %v5053 = vadd.f32 %v4864, %v5039
    %v5054 = vadd.f32 %v4865, %v5044
    %v5055 = vadd.f32 %v4866, %v5049
    %5056 = vmatprep.subr.mxu0 0.0
    %5057 = vmatpush1.msra.mxu0 0.0
    %5058 = vmatprep.subr.mxu0 0.0
    %5059 = vmatpush1.msra.mxu0 0.0
    %5060 = vmatprep.subr.mxu0 0.0
    %5061 = vmatpush1.msra.mxu0 0.0
    %5062 = vmatprep.subr.mxu0 0.0
    %5063 = vmatpush1.msra.mxu0 0.0
    %5064 = vmatprep.subr.mxu0 0.0
    %5065 = vmatpush1.msra.mxu0 0.0
    %5066 = vmatprep.subr.mxu0 0.0
    %5067 = vmatpush1.msra.mxu0 0.0
    %5068 = vmatprep.subr.mxu0 0.0
    %5069 = vmatpush1.msra.mxu0 0.0
    %5070 = vmatprep.subr.mxu0 0.0
    %5071 = vmatpush1.msra.mxu0 %v3741
    %5072 = vmatprep.subr.mxu0 0.0
    %5073 = vmatpush1.msra.mxu0 %v3740
    %5074 = vmatprep.subr.mxu0 0.0
    %5075 = vmatpush1.msra.mxu0 %v3739
    %5076 = vmatprep.subr.mxu0 0.0
    %5077 = vmatpush1.msra.mxu0 %v3738
    %5078 = vmatprep.subr.mxu0 0.0
    %5079 = vmatpush1.msra.mxu0 %v3737
    %5080 = vmatprep.subr.mxu0 0.0
    %5081 = vmatpush1.msra.mxu0 %v3736
    %5082 = vmatprep.subr.mxu0 0.0
    %5083 = vmatpush1.msra.mxu0 %v3735
    %5084 = vmatprep.subr.mxu0 0.0
    %5085 = vmatpush1.msra.mxu0 %v3734
    %5086 = vmatprep.subr.mxu0 0.0
    %5087 = vmatpush1.msra.mxu0 %v3733
    %5088 = vmatprep.subr.mxu0 0.0
    %5089 = vmatpush2.msra.mxu0 0.0
    %5090 = vmatprep.subr.mxu0 0.0
    %5091 = vmatpush2.msra.mxu0 0.0
    %5092 = vmatprep.subr.mxu0 0.0
    %5093 = vmatpush2.msra.mxu0 0.0
    %5094 = vmatprep.subr.mxu0 0.0
    %5095 = vmatpush2.msra.mxu0 0.0
    %5096 = vmatprep.subr.mxu0 0.0
    %5097 = vmatpush2.msra.mxu0 0.0
    %5098 = vmatprep.subr.mxu0 0.0
    %5099 = vmatpush2.msra.mxu0 0.0
    %5100 = vmatprep.subr.mxu0 0.0
    %5101 = vmatpush2.msra.mxu0 0.0
    %5102 = vmatprep.subr.mxu0 0.0
    %5103 = vmatpush2.msra.mxu0 0.0
    %5104 = vmatprep.subr.mxu0 0.0
    %5105 = vmatpush2.msra.mxu0 0.0
    %5106 = vmatprep.subr.mxu0 0.0
    %5107 = vmatpush2.msra.mxu0 0.0
    %5108 = vmatprep.subr.mxu0 0.0
    %5109 = vmatpush2.msra.mxu0 0.0
    %5110 = vmatprep.subr.mxu0 0.0
    %5111 = vmatpush2.msra.mxu0 0.0
    %5112 = vmatprep.subr.mxu0 0.0
    %5113 = vmatpush2.msra.mxu0 0.0
    %5114 = vmatprep.subr.mxu0 0.0
    %5115 = vmatpush2.msra.mxu0 0.0
    %5116 = vmatprep.subr.mxu0 0.0
    %5117 = vmatpush2.msra.mxu0 0.0
    %5118 = vmatprep.subr.mxu0 0.0
    %5119 = vmatpush2.msra.mxu0 0.0
    %5120 = vmatprep.mubr.f32.mxu0 0.0
    %5121 = vmatmul.mubr.f32.gmra.mxu0 %v2065
    %v5122 = vpop.f32.mrf.mxu0
    %v5123 = vadd.f32 0.0, %v5122
    %v5124 = vpop.f32.mrf.mxu0
    %5125 = vmatprep.mubr.f32.mxu0 0.0
    %5126 = vmatmul.mubr.f32.gmra.mxu0 %v2068
    %v5127 = vpop.f32.mrf.mxu0
    %v5128 = vadd.f32 0.0, %v5127
    %v5129 = vpop.f32.mrf.mxu0
    %5130 = vmatprep.mubr.f32.mxu0 0.0
    %5131 = vmatmul.mubr.f32.gmra.mxu0 %v2071
    %v5132 = vpop.f32.mrf.mxu0
    %v5133 = vadd.f32 0.0, %v5132
    %v5134 = vpop.f32.mrf.mxu0
    %5135 = vmatprep.mubr.f32.mxu0 0.0
    %5136 = vmatmul.mubr.f32.gmra.mxu0 %v2074
    %v5137 = vpop.f32.mrf.mxu0
    %v5138 = vadd.f32 0.0, %v5137
    %v5139 = vpop.f32.mrf.mxu0
    %5140 = vdwg.mxu0
    %s5141 = scalar_lea.vmem %s17, 112
    %v5142 = vld [vmem:[%s5141] sm:$0xff]
    %v5143 = vld [vmem:[%s5141 + $0x8] sm:$0xff]
    %v5145 = vsel %vm834, %v5123, 0
    %v5148 = vsel %vm834, %v5128, 0
    %v5151 = vsel %vm834, %v5133, 0
    %v5154 = vsel %vm834, %v5138, 0
    %5156 = vmatprep.subr.mxu0 0.0
    %5157 = vmatpush1.msra.mxu0 0.0
    %5158 = vmatprep.subr.mxu0 0.0
    %5159 = vmatpush1.msra.mxu0 0.0
    %5160 = vmatprep.subr.mxu0 0.0
    %5161 = vmatpush1.msra.mxu0 0.0
    %5162 = vmatprep.subr.mxu0 0.0
    %5163 = vmatpush1.msra.mxu0 0.0
    %5164 = vmatprep.subr.mxu0 0.0
    %5165 = vmatpush1.msra.mxu0 0.0
    %5166 = vmatprep.subr.mxu0 0.0
    %5167 = vmatpush1.msra.mxu0 0.0
    %5168 = vmatprep.subr.mxu0 0.0
    %5169 = vmatpush1.msra.mxu0 0.0
    %5170 = vmatprep.subr.mxu0 0.0
    %5171 = vmatpush1.msra.mxu0 0.0
    %5172 = vmatprep.subr.mxu0 0.0
    %5173 = vmatpush1.msra.mxu0 0.0
    %5174 = vmatprep.subr.mxu0 0.0
    %5175 = vmatpush1.msra.mxu0 0.0
    %5176 = vmatprep.subr.mxu0 0.0
    %5177 = vmatpush1.msra.mxu0 0.0
    %5178 = vmatprep.subr.mxu0 0.0
    %5179 = vmatpush1.msra.mxu0 0.0
    %5180 = vmatprep.subr.mxu0 0.0
    %5181 = vmatpush1.msra.mxu0 0.0
    %5182 = vmatprep.subr.mxu0 0.0
    %5183 = vmatpush1.msra.mxu0 0.0
    %5184 = vmatprep.subr.mxu0 0.0
    %5185 = vmatpush1.msra.mxu0 %v5143
    %5186 = vmatprep.subr.mxu0 0.0
    %5187 = vmatpush1.msra.mxu0 %v5142
    %5188 = vmatprep.subr.mxu0 0.0
    %5189 = vmatpush2.msra.mxu0 0.0
    %5190 = vmatprep.subr.mxu0 0.0
    %5191 = vmatpush2.msra.mxu0 0.0
    %5192 = vmatprep.subr.mxu0 0.0
    %5193 = vmatpush2.msra.mxu0 0.0
    %5194 = vmatprep.subr.mxu0 0.0
    %5195 = vmatpush2.msra.mxu0 0.0
    %5196 = vmatprep.subr.mxu0 0.0
    %5197 = vmatpush2.msra.mxu0 0.0
    %5198 = vmatprep.subr.mxu0 0.0
    %5199 = vmatpush2.msra.mxu0 0.0
    %5200 = vmatprep.subr.mxu0 0.0
    %5201 = vmatpush2.msra.mxu0 0.0
    %5202 = vmatprep.subr.mxu0 0.0
    %5203 = vmatpush2.msra.mxu0 0.0
    %5204 = vmatprep.subr.mxu0 0.0
    %5205 = vmatpush2.msra.mxu0 0.0
    %5206 = vmatprep.subr.mxu0 0.0
    %5207 = vmatpush2.msra.mxu0 0.0
    %5208 = vmatprep.subr.mxu0 0.0
    %5209 = vmatpush2.msra.mxu0 0.0
    %5210 = vmatprep.subr.mxu0 0.0
    %5211 = vmatpush2.msra.mxu0 0.0
    %5212 = vmatprep.subr.mxu0 0.0
    %5213 = vmatpush2.msra.mxu0 0.0
    %5214 = vmatprep.subr.mxu0 0.0
    %5215 = vmatpush2.msra.mxu0 0.0
    %5216 = vmatprep.subr.mxu0 0.0
    %5217 = vmatpush2.msra.mxu0 0.0
    %5218 = vmatprep.subr.mxu0 0.0
    %5219 = vmatpush2.msra.mxu0 0.0
    %5220 = vmatprep.mubr.f32.mxu0 0.0
    %5221 = vmatmul.mubr.f32.gmra.mxu0 %v5145
    %v5222 = vpop.f32.mrf.mxu0
    %v5223 = vadd.f32 0.0, %v5222
    %v5224 = vpop.f32.mrf.mxu0
    %5225 = vmatprep.mubr.f32.mxu0 0.0
    %5226 = vmatmul.mubr.f32.gmra.mxu0 %v5148
    %v5227 = vpop.f32.mrf.mxu0
    %v5228 = vadd.f32 0.0, %v5227
    %v5229 = vpop.f32.mrf.mxu0
    %5230 = vmatprep.mubr.f32.mxu0 0.0
    %5231 = vmatmul.mubr.f32.gmra.mxu0 %v5151
    %v5232 = vpop.f32.mrf.mxu0
    %v5233 = vadd.f32 0.0, %v5232
    %v5234 = vpop.f32.mrf.mxu0
    %5235 = vmatprep.mubr.f32.mxu0 0.0
    %5236 = vmatmul.mubr.f32.gmra.mxu0 %v5154
    %v5237 = vpop.f32.mrf.mxu0
    %v5238 = vadd.f32 0.0, %v5237
    %v5239 = vpop.f32.mrf.mxu0
    %5240 = vdwg.mxu0
    %v5241 = vadd.f32 %v5052, %v5223
    %v5242 = vadd.f32 %v5053, %v5228
    %v5243 = vadd.f32 %v5054, %v5233
    %v5244 = vadd.f32 %v5055, %v5238
    %5245 = vmatprep.subr.mxu0 0.0
    %5246 = vmatpush1.msra.mxu0 0.0
    %5247 = vmatprep.subr.mxu0 0.0
    %5248 = vmatpush1.msra.mxu0 0.0
    %5249 = vmatprep.subr.mxu0 0.0
    %5250 = vmatpush1.msra.mxu0 0.0
    %5251 = vmatprep.subr.mxu0 0.0
    %5252 = vmatpush1.msra.mxu0 0.0
    %5253 = vmatprep.subr.mxu0 0.0
    %5254 = vmatpush1.msra.mxu0 0.0
    %5255 = vmatprep.subr.mxu0 0.0
    %5256 = vmatpush1.msra.mxu0 0.0
    %5257 = vmatprep.subr.mxu0 0.0
    %5258 = vmatpush1.msra.mxu0 0.0
    %5259 = vmatprep.subr.mxu0 0.0
    %5260 = vmatpush1.msra.mxu0 %v3741
    %5261 = vmatprep.subr.mxu0 0.0
    %5262 = vmatpush1.msra.mxu0 %v3740
    %5263 = vmatprep.subr.mxu0 0.0
    %5264 = vmatpush1.msra.mxu0 %v3739
    %5265 = vmatprep.subr.mxu0 0.0
    %5266 = vmatpush1.msra.mxu0 %v3738
    %5267 = vmatprep.subr.mxu0 0.0
    %5268 = vmatpush1.msra.mxu0 %v3737
    %5269 = vmatprep.subr.mxu0 0.0
    %5270 = vmatpush1.msra.mxu0 %v3736
    %5271 = vmatprep.subr.mxu0 0.0
    %5272 = vmatpush1.msra.mxu0 %v3735
    %5273 = vmatprep.subr.mxu0 0.0
    %5274 = vmatpush1.msra.mxu0 %v3734
    %5275 = vmatprep.subr.mxu0 0.0
    %5276 = vmatpush1.msra.mxu0 %v3733
    %5277 = vmatprep.subr.mxu0 0.0
    %5278 = vmatpush2.msra.mxu0 0.0
    %5279 = vmatprep.subr.mxu0 0.0
    %5280 = vmatpush2.msra.mxu0 0.0
    %5281 = vmatprep.subr.mxu0 0.0
    %5282 = vmatpush2.msra.mxu0 0.0
    %5283 = vmatprep.subr.mxu0 0.0
    %5284 = vmatpush2.msra.mxu0 0.0
    %5285 = vmatprep.subr.mxu0 0.0
    %5286 = vmatpush2.msra.mxu0 0.0
    %5287 = vmatprep.subr.mxu0 0.0
    %5288 = vmatpush2.msra.mxu0 0.0
    %5289 = vmatprep.subr.mxu0 0.0
    %5290 = vmatpush2.msra.mxu0 0.0
    %5291 = vmatprep.subr.mxu0 0.0
    %5292 = vmatpush2.msra.mxu0 0.0
    %5293 = vmatprep.subr.mxu0 0.0
    %5294 = vmatpush2.msra.mxu0 0.0
    %5295 = vmatprep.subr.mxu0 0.0
    %5296 = vmatpush2.msra.mxu0 0.0
    %5297 = vmatprep.subr.mxu0 0.0
    %5298 = vmatpush2.msra.mxu0 0.0
    %5299 = vmatprep.subr.mxu0 0.0
    %5300 = vmatpush2.msra.mxu0 0.0
    %5301 = vmatprep.subr.mxu0 0.0
    %5302 = vmatpush2.msra.mxu0 0.0
    %5303 = vmatprep.subr.mxu0 0.0
    %5304 = vmatpush2.msra.mxu0 0.0
    %5305 = vmatprep.subr.mxu0 0.0
    %5306 = vmatpush2.msra.mxu0 0.0
    %5307 = vmatprep.subr.mxu0 0.0
    %5308 = vmatpush2.msra.mxu0 0.0
    %5309 = vmatprep.mubr.f32.mxu0 0.0
    %5310 = vmatmul.mubr.f32.gmra.mxu0 %v2271
    %v5311 = vpop.f32.mrf.mxu0
    %v5312 = vadd.f32 0.0, %v5311
    %v5313 = vpop.f32.mrf.mxu0
    %5314 = vmatprep.mubr.f32.mxu0 0.0
    %5315 = vmatmul.mubr.f32.gmra.mxu0 %v2274
    %v5316 = vpop.f32.mrf.mxu0
    %v5317 = vadd.f32 0.0, %v5316
    %v5318 = vpop.f32.mrf.mxu0
    %5319 = vmatprep.mubr.f32.mxu0 0.0
    %5320 = vmatmul.mubr.f32.gmra.mxu0 %v2277
    %v5321 = vpop.f32.mrf.mxu0
    %v5322 = vadd.f32 0.0, %v5321
    %v5323 = vpop.f32.mrf.mxu0
    %5324 = vmatprep.mubr.f32.mxu0 0.0
    %5325 = vmatmul.mubr.f32.gmra.mxu0 %v2280
    %v5326 = vpop.f32.mrf.mxu0
    %v5327 = vadd.f32 0.0, %v5326
    %v5328 = vpop.f32.mrf.mxu0
    %5329 = vdwg.mxu0
    %s5330 = scalar_lea.vmem %s17, 128
    %v5331 = vld [vmem:[%s5330] sm:$0xff]
    %v5332 = vld [vmem:[%s5330 + $0x8] sm:$0xff]
    %v5334 = vsel %vm834, %v5312, 0
    %v5337 = vsel %vm834, %v5317, 0
    %v5340 = vsel %vm834, %v5322, 0
    %v5343 = vsel %vm834, %v5327, 0
    %5345 = vmatprep.subr.mxu0 0.0
    %5346 = vmatpush1.msra.mxu0 0.0
    %5347 = vmatprep.subr.mxu0 0.0
    %5348 = vmatpush1.msra.mxu0 0.0
    %5349 = vmatprep.subr.mxu0 0.0
    %5350 = vmatpush1.msra.mxu0 0.0
    %5351 = vmatprep.subr.mxu0 0.0
    %5352 = vmatpush1.msra.mxu0 0.0
    %5353 = vmatprep.subr.mxu0 0.0
    %5354 = vmatpush1.msra.mxu0 0.0
    %5355 = vmatprep.subr.mxu0 0.0
    %5356 = vmatpush1.msra.mxu0 0.0
    %5357 = vmatprep.subr.mxu0 0.0
    %5358 = vmatpush1.msra.mxu0 0.0
    %5359 = vmatprep.subr.mxu0 0.0
    %5360 = vmatpush1.msra.mxu0 0.0
    %5361 = vmatprep.subr.mxu0 0.0
    %5362 = vmatpush1.msra.mxu0 0.0
    %5363 = vmatprep.subr.mxu0 0.0
    %5364 = vmatpush1.msra.mxu0 0.0
    %5365 = vmatprep.subr.mxu0 0.0
    %5366 = vmatpush1.msra.mxu0 0.0
    %5367 = vmatprep.subr.mxu0 0.0
    %5368 = vmatpush1.msra.mxu0 0.0
    %5369 = vmatprep.subr.mxu0 0.0
    %5370 = vmatpush1.msra.mxu0 0.0
    %5371 = vmatprep.subr.mxu0 0.0
    %5372 = vmatpush1.msra.mxu0 0.0
    %5373 = vmatprep.subr.mxu0 0.0
    %5374 = vmatpush1.msra.mxu0 %v5332
    %5375 = vmatprep.subr.mxu0 0.0
    %5376 = vmatpush1.msra.mxu0 %v5331
    %5377 = vmatprep.subr.mxu0 0.0
    %5378 = vmatpush2.msra.mxu0 0.0
    %5379 = vmatprep.subr.mxu0 0.0
    %5380 = vmatpush2.msra.mxu0 0.0
    %5381 = vmatprep.subr.mxu0 0.0
    %5382 = vmatpush2.msra.mxu0 0.0
    %5383 = vmatprep.subr.mxu0 0.0
    %5384 = vmatpush2.msra.mxu0 0.0
    %5385 = vmatprep.subr.mxu0 0.0
    %5386 = vmatpush2.msra.mxu0 0.0
    %5387 = vmatprep.subr.mxu0 0.0
    %5388 = vmatpush2.msra.mxu0 0.0
    %5389 = vmatprep.subr.mxu0 0.0
    %5390 = vmatpush2.msra.mxu0 0.0
    %5391 = vmatprep.subr.mxu0 0.0
    %5392 = vmatpush2.msra.mxu0 0.0
    %5393 = vmatprep.subr.mxu0 0.0
    %5394 = vmatpush2.msra.mxu0 0.0
    %5395 = vmatprep.subr.mxu0 0.0
    %5396 = vmatpush2.msra.mxu0 0.0
    %5397 = vmatprep.subr.mxu0 0.0
    %5398 = vmatpush2.msra.mxu0 0.0
    %5399 = vmatprep.subr.mxu0 0.0
    %5400 = vmatpush2.msra.mxu0 0.0
    %5401 = vmatprep.subr.mxu0 0.0
    %5402 = vmatpush2.msra.mxu0 0.0
    %5403 = vmatprep.subr.mxu0 0.0
    %5404 = vmatpush2.msra.mxu0 0.0
    %5405 = vmatprep.subr.mxu0 0.0
    %5406 = vmatpush2.msra.mxu0 0.0
    %5407 = vmatprep.subr.mxu0 0.0
    %5408 = vmatpush2.msra.mxu0 0.0
    %5409 = vmatprep.mubr.f32.mxu0 0.0
    %5410 = vmatmul.mubr.f32.gmra.mxu0 %v5334
    %v5411 = vpop.f32.mrf.mxu0
    %v5412 = vadd.f32 0.0, %v5411
    %v5413 = vpop.f32.mrf.mxu0
    %5414 = vmatprep.mubr.f32.mxu0 0.0
    %5415 = vmatmul.mubr.f32.gmra.mxu0 %v5337
    %v5416 = vpop.f32.mrf.mxu0
    %v5417 = vadd.f32 0.0, %v5416
    %v5418 = vpop.f32.mrf.mxu0
    %5419 = vmatprep.mubr.f32.mxu0 0.0
    %5420 = vmatmul.mubr.f32.gmra.mxu0 %v5340
    %v5421 = vpop.f32.mrf.mxu0
    %v5422 = vadd.f32 0.0, %v5421
    %v5423 = vpop.f32.mrf.mxu0
    %5424 = vmatprep.mubr.f32.mxu0 0.0
    %5425 = vmatmul.mubr.f32.gmra.mxu0 %v5343
    %v5426 = vpop.f32.mrf.mxu0
    %v5427 = vadd.f32 0.0, %v5426
    %v5428 = vpop.f32.mrf.mxu0
    %5429 = vdwg.mxu0
    %v5430 = vadd.f32 %v5241, %v5412
    %v5431 = vadd.f32 %v5242, %v5417
    %v5432 = vadd.f32 %v5243, %v5422
    %v5433 = vadd.f32 %v5244, %v5427
    %v5435 = vlaneseq
    %v5436 = vshrl.u32 %v5435, 7
    %v5437 = vsub.s32 0, %v5436
    %v5438 = vrot.slane %v3299, %v5437
    %v5440 = vadd.f32 %v5430, %v5438
    %v5441 = vadd.f32 %v5431, %v5438
    %v5442 = vadd.f32 %v5432, %v5438
    %v5443 = vadd.f32 %v5433, %v5438
    %v5444 = vmax.f32 %v5440, %v5441
    %v5445 = vmax.f32 %v5442, %v5443
    %v5446 = vmax.f32 %v5444, %v5445
    %vm5447 = vcmp.ge.f32.partialorder %v5446, 0.0
    %v5448 = vmul.f32 %v5446, 0.01
    %v5449 = vsel %vm5447, %v5446, %v5448
    %5450 = vmatprep.subr.mxu0 0.0
    %5451 = vmatpush1.msra.mxu0 0.0
    %5452 = vmatprep.subr.mxu0 0.0
    %5453 = vmatpush1.msra.mxu0 0.0
    %5454 = vmatprep.subr.mxu0 0.0
    %5455 = vmatpush1.msra.mxu0 0.0
    %5456 = vmatprep.subr.mxu0 0.0
    %5457 = vmatpush1.msra.mxu0 0.0
    %5458 = vmatprep.subr.mxu0 0.0
    %5459 = vmatpush1.msra.mxu0 0.0
    %5460 = vmatprep.subr.mxu0 0.0
    %5461 = vmatpush1.msra.mxu0 0.0
    %5462 = vmatprep.subr.mxu0 0.0
    %5463 = vmatpush1.msra.mxu0 0.0
    %5464 = vmatprep.subr.mxu0 0.0
    %5465 = vmatpush1.msra.mxu0 0.0
    %5466 = vmatprep.subr.mxu0 0.0
    %5467 = vmatpush1.msra.mxu0 0.0
    %5468 = vmatprep.subr.mxu0 0.0
    %5469 = vmatpush1.msra.mxu0 0.0
    %5470 = vmatprep.subr.mxu0 0.0
    %5471 = vmatpush1.msra.mxu0 0.0
    %5472 = vmatprep.subr.mxu0 0.0
    %5473 = vmatpush1.msra.mxu0 0.0
    %5474 = vmatprep.subr.mxu0 0.0
    %5475 = vmatpush1.msra.mxu0 0.0
    %5476 = vmatprep.subr.mxu0 0.0
    %5477 = vmatpush1.msra.mxu0 0.0
    %5478 = vmatprep.subr.mxu0 0.0
    %5479 = vmatpush1.msra.mxu0 0.0
    %5480 = vmatprep.subr.mxu0 0.0
    %5481 = vmatpush1.msra.mxu0 %v5449
    %5482 = vmatprep.subr.mxu0 0.0
    %5483 = vmatpush2.msra.mxu0 0.0
    %5484 = vmatprep.subr.mxu0 0.0
    %5485 = vmatpush2.msra.mxu0 0.0
    %5486 = vmatprep.subr.mxu0 0.0
    %5487 = vmatpush2.msra.mxu0 0.0
    %5488 = vmatprep.subr.mxu0 0.0
    %5489 = vmatpush2.msra.mxu0 0.0
    %5490 = vmatprep.subr.mxu0 0.0
    %5491 = vmatpush2.msra.mxu0 0.0
    %5492 = vmatprep.subr.mxu0 0.0
    %5493 = vmatpush2.msra.mxu0 0.0
    %5494 = vmatprep.subr.mxu0 0.0
    %5495 = vmatpush2.msra.mxu0 0.0
    %5496 = vmatprep.subr.mxu0 0.0
    %5497 = vmatpush2.msra.mxu0 0.0
    %5498 = vmatprep.subr.mxu0 0.0
    %5499 = vmatpush2.msra.mxu0 0.0
    %5500 = vmatprep.subr.mxu0 0.0
    %5501 = vmatpush2.msra.mxu0 0.0
    %5502 = vmatprep.subr.mxu0 0.0
    %5503 = vmatpush2.msra.mxu0 0.0
    %5504 = vmatprep.subr.mxu0 0.0
    %5505 = vmatpush2.msra.mxu0 0.0
    %5506 = vmatprep.subr.mxu0 0.0
    %5507 = vmatpush2.msra.mxu0 0.0
    %5508 = vmatprep.subr.mxu0 0.0
    %5509 = vmatpush2.msra.mxu0 0.0
    %5510 = vmatprep.subr.mxu0 0.0
    %5511 = vmatpush2.msra.mxu0 0.0
    %5512 = vmatprep.subr.mxu0 0.0
    %5513 = vmatpush2.msra.mxu0 0.0
    %5514 = vmatprep.mubr.f32.mxu0 0.0
    %5515 = vmatmul.mubr.f32.gmra.mxu0 %v2490
    %v5516 = vpop.f32.mrf.mxu0
    %v5517 = vadd.f32 0.0, %v5516
    %v5518 = vpop.f32.mrf.mxu0
    %5519 = vdwg.mxu0
    %5520 = vmatprep.subr.mxu0 0.0
    %5521 = vmatpush1.msra.mxu0 0.0
    %5522 = vmatprep.subr.mxu0 0.0
    %5523 = vmatpush1.msra.mxu0 0.0
    %5524 = vmatprep.subr.mxu0 0.0
    %5525 = vmatpush1.msra.mxu0 0.0
    %5526 = vmatprep.subr.mxu0 0.0
    %5527 = vmatpush1.msra.mxu0 0.0
    %5528 = vmatprep.subr.mxu0 0.0
    %5529 = vmatpush1.msra.mxu0 0.0
    %5530 = vmatprep.subr.mxu0 0.0
    %5531 = vmatpush1.msra.mxu0 0.0
    %5532 = vmatprep.subr.mxu0 0.0
    %5533 = vmatpush1.msra.mxu0 0.0
    %5534 = vmatprep.subr.mxu0 0.0
    %5535 = vmatpush1.msra.mxu0 0.0
    %5536 = vmatprep.subr.mxu0 0.0
    %5537 = vmatpush1.msra.mxu0 0.0
    %5538 = vmatprep.subr.mxu0 0.0
    %5539 = vmatpush1.msra.mxu0 0.0
    %5540 = vmatprep.subr.mxu0 0.0
    %5541 = vmatpush1.msra.mxu0 0.0
    %5542 = vmatprep.subr.mxu0 0.0
    %5543 = vmatpush1.msra.mxu0 0.0
    %5544 = vmatprep.subr.mxu0 0.0
    %5545 = vmatpush1.msra.mxu0 0.0
    %5546 = vmatprep.subr.mxu0 0.0
    %5547 = vmatpush1.msra.mxu0 0.0
    %5548 = vmatprep.subr.mxu0 0.0
    %5549 = vmatpush1.msra.mxu0 0.0
    %5550 = vmatprep.subr.mxu0 0.0
    %5551 = vmatpush1.msra.mxu0 %v5449
    %5552 = vmatprep.subr.mxu0 0.0
    %5553 = vmatpush2.msra.mxu0 0.0
    %5554 = vmatprep.subr.mxu0 0.0
    %5555 = vmatpush2.msra.mxu0 0.0
    %5556 = vmatprep.subr.mxu0 0.0
    %5557 = vmatpush2.msra.mxu0 0.0
    %5558 = vmatprep.subr.mxu0 0.0
    %5559 = vmatpush2.msra.mxu0 0.0
    %5560 = vmatprep.subr.mxu0 0.0
    %5561 = vmatpush2.msra.mxu0 0.0
    %5562 = vmatprep.subr.mxu0 0.0
    %5563 = vmatpush2.msra.mxu0 0.0
    %5564 = vmatprep.subr.mxu0 0.0
    %5565 = vmatpush2.msra.mxu0 0.0
    %5566 = vmatprep.subr.mxu0 0.0
    %5567 = vmatpush2.msra.mxu0 0.0
    %5568 = vmatprep.subr.mxu0 0.0
    %5569 = vmatpush2.msra.mxu0 0.0
    %5570 = vmatprep.subr.mxu0 0.0
    %5571 = vmatpush2.msra.mxu0 0.0
    %5572 = vmatprep.subr.mxu0 0.0
    %5573 = vmatpush2.msra.mxu0 0.0
    %5574 = vmatprep.subr.mxu0 0.0
    %5575 = vmatpush2.msra.mxu0 0.0
    %5576 = vmatprep.subr.mxu0 0.0
    %5577 = vmatpush2.msra.mxu0 0.0
    %5578 = vmatprep.subr.mxu0 0.0
    %5579 = vmatpush2.msra.mxu0 0.0
    %5580 = vmatprep.subr.mxu0 0.0
    %5581 = vmatpush2.msra.mxu0 0.0
    %5582 = vmatprep.subr.mxu0 0.0
    %5583 = vmatpush2.msra.mxu0 0.0
    %5584 = vmatprep.mubr.f32.mxu0 0.0
    %5585 = vmatmul.mubr.f32.gmra.mxu0 %v2569
    %v5586 = vpop.f32.mrf.mxu0
    %v5587 = vadd.f32 0.0, %v5586
    %v5588 = vpop.f32.mrf.mxu0
    %5589 = vdwg.mxu0
    %v5591 = vsel %vm2646, %v5587, 0
    %5593 = vmatprep.subr.mxu0 0.0
    %5594 = vmatpush1.msra.mxu0 0.0
    %5595 = vmatprep.subr.mxu0 0.0
    %5596 = vmatpush1.msra.mxu0 0.0
    %5597 = vmatprep.subr.mxu0 0.0
    %5598 = vmatpush1.msra.mxu0 0.0
    %5599 = vmatprep.subr.mxu0 0.0
    %5600 = vmatpush1.msra.mxu0 0.0
    %5601 = vmatprep.subr.mxu0 0.0
    %5602 = vmatpush1.msra.mxu0 0.0
    %5603 = vmatprep.subr.mxu0 0.0
    %5604 = vmatpush1.msra.mxu0 0.0
    %5605 = vmatprep.subr.mxu0 0.0
    %5606 = vmatpush1.msra.mxu0 0.0
    %5607 = vmatprep.subr.mxu0 0.0
    %5608 = vmatpush1.msra.mxu0 0.0
    %5609 = vmatprep.subr.mxu0 0.0
    %5610 = vmatpush1.msra.mxu0 0.0
    %5611 = vmatprep.subr.mxu0 0.0
    %5612 = vmatpush1.msra.mxu0 0.0
    %5613 = vmatprep.subr.mxu0 0.0
    %5614 = vmatpush1.msra.mxu0 0.0
    %5615 = vmatprep.subr.mxu0 0.0
    %5616 = vmatpush1.msra.mxu0 0.0
    %5617 = vmatprep.subr.mxu0 0.0
    %5618 = vmatpush1.msra.mxu0 %v2645
    %5619 = vmatprep.subr.mxu0 0.0
    %5620 = vmatpush1.msra.mxu0 %v2644
    %5621 = vmatprep.subr.mxu0 0.0
    %5622 = vmatpush1.msra.mxu0 %v2643
    %5623 = vmatprep.subr.mxu0 0.0
    %5624 = vmatpush1.msra.mxu0 %v2642
    %5625 = vmatprep.subr.mxu0 0.0
    %5626 = vmatpush2.msra.mxu0 0.0
    %5627 = vmatprep.subr.mxu0 0.0
    %5628 = vmatpush2.msra.mxu0 0.0
    %5629 = vmatprep.subr.mxu0 0.0
    %5630 = vmatpush2.msra.mxu0 0.0
    %5631 = vmatprep.subr.mxu0 0.0
    %5632 = vmatpush2.msra.mxu0 0.0
    %5633 = vmatprep.subr.mxu0 0.0
    %5634 = vmatpush2.msra.mxu0 0.0
    %5635 = vmatprep.subr.mxu0 0.0
    %5636 = vmatpush2.msra.mxu0 0.0
    %5637 = vmatprep.subr.mxu0 0.0
    %5638 = vmatpush2.msra.mxu0 0.0
    %5639 = vmatprep.subr.mxu0 0.0
    %5640 = vmatpush2.msra.mxu0 0.0
    %5641 = vmatprep.subr.mxu0 0.0
    %5642 = vmatpush2.msra.mxu0 0.0
    %5643 = vmatprep.subr.mxu0 0.0
    %5644 = vmatpush2.msra.mxu0 0.0
    %5645 = vmatprep.subr.mxu0 0.0
    %5646 = vmatpush2.msra.mxu0 0.0
    %5647 = vmatprep.subr.mxu0 0.0
    %5648 = vmatpush2.msra.mxu0 0.0
    %5649 = vmatprep.subr.mxu0 0.0
    %5650 = vmatpush2.msra.mxu0 0.0
    %5651 = vmatprep.subr.mxu0 0.0
    %5652 = vmatpush2.msra.mxu0 0.0
    %5653 = vmatprep.subr.mxu0 0.0
    %5654 = vmatpush2.msra.mxu0 0.0
    %5655 = vmatprep.subr.mxu0 0.0
    %5656 = vmatpush2.msra.mxu0 0.0
    %5657 = vmatprep.mubr.f32.mxu0 0.0
    %5658 = vmatmul.mubr.f32.gmra.mxu0 %v5591
    %v5659 = vpop.f32.mrf.mxu0
    %v5660 = vadd.f32 0.0, %v5659
    %v5661 = vpop.f32.mrf.mxu0
    %5662 = vdwg.mxu0
    %v5664 = vsel %vm2646, %v5517, 0
    %5666 = vmatprep.subr.mxu0 0.0
    %5667 = vmatpush1.msra.mxu0 0.0
    %5668 = vmatprep.subr.mxu0 0.0
    %5669 = vmatpush1.msra.mxu0 0.0
    %5670 = vmatprep.subr.mxu0 0.0
    %5671 = vmatpush1.msra.mxu0 0.0
    %5672 = vmatprep.subr.mxu0 0.0
    %5673 = vmatpush1.msra.mxu0 0.0
    %5674 = vmatprep.subr.mxu0 0.0
    %5675 = vmatpush1.msra.mxu0 0.0
    %5676 = vmatprep.subr.mxu0 0.0
    %5677 = vmatpush1.msra.mxu0 0.0
    %5678 = vmatprep.subr.mxu0 0.0
    %5679 = vmatpush1.msra.mxu0 0.0
    %5680 = vmatprep.subr.mxu0 0.0
    %5681 = vmatpush1.msra.mxu0 0.0
    %5682 = vmatprep.subr.mxu0 0.0
    %5683 = vmatpush1.msra.mxu0 0.0
    %5684 = vmatprep.subr.mxu0 0.0
    %5685 = vmatpush1.msra.mxu0 0.0
    %5686 = vmatprep.subr.mxu0 0.0
    %5687 = vmatpush1.msra.mxu0 0.0
    %5688 = vmatprep.subr.mxu0 0.0
    %5689 = vmatpush1.msra.mxu0 0.0
    %5690 = vmatprep.subr.mxu0 0.0
    %5691 = vmatpush1.msra.mxu0 %v2565
    %5692 = vmatprep.subr.mxu0 0.0
    %5693 = vmatpush1.msra.mxu0 %v2564
    %5694 = vmatprep.subr.mxu0 0.0
    %5695 = vmatpush1.msra.mxu0 %v2563
    %5696 = vmatprep.subr.mxu0 0.0
    %5697 = vmatpush1.msra.mxu0 %v2562
    %5698 = vmatprep.subr.mxu0 0.0
    %5699 = vmatpush2.msra.mxu0 0.0
    %5700 = vmatprep.subr.mxu0 0.0
    %5701 = vmatpush2.msra.mxu0 0.0
    %5702 = vmatprep.subr.mxu0 0.0
    %5703 = vmatpush2.msra.mxu0 0.0
    %5704 = vmatprep.subr.mxu0 0.0
    %5705 = vmatpush2.msra.mxu0 0.0
    %5706 = vmatprep.subr.mxu0 0.0
    %5707 = vmatpush2.msra.mxu0 0.0
    %5708 = vmatprep.subr.mxu0 0.0
    %5709 = vmatpush2.msra.mxu0 0.0
    %5710 = vmatprep.subr.mxu0 0.0
    %5711 = vmatpush2.msra.mxu0 0.0
    %5712 = vmatprep.subr.mxu0 0.0
    %5713 = vmatpush2.msra.mxu0 0.0
    %5714 = vmatprep.subr.mxu0 0.0
    %5715 = vmatpush2.msra.mxu0 0.0
    %5716 = vmatprep.subr.mxu0 0.0
    %5717 = vmatpush2.msra.mxu0 0.0
    %5718 = vmatprep.subr.mxu0 0.0
    %5719 = vmatpush2.msra.mxu0 0.0
    %5720 = vmatprep.subr.mxu0 0.0
    %5721 = vmatpush2.msra.mxu0 0.0
    %5722 = vmatprep.subr.mxu0 0.0
    %5723 = vmatpush2.msra.mxu0 0.0
    %5724 = vmatprep.subr.mxu0 0.0
    %5725 = vmatpush2.msra.mxu0 0.0
    %5726 = vmatprep.subr.mxu0 0.0
    %5727 = vmatpush2.msra.mxu0 0.0
    %5728 = vmatprep.subr.mxu0 0.0
    %5729 = vmatpush2.msra.mxu0 0.0
    %5730 = vmatprep.mubr.f32.mxu0 0.0
    %5731 = vmatmul.mubr.f32.gmra.mxu0 %v5664
    %v5732 = vpop.f32.mrf.mxu0
    %v5733 = vadd.f32 %v5660, %v5732
    %v5734 = vpop.f32.mrf.mxu0
    %5735 = vdwg.mxu0
    %5736 = vmatprep.subr.mxu0 0.0
    %5737 = vmatpush1.msra.mxu0 0.0
    %5738 = vmatprep.subr.mxu0 0.0
    %5739 = vmatpush1.msra.mxu0 0.0
    %5740 = vmatprep.subr.mxu0 0.0
    %5741 = vmatpush1.msra.mxu0 0.0
    %5742 = vmatprep.subr.mxu0 0.0
    %5743 = vmatpush1.msra.mxu0 0.0
    %5744 = vmatprep.subr.mxu0 0.0
    %5745 = vmatpush1.msra.mxu0 0.0
    %5746 = vmatprep.subr.mxu0 0.0
    %5747 = vmatpush1.msra.mxu0 0.0
    %5748 = vmatprep.subr.mxu0 0.0
    %5749 = vmatpush1.msra.mxu0 0.0
    %5750 = vmatprep.subr.mxu0 0.0
    %5751 = vmatpush1.msra.mxu0 0.0
    %5752 = vmatprep.subr.mxu0 0.0
    %5753 = vmatpush1.msra.mxu0 0.0
    %5754 = vmatprep.subr.mxu0 0.0
    %5755 = vmatpush1.msra.mxu0 0.0
    %5756 = vmatprep.subr.mxu0 0.0
    %5757 = vmatpush1.msra.mxu0 0.0
    %5758 = vmatprep.subr.mxu0 0.0
    %5759 = vmatpush1.msra.mxu0 0.0
    %5760 = vmatprep.subr.mxu0 0.0
    %5761 = vmatpush1.msra.mxu0 0.0
    %5762 = vmatprep.subr.mxu0 0.0
    %5763 = vmatpush1.msra.mxu0 0.0
    %5764 = vmatprep.subr.mxu0 0.0
    %5765 = vmatpush1.msra.mxu0 0.0
    %5766 = vmatprep.subr.mxu0 0.0
    %5767 = vmatpush1.msra.mxu0 %v5449
    %5768 = vmatprep.subr.mxu0 0.0
    %5769 = vmatpush2.msra.mxu0 0.0
    %5770 = vmatprep.subr.mxu0 0.0
    %5771 = vmatpush2.msra.mxu0 0.0
    %5772 = vmatprep.subr.mxu0 0.0
    %5773 = vmatpush2.msra.mxu0 0.0
    %5774 = vmatprep.subr.mxu0 0.0
    %5775 = vmatpush2.msra.mxu0 0.0
    %5776 = vmatprep.subr.mxu0 0.0
    %5777 = vmatpush2.msra.mxu0 0.0
    %5778 = vmatprep.subr.mxu0 0.0
    %5779 = vmatpush2.msra.mxu0 0.0
    %5780 = vmatprep.subr.mxu0 0.0
    %5781 = vmatpush2.msra.mxu0 0.0
    %5782 = vmatprep.subr.mxu0 0.0
    %5783 = vmatpush2.msra.mxu0 0.0
    %5784 = vmatprep.subr.mxu0 0.0
    %5785 = vmatpush2.msra.mxu0 0.0
    %5786 = vmatprep.subr.mxu0 0.0
    %5787 = vmatpush2.msra.mxu0 0.0
    %5788 = vmatprep.subr.mxu0 0.0
    %5789 = vmatpush2.msra.mxu0 0.0
    %5790 = vmatprep.subr.mxu0 0.0
    %5791 = vmatpush2.msra.mxu0 0.0
    %5792 = vmatprep.subr.mxu0 0.0
    %5793 = vmatpush2.msra.mxu0 0.0
    %5794 = vmatprep.subr.mxu0 0.0
    %5795 = vmatpush2.msra.mxu0 0.0
    %5796 = vmatprep.subr.mxu0 0.0
    %5797 = vmatpush2.msra.mxu0 0.0
    %5798 = vmatprep.subr.mxu0 0.0
    %5799 = vmatpush2.msra.mxu0 0.0
    %5800 = vmatprep.mubr.f32.mxu0 0.0
    %5801 = vmatmul.mubr.f32.gmra.mxu0 %v2796
    %v5802 = vpop.f32.mrf.mxu0
    %v5803 = vadd.f32 0.0, %v5802
    %v5804 = vpop.f32.mrf.mxu0
    %5805 = vdwg.mxu0
    %v5807 = vsel %vm2646, %v5803, 0
    %5809 = vmatprep.subr.mxu0 0.0
    %5810 = vmatpush1.msra.mxu0 0.0
    %5811 = vmatprep.subr.mxu0 0.0
    %5812 = vmatpush1.msra.mxu0 0.0
    %5813 = vmatprep.subr.mxu0 0.0
    %5814 = vmatpush1.msra.mxu0 0.0
    %5815 = vmatprep.subr.mxu0 0.0
    %5816 = vmatpush1.msra.mxu0 0.0
    %5817 = vmatprep.subr.mxu0 0.0
    %5818 = vmatpush1.msra.mxu0 0.0
    %5819 = vmatprep.subr.mxu0 0.0
    %5820 = vmatpush1.msra.mxu0 0.0
    %5821 = vmatprep.subr.mxu0 0.0
    %5822 = vmatpush1.msra.mxu0 0.0
    %5823 = vmatprep.subr.mxu0 0.0
    %5824 = vmatpush1.msra.mxu0 0.0
    %5825 = vmatprep.subr.mxu0 0.0
    %5826 = vmatpush1.msra.mxu0 0.0
    %5827 = vmatprep.subr.mxu0 0.0
    %5828 = vmatpush1.msra.mxu0 0.0
    %5829 = vmatprep.subr.mxu0 0.0
    %5830 = vmatpush1.msra.mxu0 0.0
    %5831 = vmatprep.subr.mxu0 0.0
    %5832 = vmatpush1.msra.mxu0 0.0
    %5833 = vmatprep.subr.mxu0 0.0
    %5834 = vmatpush1.msra.mxu0 %v2872
    %5835 = vmatprep.subr.mxu0 0.0
    %5836 = vmatpush1.msra.mxu0 %v2871
    %5837 = vmatprep.subr.mxu0 0.0
    %5838 = vmatpush1.msra.mxu0 %v2870
    %5839 = vmatprep.subr.mxu0 0.0
    %5840 = vmatpush1.msra.mxu0 %v2869
    %5841 = vmatprep.subr.mxu0 0.0
    %5842 = vmatpush2.msra.mxu0 0.0
    %5843 = vmatprep.subr.mxu0 0.0
    %5844 = vmatpush2.msra.mxu0 0.0
    %5845 = vmatprep.subr.mxu0 0.0
    %5846 = vmatpush2.msra.mxu0 0.0
    %5847 = vmatprep.subr.mxu0 0.0
    %5848 = vmatpush2.msra.mxu0 0.0
    %5849 = vmatprep.subr.mxu0 0.0
    %5850 = vmatpush2.msra.mxu0 0.0
    %5851 = vmatprep.subr.mxu0 0.0
    %5852 = vmatpush2.msra.mxu0 0.0
    %5853 = vmatprep.subr.mxu0 0.0
    %5854 = vmatpush2.msra.mxu0 0.0
    %5855 = vmatprep.subr.mxu0 0.0
    %5856 = vmatpush2.msra.mxu0 0.0
    %5857 = vmatprep.subr.mxu0 0.0
    %5858 = vmatpush2.msra.mxu0 0.0
    %5859 = vmatprep.subr.mxu0 0.0
    %5860 = vmatpush2.msra.mxu0 0.0
    %5861 = vmatprep.subr.mxu0 0.0
    %5862 = vmatpush2.msra.mxu0 0.0
    %5863 = vmatprep.subr.mxu0 0.0
    %5864 = vmatpush2.msra.mxu0 0.0
    %5865 = vmatprep.subr.mxu0 0.0
    %5866 = vmatpush2.msra.mxu0 0.0
    %5867 = vmatprep.subr.mxu0 0.0
    %5868 = vmatpush2.msra.mxu0 0.0
    %5869 = vmatprep.subr.mxu0 0.0
    %5870 = vmatpush2.msra.mxu0 0.0
    %5871 = vmatprep.subr.mxu0 0.0
    %5872 = vmatpush2.msra.mxu0 0.0
    %5873 = vmatprep.mubr.f32.mxu0 0.0
    %5874 = vmatmul.mubr.f32.gmra.mxu0 %v5807
    %v5875 = vpop.f32.mrf.mxu0
    %v5876 = vadd.f32 0.0, %v5875
    %v5877 = vpop.f32.mrf.mxu0
    %5878 = vdwg.mxu0
    %v5879 = vadd.f32 %v5733, %v5876
    %5880 = vmatprep.subr.mxu0 0.0
    %5881 = vmatpush1.msra.mxu0 0.0
    %5882 = vmatprep.subr.mxu0 0.0
    %5883 = vmatpush1.msra.mxu0 0.0
    %5884 = vmatprep.subr.mxu0 0.0
    %5885 = vmatpush1.msra.mxu0 0.0
    %5886 = vmatprep.subr.mxu0 0.0
    %5887 = vmatpush1.msra.mxu0 0.0
    %5888 = vmatprep.subr.mxu0 0.0
    %5889 = vmatpush1.msra.mxu0 0.0
    %5890 = vmatprep.subr.mxu0 0.0
    %5891 = vmatpush1.msra.mxu0 0.0
    %5892 = vmatprep.subr.mxu0 0.0
    %5893 = vmatpush1.msra.mxu0 0.0
    %5894 = vmatprep.subr.mxu0 0.0
    %5895 = vmatpush1.msra.mxu0 0.0
    %5896 = vmatprep.subr.mxu0 0.0
    %5897 = vmatpush1.msra.mxu0 0.0
    %5898 = vmatprep.subr.mxu0 0.0
    %5899 = vmatpush1.msra.mxu0 0.0
    %5900 = vmatprep.subr.mxu0 0.0
    %5901 = vmatpush1.msra.mxu0 0.0
    %5902 = vmatprep.subr.mxu0 0.0
    %5903 = vmatpush1.msra.mxu0 0.0
    %5904 = vmatprep.subr.mxu0 0.0
    %5905 = vmatpush1.msra.mxu0 0.0
    %5906 = vmatprep.subr.mxu0 0.0
    %5907 = vmatpush1.msra.mxu0 0.0
    %5908 = vmatprep.subr.mxu0 0.0
    %5909 = vmatpush1.msra.mxu0 0.0
    %5910 = vmatprep.subr.mxu0 0.0
    %5911 = vmatpush1.msra.mxu0 %v5449
    %5912 = vmatprep.subr.mxu0 0.0
    %5913 = vmatpush2.msra.mxu0 0.0
    %5914 = vmatprep.subr.mxu0 0.0
    %5915 = vmatpush2.msra.mxu0 0.0
    %5916 = vmatprep.subr.mxu0 0.0
    %5917 = vmatpush2.msra.mxu0 0.0
    %5918 = vmatprep.subr.mxu0 0.0
    %5919 = vmatpush2.msra.mxu0 0.0
    %5920 = vmatprep.subr.mxu0 0.0
    %5921 = vmatpush2.msra.mxu0 0.0
    %5922 = vmatprep.subr.mxu0 0.0
    %5923 = vmatpush2.msra.mxu0 0.0
    %5924 = vmatprep.subr.mxu0 0.0
    %5925 = vmatpush2.msra.mxu0 0.0
    %5926 = vmatprep.subr.mxu0 0.0
    %5927 = vmatpush2.msra.mxu0 0.0
    %5928 = vmatprep.subr.mxu0 0.0
    %5929 = vmatpush2.msra.mxu0 0.0
    %5930 = vmatprep.subr.mxu0 0.0
    %5931 = vmatpush2.msra.mxu0 0.0
    %5932 = vmatprep.subr.mxu0 0.0
    %5933 = vmatpush2.msra.mxu0 0.0
    %5934 = vmatprep.subr.mxu0 0.0
    %5935 = vmatpush2.msra.mxu0 0.0
    %5936 = vmatprep.subr.mxu0 0.0
    %5937 = vmatpush2.msra.mxu0 0.0
    %5938 = vmatprep.subr.mxu0 0.0
    %5939 = vmatpush2.msra.mxu0 0.0
    %5940 = vmatprep.subr.mxu0 0.0
    %5941 = vmatpush2.msra.mxu0 0.0
    %5942 = vmatprep.subr.mxu0 0.0
    %5943 = vmatpush2.msra.mxu0 0.0
    %5944 = vmatprep.mubr.f32.mxu0 0.0
    %5945 = vmatmul.mubr.f32.gmra.mxu0 %v2950
    %v5946 = vpop.f32.mrf.mxu0
    %v5947 = vadd.f32 0.0, %v5946
    %v5948 = vpop.f32.mrf.mxu0
    %5949 = vdwg.mxu0
    %v5951 = vsel %vm2646, %v5947, 0
    %5953 = vmatprep.subr.mxu0 0.0
    %5954 = vmatpush1.msra.mxu0 0.0
    %5955 = vmatprep.subr.mxu0 0.0
    %5956 = vmatpush1.msra.mxu0 0.0
    %5957 = vmatprep.subr.mxu0 0.0
    %5958 = vmatpush1.msra.mxu0 0.0
    %5959 = vmatprep.subr.mxu0 0.0
    %5960 = vmatpush1.msra.mxu0 0.0
    %5961 = vmatprep.subr.mxu0 0.0
    %5962 = vmatpush1.msra.mxu0 0.0
    %5963 = vmatprep.subr.mxu0 0.0
    %5964 = vmatpush1.msra.mxu0 0.0
    %5965 = vmatprep.subr.mxu0 0.0
    %5966 = vmatpush1.msra.mxu0 0.0
    %5967 = vmatprep.subr.mxu0 0.0
    %5968 = vmatpush1.msra.mxu0 0.0
    %5969 = vmatprep.subr.mxu0 0.0
    %5970 = vmatpush1.msra.mxu0 0.0
    %5971 = vmatprep.subr.mxu0 0.0
    %5972 = vmatpush1.msra.mxu0 0.0
    %5973 = vmatprep.subr.mxu0 0.0
    %5974 = vmatpush1.msra.mxu0 0.0
    %5975 = vmatprep.subr.mxu0 0.0
    %5976 = vmatpush1.msra.mxu0 0.0
    %5977 = vmatprep.subr.mxu0 0.0
    %5978 = vmatpush1.msra.mxu0 %v3026
    %5979 = vmatprep.subr.mxu0 0.0
    %5980 = vmatpush1.msra.mxu0 %v3025
    %5981 = vmatprep.subr.mxu0 0.0
    %5982 = vmatpush1.msra.mxu0 %v3024
    %5983 = vmatprep.subr.mxu0 0.0
    %5984 = vmatpush1.msra.mxu0 %v3023
    %5985 = vmatprep.subr.mxu0 0.0
    %5986 = vmatpush2.msra.mxu0 0.0
    %5987 = vmatprep.subr.mxu0 0.0
    %5988 = vmatpush2.msra.mxu0 0.0
    %5989 = vmatprep.subr.mxu0 0.0
    %5990 = vmatpush2.msra.mxu0 0.0
    %5991 = vmatprep.subr.mxu0 0.0
    %5992 = vmatpush2.msra.mxu0 0.0
    %5993 = vmatprep.subr.mxu0 0.0
    %5994 = vmatpush2.msra.mxu0 0.0
    %5995 = vmatprep.subr.mxu0 0.0
    %5996 = vmatpush2.msra.mxu0 0.0
    %5997 = vmatprep.subr.mxu0 0.0
    %5998 = vmatpush2.msra.mxu0 0.0
    %5999 = vmatprep.subr.mxu0 0.0
    %6000 = vmatpush2.msra.mxu0 0.0
    %6001 = vmatprep.subr.mxu0 0.0
    %6002 = vmatpush2.msra.mxu0 0.0
    %6003 = vmatprep.subr.mxu0 0.0
    %6004 = vmatpush2.msra.mxu0 0.0
    %6005 = vmatprep.subr.mxu0 0.0
    %6006 = vmatpush2.msra.mxu0 0.0
    %6007 = vmatprep.subr.mxu0 0.0
    %6008 = vmatpush2.msra.mxu0 0.0
    %6009 = vmatprep.subr.mxu0 0.0
    %6010 = vmatpush2.msra.mxu0 0.0
    %6011 = vmatprep.subr.mxu0 0.0
    %6012 = vmatpush2.msra.mxu0 0.0
    %6013 = vmatprep.subr.mxu0 0.0
    %6014 = vmatpush2.msra.mxu0 0.0
    %6015 = vmatprep.subr.mxu0 0.0
    %6016 = vmatpush2.msra.mxu0 0.0
    %6017 = vmatprep.mubr.f32.mxu0 0.0
    %6018 = vmatmul.mubr.f32.gmra.mxu0 %v5951
    %v6019 = vpop.f32.mrf.mxu0
    %v6020 = vadd.f32 0.0, %v6019
    %v6021 = vpop.f32.mrf.mxu0
    %6022 = vdwg.mxu0
    %v6023 = vadd.f32 %v5879, %v6020
    %v6025 = vlaneseq
    %v6026 = vshrl.u32 %v6025, 7
    %v6027 = vsub.s32 0, %v6026
    %v6028 = vrot.slane %v3316, %v6027
    %6030 = vmatprep.subr.mxu0 0.0
    %6031 = vmatpush1.msra.mxu0 %v3315
    %6032 = vmatprep.subr.mxu0 0.0
    %6033 = vmatpush1.msra.mxu0 %v3314
    %6034 = vmatprep.subr.mxu0 0.0
    %6035 = vmatpush1.msra.mxu0 %v3313
    %6036 = vmatprep.subr.mxu0 0.0
    %6037 = vmatpush1.msra.mxu0 %v3312
    %6038 = vmatprep.subr.mxu0 0.0
    %6039 = vmatpush1.msra.mxu0 %v3311
    %6040 = vmatprep.subr.mxu0 0.0
    %6041 = vmatpush1.msra.mxu0 %v3310
    %6042 = vmatprep.subr.mxu0 0.0
    %6043 = vmatpush1.msra.mxu0 %v3309
    %6044 = vmatprep.subr.mxu0 0.0
    %6045 = vmatpush1.msra.mxu0 %v3308
    %6046 = vmatprep.subr.mxu0 0.0
    %6047 = vmatpush1.msra.mxu0 %v3307
    %6048 = vmatprep.subr.mxu0 0.0
    %6049 = vmatpush1.msra.mxu0 %v3306
    %6050 = vmatprep.subr.mxu0 0.0
    %6051 = vmatpush1.msra.mxu0 %v3305
    %6052 = vmatprep.subr.mxu0 0.0
    %6053 = vmatpush1.msra.mxu0 %v3304
    %6054 = vmatprep.subr.mxu0 0.0
    %6055 = vmatpush1.msra.mxu0 %v3303
    %6056 = vmatprep.subr.mxu0 0.0
    %6057 = vmatpush1.msra.mxu0 %v3302
    %6058 = vmatprep.subr.mxu0 0.0
    %6059 = vmatpush1.msra.mxu0 %v3301
    %6060 = vmatprep.subr.mxu0 0.0
    %6061 = vmatpush1.msra.mxu0 %v3300
    %6062 = vmatprep.subr.mxu0 0.0
    %6063 = vmatpush2.msra.mxu0 0.0
    %6064 = vmatprep.subr.mxu0 0.0
    %6065 = vmatpush2.msra.mxu0 0.0
    %6066 = vmatprep.subr.mxu0 0.0
    %6067 = vmatpush2.msra.mxu0 0.0
    %6068 = vmatprep.subr.mxu0 0.0
    %6069 = vmatpush2.msra.mxu0 0.0
    %6070 = vmatprep.subr.mxu0 0.0
    %6071 = vmatpush2.msra.mxu0 0.0
    %6072 = vmatprep.subr.mxu0 0.0
    %6073 = vmatpush2.msra.mxu0 0.0
    %6074 = vmatprep.subr.mxu0 0.0
    %6075 = vmatpush2.msra.mxu0 0.0
    %6076 = vmatprep.subr.mxu0 0.0
    %6077 = vmatpush2.msra.mxu0 0.0
    %6078 = vmatprep.subr.mxu0 0.0
    %6079 = vmatpush2.msra.mxu0 0.0
    %6080 = vmatprep.subr.mxu0 0.0
    %6081 = vmatpush2.msra.mxu0 0.0
    %6082 = vmatprep.subr.mxu0 0.0
    %6083 = vmatpush2.msra.mxu0 0.0
    %6084 = vmatprep.subr.mxu0 0.0
    %6085 = vmatpush2.msra.mxu0 0.0
    %6086 = vmatprep.subr.mxu0 0.0
    %6087 = vmatpush2.msra.mxu0 0.0
    %6088 = vmatprep.subr.mxu0 0.0
    %6089 = vmatpush2.msra.mxu0 0.0
    %6090 = vmatprep.subr.mxu0 0.0
    %6091 = vmatpush2.msra.mxu0 0.0
    %6092 = vmatprep.subr.mxu0 0.0
    %6093 = vmatpush2.msra.mxu0 0.0
    %6094 = vmatprep.mubr.f32.mxu0 0.0
    %6095 = vmatmul.mubr.f32.gmra.mxu0 %v6023
    %v6096 = vpop.f32.mrf.mxu0
    %v6097 = vadd.f32 %v6028, %v6096
    %v6098 = vpop.f32.mrf.mxu0
    %6099 = vdwg.mxu0
    %vm6100 = vcmp.ge.f32.partialorder %v6097, 0.0
    %v6101 = vmul.f32 %v6097, 0.01
    %v6102 = vsel %vm6100, %v6097, %v6101
    %v6104 = vlaneseq
    %v6105 = vshrl.u32 %v6104, 7
    %v6106 = vsub.s32 0, %v6105
    %v6107 = vrot.slane %v3325, %v6106
    %v6110 = vsel %vm3186, %v6102, 0
    %6112 = vmatprep.subr.mxu0 0.0
    %6113 = vmatpush1.msra.mxu0 0.0
    %6114 = vmatprep.subr.mxu0 0.0
    %6115 = vmatpush1.msra.mxu0 0.0
    %6116 = vmatprep.subr.mxu0 0.0
    %6117 = vmatpush1.msra.mxu0 0.0
    %6118 = vmatprep.subr.mxu0 0.0
    %6119 = vmatpush1.msra.mxu0 0.0
    %6120 = vmatprep.subr.mxu0 0.0
    %6121 = vmatpush1.msra.mxu0 0.0
    %6122 = vmatprep.subr.mxu0 0.0
    %6123 = vmatpush1.msra.mxu0 0.0
    %6124 = vmatprep.subr.mxu0 0.0
    %6125 = vmatpush1.msra.mxu0 0.0
    %6126 = vmatprep.subr.mxu0 0.0
    %6127 = vmatpush1.msra.mxu0 0.0
    %6128 = vmatprep.subr.mxu0 0.0
    %6129 = vmatpush1.msra.mxu0 %v3324
    %6130 = vmatprep.subr.mxu0 0.0
    %6131 = vmatpush1.msra.mxu0 %v3323
    %6132 = vmatprep.subr.mxu0 0.0
    %6133 = vmatpush1.msra.mxu0 %v3322
    %6134 = vmatprep.subr.mxu0 0.0
    %6135 = vmatpush1.msra.mxu0 %v3321
    %6136 = vmatprep.subr.mxu0 0.0
    %6137 = vmatpush1.msra.mxu0 %v3320
    %6138 = vmatprep.subr.mxu0 0.0
    %6139 = vmatpush1.msra.mxu0 %v3319
    %6140 = vmatprep.subr.mxu0 0.0
    %6141 = vmatpush1.msra.mxu0 %v3318
    %6142 = vmatprep.subr.mxu0 0.0
    %6143 = vmatpush1.msra.mxu0 %v3317
    %6144 = vmatprep.subr.mxu0 0.0
    %6145 = vmatpush2.msra.mxu0 0.0
    %6146 = vmatprep.subr.mxu0 0.0
    %6147 = vmatpush2.msra.mxu0 0.0
    %6148 = vmatprep.subr.mxu0 0.0
    %6149 = vmatpush2.msra.mxu0 0.0
    %6150 = vmatprep.subr.mxu0 0.0
    %6151 = vmatpush2.msra.mxu0 0.0
    %6152 = vmatprep.subr.mxu0 0.0
    %6153 = vmatpush2.msra.mxu0 0.0
    %6154 = vmatprep.subr.mxu0 0.0
    %6155 = vmatpush2.msra.mxu0 0.0
    %6156 = vmatprep.subr.mxu0 0.0
    %6157 = vmatpush2.msra.mxu0 0.0
    %6158 = vmatprep.subr.mxu0 0.0
    %6159 = vmatpush2.msra.mxu0 0.0
    %6160 = vmatprep.subr.mxu0 0.0
    %6161 = vmatpush2.msra.mxu0 0.0
    %6162 = vmatprep.subr.mxu0 0.0
    %6163 = vmatpush2.msra.mxu0 0.0
    %6164 = vmatprep.subr.mxu0 0.0
    %6165 = vmatpush2.msra.mxu0 0.0
    %6166 = vmatprep.subr.mxu0 0.0
    %6167 = vmatpush2.msra.mxu0 0.0
    %6168 = vmatprep.subr.mxu0 0.0
    %6169 = vmatpush2.msra.mxu0 0.0
    %6170 = vmatprep.subr.mxu0 0.0
    %6171 = vmatpush2.msra.mxu0 0.0
    %6172 = vmatprep.subr.mxu0 0.0
    %6173 = vmatpush2.msra.mxu0 0.0
    %6174 = vmatprep.subr.mxu0 0.0
    %6175 = vmatpush2.msra.mxu0 0.0
    %6176 = vmatprep.mubr.f32.mxu0 0.0
    %6177 = vmatmul.mubr.f32.gmra.mxu0 %v6110
    %v6178 = vpop.f32.mrf.mxu0
    %v6179 = vadd.f32 %v6107, %v6178
    %v6180 = vpop.f32.mrf.mxu0
    %6181 = vdwg.mxu0
    %v6182 = vld [vmem:[%s37] sm:$0xff]
    %v6183 = vld [vmem:[%s37 + $0x8] sm:$0xff]
    %v6184 = vld [vmem:[%s37 + $0x10] sm:$0xff]
    %v6185 = vld [vmem:[%s37 + $0x18] sm:$0xff]
    %v6186 = vld [vmem:[%s37 + $0x20] sm:$0xff]
    %v6187 = vld [vmem:[%s37 + $0x28] sm:$0xff]
    %v6188 = vld [vmem:[%s37 + $0x30] sm:$0xff]
    %v6189 = vld [vmem:[%s37 + $0x38] sm:$0xff]
    %v6190 = vld [vmem:[%s37 + $0x40] sm:$0xff]
    %v6191 = vld [vmem:[%s37 + $0x48] sm:$0xff]
    %v6192 = vld [vmem:[%s37 + $0x50] sm:$0xff]
    %v6193 = vld [vmem:[%s37 + $0x58] sm:$0xff]
    %v6194 = vld [vmem:[%s37 + $0x60] sm:$0xff]
    %v6195 = vld [vmem:[%s37 + $0x68] sm:$0xff]
    %v6196 = vld [vmem:[%s37 + $0x70] sm:$0xff]
    %v6197 = vld [vmem:[%s37 + $0x78] sm:$0xff]
    %v6198 = vld [vmem:[%s39] sm:$0xff]
    %v6199 = vld [vmem:[%s39 + $0x8] sm:$0xff]
    %v6200 = vld [vmem:[%s39 + $0x10] sm:$0xff]
    %v6201 = vld [vmem:[%s39 + $0x18] sm:$0xff]
    %v6202 = vld [vmem:[%s39 + $0x20] sm:$0xff]
    %v6203 = vld [vmem:[%s39 + $0x28] sm:$0xff]
    %v6204 = vld [vmem:[%s39 + $0x30] sm:$0xff]
    %v6205 = vld [vmem:[%s39 + $0x38] sm:$0xff]
    %v6206 = vld [vmem:[%s39 + $0x40] sm:$0xff]
    %v6207 = vld [vmem:[%s39 + $0x48] sm:$0xff]
    %v6208 = vld [vmem:[%s39 + $0x50] sm:$0xff]
    %v6209 = vld [vmem:[%s39 + $0x58] sm:$0xff]
    %v6210 = vld [vmem:[%s39 + $0x60] sm:$0xff]
    %v6211 = vld [vmem:[%s39 + $0x68] sm:$0xff]
    %v6212 = vld [vmem:[%s39 + $0x70] sm:$0xff]
    %v6213 = vld [vmem:[%s39 + $0x78] sm:$0xff]
    %6214 = vmatprep.subr.mxu0 0.0
    %6215 = vmatpush1.msra.mxu0 %v6213
    %6216 = vmatprep.subr.mxu0 0.0
    %6217 = vmatpush1.msra.mxu0 %v6212
    %6218 = vmatprep.subr.mxu0 0.0
    %6219 = vmatpush1.msra.mxu0 %v6211
    %6220 = vmatprep.subr.mxu0 0.0
    %6221 = vmatpush1.msra.mxu0 %v6210
    %6222 = vmatprep.subr.mxu0 0.0
    %6223 = vmatpush1.msra.mxu0 %v6209
    %6224 = vmatprep.subr.mxu0 0.0
    %6225 = vmatpush1.msra.mxu0 %v6208
    %6226 = vmatprep.subr.mxu0 0.0
    %6227 = vmatpush1.msra.mxu0 %v6207
    %6228 = vmatprep.subr.mxu0 0.0
    %6229 = vmatpush1.msra.mxu0 %v6206
    %6230 = vmatprep.subr.mxu0 0.0
    %6231 = vmatpush1.msra.mxu0 %v6205
    %6232 = vmatprep.subr.mxu0 0.0
    %6233 = vmatpush1.msra.mxu0 %v6204
    %6234 = vmatprep.subr.mxu0 0.0
    %6235 = vmatpush1.msra.mxu0 %v6203
    %6236 = vmatprep.subr.mxu0 0.0
    %6237 = vmatpush1.msra.mxu0 %v6202
    %6238 = vmatprep.subr.mxu0 0.0
    %6239 = vmatpush1.msra.mxu0 %v6201
    %6240 = vmatprep.subr.mxu0 0.0
    %6241 = vmatpush1.msra.mxu0 %v6200
    %6242 = vmatprep.subr.mxu0 0.0
    %6243 = vmatpush1.msra.mxu0 %v6199
    %6244 = vmatprep.subr.mxu0 0.0
    %6245 = vmatpush1.msra.mxu0 %v6198
    %6246 = vmatprep.subr.mxu0 0.0
    %6247 = vmatpush2.msra.mxu0 0.0
    %6248 = vmatprep.subr.mxu0 0.0
    %6249 = vmatpush2.msra.mxu0 0.0
    %6250 = vmatprep.subr.mxu0 0.0
    %6251 = vmatpush2.msra.mxu0 0.0
    %6252 = vmatprep.subr.mxu0 0.0
    %6253 = vmatpush2.msra.mxu0 0.0
    %6254 = vmatprep.subr.mxu0 0.0
    %6255 = vmatpush2.msra.mxu0 0.0
    %6256 = vmatprep.subr.mxu0 0.0
    %6257 = vmatpush2.msra.mxu0 0.0
    %6258 = vmatprep.subr.mxu0 0.0
    %6259 = vmatpush2.msra.mxu0 0.0
    %6260 = vmatprep.subr.mxu0 0.0
    %6261 = vmatpush2.msra.mxu0 0.0
    %6262 = vmatprep.subr.mxu0 0.0
    %6263 = vmatpush2.msra.mxu0 0.0
    %6264 = vmatprep.subr.mxu0 0.0
    %6265 = vmatpush2.msra.mxu0 0.0
    %6266 = vmatprep.subr.mxu0 0.0
    %6267 = vmatpush2.msra.mxu0 0.0
    %6268 = vmatprep.subr.mxu0 0.0
    %6269 = vmatpush2.msra.mxu0 0.0
    %6270 = vmatprep.subr.mxu0 0.0
    %6271 = vmatpush2.msra.mxu0 0.0
    %6272 = vmatprep.subr.mxu0 0.0
    %6273 = vmatpush2.msra.mxu0 0.0
    %6274 = vmatprep.subr.mxu0 0.0
    %6275 = vmatpush2.msra.mxu0 0.0
    %6276 = vmatprep.subr.mxu0 0.0
    %6277 = vmatpush2.msra.mxu0 0.0
    %6278 = vmatprep.mubr.f32.mxu0 0.0
    %6279 = vmatmul.mubr.f32.gmra.mxu0 %v6023
    %v6280 = vpop.f32.mrf.mxu0
    %v6281 = vadd.f32 0.0, %v6280
    %v6282 = vpop.f32.mrf.mxu0
    %6283 = vdwg.mxu0
    %6284 = vmatprep.subr.mxu0 0.0
    %6285 = vmatpush1.msra.mxu0 %v6197
    %6286 = vmatprep.subr.mxu0 0.0
    %6287 = vmatpush1.msra.mxu0 %v6196
    %6288 = vmatprep.subr.mxu0 0.0
    %6289 = vmatpush1.msra.mxu0 %v6195
    %6290 = vmatprep.subr.mxu0 0.0
    %6291 = vmatpush1.msra.mxu0 %v6194
    %6292 = vmatprep.subr.mxu0 0.0
    %6293 = vmatpush1.msra.mxu0 %v6193
    %6294 = vmatprep.subr.mxu0 0.0
    %6295 = vmatpush1.msra.mxu0 %v6192
    %6296 = vmatprep.subr.mxu0 0.0
    %6297 = vmatpush1.msra.mxu0 %v6191
    %6298 = vmatprep.subr.mxu0 0.0
    %6299 = vmatpush1.msra.mxu0 %v6190
    %6300 = vmatprep.subr.mxu0 0.0
    %6301 = vmatpush1.msra.mxu0 %v6189
    %6302 = vmatprep.subr.mxu0 0.0
    %6303 = vmatpush1.msra.mxu0 %v6188
    %6304 = vmatprep.subr.mxu0 0.0
    %6305 = vmatpush1.msra.mxu0 %v6187
    %6306 = vmatprep.subr.mxu0 0.0
    %6307 = vmatpush1.msra.mxu0 %v6186
    %6308 = vmatprep.subr.mxu0 0.0
    %6309 = vmatpush1.msra.mxu0 %v6185
    %6310 = vmatprep.subr.mxu0 0.0
    %6311 = vmatpush1.msra.mxu0 %v6184
    %6312 = vmatprep.subr.mxu0 0.0
    %6313 = vmatpush1.msra.mxu0 %v6183
    %6314 = vmatprep.subr.mxu0 0.0
    %6315 = vmatpush1.msra.mxu0 %v6182
    %6316 = vmatprep.subr.mxu0 0.0
    %6317 = vmatpush2.msra.mxu0 0.0
    %6318 = vmatprep.subr.mxu0 0.0
    %6319 = vmatpush2.msra.mxu0 0.0
    %6320 = vmatprep.subr.mxu0 0.0
    %6321 = vmatpush2.msra.mxu0 0.0
    %6322 = vmatprep.subr.mxu0 0.0
    %6323 = vmatpush2.msra.mxu0 0.0
    %6324 = vmatprep.subr.mxu0 0.0
    %6325 = vmatpush2.msra.mxu0 0.0
    %6326 = vmatprep.subr.mxu0 0.0
    %6327 = vmatpush2.msra.mxu0 0.0
    %6328 = vmatprep.subr.mxu0 0.0
    %6329 = vmatpush2.msra.mxu0 0.0
    %6330 = vmatprep.subr.mxu0 0.0
    %6331 = vmatpush2.msra.mxu0 0.0
    %6332 = vmatprep.subr.mxu0 0.0
    %6333 = vmatpush2.msra.mxu0 0.0
    %6334 = vmatprep.subr.mxu0 0.0
    %6335 = vmatpush2.msra.mxu0 0.0
    %6336 = vmatprep.subr.mxu0 0.0
    %6337 = vmatpush2.msra.mxu0 0.0
    %6338 = vmatprep.subr.mxu0 0.0
    %6339 = vmatpush2.msra.mxu0 0.0
    %6340 = vmatprep.subr.mxu0 0.0
    %6341 = vmatpush2.msra.mxu0 0.0
    %6342 = vmatprep.subr.mxu0 0.0
    %6343 = vmatpush2.msra.mxu0 0.0
    %6344 = vmatprep.subr.mxu0 0.0
    %6345 = vmatpush2.msra.mxu0 0.0
    %6346 = vmatprep.subr.mxu0 0.0
    %6347 = vmatpush2.msra.mxu0 0.0
    %6348 = vmatprep.mubr.f32.mxu0 0.0
    %6349 = vmatmul.mubr.f32.gmra.mxu0 %v3100
    %v6350 = vpop.f32.mrf.mxu0
    %v6351 = vadd.f32 %v6281, %v6350
    %v6352 = vpop.f32.mrf.mxu0
    %6353 = vdwg.mxu0
    %v6354 = vld [vmem:[%s41] sm:$0x1]
    %v6356 = vlaneseq
    %v6357 = vshrl.u32 %v6356, 7
    %v6358 = vsub.s32 0, %v6357
    %v6359 = vrot.slane %v6354, %v6358
    %v6361 = vadd.f32 %v6351, %v6359
    %vm6362 = vcmp.ge.f32.partialorder %v6361, 0.0
    %v6363 = vmul.f32 %v6361, 0.01
    %v6364 = vsel %vm6362, %v6361, %v6363
    %v6365 = vld [vmem:[%s43] sm:$0xff]
    %v6366 = vld [vmem:[%s43 + $0x8] sm:$0xff]
    %v6367 = vld [vmem:[%s43 + $0x10] sm:$0xff]
    %v6368 = vld [vmem:[%s43 + $0x18] sm:$0xff]
    %v6369 = vld [vmem:[%s43 + $0x20] sm:$0xff]
    %v6370 = vld [vmem:[%s43 + $0x28] sm:$0xff]
    %v6371 = vld [vmem:[%s43 + $0x30] sm:$0xff]
    %v6372 = vld [vmem:[%s43 + $0x38] sm:$0xff]
    %v6373 = vld [vmem:[%s45] sm:$0x1]
    %v6375 = vlaneseq
    %v6376 = vshrl.u32 %v6375, 7
    %v6377 = vsub.s32 0, %v6376
    %v6378 = vrot.slane %v6373, %v6377
    %v6381 = vsel %vm3186, %v6364, 0
    %6383 = vmatprep.subr.mxu0 0.0
    %6384 = vmatpush1.msra.mxu0 0.0
    %6385 = vmatprep.subr.mxu0 0.0
    %6386 = vmatpush1.msra.mxu0 0.0
    %6387 = vmatprep.subr.mxu0 0.0
    %6388 = vmatpush1.msra.mxu0 0.0
    %6389 = vmatprep.subr.mxu0 0.0
    %6390 = vmatpush1.msra.mxu0 0.0
    %6391 = vmatprep.subr.mxu0 0.0
    %6392 = vmatpush1.msra.mxu0 0.0
    %6393 = vmatprep.subr.mxu0 0.0
    %6394 = vmatpush1.msra.mxu0 0.0
    %6395 = vmatprep.subr.mxu0 0.0
    %6396 = vmatpush1.msra.mxu0 0.0
    %6397 = vmatprep.subr.mxu0 0.0
    %6398 = vmatpush1.msra.mxu0 0.0
    %6399 = vmatprep.subr.mxu0 0.0
    %6400 = vmatpush1.msra.mxu0 %v6372
    %6401 = vmatprep.subr.mxu0 0.0
    %6402 = vmatpush1.msra.mxu0 %v6371
    %6403 = vmatprep.subr.mxu0 0.0
    %6404 = vmatpush1.msra.mxu0 %v6370
    %6405 = vmatprep.subr.mxu0 0.0
    %6406 = vmatpush1.msra.mxu0 %v6369
    %6407 = vmatprep.subr.mxu0 0.0
    %6408 = vmatpush1.msra.mxu0 %v6368
    %6409 = vmatprep.subr.mxu0 0.0
    %6410 = vmatpush1.msra.mxu0 %v6367
    %6411 = vmatprep.subr.mxu0 0.0
    %6412 = vmatpush1.msra.mxu0 %v6366
    %6413 = vmatprep.subr.mxu0 0.0
    %6414 = vmatpush1.msra.mxu0 %v6365
    %6415 = vmatprep.subr.mxu0 0.0
    %6416 = vmatpush2.msra.mxu0 0.0
    %6417 = vmatprep.subr.mxu0 0.0
    %6418 = vmatpush2.msra.mxu0 0.0
    %6419 = vmatprep.subr.mxu0 0.0
    %6420 = vmatpush2.msra.mxu0 0.0
    %6421 = vmatprep.subr.mxu0 0.0
    %6422 = vmatpush2.msra.mxu0 0.0
    %6423 = vmatprep.subr.mxu0 0.0
    %6424 = vmatpush2.msra.mxu0 0.0
    %6425 = vmatprep.subr.mxu0 0.0
    %6426 = vmatpush2.msra.mxu0 0.0
    %6427 = vmatprep.subr.mxu0 0.0
    %6428 = vmatpush2.msra.mxu0 0.0
    %6429 = vmatprep.subr.mxu0 0.0
    %6430 = vmatpush2.msra.mxu0 0.0
    %6431 = vmatprep.subr.mxu0 0.0
    %6432 = vmatpush2.msra.mxu0 0.0
    %6433 = vmatprep.subr.mxu0 0.0
    %6434 = vmatpush2.msra.mxu0 0.0
    %6435 = vmatprep.subr.mxu0 0.0
    %6436 = vmatpush2.msra.mxu0 0.0
    %6437 = vmatprep.subr.mxu0 0.0
    %6438 = vmatpush2.msra.mxu0 0.0
    %6439 = vmatprep.subr.mxu0 0.0
    %6440 = vmatpush2.msra.mxu0 0.0
    %6441 = vmatprep.subr.mxu0 0.0
    %6442 = vmatpush2.msra.mxu0 0.0
    %6443 = vmatprep.subr.mxu0 0.0
    %6444 = vmatpush2.msra.mxu0 0.0
    %6445 = vmatprep.subr.mxu0 0.0
    %6446 = vmatpush2.msra.mxu0 0.0
    %6447 = vmatprep.mubr.f32.mxu0 0.0
    %6448 = vmatmul.mubr.f32.gmra.mxu0 %v6381
    %v6449 = vpop.f32.mrf.mxu0
    %v6450 = vadd.f32 %v6378, %v6449
    %v6451 = vpop.f32.mrf.mxu0
    %6452 = vdwg.mxu0
    %vm6453 = vcmp.ge.f32.partialorder %v6450, 0.0
    %v6454 = vmul.f32 %v6450, 0.01
    %v6455 = vsel %vm6453, %v6450, %v6454
    %v6456 = vld [vmem:[%s47] sm:$0xff]
    %v6457 = vld [vmem:[%s47 + $0x8] sm:$0xff]
    %v6458 = vld [vmem:[%s47 + $0x10] sm:$0xff]
    %v6459 = vld [vmem:[%s47 + $0x18] sm:$0xff]
    %v6460 = vld [vmem:[%s49] sm:$0xff]
    %v6461 = vld [vmem:[%s49 + $0x8] sm:$0x3]
    %vm6462 = vcmask 80896
    %v6464 = vsel %vm6462, %v3257, 0
    %vm6466 = vcmask 1041408
    %v6468 = vsel %vm6466, %v6461, 0
    %6470 = vmatprep.subr.mxu0 0.0
    %6471 = vmatpush1.msra.mxu0 0.0
    %6472 = vmatprep.subr.mxu0 0.0
    %6473 = vmatpush1.msra.mxu0 0.0
    %6474 = vmatprep.subr.mxu0 0.0
    %6475 = vmatpush1.msra.mxu0 0.0
    %6476 = vmatprep.subr.mxu0 0.0
    %6477 = vmatpush1.msra.mxu0 0.0
    %6478 = vmatprep.subr.mxu0 0.0
    %6479 = vmatpush1.msra.mxu0 0.0
    %6480 = vmatprep.subr.mxu0 0.0
    %6481 = vmatpush1.msra.mxu0 0.0
    %6482 = vmatprep.subr.mxu0 0.0
    %6483 = vmatpush1.msra.mxu0 0.0
    %6484 = vmatprep.subr.mxu0 0.0
    %6485 = vmatpush1.msra.mxu0 0.0
    %6486 = vmatprep.subr.mxu0 0.0
    %6487 = vmatpush1.msra.mxu0 0.0
    %6488 = vmatprep.subr.mxu0 0.0
    %6489 = vmatpush1.msra.mxu0 0.0
    %6490 = vmatprep.subr.mxu0 0.0
    %6491 = vmatpush1.msra.mxu0 0.0
    %6492 = vmatprep.subr.mxu0 0.0
    %6493 = vmatpush1.msra.mxu0 0.0
    %6494 = vmatprep.subr.mxu0 0.0
    %6495 = vmatpush1.msra.mxu0 0.0
    %6496 = vmatprep.subr.mxu0 0.0
    %6497 = vmatpush1.msra.mxu0 0.0
    %6498 = vmatprep.subr.mxu0 0.0
    %6499 = vmatpush1.msra.mxu0 %v6468
    %6500 = vmatprep.subr.mxu0 0.0
    %6501 = vmatpush1.msra.mxu0 %v6460
    %6502 = vmatprep.subr.mxu0 0.0
    %6503 = vmatpush2.msra.mxu0 0.0
    %6504 = vmatprep.subr.mxu0 0.0
    %6505 = vmatpush2.msra.mxu0 0.0
    %6506 = vmatprep.subr.mxu0 0.0
    %6507 = vmatpush2.msra.mxu0 0.0
    %6508 = vmatprep.subr.mxu0 0.0
    %6509 = vmatpush2.msra.mxu0 0.0
    %6510 = vmatprep.subr.mxu0 0.0
    %6511 = vmatpush2.msra.mxu0 0.0
    %6512 = vmatprep.subr.mxu0 0.0
    %6513 = vmatpush2.msra.mxu0 0.0
    %6514 = vmatprep.subr.mxu0 0.0
    %6515 = vmatpush2.msra.mxu0 0.0
    %6516 = vmatprep.subr.mxu0 0.0
    %6517 = vmatpush2.msra.mxu0 0.0
    %6518 = vmatprep.subr.mxu0 0.0
    %6519 = vmatpush2.msra.mxu0 0.0
    %6520 = vmatprep.subr.mxu0 0.0
    %6521 = vmatpush2.msra.mxu0 0.0
    %6522 = vmatprep.subr.mxu0 0.0
    %6523 = vmatpush2.msra.mxu0 0.0
    %6524 = vmatprep.subr.mxu0 0.0
    %6525 = vmatpush2.msra.mxu0 0.0
    %6526 = vmatprep.subr.mxu0 0.0
    %6527 = vmatpush2.msra.mxu0 0.0
    %6528 = vmatprep.subr.mxu0 0.0
    %6529 = vmatpush2.msra.mxu0 0.0
    %6530 = vmatprep.subr.mxu0 0.0
    %6531 = vmatpush2.msra.mxu0 0.0
    %6532 = vmatprep.subr.mxu0 0.0
    %6533 = vmatpush2.msra.mxu0 0.0
    %6534 = vmatprep.mubr.f32.mxu0 0.0
    %6535 = vmatmul.mubr.f32.gmra.mxu0 %v6464
    %v6536 = vpop.f32.mrf.mxu0
    %v6537 = vadd.f32 0.0, %v6536
    %v6538 = vpop.f32.mrf.mxu0
    %6539 = vdwg.mxu0
    %v6541 = vsel %vm2646, %v6455, 0
    %6543 = vmatprep.subr.mxu0 0.0
    %6544 = vmatpush1.msra.mxu0 0.0
    %6545 = vmatprep.subr.mxu0 0.0
    %6546 = vmatpush1.msra.mxu0 0.0
    %6547 = vmatprep.subr.mxu0 0.0
    %6548 = vmatpush1.msra.mxu0 0.0
    %6549 = vmatprep.subr.mxu0 0.0
    %6550 = vmatpush1.msra.mxu0 0.0
    %6551 = vmatprep.subr.mxu0 0.0
    %6552 = vmatpush1.msra.mxu0 0.0
    %6553 = vmatprep.subr.mxu0 0.0
    %6554 = vmatpush1.msra.mxu0 0.0
    %6555 = vmatprep.subr.mxu0 0.0
    %6556 = vmatpush1.msra.mxu0 0.0
    %6557 = vmatprep.subr.mxu0 0.0
    %6558 = vmatpush1.msra.mxu0 0.0
    %6559 = vmatprep.subr.mxu0 0.0
    %6560 = vmatpush1.msra.mxu0 0.0
    %6561 = vmatprep.subr.mxu0 0.0
    %6562 = vmatpush1.msra.mxu0 0.0
    %6563 = vmatprep.subr.mxu0 0.0
    %6564 = vmatpush1.msra.mxu0 0.0
    %6565 = vmatprep.subr.mxu0 0.0
    %6566 = vmatpush1.msra.mxu0 0.0
    %6567 = vmatprep.subr.mxu0 0.0
    %6568 = vmatpush1.msra.mxu0 %v6459
    %6569 = vmatprep.subr.mxu0 0.0
    %6570 = vmatpush1.msra.mxu0 %v6458
    %6571 = vmatprep.subr.mxu0 0.0
    %6572 = vmatpush1.msra.mxu0 %v6457
    %6573 = vmatprep.subr.mxu0 0.0
    %6574 = vmatpush1.msra.mxu0 %v6456
    %6575 = vmatprep.subr.mxu0 0.0
    %6576 = vmatpush2.msra.mxu0 0.0
    %6577 = vmatprep.subr.mxu0 0.0
    %6578 = vmatpush2.msra.mxu0 0.0
    %6579 = vmatprep.subr.mxu0 0.0
    %6580 = vmatpush2.msra.mxu0 0.0
    %6581 = vmatprep.subr.mxu0 0.0
    %6582 = vmatpush2.msra.mxu0 0.0
    %6583 = vmatprep.subr.mxu0 0.0
    %6584 = vmatpush2.msra.mxu0 0.0
    %6585 = vmatprep.subr.mxu0 0.0
    %6586 = vmatpush2.msra.mxu0 0.0
    %6587 = vmatprep.subr.mxu0 0.0
    %6588 = vmatpush2.msra.mxu0 0.0
    %6589 = vmatprep.subr.mxu0 0.0
    %6590 = vmatpush2.msra.mxu0 0.0
    %6591 = vmatprep.subr.mxu0 0.0
    %6592 = vmatpush2.msra.mxu0 0.0
    %6593 = vmatprep.subr.mxu0 0.0
    %6594 = vmatpush2.msra.mxu0 0.0
    %6595 = vmatprep.subr.mxu0 0.0
    %6596 = vmatpush2.msra.mxu0 0.0
    %6597 = vmatprep.subr.mxu0 0.0
    %6598 = vmatpush2.msra.mxu0 0.0
    %6599 = vmatprep.subr.mxu0 0.0
    %6600 = vmatpush2.msra.mxu0 0.0
    %6601 = vmatprep.subr.mxu0 0.0
    %6602 = vmatpush2.msra.mxu0 0.0
    %6603 = vmatprep.subr.mxu0 0.0
    %6604 = vmatpush2.msra.mxu0 0.0
    %6605 = vmatprep.subr.mxu0 0.0
    %6606 = vmatpush2.msra.mxu0 0.0
    %6607 = vmatprep.mubr.f32.mxu0 0.0
    %6608 = vmatmul.mubr.f32.gmra.mxu0 %v6541
    %v6609 = vpop.f32.mrf.mxu0
    %v6610 = vadd.f32 %v6537, %v6609
    %v6611 = vpop.f32.mrf.mxu0
    %6612 = vdwg.mxu0
    %v6613 = vld [vmem:[%s51] sm:$0xff]
    %v6614 = vld [vmem:[%s51 + $0x8] sm:$0x3]
    %v6616 = vsel %vm6462, %v6179, 0
    %v6619 = vsel %vm6466, %v6614, 0
    %6621 = vmatprep.subr.mxu0 0.0
    %6622 = vmatpush1.msra.mxu0 0.0
    %6623 = vmatprep.subr.mxu0 0.0
    %6624 = vmatpush1.msra.mxu0 0.0
    %6625 = vmatprep.subr.mxu0 0.0
    %6626 = vmatpush1.msra.mxu0 0.0
    %6627 = vmatprep.subr.mxu0 0.0
    %6628 = vmatpush1.msra.mxu0 0.0
    %6629 = vmatprep.subr.mxu0 0.0
    %6630 = vmatpush1.msra.mxu0 0.0
    %6631 = vmatprep.subr.mxu0 0.0
    %6632 = vmatpush1.msra.mxu0 0.0
    %6633 = vmatprep.subr.mxu0 0.0
    %6634 = vmatpush1.msra.mxu0 0.0
    %6635 = vmatprep.subr.mxu0 0.0
    %6636 = vmatpush1.msra.mxu0 0.0
    %6637 = vmatprep.subr.mxu0 0.0
    %6638 = vmatpush1.msra.mxu0 0.0
    %6639 = vmatprep.subr.mxu0 0.0
    %6640 = vmatpush1.msra.mxu0 0.0
    %6641 = vmatprep.subr.mxu0 0.0
    %6642 = vmatpush1.msra.mxu0 0.0
    %6643 = vmatprep.subr.mxu0 0.0
    %6644 = vmatpush1.msra.mxu0 0.0
    %6645 = vmatprep.subr.mxu0 0.0
    %6646 = vmatpush1.msra.mxu0 0.0
    %6647 = vmatprep.subr.mxu0 0.0
    %6648 = vmatpush1.msra.mxu0 0.0
    %6649 = vmatprep.subr.mxu0 0.0
    %6650 = vmatpush1.msra.mxu0 %v6619
    %6651 = vmatprep.subr.mxu0 0.0
    %6652 = vmatpush1.msra.mxu0 %v6613
    %6653 = vmatprep.subr.mxu0 0.0
    %6654 = vmatpush2.msra.mxu0 0.0
    %6655 = vmatprep.subr.mxu0 0.0
    %6656 = vmatpush2.msra.mxu0 0.0
    %6657 = vmatprep.subr.mxu0 0.0
    %6658 = vmatpush2.msra.mxu0 0.0
    %6659 = vmatprep.subr.mxu0 0.0
    %6660 = vmatpush2.msra.mxu0 0.0
    %6661 = vmatprep.subr.mxu0 0.0
    %6662 = vmatpush2.msra.mxu0 0.0
    %6663 = vmatprep.subr.mxu0 0.0
    %6664 = vmatpush2.msra.mxu0 0.0
    %6665 = vmatprep.subr.mxu0 0.0
    %6666 = vmatpush2.msra.mxu0 0.0
    %6667 = vmatprep.subr.mxu0 0.0
    %6668 = vmatpush2.msra.mxu0 0.0
    %6669 = vmatprep.subr.mxu0 0.0
    %6670 = vmatpush2.msra.mxu0 0.0
    %6671 = vmatprep.subr.mxu0 0.0
    %6672 = vmatpush2.msra.mxu0 0.0
    %6673 = vmatprep.subr.mxu0 0.0
    %6674 = vmatpush2.msra.mxu0 0.0
    %6675 = vmatprep.subr.mxu0 0.0
    %6676 = vmatpush2.msra.mxu0 0.0
    %6677 = vmatprep.subr.mxu0 0.0
    %6678 = vmatpush2.msra.mxu0 0.0
    %6679 = vmatprep.subr.mxu0 0.0
    %6680 = vmatpush2.msra.mxu0 0.0
    %6681 = vmatprep.subr.mxu0 0.0
    %6682 = vmatpush2.msra.mxu0 0.0
    %6683 = vmatprep.subr.mxu0 0.0
    %6684 = vmatpush2.msra.mxu0 0.0
    %6685 = vmatprep.mubr.f32.mxu0 0.0
    %6686 = vmatmul.mubr.f32.gmra.mxu0 %v6616
    %v6687 = vpop.f32.mrf.mxu0
    %v6688 = vadd.f32 0.0, %v6687
    %v6689 = vpop.f32.mrf.mxu0
    %6690 = vdwg.mxu0
    %v6691 = vadd.f32 %v6610, %v6688
    %v6692 = vld [vmem:[%s53] sm:$0x1]
    %v6694 = vlaneseq
    %v6695 = vshrl.u32 %v6694, 7
    %v6696 = vsub.s32 0, %v6695
    %v6697 = vrot.slane %v6692, %v6696
    %v6699 = vadd.f32 %v6691, %v6697
    %vm6700 = vcmp.ge.f32.partialorder %v6699, 0.0
    %v6701 = vmul.f32 %v6699, 0.01
    %v6702 = vsel %vm6700, %v6699, %v6701
    %v6703 = vld [vmem:[%s55] sm:$0xff]
    %v6704 = vld [vmem:[%s55 + $0x8] sm:$0xff]
    %v6705 = vld [vmem:[%s55 + $0x10] sm:$0xff]
    %v6706 = vld [vmem:[%s55 + $0x18] sm:$0xff]
    %v6707 = vld [vmem:[%s57] sm:$0x1]
    %v6709 = vlaneseq
    %v6710 = vshrl.u32 %v6709, 7
    %v6711 = vsub.s32 0, %v6710
    %v6712 = vrot.slane %v6707, %v6711
    %v6715 = vsel %vm2646, %v6702, 0
    %6717 = vmatprep.subr.mxu0 0.0
    %6718 = vmatpush1.msra.mxu0 0.0
    %6719 = vmatprep.subr.mxu0 0.0
    %6720 = vmatpush1.msra.mxu0 0.0
    %6721 = vmatprep.subr.mxu0 0.0
    %6722 = vmatpush1.msra.mxu0 0.0
    %6723 = vmatprep.subr.mxu0 0.0
    %6724 = vmatpush1.msra.mxu0 0.0
    %6725 = vmatprep.subr.mxu0 0.0
    %6726 = vmatpush1.msra.mxu0 0.0
    %6727 = vmatprep.subr.mxu0 0.0
    %6728 = vmatpush1.msra.mxu0 0.0
    %6729 = vmatprep.subr.mxu0 0.0
    %6730 = vmatpush1.msra.mxu0 0.0
    %6731 = vmatprep.subr.mxu0 0.0
    %6732 = vmatpush1.msra.mxu0 0.0
    %6733 = vmatprep.subr.mxu0 0.0
    %6734 = vmatpush1.msra.mxu0 0.0
    %6735 = vmatprep.subr.mxu0 0.0
    %6736 = vmatpush1.msra.mxu0 0.0
    %6737 = vmatprep.subr.mxu0 0.0
    %6738 = vmatpush1.msra.mxu0 0.0
    %6739 = vmatprep.subr.mxu0 0.0
    %6740 = vmatpush1.msra.mxu0 0.0
    %6741 = vmatprep.subr.mxu0 0.0
    %6742 = vmatpush1.msra.mxu0 %v6706
    %6743 = vmatprep.subr.mxu0 0.0
    %6744 = vmatpush1.msra.mxu0 %v6705
    %6745 = vmatprep.subr.mxu0 0.0
    %6746 = vmatpush1.msra.mxu0 %v6704
    %6747 = vmatprep.subr.mxu0 0.0
    %6748 = vmatpush1.msra.mxu0 %v6703
    %6749 = vmatprep.subr.mxu0 0.0
    %6750 = vmatpush2.msra.mxu0 0.0
    %6751 = vmatprep.subr.mxu0 0.0
    %6752 = vmatpush2.msra.mxu0 0.0
    %6753 = vmatprep.subr.mxu0 0.0
    %6754 = vmatpush2.msra.mxu0 0.0
    %6755 = vmatprep.subr.mxu0 0.0
    %6756 = vmatpush2.msra.mxu0 0.0
    %6757 = vmatprep.subr.mxu0 0.0
    %6758 = vmatpush2.msra.mxu0 0.0
    %6759 = vmatprep.subr.mxu0 0.0
    %6760 = vmatpush2.msra.mxu0 0.0
    %6761 = vmatprep.subr.mxu0 0.0
    %6762 = vmatpush2.msra.mxu0 0.0
    %6763 = vmatprep.subr.mxu0 0.0
    %6764 = vmatpush2.msra.mxu0 0.0
    %6765 = vmatprep.subr.mxu0 0.0
    %6766 = vmatpush2.msra.mxu0 0.0
    %6767 = vmatprep.subr.mxu0 0.0
    %6768 = vmatpush2.msra.mxu0 0.0
    %6769 = vmatprep.subr.mxu0 0.0
    %6770 = vmatpush2.msra.mxu0 0.0
    %6771 = vmatprep.subr.mxu0 0.0
    %6772 = vmatpush2.msra.mxu0 0.0
    %6773 = vmatprep.subr.mxu0 0.0
    %6774 = vmatpush2.msra.mxu0 0.0
    %6775 = vmatprep.subr.mxu0 0.0
    %6776 = vmatpush2.msra.mxu0 0.0
    %6777 = vmatprep.subr.mxu0 0.0
    %6778 = vmatpush2.msra.mxu0 0.0
    %6779 = vmatprep.subr.mxu0 0.0
    %6780 = vmatpush2.msra.mxu0 0.0
    %6781 = vmatprep.mubr.f32.mxu0 0.0
    %6782 = vmatmul.mubr.f32.gmra.mxu0 %v6715
    %v6783 = vpop.f32.mrf.mxu0
    %v6784 = vadd.f32 %v6712, %v6783
    %v6785 = vpop.f32.mrf.mxu0
    %6786 = vdwg.mxu0
    %vm6787 = vcmask 9216
    %6788 = vst.msk [vmem:[#allocation2] sm:$0x3] %vm6787, %v6784
    %vm6789 = vcmask 74752
    %6790 = vst.msk [vmem:[#allocation4] sm:$0x3] %vm6789, %v3257
    %6791 = vst.msk [vmem:[#allocation6] sm:$0x3] %vm6789, %v6179
    // Predicated region
    $region130: #{forward.1} parent=1 // pred_check
      _
    $region131: #{forward.1} parent=1 // pred_check_branch
      %6793 = sbr.rel (0) target = $region133
    $region132: #{forward.1} parent=1 // pred_region
      %s6795 = ssub.s32 32, 32
      %6796 = vsyncadd [#allocation3], %s6795
      %s6798 = sshll.u32 [#allocation2], 4
      %s6799 = int_to_ptr.vmem [resolvable:$true] %s6798
      %6801 = dma.vmem_to_hbm [thread:$0]  %s6799, 32, %s65, [#allocation3]
    $region133: #{forward.1} parent=1 // pred_fallthru
      _
    // Predicated region
    $region134: #{forward.1} parent=1 // pred_check
      _
    $region135: #{forward.1} parent=1 // pred_check_branch
      %6803 = sbr.rel (0) target = $region137
    $region136: #{forward.1} parent=1 // pred_region
      %s6805 = ssub.s32 32, 32
      %6806 = vsyncadd [#allocation5], %s6805
      %s6808 = sshll.u32 [#allocation4], 4
      %s6809 = int_to_ptr.vmem [resolvable:$true] %s6808
      %6811 = dma.vmem_to_hbm [thread:$0]  %s6809, 32, %s67, [#allocation5]
    $region137: #{forward.1} parent=1 // pred_fallthru
      _
    // Predicated region
    $region138: #{forward.1} parent=1 // pred_check
      _
    $region139: #{forward.1} parent=1 // pred_check_branch
      %6813 = sbr.rel (0) target = $region141
    $region140: #{forward.1} parent=1 // pred_region
      %s6815 = ssub.s32 32, 32
      %6816 = vsyncadd [#allocation5], %s6815
      %s6818 = sshll.u32 [#allocation6], 4
      %s6819 = int_to_ptr.vmem [resolvable:$true] %s6818
      %6821 = dma.vmem_to_hbm [thread:$0]  %s6819, 32, %s69, [#allocation5]
    $region141: #{forward.1} parent=1 // pred_fallthru
      _
    // Predicated region
    $region142: #{forward.1} parent=1 // pred_check
      _
    $region143: #{forward.1} parent=1 // pred_check_branch
      %6823 = sbr.rel (0) target = $region145
    $region144: #{forward.1} parent=1 // pred_region
      %6824 = dma.done [#allocation3], 32
    $region145: #{forward.1} parent=1 // pred_fallthru
      _
    // Predicated region
    $region146: #{forward.1} parent=1 // pred_check
      _
    $region147: #{forward.1} parent=1 // pred_check_branch
      %6826 = sbr.rel (0) target = $region149
    $region148: #{forward.1} parent=1 // pred_region
      %6827 = dma.done [#allocation5], 32
    $region149: #{forward.1} parent=1 // pred_fallthru
      _
    // Predicated region
    $region150: #{forward.1} parent=1 // pred_check
      _
    $region151: #{forward.1} parent=1 // pred_check_branch
      %6829 = sbr.rel (0) target = $region153
    $region152: #{forward.1} parent=1 // pred_region
      %6830 = dma.done [#allocation5], 32
    $region153: #{forward.1} parent=1 // pred_fallthru
      _
    %6831 = vsyncpa [#allocation3], 1
    %6832 = vsyncpa [#allocation5], 1

</llo_original>
